<compile_context>
chip_gen: v6e
topology: v6e:2x2x1
jax: 0.10.0
libtpu: 0.0.40
codegen_flags: <defaults>
</compile_context>

<pallas_src>
import functools
import math

import jax
import jax.numpy as jnp
from jax.experimental import pallas as pl
from jax.experimental.pallas import tpu as pltpu

# ---------------- small synthetic RoBERTa config ----------------
B, S = 2, 8              # batch, sequence
H = 128                  # hidden size (lane-dense: multiple of 128)
N_HEADS = 4
D_HEAD = H // N_HEADS
N_LAYERS = 4
D_FF = 256
VOCAB = 100
MAX_POS = 64
TYPE_VOCAB = 2
LN_EPS = 1e-5
PAD_ID = 1               # RoBERTa padding_idx
NUM_LABELS = S           # classifier_anchor = Linear(num_labels, 1) applied to [B, S] logits


def _gelu_tanh(x):
    # TODO(synk): HF "gelu" is exact erf-GELU; tanh approximation is used in-kernel
    # because a Mosaic erf lowering is not guaranteed (tanh hits the EUP slot).
    c = math.sqrt(2.0 / math.pi)
    return 0.5 * x * (1.0 + jnp.tanh(c * (x + 0.044715 * x * x * x)))


# ---------------- fused encoder + heads kernel (single invocation, no grid) ----------------
def _encoder_kernel(emb_ref, bias_ref, embg_ref, embb_ref,
                    wqkv_ref, bqkv_ref, wo_ref, bo_ref, ln1g_ref, ln1b_ref,
                    wi_ref, bi_ref, wf_ref, bf_ref, ln2g_ref, ln2b_ref,
                    wht_ref, bht_ref, wanc_ref, banc_ref,
                    head_out_ref, anchor_out_ref,
                    *, batch, seq, n_heads, d_head, hidden, n_layers):
    f32 = jnp.float32
    bf16 = jnp.bfloat16

    def layernorm(x, g, b):
        mu = jnp.mean(x, axis=-1, keepdims=True)
        var = jnp.mean(jnp.square(x - mu), axis=-1, keepdims=True)
        return (x - mu) * jax.lax.rsqrt(var + LN_EPS) * g + b

    # additive attention bias, precomputed in the wrapper; broadcast shape made once
    bias3 = bias_ref[...].reshape(batch, 1, seq)                     # [B, 1, S]
    scale = f32(1.0 / math.sqrt(d_head))

    # Embedding LayerNorm
    h = layernorm(emb_ref[...], embg_ref[...], embb_ref[...])        # [B*S, H] f32

    for l in range(n_layers):                                        # static unroll over layers
        # ----- self-attention: fused QKV projection (one bf16 [H, 3H] matmul) -----
        h_bf = h.astype(bf16)
        qkv = (jnp.dot(h_bf, wqkv_ref[l], preferred_element_type=f32)
               + bqkv_ref[l])                                        # [B*S, 3H] f32
        qkv3 = qkv.reshape(batch, seq, 3 * hidden)                   # [B, S, 3H]

        # Per-head attention with 3-D einsums (single batch dim = B).  The
        # output projection is split per head and accumulated, so no
        # lane-interleaving concatenate is needed.
        attn_acc = None
        for hd in range(n_heads):                                    # static unroll
            lo = hd * d_head
            q = qkv3[:, :, lo:lo + d_head]                           # [B, S, Dh]
            k = qkv3[:, :, hidden + lo:hidden + lo + d_head]
            v = qkv3[:, :, 2 * hidden + lo:2 * hidden + lo + d_head]
            s = jnp.einsum("bqd,bkd->bqk", q, k,
                           preferred_element_type=f32) * scale       # [B, S, S]
            s = s + bias3
            s = s - jnp.max(s, axis=-1, keepdims=True)               # stable softmax
            p = jnp.exp(s)
            p = p / jnp.sum(p, axis=-1, keepdims=True)               # exact reciprocal
            ctx = jnp.einsum("bqk,bkd->bqd", p, v,
                             preferred_element_type=f32)             # [B, S, Dh]
            ctx2 = ctx.reshape(batch * seq, d_head).astype(bf16)
            part = jnp.dot(ctx2, wo_ref[l, hd],
                           preferred_element_type=f32)               # [B*S, H]
            attn_acc = part if attn_acc is None else attn_acc + part
        attn_out = attn_acc + bo_ref[l]
        h1 = layernorm(attn_out + h, ln1g_ref[l], ln1b_ref[l])

        # ----- feed-forward (GELU fused in-kernel, bf16 weights) -----
        inter = (jnp.dot(h1.astype(bf16), wi_ref[l], preferred_element_type=f32)
                 + bi_ref[l])
        inter = _gelu_tanh(inter)
        ffn = (jnp.dot(inter.astype(bf16), wf_ref[l], preferred_element_type=f32)
               + bf_ref[l])
        h = layernorm(ffn + h1, ln2g_ref[l], ln2b_ref[l])            # carry residual

    # ----- classification heads on the VMEM-resident final hidden state -----
    # Conv1d(H, 1, 1) over the transposed output == per-position dot with an [H]
    # weight; head & tail weights are stacked into one [H, 2] matmul.
    logits2 = (jnp.dot(h, wht_ref[...], preferred_element_type=f32)
               + bht_ref[...])                                       # [B*S, 2]
    logits2 = logits2.reshape(batch, seq, 2)
    logits_head = logits2[:, :, 0]                                   # [B, S]
    logits_tail = logits2[:, :, 1]                                   # [B, S]
    # classifier_anchor = Linear(num_labels, 1) on logits_tail, then ReLU
    anchor = (jnp.sum(logits_tail * wanc_ref[...], axis=-1, keepdims=True)
              + banc_ref[...])                                       # [B, 1]
    head_out_ref[...] = logits_head
    anchor_out_ref[...] = jnp.maximum(anchor, f32(0.0))
    # TODO(synk): PyTorch's .squeeze() drops the batch dim when B == 1; this
    # implementation always returns (B, S) / (B, 1).


def roberta_head_anchor(emb, attn_bias, p, batch, seq):
    kernel = functools.partial(_encoder_kernel, batch=batch, seq=seq,
                               n_heads=N_HEADS, d_head=D_HEAD, hidden=H,
                               n_layers=N_LAYERS)
    inputs = (emb, attn_bias,
              p["emb_ln_g"], p["emb_ln_b"],
              p["wqkv"], p["bqkv"], p["wo"], p["bo"], p["ln1_g"], p["ln1_b"],
              p["wi"], p["bi"], p["wf"], p["bf"], p["ln2_g"], p["ln2_b"],
              p["w_ht"], p["b_ht"], p["w_anchor"], p["b_anchor"])

    def vmem():
        return pl.BlockSpec(memory_space=pltpu.MemorySpace.VMEM)

    return pl.pallas_call(
        kernel,
        out_shape=(jax.ShapeDtypeStruct((batch, seq), jnp.float32),
                   jax.ShapeDtypeStruct((batch, 1), jnp.float32)),
        in_specs=[vmem() for _ in inputs],
        out_specs=(vmem(), vmem()),
    )(*inputs)


# ---------------- parameters (deterministic synthetic init) ----------------
def init_params(key):
    keys = iter(jax.random.split(key, 24))

    def nrm(shape, std=0.02):
        return (std * jax.random.normal(next(keys), shape)).astype(jnp.float32)

    L = N_LAYERS
    p = {
        "word_emb": nrm((VOCAB, H)),
        "pos_emb": nrm((MAX_POS, H)),
        "type_emb": nrm((TYPE_VOCAB, H)),
        "emb_ln_g": jnp.ones((1, H), jnp.float32),
        "emb_ln_b": jnp.zeros((1, H), jnp.float32),
        # per-layer weights stacked along the layer axis; matmul weights in bf16
        # (halves the dominant weight DMA), biases / LN params stay f32.
        "wqkv": nrm((L, H, 3 * H)).astype(jnp.bfloat16),
        "bqkv": jnp.zeros((L, 1, 3 * H), jnp.float32),
        # output projection pre-split per head: [L, n_heads, d_head, H]
        "wo": nrm((L, H, H)).reshape(L, N_HEADS, D_HEAD, H).astype(jnp.bfloat16),
        "bo": jnp.zeros((L, 1, H), jnp.float32),
        "ln1_g": jnp.ones((L, 1, H), jnp.float32),
        "ln1_b": jnp.zeros((L, 1, H), jnp.float32),
        "wi": nrm((L, H, D_FF)).astype(jnp.bfloat16),
        "bi": jnp.zeros((L, 1, D_FF), jnp.float32),
        "wf": nrm((L, D_FF, H)).astype(jnp.bfloat16),
        "bf": jnp.zeros((L, 1, H), jnp.float32),
        "ln2_g": jnp.ones((L, 1, H), jnp.float32),
        "ln2_b": jnp.zeros((L, 1, H), jnp.float32),
    }
    # classifier_conv_head / _tail: nn.Conv1d(H, 1, 1) -> weight [1,H,1], bias [1].
    # Stacked into a single [H, 2] matrix so both logits come from one matmul.
    bc = 1.0 / math.sqrt(H)
    w_head = jax.random.uniform(next(keys), (H, 1), jnp.float32, -bc, bc)
    b_head = jax.random.uniform(next(keys), (1, 1), jnp.float32, -bc, bc)
    w_tail = jax.random.uniform(next(keys), (H, 1), jnp.float32, -bc, bc)
    b_tail = jax.random.uniform(next(keys), (1, 1), jnp.float32, -bc, bc)
    p["w_ht"] = jnp.concatenate([w_head, w_tail], axis=1)   # [H, 2]
    p["b_ht"] = jnp.concatenate([b_head, b_tail], axis=1)   # [1, 2]
    # classifier_anchor: nn.Linear(num_labels, 1)
    bl = 1.0 / math.sqrt(NUM_LABELS)
    p["w_anchor"] = jax.random.uniform(next(keys), (1, NUM_LABELS), jnp.float32, -bl, bl)
    p["b_anchor"] = jax.random.uniform(next(keys), (1, 1), jnp.float32, -bl, bl)
    return p


# ---------------- forward pass (gathers in JAX, everything else in one Pallas call) ----------------
def forward(params, input_ids, attention_mask=None, token_type_ids=None,
            special_tokens_mask=None):
    if special_tokens_mask is not None:
        raise NotImplementedError()   # mirrors the PyTorch module
    Bb, Ss = input_ids.shape
    assert Ss == NUM_LABELS, "classifier_anchor requires seq_len == num_labels"
    if attention_mask is None:
        attention_mask = jnp.ones((Bb, Ss), jnp.float32)
    attention_mask = attention_mask.astype(jnp.float32)
    if token_type_ids is None:
        token_type_ids = jnp.zeros_like(input_ids)

    # RoBERTa position ids (padding_idx = 1), derived from input_ids as in HF
    not_pad = (input_ids != PAD_ID).astype(jnp.int32)
    position_ids = jnp.cumsum(not_pad, axis=1) * not_pad + PAD_ID

    # Embedding gathers stay in plain JAX (glue); everything else runs in the fused kernel.
    emb = (params["word_emb"][input_ids]
           + params["pos_emb"][position_ids]
           + params["type_emb"][token_type_ids]).reshape(Bb * Ss, H).astype(jnp.float32)

    # Additive attention bias, hoisted out of the per-layer body (computed once here).
    attn_bias = (1.0 - attention_mask) * jnp.float32(-10000.0)       # [B, S]

    logits_head, anchor_value = roberta_head_anchor(emb, attn_bias, params, Bb, Ss)
    return ((logits_head, anchor_value),)


if __name__ == "__main__":
    key = jax.random.PRNGKey(0)
    pkey, ikey = jax.random.split(key)
    params = init_params(pkey)

    input_ids = jax.random.randint(ikey, (B, S), 3, VOCAB, dtype=jnp.int32)
    input_ids = input_ids.at[:, 0].set(0).at[:, -1].set(2)   # <s> ... </s>
    attention_mask = jnp.ones((B, S), jnp.float32)

    fwd = jax.jit(forward)
    ((logits_head, anchor_value),) = fwd(params, input_ids, attention_mask)

    jax.block_until_ready((logits_head, anchor_value))
    assert logits_head.shape == (B, S)
    assert anchor_value.shape == (B, 1)
    print("KERNEL_OK")
</pallas_src>

<mosaic_0001>
module attributes {stable_mosaic.version = 11 : i64} {
  func.func @_encoder_kernel(%arg0: memref<16x128xf32, #tpu.memory_space<vmem>>, %arg1: memref<2x8xf32, #tpu.memory_space<vmem>>, %arg2: memref<1x128xf32, #tpu.memory_space<vmem>>, %arg3: memref<1x128xf32, #tpu.memory_space<vmem>>, %arg4: memref<4x128x384xbf16, #tpu.memory_space<vmem>>, %arg5: memref<4x1x384xf32, #tpu.memory_space<vmem>>, %arg6: memref<4x4x32x128xbf16, #tpu.memory_space<vmem>>, %arg7: memref<4x1x128xf32, #tpu.memory_space<vmem>>, %arg8: memref<4x1x128xf32, #tpu.memory_space<vmem>>, %arg9: memref<4x1x128xf32, #tpu.memory_space<vmem>>, %arg10: memref<4x128x256xbf16, #tpu.memory_space<vmem>>, %arg11: memref<4x1x256xf32, #tpu.memory_space<vmem>>, %arg12: memref<4x256x128xbf16, #tpu.memory_space<vmem>>, %arg13: memref<4x1x128xf32, #tpu.memory_space<vmem>>, %arg14: memref<4x1x128xf32, #tpu.memory_space<vmem>>, %arg15: memref<4x1x128xf32, #tpu.memory_space<vmem>>, %arg16: memref<128x2xf32, #tpu.memory_space<vmem>>, %arg17: memref<1x2xf32, #tpu.memory_space<vmem>>, %arg18: memref<1x8xf32, #tpu.memory_space<vmem>>, %arg19: memref<1x1xf32, #tpu.memory_space<vmem>>, %arg20: memref<2x8xf32, #tpu.memory_space<vmem>>, %arg21: memref<2x1xf32, #tpu.memory_space<vmem>>) attributes {dimension_semantics = [], scalar_prefetch = 0 : i64, scratch_operands = 0 : i64, tpu.core_type = #tpu.core_type<tc>} {
    %c0 = arith.constant 0 : index
    %c0_0 = arith.constant 0 : index
    %0 = vector.load %arg1[%c0, %c0_0] : memref<2x8xf32, #tpu.memory_space<vmem>>, vector<2x8xf32>
    %1 = vector.shape_cast %0 : vector<2x8xf32> to vector<2x1x8xf32>
    %c0_1 = arith.constant 0 : index
    %c0_2 = arith.constant 0 : index
    %2 = vector.load %arg0[%c0_1, %c0_2] : memref<16x128xf32, #tpu.memory_space<vmem>>, vector<16x128xf32>
    %c0_3 = arith.constant 0 : index
    %c0_4 = arith.constant 0 : index
    %3 = vector.load %arg2[%c0_3, %c0_4] : memref<1x128xf32, #tpu.memory_space<vmem>>, vector<1x128xf32>
    %c0_5 = arith.constant 0 : index
    %c0_6 = arith.constant 0 : index
    %4 = vector.load %arg3[%c0_5, %c0_6] : memref<1x128xf32, #tpu.memory_space<vmem>>, vector<1x128xf32>
    %cst = arith.constant dense<0.000000e+00> : vector<16xf32>
    %5 = vector.multi_reduction <add>, %2, %cst [1] : vector<16x128xf32> to vector<16xf32>
    %6 = vector.shape_cast %5 : vector<16xf32> to vector<16x1xf32>
    %cst_7 = arith.constant 1.280000e+02 : f32
    %7 = vector.broadcast %cst_7 : f32 to vector<16x1xf32>
    %8 = arith.divf %6, %7 : vector<16x1xf32>
    %9 = vector.broadcast %8 : vector<16x1xf32> to vector<16x128xf32>
    %10 = arith.subf %2, %9 : vector<16x128xf32>
    %11 = arith.mulf %10, %10 : vector<16x128xf32>
    %cst_8 = arith.constant dense<0.000000e+00> : vector<16xf32>
    %12 = vector.multi_reduction <add>, %11, %cst_8 [1] : vector<16x128xf32> to vector<16xf32>
    %13 = vector.shape_cast %12 : vector<16xf32> to vector<16x1xf32>
    %cst_9 = arith.constant 1.280000e+02 : f32
    %14 = vector.broadcast %cst_9 : f32 to vector<16x1xf32>
    %15 = arith.divf %13, %14 : vector<16x1xf32>
    %16 = vector.broadcast %8 : vector<16x1xf32> to vector<16x128xf32>
    %17 = arith.subf %2, %16 : vector<16x128xf32>
    %cst_10 = arith.constant 9.99999974E-6 : f32
    %18 = vector.broadcast %cst_10 : f32 to vector<16x1xf32>
    %19 = arith.addf %15, %18 : vector<16x1xf32>
    %20 = math.rsqrt %19 : vector<16x1xf32>
    %21 = vector.broadcast %20 : vector<16x1xf32> to vector<16x128xf32>
    %22 = arith.mulf %17, %21 : vector<16x128xf32>
    %23 = vector.broadcast %3 : vector<1x128xf32> to vector<16x128xf32>
    %24 = arith.mulf %22, %23 : vector<16x128xf32>
    %25 = vector.broadcast %4 : vector<1x128xf32> to vector<16x128xf32>
    %26 = arith.addf %24, %25 : vector<16x128xf32>
    %27 = arith.truncf %26 : vector<16x128xf32> to vector<16x128xbf16>
    %c0_11 = arith.constant 0 : index
    %c0_12 = arith.constant 0 : index
    %c0_13 = arith.constant 0 : index
    %28 = vector.load %arg4[%c0_11, %c0_12, %c0_13] : memref<4x128x384xbf16, #tpu.memory_space<vmem>>, vector<1x128x384xbf16>
    %29 = vector.shape_cast %28 : vector<1x128x384xbf16> to vector<128x384xbf16>
    %cst_14 = arith.constant dense<0.000000e+00> : vector<16x384xf32>
    %30 = tpu.matmul %27, %29, %cst_14 {dimension_numbers = #tpu.dot_dimension_numbers<[1], [0], [0], [1], [0, 0, 1, 1], [], []>} : vector<16x128xbf16>, vector<128x384xbf16>, vector<16x384xf32> -> vector<16x384xf32>
    %c0_15 = arith.constant 0 : index
    %c0_16 = arith.constant 0 : index
    %c0_17 = arith.constant 0 : index
    %31 = vector.load %arg5[%c0_15, %c0_16, %c0_17] : memref<4x1x384xf32, #tpu.memory_space<vmem>>, vector<1x1x384xf32>
    %32 = vector.shape_cast %31 : vector<1x1x384xf32> to vector<1x384xf32>
    %33 = vector.broadcast %32 : vector<1x384xf32> to vector<16x384xf32>
    %34 = arith.addf %30, %33 : vector<16x384xf32>
    %35 = vector.shape_cast %34 : vector<16x384xf32> to vector<2x8x384xf32>
    %36 = vector.extract_strided_slice %35 {offsets = [0, 0, 0], sizes = [2, 8, 32], strides = [1, 1, 1]} : vector<2x8x384xf32> to vector<2x8x32xf32>
    %37 = vector.extract_strided_slice %35 {offsets = [0, 0, 128], sizes = [2, 8, 32], strides = [1, 1, 1]} : vector<2x8x384xf32> to vector<2x8x32xf32>
    %38 = vector.extract_strided_slice %35 {offsets = [0, 0, 256], sizes = [2, 8, 32], strides = [1, 1, 1]} : vector<2x8x384xf32> to vector<2x8x32xf32>
    "tpu.trace_start"() <{level = 10 : i32, message = "bqd,bkd->bqk"}> : () -> ()
    %cst_18 = arith.constant dense<0.000000e+00> : vector<2x8x8xf32>
    %39 = tpu.matmul %36, %37, %cst_18 {dimension_numbers = #tpu.dot_dimension_numbers<[2], [2], [1], [1], [0, 0, 0, 1, 1, 1], [0], [0]>} : vector<2x8x32xf32>, vector<2x8x32xf32>, vector<2x8x8xf32> -> vector<2x8x8xf32>
    "tpu.trace_stop"() : () -> ()
    %cst_19 = arith.constant 0.176776692 : f32
    %40 = vector.broadcast %cst_19 : f32 to vector<2x8x8xf32>
    %41 = arith.mulf %39, %40 : vector<2x8x8xf32>
    %42 = vector.broadcast %1 : vector<2x1x8xf32> to vector<2x8x8xf32>
    %43 = arith.addf %41, %42 : vector<2x8x8xf32>
    %cst_20 = arith.constant dense<0xFF800000> : vector<2x8xf32>
    %44 = vector.multi_reduction <maximumf>, %43, %cst_20 [2] : vector<2x8x8xf32> to vector<2x8xf32>
    %45 = vector.shape_cast %44 : vector<2x8xf32> to vector<2x8x1xf32>
    %46 = vector.broadcast %45 : vector<2x8x1xf32> to vector<2x8x8xf32>
    %47 = arith.subf %43, %46 : vector<2x8x8xf32>
    %48 = math.exp %47 : vector<2x8x8xf32>
    %cst_21 = arith.constant dense<0.000000e+00> : vector<2x8xf32>
    %49 = vector.multi_reduction <add>, %48, %cst_21 [2] : vector<2x8x8xf32> to vector<2x8xf32>
    %50 = vector.shape_cast %49 : vector<2x8xf32> to vector<2x8x1xf32>
    %51 = vector.broadcast %50 : vector<2x8x1xf32> to vector<2x8x8xf32>
    %52 = arith.divf %48, %51 : vector<2x8x8xf32>
    "tpu.trace_start"() <{level = 10 : i32, message = "bqk,bkd->bqd"}> : () -> ()
    %cst_22 = arith.constant dense<0.000000e+00> : vector<2x8x32xf32>
    %53 = tpu.matmul %52, %38, %cst_22 {dimension_numbers = #tpu.dot_dimension_numbers<[2], [1], [1], [2], [0, 0, 0, 1, 1, 2], [0], [0]>} : vector<2x8x8xf32>, vector<2x8x32xf32>, vector<2x8x32xf32> -> vector<2x8x32xf32>
    "tpu.trace_stop"() : () -> ()
    %54 = vector.shape_cast %53 : vector<2x8x32xf32> to vector<16x32xf32>
    %55 = arith.truncf %54 : vector<16x32xf32> to vector<16x32xbf16>
    %c0_23 = arith.constant 0 : index
    %c0_24 = arith.constant 0 : index
    %c0_25 = arith.constant 0 : index
    %c0_26 = arith.constant 0 : index
    %56 = vector.load %arg6[%c0_23, %c0_24, %c0_25, %c0_26] : memref<4x4x32x128xbf16, #tpu.memory_space<vmem>>, vector<1x1x32x128xbf16>
    %57 = vector.shape_cast %56 : vector<1x1x32x128xbf16> to vector<32x128xbf16>
    %cst_27 = arith.constant dense<0.000000e+00> : vector<16x128xf32>
    %58 = tpu.matmul %55, %57, %cst_27 {dimension_numbers = #tpu.dot_dimension_numbers<[1], [0], [0], [1], [0, 0, 1, 1], [], []>} : vector<16x32xbf16>, vector<32x128xbf16>, vector<16x128xf32> -> vector<16x128xf32>
    %59 = vector.extract_strided_slice %35 {offsets = [0, 0, 32], sizes = [2, 8, 32], strides = [1, 1, 1]} : vector<2x8x384xf32> to vector<2x8x32xf32>
    %60 = vector.extract_strided_slice %35 {offsets = [0, 0, 160], sizes = [2, 8, 32], strides = [1, 1, 1]} : vector<2x8x384xf32> to vector<2x8x32xf32>
    %61 = vector.extract_strided_slice %35 {offsets = [0, 0, 288], sizes = [2, 8, 32], strides = [1, 1, 1]} : vector<2x8x384xf32> to vector<2x8x32xf32>
    "tpu.trace_start"() <{level = 10 : i32, message = "bqd,bkd->bqk"}> : () -> ()
    %cst_28 = arith.constant dense<0.000000e+00> : vector<2x8x8xf32>
    %62 = tpu.matmul %59, %60, %cst_28 {dimension_numbers = #tpu.dot_dimension_numbers<[2], [2], [1], [1], [0, 0, 0, 1, 1, 1], [0], [0]>} : vector<2x8x32xf32>, vector<2x8x32xf32>, vector<2x8x8xf32> -> vector<2x8x8xf32>
    "tpu.trace_stop"() : () -> ()
    %cst_29 = arith.constant 0.176776692 : f32
    %63 = vector.broadcast %cst_29 : f32 to vector<2x8x8xf32>
    %64 = arith.mulf %62, %63 : vector<2x8x8xf32>
    %65 = vector.broadcast %1 : vector<2x1x8xf32> to vector<2x8x8xf32>
    %66 = arith.addf %64, %65 : vector<2x8x8xf32>
    %cst_30 = arith.constant dense<0xFF800000> : vector<2x8xf32>
    %67 = vector.multi_reduction <maximumf>, %66, %cst_30 [2] : vector<2x8x8xf32> to vector<2x8xf32>
    %68 = vector.shape_cast %67 : vector<2x8xf32> to vector<2x8x1xf32>
    %69 = vector.broadcast %68 : vector<2x8x1xf32> to vector<2x8x8xf32>
    %70 = arith.subf %66, %69 : vector<2x8x8xf32>
    %71 = math.exp %70 : vector<2x8x8xf32>
    %cst_31 = arith.constant dense<0.000000e+00> : vector<2x8xf32>
    %72 = vector.multi_reduction <add>, %71, %cst_31 [2] : vector<2x8x8xf32> to vector<2x8xf32>
    %73 = vector.shape_cast %72 : vector<2x8xf32> to vector<2x8x1xf32>
    %74 = vector.broadcast %73 : vector<2x8x1xf32> to vector<2x8x8xf32>
    %75 = arith.divf %71, %74 : vector<2x8x8xf32>
    "tpu.trace_start"() <{level = 10 : i32, message = "bqk,bkd->bqd"}> : () -> ()
    %cst_32 = arith.constant dense<0.000000e+00> : vector<2x8x32xf32>
    %76 = tpu.matmul %75, %61, %cst_32 {dimension_numbers = #tpu.dot_dimension_numbers<[2], [1], [1], [2], [0, 0, 0, 1, 1, 2], [0], [0]>} : vector<2x8x8xf32>, vector<2x8x32xf32>, vector<2x8x32xf32> -> vector<2x8x32xf32>
    "tpu.trace_stop"() : () -> ()
    %77 = vector.shape_cast %76 : vector<2x8x32xf32> to vector<16x32xf32>
    %78 = arith.truncf %77 : vector<16x32xf32> to vector<16x32xbf16>
    %c0_33 = arith.constant 0 : index
    %c1 = arith.constant 1 : index
    %c0_34 = arith.constant 0 : index
    %c0_35 = arith.constant 0 : index
    %79 = vector.load %arg6[%c0_33, %c1, %c0_34, %c0_35] : memref<4x4x32x128xbf16, #tpu.memory_space<vmem>>, vector<1x1x32x128xbf16>
    %80 = vector.shape_cast %79 : vector<1x1x32x128xbf16> to vector<32x128xbf16>
    %cst_36 = arith.constant dense<0.000000e+00> : vector<16x128xf32>
    %81 = tpu.matmul %78, %80, %cst_36 {dimension_numbers = #tpu.dot_dimension_numbers<[1], [0], [0], [1], [0, 0, 1, 1], [], []>} : vector<16x32xbf16>, vector<32x128xbf16>, vector<16x128xf32> -> vector<16x128xf32>
    %82 = arith.addf %58, %81 : vector<16x128xf32>
    %83 = vector.extract_strided_slice %35 {offsets = [0, 0, 64], sizes = [2, 8, 32], strides = [1, 1, 1]} : vector<2x8x384xf32> to vector<2x8x32xf32>
    %84 = vector.extract_strided_slice %35 {offsets = [0, 0, 192], sizes = [2, 8, 32], strides = [1, 1, 1]} : vector<2x8x384xf32> to vector<2x8x32xf32>
    %85 = vector.extract_strided_slice %35 {offsets = [0, 0, 320], sizes = [2, 8, 32], strides = [1, 1, 1]} : vector<2x8x384xf32> to vector<2x8x32xf32>
    "tpu.trace_start"() <{level = 10 : i32, message = "bqd,bkd->bqk"}> : () -> ()
    %cst_37 = arith.constant dense<0.000000e+00> : vector<2x8x8xf32>
    %86 = tpu.matmul %83, %84, %cst_37 {dimension_numbers = #tpu.dot_dimension_numbers<[2], [2], [1], [1], [0, 0, 0, 1, 1, 1], [0], [0]>} : vector<2x8x32xf32>, vector<2x8x32xf32>, vector<2x8x8xf32> -> vector<2x8x8xf32>
    "tpu.trace_stop"() : () -> ()
    %cst_38 = arith.constant 0.176776692 : f32
    %87 = vector.broadcast %cst_38 : f32 to vector<2x8x8xf32>
    %88 = arith.mulf %86, %87 : vector<2x8x8xf32>
    %89 = vector.broadcast %1 : vector<2x1x8xf32> to vector<2x8x8xf32>
    %90 = arith.addf %88, %89 : vector<2x8x8xf32>
    %cst_39 = arith.constant dense<0xFF800000> : vector<2x8xf32>
    %91 = vector.multi_reduction <maximumf>, %90, %cst_39 [2] : vector<2x8x8xf32> to vector<2x8xf32>
    %92 = vector.shape_cast %91 : vector<2x8xf32> to vector<2x8x1xf32>
    %93 = vector.broadcast %92 : vector<2x8x1xf32> to vector<2x8x8xf32>
    %94 = arith.subf %90, %93 : vector<2x8x8xf32>
    %95 = math.exp %94 : vector<2x8x8xf32>
    %cst_40 = arith.constant dense<0.000000e+00> : vector<2x8xf32>
    %96 = vector.multi_reduction <add>, %95, %cst_40 [2] : vector<2x8x8xf32> to vector<2x8xf32>
    %97 = vector.shape_cast %96 : vector<2x8xf32> to vector<2x8x1xf32>
    %98 = vector.broadcast %97 : vector<2x8x1xf32> to vector<2x8x8xf32>
    %99 = arith.divf %95, %98 : vector<2x8x8xf32>
    "tpu.trace_start"() <{level = 10 : i32, message = "bqk,bkd->bqd"}> : () -> ()
    %cst_41 = arith.constant dense<0.000000e+00> : vector<2x8x32xf32>
    %100 = tpu.matmul %99, %85, %cst_41 {dimension_numbers = #tpu.dot_dimension_numbers<[2], [1], [1], [2], [0, 0, 0, 1, 1, 2], [0], [0]>} : vector<2x8x8xf32>, vector<2x8x32xf32>, vector<2x8x32xf32> -> vector<2x8x32xf32>
    "tpu.trace_stop"() : () -> ()
    %101 = vector.shape_cast %100 : vector<2x8x32xf32> to vector<16x32xf32>
    %102 = arith.truncf %101 : vector<16x32xf32> to vector<16x32xbf16>
    %c0_42 = arith.constant 0 : index
    %c2 = arith.constant 2 : index
    %c0_43 = arith.constant 0 : index
    %c0_44 = arith.constant 0 : index
    %103 = vector.load %arg6[%c0_42, %c2, %c0_43, %c0_44] : memref<4x4x32x128xbf16, #tpu.memory_space<vmem>>, vector<1x1x32x128xbf16>
    %104 = vector.shape_cast %103 : vector<1x1x32x128xbf16> to vector<32x128xbf16>
    %cst_45 = arith.constant dense<0.000000e+00> : vector<16x128xf32>
    %105 = tpu.matmul %102, %104, %cst_45 {dimension_numbers = #tpu.dot_dimension_numbers<[1], [0], [0], [1], [0, 0, 1, 1], [], []>} : vector<16x32xbf16>, vector<32x128xbf16>, vector<16x128xf32> -> vector<16x128xf32>
    %106 = arith.addf %82, %105 : vector<16x128xf32>
    %107 = vector.extract_strided_slice %35 {offsets = [0, 0, 96], sizes = [2, 8, 32], strides = [1, 1, 1]} : vector<2x8x384xf32> to vector<2x8x32xf32>
    %108 = vector.extract_strided_slice %35 {offsets = [0, 0, 224], sizes = [2, 8, 32], strides = [1, 1, 1]} : vector<2x8x384xf32> to vector<2x8x32xf32>
    %109 = vector.extract_strided_slice %35 {offsets = [0, 0, 352], sizes = [2, 8, 32], strides = [1, 1, 1]} : vector<2x8x384xf32> to vector<2x8x32xf32>
    "tpu.trace_start"() <{level = 10 : i32, message = "bqd,bkd->bqk"}> : () -> ()
    %cst_46 = arith.constant dense<0.000000e+00> : vector<2x8x8xf32>
    %110 = tpu.matmul %107, %108, %cst_46 {dimension_numbers = #tpu.dot_dimension_numbers<[2], [2], [1], [1], [0, 0, 0, 1, 1, 1], [0], [0]>} : vector<2x8x32xf32>, vector<2x8x32xf32>, vector<2x8x8xf32> -> vector<2x8x8xf32>
    "tpu.trace_stop"() : () -> ()
    %cst_47 = arith.constant 0.176776692 : f32
    %111 = vector.broadcast %cst_47 : f32 to vector<2x8x8xf32>
    %112 = arith.mulf %110, %111 : vector<2x8x8xf32>
    %113 = vector.broadcast %1 : vector<2x1x8xf32> to vector<2x8x8xf32>
    %114 = arith.addf %112, %113 : vector<2x8x8xf32>
    %cst_48 = arith.constant dense<0xFF800000> : vector<2x8xf32>
    %115 = vector.multi_reduction <maximumf>, %114, %cst_48 [2] : vector<2x8x8xf32> to vector<2x8xf32>
    %116 = vector.shape_cast %115 : vector<2x8xf32> to vector<2x8x1xf32>
    %117 = vector.broadcast %116 : vector<2x8x1xf32> to vector<2x8x8xf32>
    %118 = arith.subf %114, %117 : vector<2x8x8xf32>
    %119 = math.exp %118 : vector<2x8x8xf32>
    %cst_49 = arith.constant dense<0.000000e+00> : vector<2x8xf32>
    %120 = vector.multi_reduction <add>, %119, %cst_49 [2] : vector<2x8x8xf32> to vector<2x8xf32>
    %121 = vector.shape_cast %120 : vector<2x8xf32> to vector<2x8x1xf32>
    %122 = vector.broadcast %121 : vector<2x8x1xf32> to vector<2x8x8xf32>
    %123 = arith.divf %119, %122 : vector<2x8x8xf32>
    "tpu.trace_start"() <{level = 10 : i32, message = "bqk,bkd->bqd"}> : () -> ()
    %cst_50 = arith.constant dense<0.000000e+00> : vector<2x8x32xf32>
    %124 = tpu.matmul %123, %109, %cst_50 {dimension_numbers = #tpu.dot_dimension_numbers<[2], [1], [1], [2], [0, 0, 0, 1, 1, 2], [0], [0]>} : vector<2x8x8xf32>, vector<2x8x32xf32>, vector<2x8x32xf32> -> vector<2x8x32xf32>
    "tpu.trace_stop"() : () -> ()
    %125 = vector.shape_cast %124 : vector<2x8x32xf32> to vector<16x32xf32>
    %126 = arith.truncf %125 : vector<16x32xf32> to vector<16x32xbf16>
    %c0_51 = arith.constant 0 : index
    %c3 = arith.constant 3 : index
    %c0_52 = arith.constant 0 : index
    %c0_53 = arith.constant 0 : index
    %127 = vector.load %arg6[%c0_51, %c3, %c0_52, %c0_53] : memref<4x4x32x128xbf16, #tpu.memory_space<vmem>>, vector<1x1x32x128xbf16>
    %128 = vector.shape_cast %127 : vector<1x1x32x128xbf16> to vector<32x128xbf16>
    %cst_54 = arith.constant dense<0.000000e+00> : vector<16x128xf32>
    %129 = tpu.matmul %126, %128, %cst_54 {dimension_numbers = #tpu.dot_dimension_numbers<[1], [0], [0], [1], [0, 0, 1, 1], [], []>} : vector<16x32xbf16>, vector<32x128xbf16>, vector<16x128xf32> -> vector<16x128xf32>
    %130 = arith.addf %106, %129 : vector<16x128xf32>
    %c0_55 = arith.constant 0 : index
    %c0_56 = arith.constant 0 : index
    %c0_57 = arith.constant 0 : index
    %131 = vector.load %arg7[%c0_55, %c0_56, %c0_57] : memref<4x1x128xf32, #tpu.memory_space<vmem>>, vector<1x1x128xf32>
    %132 = vector.shape_cast %131 : vector<1x1x128xf32> to vector<1x128xf32>
    %133 = vector.broadcast %132 : vector<1x128xf32> to vector<16x128xf32>
    %134 = arith.addf %130, %133 : vector<16x128xf32>
    %135 = arith.addf %134, %26 : vector<16x128xf32>
    %c0_58 = arith.constant 0 : index
    %c0_59 = arith.constant 0 : index
    %c0_60 = arith.constant 0 : index
    %136 = vector.load %arg8[%c0_58, %c0_59, %c0_60] : memref<4x1x128xf32, #tpu.memory_space<vmem>>, vector<1x1x128xf32>
    %137 = vector.shape_cast %136 : vector<1x1x128xf32> to vector<1x128xf32>
    %c0_61 = arith.constant 0 : index
    %c0_62 = arith.constant 0 : index
    %c0_63 = arith.constant 0 : index
    %138 = vector.load %arg9[%c0_61, %c0_62, %c0_63] : memref<4x1x128xf32, #tpu.memory_space<vmem>>, vector<1x1x128xf32>
    %139 = vector.shape_cast %138 : vector<1x1x128xf32> to vector<1x128xf32>
    %cst_64 = arith.constant dense<0.000000e+00> : vector<16xf32>
    %140 = vector.multi_reduction <add>, %135, %cst_64 [1] : vector<16x128xf32> to vector<16xf32>
    %141 = vector.shape_cast %140 : vector<16xf32> to vector<16x1xf32>
    %cst_65 = arith.constant 1.280000e+02 : f32
    %142 = vector.broadcast %cst_65 : f32 to vector<16x1xf32>
    %143 = arith.divf %141, %142 : vector<16x1xf32>
    %144 = vector.broadcast %143 : vector<16x1xf32> to vector<16x128xf32>
    %145 = arith.subf %135, %144 : vector<16x128xf32>
    %146 = arith.mulf %145, %145 : vector<16x128xf32>
    %cst_66 = arith.constant dense<0.000000e+00> : vector<16xf32>
    %147 = vector.multi_reduction <add>, %146, %cst_66 [1] : vector<16x128xf32> to vector<16xf32>
    %148 = vector.shape_cast %147 : vector<16xf32> to vector<16x1xf32>
    %cst_67 = arith.constant 1.280000e+02 : f32
    %149 = vector.broadcast %cst_67 : f32 to vector<16x1xf32>
    %150 = arith.divf %148, %149 : vector<16x1xf32>
    %151 = vector.broadcast %143 : vector<16x1xf32> to vector<16x128xf32>
    %152 = arith.subf %135, %151 : vector<16x128xf32>
    %cst_68 = arith.constant 9.99999974E-6 : f32
    %153 = vector.broadcast %cst_68 : f32 to vector<16x1xf32>
    %154 = arith.addf %150, %153 : vector<16x1xf32>
    %155 = math.rsqrt %154 : vector<16x1xf32>
    %156 = vector.broadcast %155 : vector<16x1xf32> to vector<16x128xf32>
    %157 = arith.mulf %152, %156 : vector<16x128xf32>
    %158 = vector.broadcast %137 : vector<1x128xf32> to vector<16x128xf32>
    %159 = arith.mulf %157, %158 : vector<16x128xf32>
    %160 = vector.broadcast %139 : vector<1x128xf32> to vector<16x128xf32>
    %161 = arith.addf %159, %160 : vector<16x128xf32>
    %162 = arith.truncf %161 : vector<16x128xf32> to vector<16x128xbf16>
    %c0_69 = arith.constant 0 : index
    %c0_70 = arith.constant 0 : index
    %c0_71 = arith.constant 0 : index
    %163 = vector.load %arg10[%c0_69, %c0_70, %c0_71] : memref<4x128x256xbf16, #tpu.memory_space<vmem>>, vector<1x128x256xbf16>
    %164 = vector.shape_cast %163 : vector<1x128x256xbf16> to vector<128x256xbf16>
    %cst_72 = arith.constant dense<0.000000e+00> : vector<16x256xf32>
    %165 = tpu.matmul %162, %164, %cst_72 {dimension_numbers = #tpu.dot_dimension_numbers<[1], [0], [0], [1], [0, 0, 1, 1], [], []>} : vector<16x128xbf16>, vector<128x256xbf16>, vector<16x256xf32> -> vector<16x256xf32>
    %c0_73 = arith.constant 0 : index
    %c0_74 = arith.constant 0 : index
    %c0_75 = arith.constant 0 : index
    %166 = vector.load %arg11[%c0_73, %c0_74, %c0_75] : memref<4x1x256xf32, #tpu.memory_space<vmem>>, vector<1x1x256xf32>
    %167 = vector.shape_cast %166 : vector<1x1x256xf32> to vector<1x256xf32>
    %168 = vector.broadcast %167 : vector<1x256xf32> to vector<16x256xf32>
    %169 = arith.addf %165, %168 : vector<16x256xf32>
    %cst_76 = arith.constant 5.000000e-01 : f32
    %170 = vector.broadcast %cst_76 : f32 to vector<16x256xf32>
    %171 = arith.mulf %170, %169 : vector<16x256xf32>
    %cst_77 = arith.constant 4.471500e-02 : f32
    %172 = vector.broadcast %cst_77 : f32 to vector<16x256xf32>
    %173 = arith.mulf %172, %169 : vector<16x256xf32>
    %174 = arith.mulf %173, %169 : vector<16x256xf32>
    %175 = arith.mulf %174, %169 : vector<16x256xf32>
    %176 = arith.addf %169, %175 : vector<16x256xf32>
    %cst_78 = arith.constant 0.797884583 : f32
    %177 = vector.broadcast %cst_78 : f32 to vector<16x256xf32>
    %178 = arith.mulf %177, %176 : vector<16x256xf32>
    %179 = math.tanh %178 : vector<16x256xf32>
    %cst_79 = arith.constant 1.000000e+00 : f32
    %180 = vector.broadcast %cst_79 : f32 to vector<16x256xf32>
    %181 = arith.addf %180, %179 : vector<16x256xf32>
    %182 = arith.mulf %171, %181 : vector<16x256xf32>
    %183 = arith.truncf %182 : vector<16x256xf32> to vector<16x256xbf16>
    %c0_80 = arith.constant 0 : index
    %c0_81 = arith.constant 0 : index
    %c0_82 = arith.constant 0 : index
    %184 = vector.load %arg12[%c0_80, %c0_81, %c0_82] : memref<4x256x128xbf16, #tpu.memory_space<vmem>>, vector<1x256x128xbf16>
    %185 = vector.shape_cast %184 : vector<1x256x128xbf16> to vector<256x128xbf16>
    %cst_83 = arith.constant dense<0.000000e+00> : vector<16x128xf32>
    %186 = tpu.matmul %183, %185, %cst_83 {dimension_numbers = #tpu.dot_dimension_numbers<[1], [0], [0], [1], [0, 0, 1, 1], [], []>} : vector<16x256xbf16>, vector<256x128xbf16>, vector<16x128xf32> -> vector<16x128xf32>
    %c0_84 = arith.constant 0 : index
    %c0_85 = arith.constant 0 : index
    %c0_86 = arith.constant 0 : index
    %187 = vector.load %arg13[%c0_84, %c0_85, %c0_86] : memref<4x1x128xf32, #tpu.memory_space<vmem>>, vector<1x1x128xf32>
    %188 = vector.shape_cast %187 : vector<1x1x128xf32> to vector<1x128xf32>
    %189 = vector.broadcast %188 : vector<1x128xf32> to vector<16x128xf32>
    %190 = arith.addf %186, %189 : vector<16x128xf32>
    %191 = arith.addf %190, %161 : vector<16x128xf32>
    %c0_87 = arith.constant 0 : index
    %c0_88 = arith.constant 0 : index
    %c0_89 = arith.constant 0 : index
    %192 = vector.load %arg14[%c0_87, %c0_88, %c0_89] : memref<4x1x128xf32, #tpu.memory_space<vmem>>, vector<1x1x128xf32>
    %193 = vector.shape_cast %192 : vector<1x1x128xf32> to vector<1x128xf32>
    %c0_90 = arith.constant 0 : index
    %c0_91 = arith.constant 0 : index
    %c0_92 = arith.constant 0 : index
    %194 = vector.load %arg15[%c0_90, %c0_91, %c0_92] : memref<4x1x128xf32, #tpu.memory_space<vmem>>, vector<1x1x128xf32>
    %195 = vector.shape_cast %194 : vector<1x1x128xf32> to vector<1x128xf32>
    %cst_93 = arith.constant dense<0.000000e+00> : vector<16xf32>
    %196 = vector.multi_reduction <add>, %191, %cst_93 [1] : vector<16x128xf32> to vector<16xf32>
    %197 = vector.shape_cast %196 : vector<16xf32> to vector<16x1xf32>
    %cst_94 = arith.constant 1.280000e+02 : f32
    %198 = vector.broadcast %cst_94 : f32 to vector<16x1xf32>
    %199 = arith.divf %197, %198 : vector<16x1xf32>
    %200 = vector.broadcast %199 : vector<16x1xf32> to vector<16x128xf32>
    %201 = arith.subf %191, %200 : vector<16x128xf32>
    %202 = arith.mulf %201, %201 : vector<16x128xf32>
    %cst_95 = arith.constant dense<0.000000e+00> : vector<16xf32>
    %203 = vector.multi_reduction <add>, %202, %cst_95 [1] : vector<16x128xf32> to vector<16xf32>
    %204 = vector.shape_cast %203 : vector<16xf32> to vector<16x1xf32>
    %cst_96 = arith.constant 1.280000e+02 : f32
    %205 = vector.broadcast %cst_96 : f32 to vector<16x1xf32>
    %206 = arith.divf %204, %205 : vector<16x1xf32>
    %207 = vector.broadcast %199 : vector<16x1xf32> to vector<16x128xf32>
    %208 = arith.subf %191, %207 : vector<16x128xf32>
    %cst_97 = arith.constant 9.99999974E-6 : f32
    %209 = vector.broadcast %cst_97 : f32 to vector<16x1xf32>
    %210 = arith.addf %206, %209 : vector<16x1xf32>
    %211 = math.rsqrt %210 : vector<16x1xf32>
    %212 = vector.broadcast %211 : vector<16x1xf32> to vector<16x128xf32>
    %213 = arith.mulf %208, %212 : vector<16x128xf32>
    %214 = vector.broadcast %193 : vector<1x128xf32> to vector<16x128xf32>
    %215 = arith.mulf %213, %214 : vector<16x128xf32>
    %216 = vector.broadcast %195 : vector<1x128xf32> to vector<16x128xf32>
    %217 = arith.addf %215, %216 : vector<16x128xf32>
    %218 = arith.truncf %217 : vector<16x128xf32> to vector<16x128xbf16>
    %c1_98 = arith.constant 1 : index
    %c0_99 = arith.constant 0 : index
    %c0_100 = arith.constant 0 : index
    %219 = vector.load %arg4[%c1_98, %c0_99, %c0_100] : memref<4x128x384xbf16, #tpu.memory_space<vmem>>, vector<1x128x384xbf16>
    %220 = vector.shape_cast %219 : vector<1x128x384xbf16> to vector<128x384xbf16>
    %cst_101 = arith.constant dense<0.000000e+00> : vector<16x384xf32>
    %221 = tpu.matmul %218, %220, %cst_101 {dimension_numbers = #tpu.dot_dimension_numbers<[1], [0], [0], [1], [0, 0, 1, 1], [], []>} : vector<16x128xbf16>, vector<128x384xbf16>, vector<16x384xf32> -> vector<16x384xf32>
    %c1_102 = arith.constant 1 : index
    %c0_103 = arith.constant 0 : index
    %c0_104 = arith.constant 0 : index
    %222 = vector.load %arg5[%c1_102, %c0_103, %c0_104] : memref<4x1x384xf32, #tpu.memory_space<vmem>>, vector<1x1x384xf32>
    %223 = vector.shape_cast %222 : vector<1x1x384xf32> to vector<1x384xf32>
    %224 = vector.broadcast %223 : vector<1x384xf32> to vector<16x384xf32>
    %225 = arith.addf %221, %224 : vector<16x384xf32>
    %226 = vector.shape_cast %225 : vector<16x384xf32> to vector<2x8x384xf32>
    %227 = vector.extract_strided_slice %226 {offsets = [0, 0, 0], sizes = [2, 8, 32], strides = [1, 1, 1]} : vector<2x8x384xf32> to vector<2x8x32xf32>
    %228 = vector.extract_strided_slice %226 {offsets = [0, 0, 128], sizes = [2, 8, 32], strides = [1, 1, 1]} : vector<2x8x384xf32> to vector<2x8x32xf32>
    %229 = vector.extract_strided_slice %226 {offsets = [0, 0, 256], sizes = [2, 8, 32], strides = [1, 1, 1]} : vector<2x8x384xf32> to vector<2x8x32xf32>
    "tpu.trace_start"() <{level = 10 : i32, message = "bqd,bkd->bqk"}> : () -> ()
    %cst_105 = arith.constant dense<0.000000e+00> : vector<2x8x8xf32>
    %230 = tpu.matmul %227, %228, %cst_105 {dimension_numbers = #tpu.dot_dimension_numbers<[2], [2], [1], [1], [0, 0, 0, 1, 1, 1], [0], [0]>} : vector<2x8x32xf32>, vector<2x8x32xf32>, vector<2x8x8xf32> -> vector<2x8x8xf32>
    "tpu.trace_stop"() : () -> ()
    %cst_106 = arith.constant 0.176776692 : f32
    %231 = vector.broadcast %cst_106 : f32 to vector<2x8x8xf32>
    %232 = arith.mulf %230, %231 : vector<2x8x8xf32>
    %233 = vector.broadcast %1 : vector<2x1x8xf32> to vector<2x8x8xf32>
    %234 = arith.addf %232, %233 : vector<2x8x8xf32>
    %cst_107 = arith.constant dense<0xFF800000> : vector<2x8xf32>
    %235 = vector.multi_reduction <maximumf>, %234, %cst_107 [2] : vector<2x8x8xf32> to vector<2x8xf32>
    %236 = vector.shape_cast %235 : vector<2x8xf32> to vector<2x8x1xf32>
    %237 = vector.broadcast %236 : vector<2x8x1xf32> to vector<2x8x8xf32>
    %238 = arith.subf %234, %237 : vector<2x8x8xf32>
    %239 = math.exp %238 : vector<2x8x8xf32>
    %cst_108 = arith.constant dense<0.000000e+00> : vector<2x8xf32>
    %240 = vector.multi_reduction <add>, %239, %cst_108 [2] : vector<2x8x8xf32> to vector<2x8xf32>
    %241 = vector.shape_cast %240 : vector<2x8xf32> to vector<2x8x1xf32>
    %242 = vector.broadcast %241 : vector<2x8x1xf32> to vector<2x8x8xf32>
    %243 = arith.divf %239, %242 : vector<2x8x8xf32>
    "tpu.trace_start"() <{level = 10 : i32, message = "bqk,bkd->bqd"}> : () -> ()
    %cst_109 = arith.constant dense<0.000000e+00> : vector<2x8x32xf32>
    %244 = tpu.matmul %243, %229, %cst_109 {dimension_numbers = #tpu.dot_dimension_numbers<[2], [1], [1], [2], [0, 0, 0, 1, 1, 2], [0], [0]>} : vector<2x8x8xf32>, vector<2x8x32xf32>, vector<2x8x32xf32> -> vector<2x8x32xf32>
    "tpu.trace_stop"() : () -> ()
    %245 = vector.shape_cast %244 : vector<2x8x32xf32> to vector<16x32xf32>
    %246 = arith.truncf %245 : vector<16x32xf32> to vector<16x32xbf16>
    %c1_110 = arith.constant 1 : index
    %c0_111 = arith.constant 0 : index
    %c0_112 = arith.constant 0 : index
    %c0_113 = arith.constant 0 : index
    %247 = vector.load %arg6[%c1_110, %c0_111, %c0_112, %c0_113] : memref<4x4x32x128xbf16, #tpu.memory_space<vmem>>, vector<1x1x32x128xbf16>
    %248 = vector.shape_cast %247 : vector<1x1x32x128xbf16> to vector<32x128xbf16>
    %cst_114 = arith.constant dense<0.000000e+00> : vector<16x128xf32>
    %249 = tpu.matmul %246, %248, %cst_114 {dimension_numbers = #tpu.dot_dimension_numbers<[1], [0], [0], [1], [0, 0, 1, 1], [], []>} : vector<16x32xbf16>, vector<32x128xbf16>, vector<16x128xf32> -> vector<16x128xf32>
    %250 = vector.extract_strided_slice %226 {offsets = [0, 0, 32], sizes = [2, 8, 32], strides = [1, 1, 1]} : vector<2x8x384xf32> to vector<2x8x32xf32>
    %251 = vector.extract_strided_slice %226 {offsets = [0, 0, 160], sizes = [2, 8, 32], strides = [1, 1, 1]} : vector<2x8x384xf32> to vector<2x8x32xf32>
    %252 = vector.extract_strided_slice %226 {offsets = [0, 0, 288], sizes = [2, 8, 32], strides = [1, 1, 1]} : vector<2x8x384xf32> to vector<2x8x32xf32>
    "tpu.trace_start"() <{level = 10 : i32, message = "bqd,bkd->bqk"}> : () -> ()
    %cst_115 = arith.constant dense<0.000000e+00> : vector<2x8x8xf32>
    %253 = tpu.matmul %250, %251, %cst_115 {dimension_numbers = #tpu.dot_dimension_numbers<[2], [2], [1], [1], [0, 0, 0, 1, 1, 1], [0], [0]>} : vector<2x8x32xf32>, vector<2x8x32xf32>, vector<2x8x8xf32> -> vector<2x8x8xf32>
    "tpu.trace_stop"() : () -> ()
    %cst_116 = arith.constant 0.176776692 : f32
    %254 = vector.broadcast %cst_116 : f32 to vector<2x8x8xf32>
    %255 = arith.mulf %253, %254 : vector<2x8x8xf32>
    %256 = vector.broadcast %1 : vector<2x1x8xf32> to vector<2x8x8xf32>
    %257 = arith.addf %255, %256 : vector<2x8x8xf32>
    %cst_117 = arith.constant dense<0xFF800000> : vector<2x8xf32>
    %258 = vector.multi_reduction <maximumf>, %257, %cst_117 [2] : vector<2x8x8xf32> to vector<2x8xf32>
    %259 = vector.shape_cast %258 : vector<2x8xf32> to vector<2x8x1xf32>
    %260 = vector.broadcast %259 : vector<2x8x1xf32> to vector<2x8x8xf32>
    %261 = arith.subf %257, %260 : vector<2x8x8xf32>
    %262 = math.exp %261 : vector<2x8x8xf32>
    %cst_118 = arith.constant dense<0.000000e+00> : vector<2x8xf32>
    %263 = vector.multi_reduction <add>, %262, %cst_118 [2] : vector<2x8x8xf32> to vector<2x8xf32>
    %264 = vector.shape_cast %263 : vector<2x8xf32> to vector<2x8x1xf32>
    %265 = vector.broadcast %264 : vector<2x8x1xf32> to vector<2x8x8xf32>
    %266 = arith.divf %262, %265 : vector<2x8x8xf32>
    "tpu.trace_start"() <{level = 10 : i32, message = "bqk,bkd->bqd"}> : () -> ()
    %cst_119 = arith.constant dense<0.000000e+00> : vector<2x8x32xf32>
    %267 = tpu.matmul %266, %252, %cst_119 {dimension_numbers = #tpu.dot_dimension_numbers<[2], [1], [1], [2], [0, 0, 0, 1, 1, 2], [0], [0]>} : vector<2x8x8xf32>, vector<2x8x32xf32>, vector<2x8x32xf32> -> vector<2x8x32xf32>
    "tpu.trace_stop"() : () -> ()
    %268 = vector.shape_cast %267 : vector<2x8x32xf32> to vector<16x32xf32>
    %269 = arith.truncf %268 : vector<16x32xf32> to vector<16x32xbf16>
    %c1_120 = arith.constant 1 : index
    %c1_121 = arith.constant 1 : index
    %c0_122 = arith.constant 0 : index
    %c0_123 = arith.constant 0 : index
    %270 = vector.load %arg6[%c1_120, %c1_121, %c0_122, %c0_123] : memref<4x4x32x128xbf16, #tpu.memory_space<vmem>>, vector<1x1x32x128xbf16>
    %271 = vector.shape_cast %270 : vector<1x1x32x128xbf16> to vector<32x128xbf16>
    %cst_124 = arith.constant dense<0.000000e+00> : vector<16x128xf32>
    %272 = tpu.matmul %269, %271, %cst_124 {dimension_numbers = #tpu.dot_dimension_numbers<[1], [0], [0], [1], [0, 0, 1, 1], [], []>} : vector<16x32xbf16>, vector<32x128xbf16>, vector<16x128xf32> -> vector<16x128xf32>
    %273 = arith.addf %249, %272 : vector<16x128xf32>
    %274 = vector.extract_strided_slice %226 {offsets = [0, 0, 64], sizes = [2, 8, 32], strides = [1, 1, 1]} : vector<2x8x384xf32> to vector<2x8x32xf32>
    %275 = vector.extract_strided_slice %226 {offsets = [0, 0, 192], sizes = [2, 8, 32], strides = [1, 1, 1]} : vector<2x8x384xf32> to vector<2x8x32xf32>
    %276 = vector.extract_strided_slice %226 {offsets = [0, 0, 320], sizes = [2, 8, 32], strides = [1, 1, 1]} : vector<2x8x384xf32> to vector<2x8x32xf32>
    "tpu.trace_start"() <{level = 10 : i32, message = "bqd,bkd->bqk"}> : () -> ()
    %cst_125 = arith.constant dense<0.000000e+00> : vector<2x8x8xf32>
    %277 = tpu.matmul %274, %275, %cst_125 {dimension_numbers = #tpu.dot_dimension_numbers<[2], [2], [1], [1], [0, 0, 0, 1, 1, 1], [0], [0]>} : vector<2x8x32xf32>, vector<2x8x32xf32>, vector<2x8x8xf32> -> vector<2x8x8xf32>
    "tpu.trace_stop"() : () -> ()
    %cst_126 = arith.constant 0.176776692 : f32
    %278 = vector.broadcast %cst_126 : f32 to vector<2x8x8xf32>
    %279 = arith.mulf %277, %278 : vector<2x8x8xf32>
    %280 = vector.broadcast %1 : vector<2x1x8xf32> to vector<2x8x8xf32>
    %281 = arith.addf %279, %280 : vector<2x8x8xf32>
    %cst_127 = arith.constant dense<0xFF800000> : vector<2x8xf32>
    %282 = vector.multi_reduction <maximumf>, %281, %cst_127 [2] : vector<2x8x8xf32> to vector<2x8xf32>
    %283 = vector.shape_cast %282 : vector<2x8xf32> to vector<2x8x1xf32>
    %284 = vector.broadcast %283 : vector<2x8x1xf32> to vector<2x8x8xf32>
    %285 = arith.subf %281, %284 : vector<2x8x8xf32>
    %286 = math.exp %285 : vector<2x8x8xf32>
    %cst_128 = arith.constant dense<0.000000e+00> : vector<2x8xf32>
    %287 = vector.multi_reduction <add>, %286, %cst_128 [2] : vector<2x8x8xf32> to vector<2x8xf32>
    %288 = vector.shape_cast %287 : vector<2x8xf32> to vector<2x8x1xf32>
    %289 = vector.broadcast %288 : vector<2x8x1xf32> to vector<2x8x8xf32>
    %290 = arith.divf %286, %289 : vector<2x8x8xf32>
    "tpu.trace_start"() <{level = 10 : i32, message = "bqk,bkd->bqd"}> : () -> ()
    %cst_129 = arith.constant dense<0.000000e+00> : vector<2x8x32xf32>
    %291 = tpu.matmul %290, %276, %cst_129 {dimension_numbers = #tpu.dot_dimension_numbers<[2], [1], [1], [2], [0, 0, 0, 1, 1, 2], [0], [0]>} : vector<2x8x8xf32>, vector<2x8x32xf32>, vector<2x8x32xf32> -> vector<2x8x32xf32>
    "tpu.trace_stop"() : () -> ()
    %292 = vector.shape_cast %291 : vector<2x8x32xf32> to vector<16x32xf32>
    %293 = arith.truncf %292 : vector<16x32xf32> to vector<16x32xbf16>
    %c1_130 = arith.constant 1 : index
    %c2_131 = arith.constant 2 : index
    %c0_132 = arith.constant 0 : index
    %c0_133 = arith.constant 0 : index
    %294 = vector.load %arg6[%c1_130, %c2_131, %c0_132, %c0_133] : memref<4x4x32x128xbf16, #tpu.memory_space<vmem>>, vector<1x1x32x128xbf16>
    %295 = vector.shape_cast %294 : vector<1x1x32x128xbf16> to vector<32x128xbf16>
    %cst_134 = arith.constant dense<0.000000e+00> : vector<16x128xf32>
    %296 = tpu.matmul %293, %295, %cst_134 {dimension_numbers = #tpu.dot_dimension_numbers<[1], [0], [0], [1], [0, 0, 1, 1], [], []>} : vector<16x32xbf16>, vector<32x128xbf16>, vector<16x128xf32> -> vector<16x128xf32>
    %297 = arith.addf %273, %296 : vector<16x128xf32>
    %298 = vector.extract_strided_slice %226 {offsets = [0, 0, 96], sizes = [2, 8, 32], strides = [1, 1, 1]} : vector<2x8x384xf32> to vector<2x8x32xf32>
    %299 = vector.extract_strided_slice %226 {offsets = [0, 0, 224], sizes = [2, 8, 32], strides = [1, 1, 1]} : vector<2x8x384xf32> to vector<2x8x32xf32>
    %300 = vector.extract_strided_slice %226 {offsets = [0, 0, 352], sizes = [2, 8, 32], strides = [1, 1, 1]} : vector<2x8x384xf32> to vector<2x8x32xf32>
    "tpu.trace_start"() <{level = 10 : i32, message = "bqd,bkd->bqk"}> : () -> ()
    %cst_135 = arith.constant dense<0.000000e+00> : vector<2x8x8xf32>
    %301 = tpu.matmul %298, %299, %cst_135 {dimension_numbers = #tpu.dot_dimension_numbers<[2], [2], [1], [1], [0, 0, 0, 1, 1, 1], [0], [0]>} : vector<2x8x32xf32>, vector<2x8x32xf32>, vector<2x8x8xf32> -> vector<2x8x8xf32>
    "tpu.trace_stop"() : () -> ()
    %cst_136 = arith.constant 0.176776692 : f32
    %302 = vector.broadcast %cst_136 : f32 to vector<2x8x8xf32>
    %303 = arith.mulf %301, %302 : vector<2x8x8xf32>
    %304 = vector.broadcast %1 : vector<2x1x8xf32> to vector<2x8x8xf32>
    %305 = arith.addf %303, %304 : vector<2x8x8xf32>
    %cst_137 = arith.constant dense<0xFF800000> : vector<2x8xf32>
    %306 = vector.multi_reduction <maximumf>, %305, %cst_137 [2] : vector<2x8x8xf32> to vector<2x8xf32>
    %307 = vector.shape_cast %306 : vector<2x8xf32> to vector<2x8x1xf32>
    %308 = vector.broadcast %307 : vector<2x8x1xf32> to vector<2x8x8xf32>
    %309 = arith.subf %305, %308 : vector<2x8x8xf32>
    %310 = math.exp %309 : vector<2x8x8xf32>
    %cst_138 = arith.constant dense<0.000000e+00> : vector<2x8xf32>
    %311 = vector.multi_reduction <add>, %310, %cst_138 [2] : vector<2x8x8xf32> to vector<2x8xf32>
    %312 = vector.shape_cast %311 : vector<2x8xf32> to vector<2x8x1xf32>
    %313 = vector.broadcast %312 : vector<2x8x1xf32> to vector<2x8x8xf32>
    %314 = arith.divf %310, %313 : vector<2x8x8xf32>
    "tpu.trace_start"() <{level = 10 : i32, message = "bqk,bkd->bqd"}> : () -> ()
    %cst_139 = arith.constant dense<0.000000e+00> : vector<2x8x32xf32>
    %315 = tpu.matmul %314, %300, %cst_139 {dimension_numbers = #tpu.dot_dimension_numbers<[2], [1], [1], [2], [0, 0, 0, 1, 1, 2], [0], [0]>} : vector<2x8x8xf32>, vector<2x8x32xf32>, vector<2x8x32xf32> -> vector<2x8x32xf32>
    "tpu.trace_stop"() : () -> ()
    %316 = vector.shape_cast %315 : vector<2x8x32xf32> to vector<16x32xf32>
    %317 = arith.truncf %316 : vector<16x32xf32> to vector<16x32xbf16>
    %c1_140 = arith.constant 1 : index
    %c3_141 = arith.constant 3 : index
    %c0_142 = arith.constant 0 : index
    %c0_143 = arith.constant 0 : index
    %318 = vector.load %arg6[%c1_140, %c3_141, %c0_142, %c0_143] : memref<4x4x32x128xbf16, #tpu.memory_space<vmem>>, vector<1x1x32x128xbf16>
    %319 = vector.shape_cast %318 : vector<1x1x32x128xbf16> to vector<32x128xbf16>
    %cst_144 = arith.constant dense<0.000000e+00> : vector<16x128xf32>
    %320 = tpu.matmul %317, %319, %cst_144 {dimension_numbers = #tpu.dot_dimension_numbers<[1], [0], [0], [1], [0, 0, 1, 1], [], []>} : vector<16x32xbf16>, vector<32x128xbf16>, vector<16x128xf32> -> vector<16x128xf32>
    %321 = arith.addf %297, %320 : vector<16x128xf32>
    %c1_145 = arith.constant 1 : index
    %c0_146 = arith.constant 0 : index
    %c0_147 = arith.constant 0 : index
    %322 = vector.load %arg7[%c1_145, %c0_146, %c0_147] : memref<4x1x128xf32, #tpu.memory_space<vmem>>, vector<1x1x128xf32>
    %323 = vector.shape_cast %322 : vector<1x1x128xf32> to vector<1x128xf32>
    %324 = vector.broadcast %323 : vector<1x128xf32> to vector<16x128xf32>
    %325 = arith.addf %321, %324 : vector<16x128xf32>
    %326 = arith.addf %325, %217 : vector<16x128xf32>
    %c1_148 = arith.constant 1 : index
    %c0_149 = arith.constant 0 : index
    %c0_150 = arith.constant 0 : index
    %327 = vector.load %arg8[%c1_148, %c0_149, %c0_150] : memref<4x1x128xf32, #tpu.memory_space<vmem>>, vector<1x1x128xf32>
    %328 = vector.shape_cast %327 : vector<1x1x128xf32> to vector<1x128xf32>
    %c1_151 = arith.constant 1 : index
    %c0_152 = arith.constant 0 : index
    %c0_153 = arith.constant 0 : index
    %329 = vector.load %arg9[%c1_151, %c0_152, %c0_153] : memref<4x1x128xf32, #tpu.memory_space<vmem>>, vector<1x1x128xf32>
    %330 = vector.shape_cast %329 : vector<1x1x128xf32> to vector<1x128xf32>
    %cst_154 = arith.constant dense<0.000000e+00> : vector<16xf32>
    %331 = vector.multi_reduction <add>, %326, %cst_154 [1] : vector<16x128xf32> to vector<16xf32>
    %332 = vector.shape_cast %331 : vector<16xf32> to vector<16x1xf32>
    %cst_155 = arith.constant 1.280000e+02 : f32
    %333 = vector.broadcast %cst_155 : f32 to vector<16x1xf32>
    %334 = arith.divf %332, %333 : vector<16x1xf32>
    %335 = vector.broadcast %334 : vector<16x1xf32> to vector<16x128xf32>
    %336 = arith.subf %326, %335 : vector<16x128xf32>
    %337 = arith.mulf %336, %336 : vector<16x128xf32>
    %cst_156 = arith.constant dense<0.000000e+00> : vector<16xf32>
    %338 = vector.multi_reduction <add>, %337, %cst_156 [1] : vector<16x128xf32> to vector<16xf32>
    %339 = vector.shape_cast %338 : vector<16xf32> to vector<16x1xf32>
    %cst_157 = arith.constant 1.280000e+02 : f32
    %340 = vector.broadcast %cst_157 : f32 to vector<16x1xf32>
    %341 = arith.divf %339, %340 : vector<16x1xf32>
    %342 = vector.broadcast %334 : vector<16x1xf32> to vector<16x128xf32>
    %343 = arith.subf %326, %342 : vector<16x128xf32>
    %cst_158 = arith.constant 9.99999974E-6 : f32
    %344 = vector.broadcast %cst_158 : f32 to vector<16x1xf32>
    %345 = arith.addf %341, %344 : vector<16x1xf32>
    %346 = math.rsqrt %345 : vector<16x1xf32>
    %347 = vector.broadcast %346 : vector<16x1xf32> to vector<16x128xf32>
    %348 = arith.mulf %343, %347 : vector<16x128xf32>
    %349 = vector.broadcast %328 : vector<1x128xf32> to vector<16x128xf32>
    %350 = arith.mulf %348, %349 : vector<16x128xf32>
    %351 = vector.broadcast %330 : vector<1x128xf32> to vector<16x128xf32>
    %352 = arith.addf %350, %351 : vector<16x128xf32>
    %353 = arith.truncf %352 : vector<16x128xf32> to vector<16x128xbf16>
    %c1_159 = arith.constant 1 : index
    %c0_160 = arith.constant 0 : index
    %c0_161 = arith.constant 0 : index
    %354 = vector.load %arg10[%c1_159, %c0_160, %c0_161] : memref<4x128x256xbf16, #tpu.memory_space<vmem>>, vector<1x128x256xbf16>
    %355 = vector.shape_cast %354 : vector<1x128x256xbf16> to vector<128x256xbf16>
    %cst_162 = arith.constant dense<0.000000e+00> : vector<16x256xf32>
    %356 = tpu.matmul %353, %355, %cst_162 {dimension_numbers = #tpu.dot_dimension_numbers<[1], [0], [0], [1], [0, 0, 1, 1], [], []>} : vector<16x128xbf16>, vector<128x256xbf16>, vector<16x256xf32> -> vector<16x256xf32>
    %c1_163 = arith.constant 1 : index
    %c0_164 = arith.constant 0 : index
    %c0_165 = arith.constant 0 : index
    %357 = vector.load %arg11[%c1_163, %c0_164, %c0_165] : memref<4x1x256xf32, #tpu.memory_space<vmem>>, vector<1x1x256xf32>
    %358 = vector.shape_cast %357 : vector<1x1x256xf32> to vector<1x256xf32>
    %359 = vector.broadcast %358 : vector<1x256xf32> to vector<16x256xf32>
    %360 = arith.addf %356, %359 : vector<16x256xf32>
    %cst_166 = arith.constant 5.000000e-01 : f32
    %361 = vector.broadcast %cst_166 : f32 to vector<16x256xf32>
    %362 = arith.mulf %361, %360 : vector<16x256xf32>
    %cst_167 = arith.constant 4.471500e-02 : f32
    %363 = vector.broadcast %cst_167 : f32 to vector<16x256xf32>
    %364 = arith.mulf %363, %360 : vector<16x256xf32>
    %365 = arith.mulf %364, %360 : vector<16x256xf32>
    %366 = arith.mulf %365, %360 : vector<16x256xf32>
    %367 = arith.addf %360, %366 : vector<16x256xf32>
    %cst_168 = arith.constant 0.797884583 : f32
    %368 = vector.broadcast %cst_168 : f32 to vector<16x256xf32>
    %369 = arith.mulf %368, %367 : vector<16x256xf32>
    %370 = math.tanh %369 : vector<16x256xf32>
    %cst_169 = arith.constant 1.000000e+00 : f32
    %371 = vector.broadcast %cst_169 : f32 to vector<16x256xf32>
    %372 = arith.addf %371, %370 : vector<16x256xf32>
    %373 = arith.mulf %362, %372 : vector<16x256xf32>
    %374 = arith.truncf %373 : vector<16x256xf32> to vector<16x256xbf16>
    %c1_170 = arith.constant 1 : index
    %c0_171 = arith.constant 0 : index
    %c0_172 = arith.constant 0 : index
    %375 = vector.load %arg12[%c1_170, %c0_171, %c0_172] : memref<4x256x128xbf16, #tpu.memory_space<vmem>>, vector<1x256x128xbf16>
    %376 = vector.shape_cast %375 : vector<1x256x128xbf16> to vector<256x128xbf16>
    %cst_173 = arith.constant dense<0.000000e+00> : vector<16x128xf32>
    %377 = tpu.matmul %374, %376, %cst_173 {dimension_numbers = #tpu.dot_dimension_numbers<[1], [0], [0], [1], [0, 0, 1, 1], [], []>} : vector<16x256xbf16>, vector<256x128xbf16>, vector<16x128xf32> -> vector<16x128xf32>
    %c1_174 = arith.constant 1 : index
    %c0_175 = arith.constant 0 : index
    %c0_176 = arith.constant 0 : index
    %378 = vector.load %arg13[%c1_174, %c0_175, %c0_176] : memref<4x1x128xf32, #tpu.memory_space<vmem>>, vector<1x1x128xf32>
    %379 = vector.shape_cast %378 : vector<1x1x128xf32> to vector<1x128xf32>
    %380 = vector.broadcast %379 : vector<1x128xf32> to vector<16x128xf32>
    %381 = arith.addf %377, %380 : vector<16x128xf32>
    %382 = arith.addf %381, %352 : vector<16x128xf32>
    %c1_177 = arith.constant 1 : index
    %c0_178 = arith.constant 0 : index
    %c0_179 = arith.constant 0 : index
    %383 = vector.load %arg14[%c1_177, %c0_178, %c0_179] : memref<4x1x128xf32, #tpu.memory_space<vmem>>, vector<1x1x128xf32>
    %384 = vector.shape_cast %383 : vector<1x1x128xf32> to vector<1x128xf32>
    %c1_180 = arith.constant 1 : index
    %c0_181 = arith.constant 0 : index
    %c0_182 = arith.constant 0 : index
    %385 = vector.load %arg15[%c1_180, %c0_181, %c0_182] : memref<4x1x128xf32, #tpu.memory_space<vmem>>, vector<1x1x128xf32>
    %386 = vector.shape_cast %385 : vector<1x1x128xf32> to vector<1x128xf32>
    %cst_183 = arith.constant dense<0.000000e+00> : vector<16xf32>
    %387 = vector.multi_reduction <add>, %382, %cst_183 [1] : vector<16x128xf32> to vector<16xf32>
    %388 = vector.shape_cast %387 : vector<16xf32> to vector<16x1xf32>
    %cst_184 = arith.constant 1.280000e+02 : f32
    %389 = vector.broadcast %cst_184 : f32 to vector<16x1xf32>
    %390 = arith.divf %388, %389 : vector<16x1xf32>
    %391 = vector.broadcast %390 : vector<16x1xf32> to vector<16x128xf32>
    %392 = arith.subf %382, %391 : vector<16x128xf32>
    %393 = arith.mulf %392, %392 : vector<16x128xf32>
    %cst_185 = arith.constant dense<0.000000e+00> : vector<16xf32>
    %394 = vector.multi_reduction <add>, %393, %cst_185 [1] : vector<16x128xf32> to vector<16xf32>
    %395 = vector.shape_cast %394 : vector<16xf32> to vector<16x1xf32>
    %cst_186 = arith.constant 1.280000e+02 : f32
    %396 = vector.broadcast %cst_186 : f32 to vector<16x1xf32>
    %397 = arith.divf %395, %396 : vector<16x1xf32>
    %398 = vector.broadcast %390 : vector<16x1xf32> to vector<16x128xf32>
    %399 = arith.subf %382, %398 : vector<16x128xf32>
    %cst_187 = arith.constant 9.99999974E-6 : f32
    %400 = vector.broadcast %cst_187 : f32 to vector<16x1xf32>
    %401 = arith.addf %397, %400 : vector<16x1xf32>
    %402 = math.rsqrt %401 : vector<16x1xf32>
    %403 = vector.broadcast %402 : vector<16x1xf32> to vector<16x128xf32>
    %404 = arith.mulf %399, %403 : vector<16x128xf32>
    %405 = vector.broadcast %384 : vector<1x128xf32> to vector<16x128xf32>
    %406 = arith.mulf %404, %405 : vector<16x128xf32>
    %407 = vector.broadcast %386 : vector<1x128xf32> to vector<16x128xf32>
    %408 = arith.addf %406, %407 : vector<16x128xf32>
    %409 = arith.truncf %408 : vector<16x128xf32> to vector<16x128xbf16>
    %c2_188 = arith.constant 2 : index
    %c0_189 = arith.constant 0 : index
    %c0_190 = arith.constant 0 : index
    %410 = vector.load %arg4[%c2_188, %c0_189, %c0_190] : memref<4x128x384xbf16, #tpu.memory_space<vmem>>, vector<1x128x384xbf16>
    %411 = vector.shape_cast %410 : vector<1x128x384xbf16> to vector<128x384xbf16>
    %cst_191 = arith.constant dense<0.000000e+00> : vector<16x384xf32>
    %412 = tpu.matmul %409, %411, %cst_191 {dimension_numbers = #tpu.dot_dimension_numbers<[1], [0], [0], [1], [0, 0, 1, 1], [], []>} : vector<16x128xbf16>, vector<128x384xbf16>, vector<16x384xf32> -> vector<16x384xf32>
    %c2_192 = arith.constant 2 : index
    %c0_193 = arith.constant 0 : index
    %c0_194 = arith.constant 0 : index
    %413 = vector.load %arg5[%c2_192, %c0_193, %c0_194] : memref<4x1x384xf32, #tpu.memory_space<vmem>>, vector<1x1x384xf32>
    %414 = vector.shape_cast %413 : vector<1x1x384xf32> to vector<1x384xf32>
    %415 = vector.broadcast %414 : vector<1x384xf32> to vector<16x384xf32>
    %416 = arith.addf %412, %415 : vector<16x384xf32>
    %417 = vector.shape_cast %416 : vector<16x384xf32> to vector<2x8x384xf32>
    %418 = vector.extract_strided_slice %417 {offsets = [0, 0, 0], sizes = [2, 8, 32], strides = [1, 1, 1]} : vector<2x8x384xf32> to vector<2x8x32xf32>
    %419 = vector.extract_strided_slice %417 {offsets = [0, 0, 128], sizes = [2, 8, 32], strides = [1, 1, 1]} : vector<2x8x384xf32> to vector<2x8x32xf32>
    %420 = vector.extract_strided_slice %417 {offsets = [0, 0, 256], sizes = [2, 8, 32], strides = [1, 1, 1]} : vector<2x8x384xf32> to vector<2x8x32xf32>
    "tpu.trace_start"() <{level = 10 : i32, message = "bqd,bkd->bqk"}> : () -> ()
    %cst_195 = arith.constant dense<0.000000e+00> : vector<2x8x8xf32>
    %421 = tpu.matmul %418, %419, %cst_195 {dimension_numbers = #tpu.dot_dimension_numbers<[2], [2], [1], [1], [0, 0, 0, 1, 1, 1], [0], [0]>} : vector<2x8x32xf32>, vector<2x8x32xf32>, vector<2x8x8xf32> -> vector<2x8x8xf32>
    "tpu.trace_stop"() : () -> ()
    %cst_196 = arith.constant 0.176776692 : f32
    %422 = vector.broadcast %cst_196 : f32 to vector<2x8x8xf32>
    %423 = arith.mulf %421, %422 : vector<2x8x8xf32>
    %424 = vector.broadcast %1 : vector<2x1x8xf32> to vector<2x8x8xf32>
    %425 = arith.addf %423, %424 : vector<2x8x8xf32>
    %cst_197 = arith.constant dense<0xFF800000> : vector<2x8xf32>
    %426 = vector.multi_reduction <maximumf>, %425, %cst_197 [2] : vector<2x8x8xf32> to vector<2x8xf32>
    %427 = vector.shape_cast %426 : vector<2x8xf32> to vector<2x8x1xf32>
    %428 = vector.broadcast %427 : vector<2x8x1xf32> to vector<2x8x8xf32>
    %429 = arith.subf %425, %428 : vector<2x8x8xf32>
    %430 = math.exp %429 : vector<2x8x8xf32>
    %cst_198 = arith.constant dense<0.000000e+00> : vector<2x8xf32>
    %431 = vector.multi_reduction <add>, %430, %cst_198 [2] : vector<2x8x8xf32> to vector<2x8xf32>
    %432 = vector.shape_cast %431 : vector<2x8xf32> to vector<2x8x1xf32>
    %433 = vector.broadcast %432 : vector<2x8x1xf32> to vector<2x8x8xf32>
    %434 = arith.divf %430, %433 : vector<2x8x8xf32>
    "tpu.trace_start"() <{level = 10 : i32, message = "bqk,bkd->bqd"}> : () -> ()
    %cst_199 = arith.constant dense<0.000000e+00> : vector<2x8x32xf32>
    %435 = tpu.matmul %434, %420, %cst_199 {dimension_numbers = #tpu.dot_dimension_numbers<[2], [1], [1], [2], [0, 0, 0, 1, 1, 2], [0], [0]>} : vector<2x8x8xf32>, vector<2x8x32xf32>, vector<2x8x32xf32> -> vector<2x8x32xf32>
    "tpu.trace_stop"() : () -> ()
    %436 = vector.shape_cast %435 : vector<2x8x32xf32> to vector<16x32xf32>
    %437 = arith.truncf %436 : vector<16x32xf32> to vector<16x32xbf16>
    %c2_200 = arith.constant 2 : index
    %c0_201 = arith.constant 0 : index
    %c0_202 = arith.constant 0 : index
    %c0_203 = arith.constant 0 : index
    %438 = vector.load %arg6[%c2_200, %c0_201, %c0_202, %c0_203] : memref<4x4x32x128xbf16, #tpu.memory_space<vmem>>, vector<1x1x32x128xbf16>
    %439 = vector.shape_cast %438 : vector<1x1x32x128xbf16> to vector<32x128xbf16>
    %cst_204 = arith.constant dense<0.000000e+00> : vector<16x128xf32>
    %440 = tpu.matmul %437, %439, %cst_204 {dimension_numbers = #tpu.dot_dimension_numbers<[1], [0], [0], [1], [0, 0, 1, 1], [], []>} : vector<16x32xbf16>, vector<32x128xbf16>, vector<16x128xf32> -> vector<16x128xf32>
    %441 = vector.extract_strided_slice %417 {offsets = [0, 0, 32], sizes = [2, 8, 32], strides = [1, 1, 1]} : vector<2x8x384xf32> to vector<2x8x32xf32>
    %442 = vector.extract_strided_slice %417 {offsets = [0, 0, 160], sizes = [2, 8, 32], strides = [1, 1, 1]} : vector<2x8x384xf32> to vector<2x8x32xf32>
    %443 = vector.extract_strided_slice %417 {offsets = [0, 0, 288], sizes = [2, 8, 32], strides = [1, 1, 1]} : vector<2x8x384xf32> to vector<2x8x32xf32>
    "tpu.trace_start"() <{level = 10 : i32, message = "bqd,bkd->bqk"}> : () -> ()
    %cst_205 = arith.constant dense<0.000000e+00> : vector<2x8x8xf32>
    %444 = tpu.matmul %441, %442, %cst_205 {dimension_numbers = #tpu.dot_dimension_numbers<[2], [2], [1], [1], [0, 0, 0, 1, 1, 1], [0], [0]>} : vector<2x8x32xf32>, vector<2x8x32xf32>, vector<2x8x8xf32> -> vector<2x8x8xf32>
    "tpu.trace_stop"() : () -> ()
    %cst_206 = arith.constant 0.176776692 : f32
    %445 = vector.broadcast %cst_206 : f32 to vector<2x8x8xf32>
    %446 = arith.mulf %444, %445 : vector<2x8x8xf32>
    %447 = vector.broadcast %1 : vector<2x1x8xf32> to vector<2x8x8xf32>
    %448 = arith.addf %446, %447 : vector<2x8x8xf32>
    %cst_207 = arith.constant dense<0xFF800000> : vector<2x8xf32>
    %449 = vector.multi_reduction <maximumf>, %448, %cst_207 [2] : vector<2x8x8xf32> to vector<2x8xf32>
    %450 = vector.shape_cast %449 : vector<2x8xf32> to vector<2x8x1xf32>
    %451 = vector.broadcast %450 : vector<2x8x1xf32> to vector<2x8x8xf32>
    %452 = arith.subf %448, %451 : vector<2x8x8xf32>
    %453 = math.exp %452 : vector<2x8x8xf32>
    %cst_208 = arith.constant dense<0.000000e+00> : vector<2x8xf32>
    %454 = vector.multi_reduction <add>, %453, %cst_208 [2] : vector<2x8x8xf32> to vector<2x8xf32>
    %455 = vector.shape_cast %454 : vector<2x8xf32> to vector<2x8x1xf32>
    %456 = vector.broadcast %455 : vector<2x8x1xf32> to vector<2x8x8xf32>
    %457 = arith.divf %453, %456 : vector<2x8x8xf32>
    "tpu.trace_start"() <{level = 10 : i32, message = "bqk,bkd->bqd"}> : () -> ()
    %cst_209 = arith.constant dense<0.000000e+00> : vector<2x8x32xf32>
    %458 = tpu.matmul %457, %443, %cst_209 {dimension_numbers = #tpu.dot_dimension_numbers<[2], [1], [1], [2], [0, 0, 0, 1, 1, 2], [0], [0]>} : vector<2x8x8xf32>, vector<2x8x32xf32>, vector<2x8x32xf32> -> vector<2x8x32xf32>
    "tpu.trace_stop"() : () -> ()
    %459 = vector.shape_cast %458 : vector<2x8x32xf32> to vector<16x32xf32>
    %460 = arith.truncf %459 : vector<16x32xf32> to vector<16x32xbf16>
    %c2_210 = arith.constant 2 : index
    %c1_211 = arith.constant 1 : index
    %c0_212 = arith.constant 0 : index
    %c0_213 = arith.constant 0 : index
    %461 = vector.load %arg6[%c2_210, %c1_211, %c0_212, %c0_213] : memref<4x4x32x128xbf16, #tpu.memory_space<vmem>>, vector<1x1x32x128xbf16>
    %462 = vector.shape_cast %461 : vector<1x1x32x128xbf16> to vector<32x128xbf16>
    %cst_214 = arith.constant dense<0.000000e+00> : vector<16x128xf32>
    %463 = tpu.matmul %460, %462, %cst_214 {dimension_numbers = #tpu.dot_dimension_numbers<[1], [0], [0], [1], [0, 0, 1, 1], [], []>} : vector<16x32xbf16>, vector<32x128xbf16>, vector<16x128xf32> -> vector<16x128xf32>
    %464 = arith.addf %440, %463 : vector<16x128xf32>
    %465 = vector.extract_strided_slice %417 {offsets = [0, 0, 64], sizes = [2, 8, 32], strides = [1, 1, 1]} : vector<2x8x384xf32> to vector<2x8x32xf32>
    %466 = vector.extract_strided_slice %417 {offsets = [0, 0, 192], sizes = [2, 8, 32], strides = [1, 1, 1]} : vector<2x8x384xf32> to vector<2x8x32xf32>
    %467 = vector.extract_strided_slice %417 {offsets = [0, 0, 320], sizes = [2, 8, 32], strides = [1, 1, 1]} : vector<2x8x384xf32> to vector<2x8x32xf32>
    "tpu.trace_start"() <{level = 10 : i32, message = "bqd,bkd->bqk"}> : () -> ()
    %cst_215 = arith.constant dense<0.000000e+00> : vector<2x8x8xf32>
    %468 = tpu.matmul %465, %466, %cst_215 {dimension_numbers = #tpu.dot_dimension_numbers<[2], [2], [1], [1], [0, 0, 0, 1, 1, 1], [0], [0]>} : vector<2x8x32xf32>, vector<2x8x32xf32>, vector<2x8x8xf32> -> vector<2x8x8xf32>
    "tpu.trace_stop"() : () -> ()
    %cst_216 = arith.constant 0.176776692 : f32
    %469 = vector.broadcast %cst_216 : f32 to vector<2x8x8xf32>
    %470 = arith.mulf %468, %469 : vector<2x8x8xf32>
    %471 = vector.broadcast %1 : vector<2x1x8xf32> to vector<2x8x8xf32>
    %472 = arith.addf %470, %471 : vector<2x8x8xf32>
    %cst_217 = arith.constant dense<0xFF800000> : vector<2x8xf32>
    %473 = vector.multi_reduction <maximumf>, %472, %cst_217 [2] : vector<2x8x8xf32> to vector<2x8xf32>
    %474 = vector.shape_cast %473 : vector<2x8xf32> to vector<2x8x1xf32>
    %475 = vector.broadcast %474 : vector<2x8x1xf32> to vector<2x8x8xf32>
    %476 = arith.subf %472, %475 : vector<2x8x8xf32>
    %477 = math.exp %476 : vector<2x8x8xf32>
    %cst_218 = arith.constant dense<0.000000e+00> : vector<2x8xf32>
    %478 = vector.multi_reduction <add>, %477, %cst_218 [2] : vector<2x8x8xf32> to vector<2x8xf32>
    %479 = vector.shape_cast %478 : vector<2x8xf32> to vector<2x8x1xf32>
    %480 = vector.broadcast %479 : vector<2x8x1xf32> to vector<2x8x8xf32>
    %481 = arith.divf %477, %480 : vector<2x8x8xf32>
    "tpu.trace_start"() <{level = 10 : i32, message = "bqk,bkd->bqd"}> : () -> ()
    %cst_219 = arith.constant dense<0.000000e+00> : vector<2x8x32xf32>
    %482 = tpu.matmul %481, %467, %cst_219 {dimension_numbers = #tpu.dot_dimension_numbers<[2], [1], [1], [2], [0, 0, 0, 1, 1, 2], [0], [0]>} : vector<2x8x8xf32>, vector<2x8x32xf32>, vector<2x8x32xf32> -> vector<2x8x32xf32>
    "tpu.trace_stop"() : () -> ()
    %483 = vector.shape_cast %482 : vector<2x8x32xf32> to vector<16x32xf32>
    %484 = arith.truncf %483 : vector<16x32xf32> to vector<16x32xbf16>
    %c2_220 = arith.constant 2 : index
    %c2_221 = arith.constant 2 : index
    %c0_222 = arith.constant 0 : index
    %c0_223 = arith.constant 0 : index
    %485 = vector.load %arg6[%c2_220, %c2_221, %c0_222, %c0_223] : memref<4x4x32x128xbf16, #tpu.memory_space<vmem>>, vector<1x1x32x128xbf16>
    %486 = vector.shape_cast %485 : vector<1x1x32x128xbf16> to vector<32x128xbf16>
    %cst_224 = arith.constant dense<0.000000e+00> : vector<16x128xf32>
    %487 = tpu.matmul %484, %486, %cst_224 {dimension_numbers = #tpu.dot_dimension_numbers<[1], [0], [0], [1], [0, 0, 1, 1], [], []>} : vector<16x32xbf16>, vector<32x128xbf16>, vector<16x128xf32> -> vector<16x128xf32>
    %488 = arith.addf %464, %487 : vector<16x128xf32>
    %489 = vector.extract_strided_slice %417 {offsets = [0, 0, 96], sizes = [2, 8, 32], strides = [1, 1, 1]} : vector<2x8x384xf32> to vector<2x8x32xf32>
    %490 = vector.extract_strided_slice %417 {offsets = [0, 0, 224], sizes = [2, 8, 32], strides = [1, 1, 1]} : vector<2x8x384xf32> to vector<2x8x32xf32>
    %491 = vector.extract_strided_slice %417 {offsets = [0, 0, 352], sizes = [2, 8, 32], strides = [1, 1, 1]} : vector<2x8x384xf32> to vector<2x8x32xf32>
    "tpu.trace_start"() <{level = 10 : i32, message = "bqd,bkd->bqk"}> : () -> ()
    %cst_225 = arith.constant dense<0.000000e+00> : vector<2x8x8xf32>
    %492 = tpu.matmul %489, %490, %cst_225 {dimension_numbers = #tpu.dot_dimension_numbers<[2], [2], [1], [1], [0, 0, 0, 1, 1, 1], [0], [0]>} : vector<2x8x32xf32>, vector<2x8x32xf32>, vector<2x8x8xf32> -> vector<2x8x8xf32>
    "tpu.trace_stop"() : () -> ()
    %cst_226 = arith.constant 0.176776692 : f32
    %493 = vector.broadcast %cst_226 : f32 to vector<2x8x8xf32>
    %494 = arith.mulf %492, %493 : vector<2x8x8xf32>
    %495 = vector.broadcast %1 : vector<2x1x8xf32> to vector<2x8x8xf32>
    %496 = arith.addf %494, %495 : vector<2x8x8xf32>
    %cst_227 = arith.constant dense<0xFF800000> : vector<2x8xf32>
    %497 = vector.multi_reduction <maximumf>, %496, %cst_227 [2] : vector<2x8x8xf32> to vector<2x8xf32>
    %498 = vector.shape_cast %497 : vector<2x8xf32> to vector<2x8x1xf32>
    %499 = vector.broadcast %498 : vector<2x8x1xf32> to vector<2x8x8xf32>
    %500 = arith.subf %496, %499 : vector<2x8x8xf32>
    %501 = math.exp %500 : vector<2x8x8xf32>
    %cst_228 = arith.constant dense<0.000000e+00> : vector<2x8xf32>
    %502 = vector.multi_reduction <add>, %501, %cst_228 [2] : vector<2x8x8xf32> to vector<2x8xf32>
    %503 = vector.shape_cast %502 : vector<2x8xf32> to vector<2x8x1xf32>
    %504 = vector.broadcast %503 : vector<2x8x1xf32> to vector<2x8x8xf32>
    %505 = arith.divf %501, %504 : vector<2x8x8xf32>
    "tpu.trace_start"() <{level = 10 : i32, message = "bqk,bkd->bqd"}> : () -> ()
    %cst_229 = arith.constant dense<0.000000e+00> : vector<2x8x32xf32>
    %506 = tpu.matmul %505, %491, %cst_229 {dimension_numbers = #tpu.dot_dimension_numbers<[2], [1], [1], [2], [0, 0, 0, 1, 1, 2], [0], [0]>} : vector<2x8x8xf32>, vector<2x8x32xf32>, vector<2x8x32xf32> -> vector<2x8x32xf32>
    "tpu.trace_stop"() : () -> ()
    %507 = vector.shape_cast %506 : vector<2x8x32xf32> to vector<16x32xf32>
    %508 = arith.truncf %507 : vector<16x32xf32> to vector<16x32xbf16>
    %c2_230 = arith.constant 2 : index
    %c3_231 = arith.constant 3 : index
    %c0_232 = arith.constant 0 : index
    %c0_233 = arith.constant 0 : index
    %509 = vector.load %arg6[%c2_230, %c3_231, %c0_232, %c0_233] : memref<4x4x32x128xbf16, #tpu.memory_space<vmem>>, vector<1x1x32x128xbf16>
    %510 = vector.shape_cast %509 : vector<1x1x32x128xbf16> to vector<32x128xbf16>
    %cst_234 = arith.constant dense<0.000000e+00> : vector<16x128xf32>
    %511 = tpu.matmul %508, %510, %cst_234 {dimension_numbers = #tpu.dot_dimension_numbers<[1], [0], [0], [1], [0, 0, 1, 1], [], []>} : vector<16x32xbf16>, vector<32x128xbf16>, vector<16x128xf32> -> vector<16x128xf32>
    %512 = arith.addf %488, %511 : vector<16x128xf32>
    %c2_235 = arith.constant 2 : index
    %c0_236 = arith.constant 0 : index
    %c0_237 = arith.constant 0 : index
    %513 = vector.load %arg7[%c2_235, %c0_236, %c0_237] : memref<4x1x128xf32, #tpu.memory_space<vmem>>, vector<1x1x128xf32>
    %514 = vector.shape_cast %513 : vector<1x1x128xf32> to vector<1x128xf32>
    %515 = vector.broadcast %514 : vector<1x128xf32> to vector<16x128xf32>
    %516 = arith.addf %512, %515 : vector<16x128xf32>
    %517 = arith.addf %516, %408 : vector<16x128xf32>
    %c2_238 = arith.constant 2 : index
    %c0_239 = arith.constant 0 : index
    %c0_240 = arith.constant 0 : index
    %518 = vector.load %arg8[%c2_238, %c0_239, %c0_240] : memref<4x1x128xf32, #tpu.memory_space<vmem>>, vector<1x1x128xf32>
    %519 = vector.shape_cast %518 : vector<1x1x128xf32> to vector<1x128xf32>
    %c2_241 = arith.constant 2 : index
    %c0_242 = arith.constant 0 : index
    %c0_243 = arith.constant 0 : index
    %520 = vector.load %arg9[%c2_241, %c0_242, %c0_243] : memref<4x1x128xf32, #tpu.memory_space<vmem>>, vector<1x1x128xf32>
    %521 = vector.shape_cast %520 : vector<1x1x128xf32> to vector<1x128xf32>
    %cst_244 = arith.constant dense<0.000000e+00> : vector<16xf32>
    %522 = vector.multi_reduction <add>, %517, %cst_244 [1] : vector<16x128xf32> to vector<16xf32>
    %523 = vector.shape_cast %522 : vector<16xf32> to vector<16x1xf32>
    %cst_245 = arith.constant 1.280000e+02 : f32
    %524 = vector.broadcast %cst_245 : f32 to vector<16x1xf32>
    %525 = arith.divf %523, %524 : vector<16x1xf32>
    %526 = vector.broadcast %525 : vector<16x1xf32> to vector<16x128xf32>
    %527 = arith.subf %517, %526 : vector<16x128xf32>
    %528 = arith.mulf %527, %527 : vector<16x128xf32>
    %cst_246 = arith.constant dense<0.000000e+00> : vector<16xf32>
    %529 = vector.multi_reduction <add>, %528, %cst_246 [1] : vector<16x128xf32> to vector<16xf32>
    %530 = vector.shape_cast %529 : vector<16xf32> to vector<16x1xf32>
    %cst_247 = arith.constant 1.280000e+02 : f32
    %531 = vector.broadcast %cst_247 : f32 to vector<16x1xf32>
    %532 = arith.divf %530, %531 : vector<16x1xf32>
    %533 = vector.broadcast %525 : vector<16x1xf32> to vector<16x128xf32>
    %534 = arith.subf %517, %533 : vector<16x128xf32>
    %cst_248 = arith.constant 9.99999974E-6 : f32
    %535 = vector.broadcast %cst_248 : f32 to vector<16x1xf32>
    %536 = arith.addf %532, %535 : vector<16x1xf32>
    %537 = math.rsqrt %536 : vector<16x1xf32>
    %538 = vector.broadcast %537 : vector<16x1xf32> to vector<16x128xf32>
    %539 = arith.mulf %534, %538 : vector<16x128xf32>
    %540 = vector.broadcast %519 : vector<1x128xf32> to vector<16x128xf32>
    %541 = arith.mulf %539, %540 : vector<16x128xf32>
    %542 = vector.broadcast %521 : vector<1x128xf32> to vector<16x128xf32>
    %543 = arith.addf %541, %542 : vector<16x128xf32>
    %544 = arith.truncf %543 : vector<16x128xf32> to vector<16x128xbf16>
    %c2_249 = arith.constant 2 : index
    %c0_250 = arith.constant 0 : index
    %c0_251 = arith.constant 0 : index
    %545 = vector.load %arg10[%c2_249, %c0_250, %c0_251] : memref<4x128x256xbf16, #tpu.memory_space<vmem>>, vector<1x128x256xbf16>
    %546 = vector.shape_cast %545 : vector<1x128x256xbf16> to vector<128x256xbf16>
    %cst_252 = arith.constant dense<0.000000e+00> : vector<16x256xf32>
    %547 = tpu.matmul %544, %546, %cst_252 {dimension_numbers = #tpu.dot_dimension_numbers<[1], [0], [0], [1], [0, 0, 1, 1], [], []>} : vector<16x128xbf16>, vector<128x256xbf16>, vector<16x256xf32> -> vector<16x256xf32>
    %c2_253 = arith.constant 2 : index
    %c0_254 = arith.constant 0 : index
    %c0_255 = arith.constant 0 : index
    %548 = vector.load %arg11[%c2_253, %c0_254, %c0_255] : memref<4x1x256xf32, #tpu.memory_space<vmem>>, vector<1x1x256xf32>
    %549 = vector.shape_cast %548 : vector<1x1x256xf32> to vector<1x256xf32>
    %550 = vector.broadcast %549 : vector<1x256xf32> to vector<16x256xf32>
    %551 = arith.addf %547, %550 : vector<16x256xf32>
    %cst_256 = arith.constant 5.000000e-01 : f32
    %552 = vector.broadcast %cst_256 : f32 to vector<16x256xf32>
    %553 = arith.mulf %552, %551 : vector<16x256xf32>
    %cst_257 = arith.constant 4.471500e-02 : f32
    %554 = vector.broadcast %cst_257 : f32 to vector<16x256xf32>
    %555 = arith.mulf %554, %551 : vector<16x256xf32>
    %556 = arith.mulf %555, %551 : vector<16x256xf32>
    %557 = arith.mulf %556, %551 : vector<16x256xf32>
    %558 = arith.addf %551, %557 : vector<16x256xf32>
    %cst_258 = arith.constant 0.797884583 : f32
    %559 = vector.broadcast %cst_258 : f32 to vector<16x256xf32>
    %560 = arith.mulf %559, %558 : vector<16x256xf32>
    %561 = math.tanh %560 : vector<16x256xf32>
    %cst_259 = arith.constant 1.000000e+00 : f32
    %562 = vector.broadcast %cst_259 : f32 to vector<16x256xf32>
    %563 = arith.addf %562, %561 : vector<16x256xf32>
    %564 = arith.mulf %553, %563 : vector<16x256xf32>
    %565 = arith.truncf %564 : vector<16x256xf32> to vector<16x256xbf16>
    %c2_260 = arith.constant 2 : index
    %c0_261 = arith.constant 0 : index
    %c0_262 = arith.constant 0 : index
    %566 = vector.load %arg12[%c2_260, %c0_261, %c0_262] : memref<4x256x128xbf16, #tpu.memory_space<vmem>>, vector<1x256x128xbf16>
    %567 = vector.shape_cast %566 : vector<1x256x128xbf16> to vector<256x128xbf16>
    %cst_263 = arith.constant dense<0.000000e+00> : vector<16x128xf32>
    %568 = tpu.matmul %565, %567, %cst_263 {dimension_numbers = #tpu.dot_dimension_numbers<[1], [0], [0], [1], [0, 0, 1, 1], [], []>} : vector<16x256xbf16>, vector<256x128xbf16>, vector<16x128xf32> -> vector<16x128xf32>
    %c2_264 = arith.constant 2 : index
    %c0_265 = arith.constant 0 : index
    %c0_266 = arith.constant 0 : index
    %569 = vector.load %arg13[%c2_264, %c0_265, %c0_266] : memref<4x1x128xf32, #tpu.memory_space<vmem>>, vector<1x1x128xf32>
    %570 = vector.shape_cast %569 : vector<1x1x128xf32> to vector<1x128xf32>
    %571 = vector.broadcast %570 : vector<1x128xf32> to vector<16x128xf32>
    %572 = arith.addf %568, %571 : vector<16x128xf32>
    %573 = arith.addf %572, %543 : vector<16x128xf32>
    %c2_267 = arith.constant 2 : index
    %c0_268 = arith.constant 0 : index
    %c0_269 = arith.constant 0 : index
    %574 = vector.load %arg14[%c2_267, %c0_268, %c0_269] : memref<4x1x128xf32, #tpu.memory_space<vmem>>, vector<1x1x128xf32>
    %575 = vector.shape_cast %574 : vector<1x1x128xf32> to vector<1x128xf32>
    %c2_270 = arith.constant 2 : index
    %c0_271 = arith.constant 0 : index
    %c0_272 = arith.constant 0 : index
    %576 = vector.load %arg15[%c2_270, %c0_271, %c0_272] : memref<4x1x128xf32, #tpu.memory_space<vmem>>, vector<1x1x128xf32>
    %577 = vector.shape_cast %576 : vector<1x1x128xf32> to vector<1x128xf32>
    %cst_273 = arith.constant dense<0.000000e+00> : vector<16xf32>
    %578 = vector.multi_reduction <add>, %573, %cst_273 [1] : vector<16x128xf32> to vector<16xf32>
    %579 = vector.shape_cast %578 : vector<16xf32> to vector<16x1xf32>
    %cst_274 = arith.constant 1.280000e+02 : f32
    %580 = vector.broadcast %cst_274 : f32 to vector<16x1xf32>
    %581 = arith.divf %579, %580 : vector<16x1xf32>
    %582 = vector.broadcast %581 : vector<16x1xf32> to vector<16x128xf32>
    %583 = arith.subf %573, %582 : vector<16x128xf32>
    %584 = arith.mulf %583, %583 : vector<16x128xf32>
    %cst_275 = arith.constant dense<0.000000e+00> : vector<16xf32>
    %585 = vector.multi_reduction <add>, %584, %cst_275 [1] : vector<16x128xf32> to vector<16xf32>
    %586 = vector.shape_cast %585 : vector<16xf32> to vector<16x1xf32>
    %cst_276 = arith.constant 1.280000e+02 : f32
    %587 = vector.broadcast %cst_276 : f32 to vector<16x1xf32>
    %588 = arith.divf %586, %587 : vector<16x1xf32>
    %589 = vector.broadcast %581 : vector<16x1xf32> to vector<16x128xf32>
    %590 = arith.subf %573, %589 : vector<16x128xf32>
    %cst_277 = arith.constant 9.99999974E-6 : f32
    %591 = vector.broadcast %cst_277 : f32 to vector<16x1xf32>
    %592 = arith.addf %588, %591 : vector<16x1xf32>
    %593 = math.rsqrt %592 : vector<16x1xf32>
    %594 = vector.broadcast %593 : vector<16x1xf32> to vector<16x128xf32>
    %595 = arith.mulf %590, %594 : vector<16x128xf32>
    %596 = vector.broadcast %575 : vector<1x128xf32> to vector<16x128xf32>
    %597 = arith.mulf %595, %596 : vector<16x128xf32>
    %598 = vector.broadcast %577 : vector<1x128xf32> to vector<16x128xf32>
    %599 = arith.addf %597, %598 : vector<16x128xf32>
    %600 = arith.truncf %599 : vector<16x128xf32> to vector<16x128xbf16>
    %c3_278 = arith.constant 3 : index
    %c0_279 = arith.constant 0 : index
    %c0_280 = arith.constant 0 : index
    %601 = vector.load %arg4[%c3_278, %c0_279, %c0_280] : memref<4x128x384xbf16, #tpu.memory_space<vmem>>, vector<1x128x384xbf16>
    %602 = vector.shape_cast %601 : vector<1x128x384xbf16> to vector<128x384xbf16>
    %cst_281 = arith.constant dense<0.000000e+00> : vector<16x384xf32>
    %603 = tpu.matmul %600, %602, %cst_281 {dimension_numbers = #tpu.dot_dimension_numbers<[1], [0], [0], [1], [0, 0, 1, 1], [], []>} : vector<16x128xbf16>, vector<128x384xbf16>, vector<16x384xf32> -> vector<16x384xf32>
    %c3_282 = arith.constant 3 : index
    %c0_283 = arith.constant 0 : index
    %c0_284 = arith.constant 0 : index
    %604 = vector.load %arg5[%c3_282, %c0_283, %c0_284] : memref<4x1x384xf32, #tpu.memory_space<vmem>>, vector<1x1x384xf32>
    %605 = vector.shape_cast %604 : vector<1x1x384xf32> to vector<1x384xf32>
    %606 = vector.broadcast %605 : vector<1x384xf32> to vector<16x384xf32>
    %607 = arith.addf %603, %606 : vector<16x384xf32>
    %608 = vector.shape_cast %607 : vector<16x384xf32> to vector<2x8x384xf32>
    %609 = vector.extract_strided_slice %608 {offsets = [0, 0, 0], sizes = [2, 8, 32], strides = [1, 1, 1]} : vector<2x8x384xf32> to vector<2x8x32xf32>
    %610 = vector.extract_strided_slice %608 {offsets = [0, 0, 128], sizes = [2, 8, 32], strides = [1, 1, 1]} : vector<2x8x384xf32> to vector<2x8x32xf32>
    %611 = vector.extract_strided_slice %608 {offsets = [0, 0, 256], sizes = [2, 8, 32], strides = [1, 1, 1]} : vector<2x8x384xf32> to vector<2x8x32xf32>
    "tpu.trace_start"() <{level = 10 : i32, message = "bqd,bkd->bqk"}> : () -> ()
    %cst_285 = arith.constant dense<0.000000e+00> : vector<2x8x8xf32>
    %612 = tpu.matmul %609, %610, %cst_285 {dimension_numbers = #tpu.dot_dimension_numbers<[2], [2], [1], [1], [0, 0, 0, 1, 1, 1], [0], [0]>} : vector<2x8x32xf32>, vector<2x8x32xf32>, vector<2x8x8xf32> -> vector<2x8x8xf32>
    "tpu.trace_stop"() : () -> ()
    %cst_286 = arith.constant 0.176776692 : f32
    %613 = vector.broadcast %cst_286 : f32 to vector<2x8x8xf32>
    %614 = arith.mulf %612, %613 : vector<2x8x8xf32>
    %615 = vector.broadcast %1 : vector<2x1x8xf32> to vector<2x8x8xf32>
    %616 = arith.addf %614, %615 : vector<2x8x8xf32>
    %cst_287 = arith.constant dense<0xFF800000> : vector<2x8xf32>
    %617 = vector.multi_reduction <maximumf>, %616, %cst_287 [2] : vector<2x8x8xf32> to vector<2x8xf32>
    %618 = vector.shape_cast %617 : vector<2x8xf32> to vector<2x8x1xf32>
    %619 = vector.broadcast %618 : vector<2x8x1xf32> to vector<2x8x8xf32>
    %620 = arith.subf %616, %619 : vector<2x8x8xf32>
    %621 = math.exp %620 : vector<2x8x8xf32>
    %cst_288 = arith.constant dense<0.000000e+00> : vector<2x8xf32>
    %622 = vector.multi_reduction <add>, %621, %cst_288 [2] : vector<2x8x8xf32> to vector<2x8xf32>
    %623 = vector.shape_cast %622 : vector<2x8xf32> to vector<2x8x1xf32>
    %624 = vector.broadcast %623 : vector<2x8x1xf32> to vector<2x8x8xf32>
    %625 = arith.divf %621, %624 : vector<2x8x8xf32>
    "tpu.trace_start"() <{level = 10 : i32, message = "bqk,bkd->bqd"}> : () -> ()
    %cst_289 = arith.constant dense<0.000000e+00> : vector<2x8x32xf32>
    %626 = tpu.matmul %625, %611, %cst_289 {dimension_numbers = #tpu.dot_dimension_numbers<[2], [1], [1], [2], [0, 0, 0, 1, 1, 2], [0], [0]>} : vector<2x8x8xf32>, vector<2x8x32xf32>, vector<2x8x32xf32> -> vector<2x8x32xf32>
    "tpu.trace_stop"() : () -> ()
    %627 = vector.shape_cast %626 : vector<2x8x32xf32> to vector<16x32xf32>
    %628 = arith.truncf %627 : vector<16x32xf32> to vector<16x32xbf16>
    %c3_290 = arith.constant 3 : index
    %c0_291 = arith.constant 0 : index
    %c0_292 = arith.constant 0 : index
    %c0_293 = arith.constant 0 : index
    %629 = vector.load %arg6[%c3_290, %c0_291, %c0_292, %c0_293] : memref<4x4x32x128xbf16, #tpu.memory_space<vmem>>, vector<1x1x32x128xbf16>
    %630 = vector.shape_cast %629 : vector<1x1x32x128xbf16> to vector<32x128xbf16>
    %cst_294 = arith.constant dense<0.000000e+00> : vector<16x128xf32>
    %631 = tpu.matmul %628, %630, %cst_294 {dimension_numbers = #tpu.dot_dimension_numbers<[1], [0], [0], [1], [0, 0, 1, 1], [], []>} : vector<16x32xbf16>, vector<32x128xbf16>, vector<16x128xf32> -> vector<16x128xf32>
    %632 = vector.extract_strided_slice %608 {offsets = [0, 0, 32], sizes = [2, 8, 32], strides = [1, 1, 1]} : vector<2x8x384xf32> to vector<2x8x32xf32>
    %633 = vector.extract_strided_slice %608 {offsets = [0, 0, 160], sizes = [2, 8, 32], strides = [1, 1, 1]} : vector<2x8x384xf32> to vector<2x8x32xf32>
    %634 = vector.extract_strided_slice %608 {offsets = [0, 0, 288], sizes = [2, 8, 32], strides = [1, 1, 1]} : vector<2x8x384xf32> to vector<2x8x32xf32>
    "tpu.trace_start"() <{level = 10 : i32, message = "bqd,bkd->bqk"}> : () -> ()
    %cst_295 = arith.constant dense<0.000000e+00> : vector<2x8x8xf32>
    %635 = tpu.matmul %632, %633, %cst_295 {dimension_numbers = #tpu.dot_dimension_numbers<[2], [2], [1], [1], [0, 0, 0, 1, 1, 1], [0], [0]>} : vector<2x8x32xf32>, vector<2x8x32xf32>, vector<2x8x8xf32> -> vector<2x8x8xf32>
    "tpu.trace_stop"() : () -> ()
    %cst_296 = arith.constant 0.176776692 : f32
    %636 = vector.broadcast %cst_296 : f32 to vector<2x8x8xf32>
    %637 = arith.mulf %635, %636 : vector<2x8x8xf32>
    %638 = vector.broadcast %1 : vector<2x1x8xf32> to vector<2x8x8xf32>
    %639 = arith.addf %637, %638 : vector<2x8x8xf32>
    %cst_297 = arith.constant dense<0xFF800000> : vector<2x8xf32>
    %640 = vector.multi_reduction <maximumf>, %639, %cst_297 [2] : vector<2x8x8xf32> to vector<2x8xf32>
    %641 = vector.shape_cast %640 : vector<2x8xf32> to vector<2x8x1xf32>
    %642 = vector.broadcast %641 : vector<2x8x1xf32> to vector<2x8x8xf32>
    %643 = arith.subf %639, %642 : vector<2x8x8xf32>
    %644 = math.exp %643 : vector<2x8x8xf32>
    %cst_298 = arith.constant dense<0.000000e+00> : vector<2x8xf32>
    %645 = vector.multi_reduction <add>, %644, %cst_298 [2] : vector<2x8x8xf32> to vector<2x8xf32>
    %646 = vector.shape_cast %645 : vector<2x8xf32> to vector<2x8x1xf32>
    %647 = vector.broadcast %646 : vector<2x8x1xf32> to vector<2x8x8xf32>
    %648 = arith.divf %644, %647 : vector<2x8x8xf32>
    "tpu.trace_start"() <{level = 10 : i32, message = "bqk,bkd->bqd"}> : () -> ()
    %cst_299 = arith.constant dense<0.000000e+00> : vector<2x8x32xf32>
    %649 = tpu.matmul %648, %634, %cst_299 {dimension_numbers = #tpu.dot_dimension_numbers<[2], [1], [1], [2], [0, 0, 0, 1, 1, 2], [0], [0]>} : vector<2x8x8xf32>, vector<2x8x32xf32>, vector<2x8x32xf32> -> vector<2x8x32xf32>
    "tpu.trace_stop"() : () -> ()
    %650 = vector.shape_cast %649 : vector<2x8x32xf32> to vector<16x32xf32>
    %651 = arith.truncf %650 : vector<16x32xf32> to vector<16x32xbf16>
    %c3_300 = arith.constant 3 : index
    %c1_301 = arith.constant 1 : index
    %c0_302 = arith.constant 0 : index
    %c0_303 = arith.constant 0 : index
    %652 = vector.load %arg6[%c3_300, %c1_301, %c0_302, %c0_303] : memref<4x4x32x128xbf16, #tpu.memory_space<vmem>>, vector<1x1x32x128xbf16>
    %653 = vector.shape_cast %652 : vector<1x1x32x128xbf16> to vector<32x128xbf16>
    %cst_304 = arith.constant dense<0.000000e+00> : vector<16x128xf32>
    %654 = tpu.matmul %651, %653, %cst_304 {dimension_numbers = #tpu.dot_dimension_numbers<[1], [0], [0], [1], [0, 0, 1, 1], [], []>} : vector<16x32xbf16>, vector<32x128xbf16>, vector<16x128xf32> -> vector<16x128xf32>
    %655 = arith.addf %631, %654 : vector<16x128xf32>
    %656 = vector.extract_strided_slice %608 {offsets = [0, 0, 64], sizes = [2, 8, 32], strides = [1, 1, 1]} : vector<2x8x384xf32> to vector<2x8x32xf32>
    %657 = vector.extract_strided_slice %608 {offsets = [0, 0, 192], sizes = [2, 8, 32], strides = [1, 1, 1]} : vector<2x8x384xf32> to vector<2x8x32xf32>
    %658 = vector.extract_strided_slice %608 {offsets = [0, 0, 320], sizes = [2, 8, 32], strides = [1, 1, 1]} : vector<2x8x384xf32> to vector<2x8x32xf32>
    "tpu.trace_start"() <{level = 10 : i32, message = "bqd,bkd->bqk"}> : () -> ()
    %cst_305 = arith.constant dense<0.000000e+00> : vector<2x8x8xf32>
    %659 = tpu.matmul %656, %657, %cst_305 {dimension_numbers = #tpu.dot_dimension_numbers<[2], [2], [1], [1], [0, 0, 0, 1, 1, 1], [0], [0]>} : vector<2x8x32xf32>, vector<2x8x32xf32>, vector<2x8x8xf32> -> vector<2x8x8xf32>
    "tpu.trace_stop"() : () -> ()
    %cst_306 = arith.constant 0.176776692 : f32
    %660 = vector.broadcast %cst_306 : f32 to vector<2x8x8xf32>
    %661 = arith.mulf %659, %660 : vector<2x8x8xf32>
    %662 = vector.broadcast %1 : vector<2x1x8xf32> to vector<2x8x8xf32>
    %663 = arith.addf %661, %662 : vector<2x8x8xf32>
    %cst_307 = arith.constant dense<0xFF800000> : vector<2x8xf32>
    %664 = vector.multi_reduction <maximumf>, %663, %cst_307 [2] : vector<2x8x8xf32> to vector<2x8xf32>
    %665 = vector.shape_cast %664 : vector<2x8xf32> to vector<2x8x1xf32>
    %666 = vector.broadcast %665 : vector<2x8x1xf32> to vector<2x8x8xf32>
    %667 = arith.subf %663, %666 : vector<2x8x8xf32>
    %668 = math.exp %667 : vector<2x8x8xf32>
    %cst_308 = arith.constant dense<0.000000e+00> : vector<2x8xf32>
    %669 = vector.multi_reduction <add>, %668, %cst_308 [2] : vector<2x8x8xf32> to vector<2x8xf32>
    %670 = vector.shape_cast %669 : vector<2x8xf32> to vector<2x8x1xf32>
    %671 = vector.broadcast %670 : vector<2x8x1xf32> to vector<2x8x8xf32>
    %672 = arith.divf %668, %671 : vector<2x8x8xf32>
    "tpu.trace_start"() <{level = 10 : i32, message = "bqk,bkd->bqd"}> : () -> ()
    %cst_309 = arith.constant dense<0.000000e+00> : vector<2x8x32xf32>
    %673 = tpu.matmul %672, %658, %cst_309 {dimension_numbers = #tpu.dot_dimension_numbers<[2], [1], [1], [2], [0, 0, 0, 1, 1, 2], [0], [0]>} : vector<2x8x8xf32>, vector<2x8x32xf32>, vector<2x8x32xf32> -> vector<2x8x32xf32>
    "tpu.trace_stop"() : () -> ()
    %674 = vector.shape_cast %673 : vector<2x8x32xf32> to vector<16x32xf32>
    %675 = arith.truncf %674 : vector<16x32xf32> to vector<16x32xbf16>
    %c3_310 = arith.constant 3 : index
    %c2_311 = arith.constant 2 : index
    %c0_312 = arith.constant 0 : index
    %c0_313 = arith.constant 0 : index
    %676 = vector.load %arg6[%c3_310, %c2_311, %c0_312, %c0_313] : memref<4x4x32x128xbf16, #tpu.memory_space<vmem>>, vector<1x1x32x128xbf16>
    %677 = vector.shape_cast %676 : vector<1x1x32x128xbf16> to vector<32x128xbf16>
    %cst_314 = arith.constant dense<0.000000e+00> : vector<16x128xf32>
    %678 = tpu.matmul %675, %677, %cst_314 {dimension_numbers = #tpu.dot_dimension_numbers<[1], [0], [0], [1], [0, 0, 1, 1], [], []>} : vector<16x32xbf16>, vector<32x128xbf16>, vector<16x128xf32> -> vector<16x128xf32>
    %679 = arith.addf %655, %678 : vector<16x128xf32>
    %680 = vector.extract_strided_slice %608 {offsets = [0, 0, 96], sizes = [2, 8, 32], strides = [1, 1, 1]} : vector<2x8x384xf32> to vector<2x8x32xf32>
    %681 = vector.extract_strided_slice %608 {offsets = [0, 0, 224], sizes = [2, 8, 32], strides = [1, 1, 1]} : vector<2x8x384xf32> to vector<2x8x32xf32>
    %682 = vector.extract_strided_slice %608 {offsets = [0, 0, 352], sizes = [2, 8, 32], strides = [1, 1, 1]} : vector<2x8x384xf32> to vector<2x8x32xf32>
    "tpu.trace_start"() <{level = 10 : i32, message = "bqd,bkd->bqk"}> : () -> ()
    %cst_315 = arith.constant dense<0.000000e+00> : vector<2x8x8xf32>
    %683 = tpu.matmul %680, %681, %cst_315 {dimension_numbers = #tpu.dot_dimension_numbers<[2], [2], [1], [1], [0, 0, 0, 1, 1, 1], [0], [0]>} : vector<2x8x32xf32>, vector<2x8x32xf32>, vector<2x8x8xf32> -> vector<2x8x8xf32>
    "tpu.trace_stop"() : () -> ()
    %cst_316 = arith.constant 0.176776692 : f32
    %684 = vector.broadcast %cst_316 : f32 to vector<2x8x8xf32>
    %685 = arith.mulf %683, %684 : vector<2x8x8xf32>
    %686 = vector.broadcast %1 : vector<2x1x8xf32> to vector<2x8x8xf32>
    %687 = arith.addf %685, %686 : vector<2x8x8xf32>
    %cst_317 = arith.constant dense<0xFF800000> : vector<2x8xf32>
    %688 = vector.multi_reduction <maximumf>, %687, %cst_317 [2] : vector<2x8x8xf32> to vector<2x8xf32>
    %689 = vector.shape_cast %688 : vector<2x8xf32> to vector<2x8x1xf32>
    %690 = vector.broadcast %689 : vector<2x8x1xf32> to vector<2x8x8xf32>
    %691 = arith.subf %687, %690 : vector<2x8x8xf32>
    %692 = math.exp %691 : vector<2x8x8xf32>
    %cst_318 = arith.constant dense<0.000000e+00> : vector<2x8xf32>
    %693 = vector.multi_reduction <add>, %692, %cst_318 [2] : vector<2x8x8xf32> to vector<2x8xf32>
    %694 = vector.shape_cast %693 : vector<2x8xf32> to vector<2x8x1xf32>
    %695 = vector.broadcast %694 : vector<2x8x1xf32> to vector<2x8x8xf32>
    %696 = arith.divf %692, %695 : vector<2x8x8xf32>
    "tpu.trace_start"() <{level = 10 : i32, message = "bqk,bkd->bqd"}> : () -> ()
    %cst_319 = arith.constant dense<0.000000e+00> : vector<2x8x32xf32>
    %697 = tpu.matmul %696, %682, %cst_319 {dimension_numbers = #tpu.dot_dimension_numbers<[2], [1], [1], [2], [0, 0, 0, 1, 1, 2], [0], [0]>} : vector<2x8x8xf32>, vector<2x8x32xf32>, vector<2x8x32xf32> -> vector<2x8x32xf32>
    "tpu.trace_stop"() : () -> ()
    %698 = vector.shape_cast %697 : vector<2x8x32xf32> to vector<16x32xf32>
    %699 = arith.truncf %698 : vector<16x32xf32> to vector<16x32xbf16>
    %c3_320 = arith.constant 3 : index
    %c3_321 = arith.constant 3 : index
    %c0_322 = arith.constant 0 : index
    %c0_323 = arith.constant 0 : index
    %700 = vector.load %arg6[%c3_320, %c3_321, %c0_322, %c0_323] : memref<4x4x32x128xbf16, #tpu.memory_space<vmem>>, vector<1x1x32x128xbf16>
    %701 = vector.shape_cast %700 : vector<1x1x32x128xbf16> to vector<32x128xbf16>
    %cst_324 = arith.constant dense<0.000000e+00> : vector<16x128xf32>
    %702 = tpu.matmul %699, %701, %cst_324 {dimension_numbers = #tpu.dot_dimension_numbers<[1], [0], [0], [1], [0, 0, 1, 1], [], []>} : vector<16x32xbf16>, vector<32x128xbf16>, vector<16x128xf32> -> vector<16x128xf32>
    %703 = arith.addf %679, %702 : vector<16x128xf32>
    %c3_325 = arith.constant 3 : index
    %c0_326 = arith.constant 0 : index
    %c0_327 = arith.constant 0 : index
    %704 = vector.load %arg7[%c3_325, %c0_326, %c0_327] : memref<4x1x128xf32, #tpu.memory_space<vmem>>, vector<1x1x128xf32>
    %705 = vector.shape_cast %704 : vector<1x1x128xf32> to vector<1x128xf32>
    %706 = vector.broadcast %705 : vector<1x128xf32> to vector<16x128xf32>
    %707 = arith.addf %703, %706 : vector<16x128xf32>
    %708 = arith.addf %707, %599 : vector<16x128xf32>
    %c3_328 = arith.constant 3 : index
    %c0_329 = arith.constant 0 : index
    %c0_330 = arith.constant 0 : index
    %709 = vector.load %arg8[%c3_328, %c0_329, %c0_330] : memref<4x1x128xf32, #tpu.memory_space<vmem>>, vector<1x1x128xf32>
    %710 = vector.shape_cast %709 : vector<1x1x128xf32> to vector<1x128xf32>
    %c3_331 = arith.constant 3 : index
    %c0_332 = arith.constant 0 : index
    %c0_333 = arith.constant 0 : index
    %711 = vector.load %arg9[%c3_331, %c0_332, %c0_333] : memref<4x1x128xf32, #tpu.memory_space<vmem>>, vector<1x1x128xf32>
    %712 = vector.shape_cast %711 : vector<1x1x128xf32> to vector<1x128xf32>
    %cst_334 = arith.constant dense<0.000000e+00> : vector<16xf32>
    %713 = vector.multi_reduction <add>, %708, %cst_334 [1] : vector<16x128xf32> to vector<16xf32>
    %714 = vector.shape_cast %713 : vector<16xf32> to vector<16x1xf32>
    %cst_335 = arith.constant 1.280000e+02 : f32
    %715 = vector.broadcast %cst_335 : f32 to vector<16x1xf32>
    %716 = arith.divf %714, %715 : vector<16x1xf32>
    %717 = vector.broadcast %716 : vector<16x1xf32> to vector<16x128xf32>
    %718 = arith.subf %708, %717 : vector<16x128xf32>
    %719 = arith.mulf %718, %718 : vector<16x128xf32>
    %cst_336 = arith.constant dense<0.000000e+00> : vector<16xf32>
    %720 = vector.multi_reduction <add>, %719, %cst_336 [1] : vector<16x128xf32> to vector<16xf32>
    %721 = vector.shape_cast %720 : vector<16xf32> to vector<16x1xf32>
    %cst_337 = arith.constant 1.280000e+02 : f32
    %722 = vector.broadcast %cst_337 : f32 to vector<16x1xf32>
    %723 = arith.divf %721, %722 : vector<16x1xf32>
    %724 = vector.broadcast %716 : vector<16x1xf32> to vector<16x128xf32>
    %725 = arith.subf %708, %724 : vector<16x128xf32>
    %cst_338 = arith.constant 9.99999974E-6 : f32
    %726 = vector.broadcast %cst_338 : f32 to vector<16x1xf32>
    %727 = arith.addf %723, %726 : vector<16x1xf32>
    %728 = math.rsqrt %727 : vector<16x1xf32>
    %729 = vector.broadcast %728 : vector<16x1xf32> to vector<16x128xf32>
    %730 = arith.mulf %725, %729 : vector<16x128xf32>
    %731 = vector.broadcast %710 : vector<1x128xf32> to vector<16x128xf32>
    %732 = arith.mulf %730, %731 : vector<16x128xf32>
    %733 = vector.broadcast %712 : vector<1x128xf32> to vector<16x128xf32>
    %734 = arith.addf %732, %733 : vector<16x128xf32>
    %735 = arith.truncf %734 : vector<16x128xf32> to vector<16x128xbf16>
    %c3_339 = arith.constant 3 : index
    %c0_340 = arith.constant 0 : index
    %c0_341 = arith.constant 0 : index
    %736 = vector.load %arg10[%c3_339, %c0_340, %c0_341] : memref<4x128x256xbf16, #tpu.memory_space<vmem>>, vector<1x128x256xbf16>
    %737 = vector.shape_cast %736 : vector<1x128x256xbf16> to vector<128x256xbf16>
    %cst_342 = arith.constant dense<0.000000e+00> : vector<16x256xf32>
    %738 = tpu.matmul %735, %737, %cst_342 {dimension_numbers = #tpu.dot_dimension_numbers<[1], [0], [0], [1], [0, 0, 1, 1], [], []>} : vector<16x128xbf16>, vector<128x256xbf16>, vector<16x256xf32> -> vector<16x256xf32>
    %c3_343 = arith.constant 3 : index
    %c0_344 = arith.constant 0 : index
    %c0_345 = arith.constant 0 : index
    %739 = vector.load %arg11[%c3_343, %c0_344, %c0_345] : memref<4x1x256xf32, #tpu.memory_space<vmem>>, vector<1x1x256xf32>
    %740 = vector.shape_cast %739 : vector<1x1x256xf32> to vector<1x256xf32>
    %741 = vector.broadcast %740 : vector<1x256xf32> to vector<16x256xf32>
    %742 = arith.addf %738, %741 : vector<16x256xf32>
    %cst_346 = arith.constant 5.000000e-01 : f32
    %743 = vector.broadcast %cst_346 : f32 to vector<16x256xf32>
    %744 = arith.mulf %743, %742 : vector<16x256xf32>
    %cst_347 = arith.constant 4.471500e-02 : f32
    %745 = vector.broadcast %cst_347 : f32 to vector<16x256xf32>
    %746 = arith.mulf %745, %742 : vector<16x256xf32>
    %747 = arith.mulf %746, %742 : vector<16x256xf32>
    %748 = arith.mulf %747, %742 : vector<16x256xf32>
    %749 = arith.addf %742, %748 : vector<16x256xf32>
    %cst_348 = arith.constant 0.797884583 : f32
    %750 = vector.broadcast %cst_348 : f32 to vector<16x256xf32>
    %751 = arith.mulf %750, %749 : vector<16x256xf32>
    %752 = math.tanh %751 : vector<16x256xf32>
    %cst_349 = arith.constant 1.000000e+00 : f32
    %753 = vector.broadcast %cst_349 : f32 to vector<16x256xf32>
    %754 = arith.addf %753, %752 : vector<16x256xf32>
    %755 = arith.mulf %744, %754 : vector<16x256xf32>
    %756 = arith.truncf %755 : vector<16x256xf32> to vector<16x256xbf16>
    %c3_350 = arith.constant 3 : index
    %c0_351 = arith.constant 0 : index
    %c0_352 = arith.constant 0 : index
    %757 = vector.load %arg12[%c3_350, %c0_351, %c0_352] : memref<4x256x128xbf16, #tpu.memory_space<vmem>>, vector<1x256x128xbf16>
    %758 = vector.shape_cast %757 : vector<1x256x128xbf16> to vector<256x128xbf16>
    %cst_353 = arith.constant dense<0.000000e+00> : vector<16x128xf32>
    %759 = tpu.matmul %756, %758, %cst_353 {dimension_numbers = #tpu.dot_dimension_numbers<[1], [0], [0], [1], [0, 0, 1, 1], [], []>} : vector<16x256xbf16>, vector<256x128xbf16>, vector<16x128xf32> -> vector<16x128xf32>
    %c3_354 = arith.constant 3 : index
    %c0_355 = arith.constant 0 : index
    %c0_356 = arith.constant 0 : index
    %760 = vector.load %arg13[%c3_354, %c0_355, %c0_356] : memref<4x1x128xf32, #tpu.memory_space<vmem>>, vector<1x1x128xf32>
    %761 = vector.shape_cast %760 : vector<1x1x128xf32> to vector<1x128xf32>
    %762 = vector.broadcast %761 : vector<1x128xf32> to vector<16x128xf32>
    %763 = arith.addf %759, %762 : vector<16x128xf32>
    %764 = arith.addf %763, %734 : vector<16x128xf32>
    %c3_357 = arith.constant 3 : index
    %c0_358 = arith.constant 0 : index
    %c0_359 = arith.constant 0 : index
    %765 = vector.load %arg14[%c3_357, %c0_358, %c0_359] : memref<4x1x128xf32, #tpu.memory_space<vmem>>, vector<1x1x128xf32>
    %766 = vector.shape_cast %765 : vector<1x1x128xf32> to vector<1x128xf32>
    %c3_360 = arith.constant 3 : index
    %c0_361 = arith.constant 0 : index
    %c0_362 = arith.constant 0 : index
    %767 = vector.load %arg15[%c3_360, %c0_361, %c0_362] : memref<4x1x128xf32, #tpu.memory_space<vmem>>, vector<1x1x128xf32>
    %768 = vector.shape_cast %767 : vector<1x1x128xf32> to vector<1x128xf32>
    %cst_363 = arith.constant dense<0.000000e+00> : vector<16xf32>
    %769 = vector.multi_reduction <add>, %764, %cst_363 [1] : vector<16x128xf32> to vector<16xf32>
    %770 = vector.shape_cast %769 : vector<16xf32> to vector<16x1xf32>
    %cst_364 = arith.constant 1.280000e+02 : f32
    %771 = vector.broadcast %cst_364 : f32 to vector<16x1xf32>
    %772 = arith.divf %770, %771 : vector<16x1xf32>
    %773 = vector.broadcast %772 : vector<16x1xf32> to vector<16x128xf32>
    %774 = arith.subf %764, %773 : vector<16x128xf32>
    %775 = arith.mulf %774, %774 : vector<16x128xf32>
    %cst_365 = arith.constant dense<0.000000e+00> : vector<16xf32>
    %776 = vector.multi_reduction <add>, %775, %cst_365 [1] : vector<16x128xf32> to vector<16xf32>
    %777 = vector.shape_cast %776 : vector<16xf32> to vector<16x1xf32>
    %cst_366 = arith.constant 1.280000e+02 : f32
    %778 = vector.broadcast %cst_366 : f32 to vector<16x1xf32>
    %779 = arith.divf %777, %778 : vector<16x1xf32>
    %780 = vector.broadcast %772 : vector<16x1xf32> to vector<16x128xf32>
    %781 = arith.subf %764, %780 : vector<16x128xf32>
    %cst_367 = arith.constant 9.99999974E-6 : f32
    %782 = vector.broadcast %cst_367 : f32 to vector<16x1xf32>
    %783 = arith.addf %779, %782 : vector<16x1xf32>
    %784 = math.rsqrt %783 : vector<16x1xf32>
    %785 = vector.broadcast %784 : vector<16x1xf32> to vector<16x128xf32>
    %786 = arith.mulf %781, %785 : vector<16x128xf32>
    %787 = vector.broadcast %766 : vector<1x128xf32> to vector<16x128xf32>
    %788 = arith.mulf %786, %787 : vector<16x128xf32>
    %789 = vector.broadcast %768 : vector<1x128xf32> to vector<16x128xf32>
    %790 = arith.addf %788, %789 : vector<16x128xf32>
    %c0_368 = arith.constant 0 : index
    %c0_369 = arith.constant 0 : index
    %791 = vector.load %arg16[%c0_368, %c0_369] : memref<128x2xf32, #tpu.memory_space<vmem>>, vector<128x2xf32>
    %cst_370 = arith.constant dense<0.000000e+00> : vector<16x2xf32>
    %792 = tpu.matmul %790, %791, %cst_370 {dimension_numbers = #tpu.dot_dimension_numbers<[1], [0], [0], [1], [0, 0, 1, 1], [], []>} : vector<16x128xf32>, vector<128x2xf32>, vector<16x2xf32> -> vector<16x2xf32>
    %c0_371 = arith.constant 0 : index
    %c0_372 = arith.constant 0 : index
    %793 = vector.load %arg17[%c0_371, %c0_372] : memref<1x2xf32, #tpu.memory_space<vmem>>, vector<1x2xf32>
    %794 = vector.broadcast %793 : vector<1x2xf32> to vector<16x2xf32>
    %795 = arith.addf %792, %794 : vector<16x2xf32>
    %796 = vector.shape_cast %795 : vector<16x2xf32> to vector<2x8x2xf32>
    %797 = vector.extract_strided_slice %796 {offsets = [0, 0, 0], sizes = [2, 8, 1], strides = [1, 1, 1]} : vector<2x8x2xf32> to vector<2x8x1xf32>
    %798 = vector.shape_cast %797 : vector<2x8x1xf32> to vector<2x8xf32>
    %799 = vector.extract_strided_slice %796 {offsets = [0, 0, 1], sizes = [2, 8, 1], strides = [1, 1, 1]} : vector<2x8x2xf32> to vector<2x8x1xf32>
    %800 = vector.shape_cast %799 : vector<2x8x1xf32> to vector<2x8xf32>
    %c0_373 = arith.constant 0 : index
    %c0_374 = arith.constant 0 : index
    %801 = vector.load %arg18[%c0_373, %c0_374] : memref<1x8xf32, #tpu.memory_space<vmem>>, vector<1x8xf32>
    %802 = vector.broadcast %801 : vector<1x8xf32> to vector<2x8xf32>
    %803 = arith.mulf %800, %802 : vector<2x8xf32>
    %cst_375 = arith.constant dense<0.000000e+00> : vector<2xf32>
    %804 = vector.multi_reduction <add>, %803, %cst_375 [1] : vector<2x8xf32> to vector<2xf32>
    %805 = vector.shape_cast %804 : vector<2xf32> to vector<2x1xf32>
    %c0_376 = arith.constant 0 : index
    %c0_377 = arith.constant 0 : index
    %806 = vector.load %arg19[%c0_376, %c0_377] : memref<1x1xf32, #tpu.memory_space<vmem>>, vector<1x1xf32>
    %807 = vector.broadcast %806 : vector<1x1xf32> to vector<2x1xf32>
    %808 = arith.addf %805, %807 : vector<2x1xf32>
    %c0_378 = arith.constant 0 : index
    %c0_379 = arith.constant 0 : index
    %809 = vector.load %arg20[%c0_378, %c0_379] : memref<2x8xf32, #tpu.memory_space<vmem>>, vector<2x8xf32>
    tpu.vector_store %arg20[%c0_378, %c0_379], %798 {strides = array<i32>} : memref<2x8xf32, #tpu.memory_space<vmem>>, vector<2x8xf32>,
    %cst_380 = arith.constant 0.000000e+00 : f32
    %810 = vector.broadcast %cst_380 : f32 to vector<2x1xf32>
    %811 = arith.maximumf %808, %810 : vector<2x1xf32>
    %c0_381 = arith.constant 0 : index
    %c0_382 = arith.constant 0 : index
    %812 = vector.load %arg21[%c0_381, %c0_382] : memref<2x1xf32, #tpu.memory_space<vmem>>, vector<2x1xf32>
    tpu.vector_store %arg21[%c0_381, %c0_382], %811 {strides = array<i32>} : memref<2x1xf32, #tpu.memory_space<vmem>>, vector<2x1xf32>,
    return
  }
}

</mosaic_0001>

<llo_original>
// kernel: forward.1
$region0: #{forward.1}
  #allocation0 [shape = 'u32[]', space=smem, size = 0x4, offset = 0x4, fixed_abs, tag = 'smem constant byte address 0x4 - core index']
  #allocation1 [shape = 'u32[144,128]{1,0:T(1,128)}', space=vmem, size = 0x12000, scoped, tag = 'internal scratch']
  #allocation2 [shape = 'f32[1,1]{1,0:T(1,128)S(1)}', space=vmem, size = 0x200, scoped, tag = 'scoped memory for forward.1']
  %s0 = inlined_call_operand.vmem [shape: f32[16,128], index: 0, kind: input, shape index: {}]
  %s1 = inlined_call_operand.vmem [shape: f32[2,8], index: 1, kind: input, shape index: {}]
  %s2 = inlined_call_operand.vmem [shape: f32[1,128], index: 2, kind: input, shape index: {}]
  %s3 = inlined_call_operand.vmem [shape: f32[1,128], index: 3, kind: input, shape index: {}]
  %s4 = inlined_call_operand.hbm [shape: bf16[4,128,384], index: 4, kind: input, shape index: {}]
  %s5 = inlined_call_operand.vmem [shape: f32[4,1,384], index: 5, kind: input, shape index: {}]
  %s6 = inlined_call_operand.hbm [shape: bf16[4,4,32,128], index: 6, kind: input, shape index: {}]
  %s7 = inlined_call_operand.vmem [shape: f32[4,1,128], index: 7, kind: input, shape index: {}]
  %s8 = inlined_call_operand.vmem [shape: f32[4,1,128], index: 8, kind: input, shape index: {}]
  %s9 = inlined_call_operand.vmem [shape: f32[4,1,128], index: 9, kind: input, shape index: {}]
  %s10 = inlined_call_operand.vmem [shape: bf16[4,128,256], index: 10, kind: input, shape index: {}]
  %s11 = inlined_call_operand.vmem [shape: f32[4,1,256], index: 11, kind: input, shape index: {}]
  %s12 = inlined_call_operand.hbm [shape: bf16[4,256,128], index: 12, kind: input, shape index: {}]
  %s13 = inlined_call_operand.vmem [shape: f32[4,1,128], index: 13, kind: input, shape index: {}]
  %s14 = inlined_call_operand.vmem [shape: f32[4,1,128], index: 14, kind: input, shape index: {}]
  %s15 = inlined_call_operand.vmem [shape: f32[4,1,128], index: 15, kind: input, shape index: {}]
  %s16 = inlined_call_operand.vmem [shape: f32[128,2], index: 16, kind: input, shape index: {}]
  %s17 = inlined_call_operand.vmem [shape: f32[1,2], index: 17, kind: input, shape index: {}]
  %s18 = inlined_call_operand.vmem [shape: f32[1,8], index: 18, kind: input, shape index: {}]
  %s19 = inlined_call_operand.<no memory space> [shape: f32[1,1], index: 19, kind: input, shape index: {}]
  %s20 = inlined_call_operand.hbm [shape: f32[2,8], index: 20, kind: output, shape index: {0}]
  %s21 = inlined_call_operand.vmem [shape: f32[2,1], index: 21, kind: output, shape index: {1}]
  %22 = xla_tuple %s20, %s21
  %s23 = sld [smem:[#allocation0]]
  $region110: #{forward.1} parent=0
    _
  %s25 = ssub.s32 1, %s23
  %s26 = scalar_select 0, %s25, %s23
  %v27 = vstv %s19
  %28 = vst [vmem:[#allocation2] sm:$0x1] %v27
  $region1: #{forward.1} parent=0
    #allocation3 [shape = 'u8[393216]{0}', space=vmem, size = 0x60000, scoped, tag = 'input window, operand 4, single buffered']
    #allocation4 [shape = 's32[1]{0}', space=sflag, size = 0x4, scoped, tag = 'scoped memory for forward.1']
    #allocation5 [shape = 's32[1]{0}', space=sflag, size = 0x4, scoped, tag = 'scoped memory for forward.1']
    #allocation6 [shape = 'u8[131072]{0}', space=vmem, size = 0x20000, scoped, tag = 'input window, operand 6, single buffered']
    #allocation7 [shape = 's32[1]{0}', space=sflag, size = 0x4, scoped, tag = 'scoped memory for forward.1']
    #allocation8 [shape = 'u8[262144]{0}', space=vmem, size = 0x40000, scoped, tag = 'input window, operand 12, single buffered']
    #allocation9 [shape = 'u8[1024]{0}', space=vmem, size = 0x400, scoped, tag = 'output window, operand 0, single buffered']
    %29 = vsyncpa [#allocation4], 0
    %30 = vsyncpa [#allocation7], 0
    %31 = vsyncpa [#allocation5], 0
    // Predicated region
    $region2: #{forward.1} parent=1 // pred_check
      _
    $region3: #{forward.1} parent=1 // pred_check_branch
      %33 = sbr.rel (0) target = $region5
    $region4: #{forward.1} parent=1 // pred_region
      _
    $region5: #{forward.1} parent=1 // pred_fallthru
      _
    // Predicated region
    $region6: #{forward.1} parent=1 // pred_check
      _
    $region7: #{forward.1} parent=1 // pred_check_branch
      %35 = sbr.rel (0) target = $region9
    $region8: #{forward.1} parent=1 // pred_region
      _
    $region9: #{forward.1} parent=1 // pred_fallthru
      _
    // Predicated region
    $region10: #{forward.1} parent=1 // pred_check
      _
    $region11: #{forward.1} parent=1 // pred_check_branch
      %37 = sbr.rel (0) target = $region13
    $region12: #{forward.1} parent=1 // pred_region
      _
    $region13: #{forward.1} parent=1 // pred_fallthru
      _
    // Predicated region
    $region14: #{forward.1} parent=1 // pred_check
      _
    $region15: #{forward.1} parent=1 // pred_check_branch
      %39 = sbr.rel (0) target = $region17
    $region16: #{forward.1} parent=1 // pred_region
      _
    $region17: #{forward.1} parent=1 // pred_fallthru
      _
    // Predicated region
    $region18: #{forward.1} parent=1 // pred_check
      _
    $region19: #{forward.1} parent=1 // pred_check_branch
      %41 = sbr.rel (0) target = $region21
    $region20: #{forward.1} parent=1 // pred_region
      %s43 = ssub.s32 12288, 12288
      %44 = vsyncadd [#allocation4], %s43
      %s45 = sshll.u32 [#allocation3], 4
      %s46 = int_to_ptr.vmem [resolvable:$true] %s45
      %51 = dma.hbm_to_vmem [thread:$0]  %s4, 12288, %s46, [#allocation4], 192, 192, 12
    $region21: #{forward.1} parent=1 // pred_fallthru
      _
    // Predicated region
    $region22: #{forward.1} parent=1 // pred_check
      _
    $region23: #{forward.1} parent=1 // pred_check_branch
      %53 = sbr.rel (0) target = $region25
    $region24: #{forward.1} parent=1 // pred_region
      _
    $region25: #{forward.1} parent=1 // pred_fallthru
      _
    // Predicated region
    $region26: #{forward.1} parent=1 // pred_check
      _
    $region27: #{forward.1} parent=1 // pred_check_branch
      %55 = sbr.rel (0) target = $region29
    $region28: #{forward.1} parent=1 // pred_region
      %s57 = ssub.s32 4096, 4096
      %58 = vsyncadd [#allocation7], %s57
      %s59 = sshll.u32 [#allocation6], 4
      %s60 = int_to_ptr.vmem [resolvable:$true] %s59
      %65 = dma.hbm_to_vmem [thread:$0]  %s6, 4096, %s60, [#allocation7], 64, 64, 4
    $region29: #{forward.1} parent=1 // pred_fallthru
      _
    // Predicated region
    $region30: #{forward.1} parent=1 // pred_check
      _
    $region31: #{forward.1} parent=1 // pred_check_branch
      %67 = sbr.rel (0) target = $region33
    $region32: #{forward.1} parent=1 // pred_region
      _
    $region33: #{forward.1} parent=1 // pred_fallthru
      _
    // Predicated region
    $region34: #{forward.1} parent=1 // pred_check
      _
    $region35: #{forward.1} parent=1 // pred_check_branch
      %69 = sbr.rel (0) target = $region37
    $region36: #{forward.1} parent=1 // pred_region
      _
    $region37: #{forward.1} parent=1 // pred_fallthru
      _
    // Predicated region
    $region38: #{forward.1} parent=1 // pred_check
      _
    $region39: #{forward.1} parent=1 // pred_check_branch
      %71 = sbr.rel (0) target = $region41
    $region40: #{forward.1} parent=1 // pred_region
      _
    $region41: #{forward.1} parent=1 // pred_fallthru
      _
    // Predicated region
    $region42: #{forward.1} parent=1 // pred_check
      _
    $region43: #{forward.1} parent=1 // pred_check_branch
      %73 = sbr.rel (0) target = $region45
    $region44: #{forward.1} parent=1 // pred_region
      _
    $region45: #{forward.1} parent=1 // pred_fallthru
      _
    // Predicated region
    $region46: #{forward.1} parent=1 // pred_check
      _
    $region47: #{forward.1} parent=1 // pred_check_branch
      %75 = sbr.rel (0) target = $region49
    $region48: #{forward.1} parent=1 // pred_region
      _
    $region49: #{forward.1} parent=1 // pred_fallthru
      _
    // Predicated region
    $region50: #{forward.1} parent=1 // pred_check
      _
    $region51: #{forward.1} parent=1 // pred_check_branch
      %77 = sbr.rel (0) target = $region53
    $region52: #{forward.1} parent=1 // pred_region
      %s79 = ssub.s32 8192, 8192
      %80 = vsyncadd [#allocation7], %s79
      %s81 = sshll.u32 [#allocation8], 4
      %s82 = int_to_ptr.vmem [resolvable:$true] %s81
      %87 = dma.hbm_to_vmem [thread:$0]  %s12, 8192, %s82, [#allocation7], 64, 64, 4
    $region53: #{forward.1} parent=1 // pred_fallthru
      _
    // Predicated region
    $region54: #{forward.1} parent=1 // pred_check
      _
    $region55: #{forward.1} parent=1 // pred_check_branch
      %89 = sbr.rel (0) target = $region57
    $region56: #{forward.1} parent=1 // pred_region
      _
    $region57: #{forward.1} parent=1 // pred_fallthru
      _
    // Predicated region
    $region58: #{forward.1} parent=1 // pred_check
      _
    $region59: #{forward.1} parent=1 // pred_check_branch
      %91 = sbr.rel (0) target = $region61
    $region60: #{forward.1} parent=1 // pred_region
      _
    $region61: #{forward.1} parent=1 // pred_fallthru
      _
    // Predicated region
    $region62: #{forward.1} parent=1 // pred_check
      _
    $region63: #{forward.1} parent=1 // pred_check_branch
      %93 = sbr.rel (0) target = $region65
    $region64: #{forward.1} parent=1 // pred_region
      _
    $region65: #{forward.1} parent=1 // pred_fallthru
      _
    // Predicated region
    $region66: #{forward.1} parent=1 // pred_check
      _
    $region67: #{forward.1} parent=1 // pred_check_branch
      %95 = sbr.rel (0) target = $region69
    $region68: #{forward.1} parent=1 // pred_region
      _
    $region69: #{forward.1} parent=1 // pred_fallthru
      _
    // Predicated region
    $region70: #{forward.1} parent=1 // pred_check
      _
    $region71: #{forward.1} parent=1 // pred_check_branch
      %97 = sbr.rel (0) target = $region73
    $region72: #{forward.1} parent=1 // pred_region
      _
    $region73: #{forward.1} parent=1 // pred_fallthru
      _
    // Predicated region
    $region74: #{forward.1} parent=1 // pred_check
      _
    $region75: #{forward.1} parent=1 // pred_check_branch
      %99 = sbr.rel (0) target = $region77
    $region76: #{forward.1} parent=1 // pred_region
      _
    $region77: #{forward.1} parent=1 // pred_fallthru
      _
    // Predicated region
    $region78: #{forward.1} parent=1 // pred_check
      _
    $region79: #{forward.1} parent=1 // pred_check_branch
      %101 = sbr.rel (0) target = $region81
    $region80: #{forward.1} parent=1 // pred_region
      _
    $region81: #{forward.1} parent=1 // pred_fallthru
      _
    // Predicated region
    $region82: #{forward.1} parent=1 // pred_check
      _
    $region83: #{forward.1} parent=1 // pred_check_branch
      %103 = sbr.rel (0) target = $region85
    $region84: #{forward.1} parent=1 // pred_region
      %104 = dma.done [#allocation4], 12288
    $region85: #{forward.1} parent=1 // pred_fallthru
      _
    // Predicated region
    $region86: #{forward.1} parent=1 // pred_check
      _
    $region87: #{forward.1} parent=1 // pred_check_branch
      %106 = sbr.rel (0) target = $region89
    $region88: #{forward.1} parent=1 // pred_region
      %107 = dma.done [#allocation7], 4096
    $region89: #{forward.1} parent=1 // pred_fallthru
      _
    // Predicated region
    $region90: #{forward.1} parent=1 // pred_check
      _
    $region91: #{forward.1} parent=1 // pred_check_branch
      %109 = sbr.rel (0) target = $region93
    $region92: #{forward.1} parent=1 // pred_region
      %110 = dma.done [#allocation7], 8192
    $region93: #{forward.1} parent=1 // pred_fallthru
      _
    %v112 = vld [vmem:[%s1] sm:$0x3]
    %v115 = vunpack.c.l.s4 1966171168
    %v116 = vunpack.c.0.s8 %v115
    %v117 = vlaneseq
    %v118 = vshrl.u32 %v117, 7
    %v119 = vsub.s32 %v116, %v118
    %v120 = vrot.slane %v112, %v119
    %v121 = vcombine.high %v120, %v120
    %v123 = vunpack.c.l.s4 1966171168
    %v124 = vunpack.c.0.s8 %v123
    %v125 = vlaneseq
    %v126 = vshrl.u32 %v125, 7
    %v127 = vsub.s32 %v124, %v126
    %v128 = vrot.slane %v120, %v127
    %v130 = vunpack.c.l.s4 1966171168
    %v131 = vunpack.c.0.s8 %v130
    %v132 = vlaneseq
    %v133 = vshrl.u32 %v132, 7
    %v134 = vsub.s32 %v131, %v133
    %v135 = vrot.slane %v121, %v134
    %v136 = vld [vmem:[%s0] sm:$0xff]
    %v137 = vld [vmem:[%s0 + $0x8] sm:$0xff]
    %v138 = vld [vmem:[%s2] sm:$0x1]
    %v139 = vld [vmem:[%s3] sm:$0x1]
    %140 = vadd.xlane.f32.xlu0 %v136
    %v141 = vpop.xlane.xlu0 %140
    %142 = vadd.xlane.f32.xlu0 %v137
    %v143 = vpop.xlane.xlu0 %142
    %v144 = vrcp.pop 128.0
    %v145 = vmul.f32 %v141, %v144
    %v146 = vmul.f32 %v143, %v144
    %v147 = vsub.f32 %v136, %v145
    %v148 = vsub.f32 %v137, %v146
    %v149 = vmul.f32 %v147, %v147
    %v150 = vmul.f32 %v148, %v148
    %151 = vadd.xlane.f32.xlu0 %v149
    %v152 = vpop.xlane.xlu0 %151
    %153 = vadd.xlane.f32.xlu0 %v150
    %v154 = vpop.xlane.xlu0 %153
    %v155 = vmul.f32 %v152, %v144
    %v156 = vmul.f32 %v154, %v144
    %v157 = vadd.f32 %v155, 1e-05
    %v158 = vadd.f32 %v156, 1e-05
    %v159 = vrsqrt.pop %v157
    %v160 = vrsqrt.pop %v158
    %v161 = vmul.f32 %v147, %v159
    %v162 = vmul.f32 %v148, %v160
    %v164 = vlaneseq
    %v165 = vshrl.u32 %v164, 7
    %v166 = vsub.s32 0, %v165
    %v167 = vrot.slane %v138, %v166
    %v169 = vmul.f32 %v161, %v167
    %v170 = vmul.f32 %v162, %v167
    %v172 = vlaneseq
    %v173 = vshrl.u32 %v172, 7
    %v174 = vsub.s32 0, %v173
    %v175 = vrot.slane %v139, %v174
    %v177 = vadd.f32 %v169, %v175
    %v178 = vadd.f32 %v170, %v175
    %v179 = vpack.c.bf16 %v178, %v177
    %v180 = vld [vmem:[#allocation3] sm:$0xff]
    %v181 = vld [vmem:[#allocation3 + $0x8] sm:$0xf]
    %v182 = vld [vmem:[#allocation3 + $0xc] sm:$0xff]
    %v183 = vld [vmem:[#allocation3 + $0x14] sm:$0xf]
    %v184 = vld [vmem:[#allocation3 + $0x18] sm:$0xff]
    %v185 = vld [vmem:[#allocation3 + $0x20] sm:$0xf]
    %v186 = vld [vmem:[#allocation3 + $0x24] sm:$0xff]
    %v187 = vld [vmem:[#allocation3 + $0x2c] sm:$0xf]
    %v188 = vld [vmem:[#allocation3 + $0x30] sm:$0xff]
    %v189 = vld [vmem:[#allocation3 + $0x38] sm:$0xf]
    %v190 = vld [vmem:[#allocation3 + $0x3c] sm:$0xff]
    %v191 = vld [vmem:[#allocation3 + $0x44] sm:$0xf]
    %v192 = vld [vmem:[#allocation3 + $0x48] sm:$0xff]
    %v193 = vld [vmem:[#allocation3 + $0x50] sm:$0xf]
    %v194 = vld [vmem:[#allocation3 + $0x54] sm:$0xff]
    %v195 = vld [vmem:[#allocation3 + $0x5c] sm:$0xf]
    %v196 = vld [vmem:[#allocation3 + $0x60] sm:$0xff]
    %v197 = vld [vmem:[#allocation3 + $0x68] sm:$0xf]
    %v198 = vld [vmem:[#allocation3 + $0x6c] sm:$0xff]
    %v199 = vld [vmem:[#allocation3 + $0x74] sm:$0xf]
    %v200 = vld [vmem:[#allocation3 + $0x78] sm:$0xff]
    %v201 = vld [vmem:[#allocation3 + $0x80] sm:$0xf]
    %v202 = vld [vmem:[#allocation3 + $0x84] sm:$0xff]
    %v203 = vld [vmem:[#allocation3 + $0x8c] sm:$0xf]
    %v204 = vld [vmem:[#allocation3 + $0x90] sm:$0xff]
    %v205 = vld [vmem:[#allocation3 + $0x98] sm:$0xf]
    %v206 = vld [vmem:[#allocation3 + $0x9c] sm:$0xff]
    %v207 = vld [vmem:[#allocation3 + $0xa4] sm:$0xf]
    %v208 = vld [vmem:[#allocation3 + $0xa8] sm:$0xff]
    %v209 = vld [vmem:[#allocation3 + $0xb0] sm:$0xf]
    %v210 = vld [vmem:[#allocation3 + $0xb4] sm:$0xff]
    %v211 = vld [vmem:[#allocation3 + $0xbc] sm:$0xf]
    %v212 = vld [vmem:[%s5] sm:$0x7]
    %v214 = vlaneseq
    %v215 = vshrl.u32 %v214, 7
    %v216 = vsub.s32 0, %v215
    %v217 = vrot.slane %v212, %v216
    %v218 = vlaneseq
    %v219 = vshrl.u32 %v218, 7
    %v220 = vsub.s32 1, %v219
    %v221 = vrot.slane %v212, %v220
    %v222 = vlaneseq
    %v223 = vshrl.u32 %v222, 7
    %v224 = vsub.s32 2, %v223
    %v225 = vrot.slane %v212, %v224
    %v261 = vunpack.c.l.b16 %v180
    %v262 = vunpack.c.h.b16 %v180
    %v263 = vunpack.c.l.b16 %v181
    %v264 = vunpack.c.l.b16 %v182
    %v265 = vunpack.c.h.b16 %v182
    %v266 = vunpack.c.l.b16 %v183
    %v267 = vunpack.c.l.b16 %v184
    %v268 = vunpack.c.h.b16 %v184
    %v269 = vunpack.c.l.b16 %v185
    %v270 = vunpack.c.l.b16 %v186
    %v271 = vunpack.c.h.b16 %v186
    %v272 = vunpack.c.l.b16 %v187
    %v273 = vunpack.c.l.b16 %v188
    %v274 = vunpack.c.h.b16 %v188
    %v275 = vunpack.c.l.b16 %v189
    %v276 = vunpack.c.l.b16 %v190
    %v277 = vunpack.c.h.b16 %v190
    %v278 = vunpack.c.l.b16 %v191
    %v279 = vunpack.c.l.b16 %v192
    %v280 = vunpack.c.h.b16 %v192
    %v281 = vunpack.c.l.b16 %v193
    %v282 = vunpack.c.l.b16 %v194
    %v283 = vunpack.c.h.b16 %v194
    %v284 = vunpack.c.l.b16 %v195
    %v285 = vunpack.c.l.b16 %v196
    %v286 = vunpack.c.h.b16 %v196
    %v287 = vunpack.c.l.b16 %v197
    %v288 = vunpack.c.l.b16 %v198
    %v289 = vunpack.c.h.b16 %v198
    %v290 = vunpack.c.l.b16 %v199
    %v291 = vunpack.c.l.b16 %v200
    %v292 = vunpack.c.h.b16 %v200
    %v293 = vunpack.c.l.b16 %v201
    %v294 = vunpack.c.l.b16 %v202
    %v295 = vunpack.c.h.b16 %v202
    %v296 = vunpack.c.l.b16 %v203
    %v297 = vunpack.c.l.b16 %v204
    %v298 = vunpack.c.h.b16 %v204
    %v299 = vunpack.c.l.b16 %v205
    %v300 = vunpack.c.l.b16 %v206
    %v301 = vunpack.c.h.b16 %v206
    %v302 = vunpack.c.l.b16 %v207
    %v303 = vunpack.c.l.b16 %v208
    %v304 = vunpack.c.h.b16 %v208
    %v305 = vunpack.c.l.b16 %v209
    %v306 = vunpack.c.l.b16 %v210
    %v307 = vunpack.c.h.b16 %v210
    %v308 = vunpack.c.l.b16 %v211
    %v309 = vpack.c.b16 %v264, %v261
    %v310 = vpack.c.b16 %v265, %v262
    %v311 = vpack.c.b16 %v266, %v263
    %v312 = vpack.c.b16 %v270, %v267
    %v313 = vpack.c.b16 %v271, %v268
    %v314 = vpack.c.b16 %v272, %v269
    %v315 = vpack.c.b16 %v276, %v273
    %v316 = vpack.c.b16 %v277, %v274
    %v317 = vpack.c.b16 %v278, %v275
    %v318 = vpack.c.b16 %v282, %v279
    %v319 = vpack.c.b16 %v283, %v280
    %v320 = vpack.c.b16 %v284, %v281
    %v321 = vpack.c.b16 %v288, %v285
    %v322 = vpack.c.b16 %v289, %v286
    %v323 = vpack.c.b16 %v290, %v287
    %v324 = vpack.c.b16 %v294, %v291
    %v325 = vpack.c.b16 %v295, %v292
    %v326 = vpack.c.b16 %v296, %v293
    %v327 = vpack.c.b16 %v300, %v297
    %v328 = vpack.c.b16 %v301, %v298
    %v329 = vpack.c.b16 %v302, %v299
    %v330 = vpack.c.b16 %v306, %v303
    %v331 = vpack.c.b16 %v307, %v304
    %v332 = vpack.c.b16 %v308, %v305
    %357 = vmatprep.subr.bf16.mxu0 %v331
    %358 = vmatpush1.bf16.msra.mxu0 %v330
    %359 = vmatprep.subr.bf16.mxu0 %v328
    %360 = vmatpush1.bf16.msra.mxu0 %v327
    %361 = vmatprep.subr.bf16.mxu0 %v325
    %362 = vmatpush1.bf16.msra.mxu0 %v324
    %363 = vmatprep.subr.bf16.mxu0 %v322
    %364 = vmatpush1.bf16.msra.mxu0 %v321
    %365 = vmatprep.subr.bf16.mxu0 %v319
    %366 = vmatpush1.bf16.msra.mxu0 %v318
    %367 = vmatprep.subr.bf16.mxu0 %v316
    %368 = vmatpush1.bf16.msra.mxu0 %v315
    %369 = vmatprep.subr.bf16.mxu0 %v313
    %370 = vmatpush1.bf16.msra.mxu0 %v312
    %371 = vmatprep.subr.bf16.mxu0 %v310
    %372 = vmatpush1.bf16.msra.mxu0 %v309
    %373 = vmatprep.subr.bf16.mxu0 0
    %374 = vmatpush2.bf16.msra.mxu0 0
    %375 = vmatprep.subr.bf16.mxu0 0
    %376 = vmatpush2.bf16.msra.mxu0 0
    %377 = vmatprep.subr.bf16.mxu0 0
    %378 = vmatpush2.bf16.msra.mxu0 0
    %379 = vmatprep.subr.bf16.mxu0 0
    %380 = vmatpush2.bf16.msra.mxu0 0
    %381 = vmatprep.subr.bf16.mxu0 0
    %382 = vmatpush2.bf16.msra.mxu0 0
    %383 = vmatprep.subr.bf16.mxu0 0
    %384 = vmatpush2.bf16.msra.mxu0 0
    %385 = vmatprep.subr.bf16.mxu0 0
    %386 = vmatpush2.bf16.msra.mxu0 0
    %387 = vmatprep.subr.bf16.mxu0 0
    %388 = vmatpush2.bf16.msra.mxu0 0
    %389 = vmatprep.mubr.bf16.mxu0 0
    %390 = vmatmul.mubr.bf16.gmra.mxu0 %v179
    %v391 = vpop.f32.mrf.mxu0
    %v392 = vadd.f32 %v217, %v391
    %v393 = vpop.f32.mrf.mxu0
    %v394 = vadd.f32 %v221, %v393
    %v395 = vpop.f32.mrf.mxu0
    %v396 = vadd.f32 %v217, %v395
    %v397 = vpop.f32.mrf.mxu0
    %v398 = vadd.f32 %v221, %v397
    %399 = vdwg.mxu0
    %400 = vmatprep.subr.bf16.mxu0 0
    %401 = vmatpush1.bf16.msra.mxu0 %v332
    %402 = vmatprep.subr.bf16.mxu0 0
    %403 = vmatpush1.bf16.msra.mxu0 %v329
    %404 = vmatprep.subr.bf16.mxu0 0
    %405 = vmatpush1.bf16.msra.mxu0 %v326
    %406 = vmatprep.subr.bf16.mxu0 0
    %407 = vmatpush1.bf16.msra.mxu0 %v323
    %408 = vmatprep.subr.bf16.mxu0 0
    %409 = vmatpush1.bf16.msra.mxu0 %v320
    %410 = vmatprep.subr.bf16.mxu0 0
    %411 = vmatpush1.bf16.msra.mxu0 %v317
    %412 = vmatprep.subr.bf16.mxu0 0
    %413 = vmatpush1.bf16.msra.mxu0 %v314
    %414 = vmatprep.subr.bf16.mxu0 0
    %415 = vmatpush1.bf16.msra.mxu0 %v311
    %416 = vmatprep.subr.bf16.mxu0 0
    %417 = vmatpush2.bf16.msra.mxu0 0
    %418 = vmatprep.subr.bf16.mxu0 0
    %419 = vmatpush2.bf16.msra.mxu0 0
    %420 = vmatprep.subr.bf16.mxu0 0
    %421 = vmatpush2.bf16.msra.mxu0 0
    %422 = vmatprep.subr.bf16.mxu0 0
    %423 = vmatpush2.bf16.msra.mxu0 0
    %424 = vmatprep.subr.bf16.mxu0 0
    %425 = vmatpush2.bf16.msra.mxu0 0
    %426 = vmatprep.subr.bf16.mxu0 0
    %427 = vmatpush2.bf16.msra.mxu0 0
    %428 = vmatprep.subr.bf16.mxu0 0
    %429 = vmatpush2.bf16.msra.mxu0 0
    %430 = vmatprep.subr.bf16.mxu0 0
    %431 = vmatpush2.bf16.msra.mxu0 0
    %432 = vmatprep.mubr.bf16.mxu0 0
    %433 = vmatmul.mubr.bf16.gmra.mxu0 %v179
    %v434 = vpop.f32.mrf.mxu0
    %v435 = vadd.f32 %v225, %v434
    %v436 = vpop.f32.mrf.mxu0
    %v437 = vpop.f32.mrf.mxu0
    %v438 = vadd.f32 %v225, %v437
    %v439 = vpop.f32.mrf.mxu0
    %440 = vdwg.mxu0
    %vm441 = vcmask 261120
    %v443 = vsel %vm441, %v392, 0
    %v446 = vsel %vm441, %v394, 0
    %448 = vmatprep.subr.mxu0 0.0
    %449 = vmatpush1.xpose.msra.mxu0 0.0
    %450 = vmatprep.subr.mxu0 0.0
    %451 = vmatpush1.xpose.msra.mxu0 0.0
    %452 = vmatprep.subr.mxu0 0.0
    %453 = vmatpush1.xpose.msra.mxu0 0.0
    %454 = vmatprep.subr.mxu0 0.0
    %455 = vmatpush1.xpose.msra.mxu0 0.0
    %456 = vmatprep.subr.mxu0 0.0
    %457 = vmatpush1.xpose.msra.mxu0 0.0
    %458 = vmatprep.subr.mxu0 0.0
    %459 = vmatpush1.xpose.msra.mxu0 0.0
    %460 = vmatprep.subr.mxu0 0.0
    %461 = vmatpush1.xpose.msra.mxu0 0.0
    %462 = vmatprep.subr.mxu0 0.0
    %463 = vmatpush1.xpose.msra.mxu0 0.0
    %464 = vmatprep.subr.mxu0 0.0
    %465 = vmatpush1.xpose.msra.mxu0 0.0
    %466 = vmatprep.subr.mxu0 0.0
    %467 = vmatpush1.xpose.msra.mxu0 0.0
    %468 = vmatprep.subr.mxu0 0.0
    %469 = vmatpush1.xpose.msra.mxu0 0.0
    %470 = vmatprep.subr.mxu0 0.0
    %471 = vmatpush1.xpose.msra.mxu0 0.0
    %472 = vmatprep.subr.mxu0 0.0
    %473 = vmatpush1.xpose.msra.mxu0 0.0
    %474 = vmatprep.subr.mxu0 0.0
    %475 = vmatpush1.xpose.msra.mxu0 0.0
    %476 = vmatprep.subr.mxu0 0.0
    %477 = vmatpush1.xpose.msra.mxu0 0.0
    %478 = vmatprep.subr.mxu0 0.0
    %479 = vmatpush1.xpose.msra.mxu0 %v446
    %480 = vmatprep.subr.mxu0 0.0
    %481 = vmatpush2.xpose.msra.mxu0 0.0
    %482 = vmatprep.subr.mxu0 0.0
    %483 = vmatpush2.xpose.msra.mxu0 0.0
    %484 = vmatprep.subr.mxu0 0.0
    %485 = vmatpush2.xpose.msra.mxu0 0.0
    %486 = vmatprep.subr.mxu0 0.0
    %487 = vmatpush2.xpose.msra.mxu0 0.0
    %488 = vmatprep.subr.mxu0 0.0
    %489 = vmatpush2.xpose.msra.mxu0 0.0
    %490 = vmatprep.subr.mxu0 0.0
    %491 = vmatpush2.xpose.msra.mxu0 0.0
    %492 = vmatprep.subr.mxu0 0.0
    %493 = vmatpush2.xpose.msra.mxu0 0.0
    %494 = vmatprep.subr.mxu0 0.0
    %495 = vmatpush2.xpose.msra.mxu0 0.0
    %496 = vmatprep.subr.mxu0 0.0
    %497 = vmatpush2.xpose.msra.mxu0 0.0
    %498 = vmatprep.subr.mxu0 0.0
    %499 = vmatpush2.xpose.msra.mxu0 0.0
    %500 = vmatprep.subr.mxu0 0.0
    %501 = vmatpush2.xpose.msra.mxu0 0.0
    %502 = vmatprep.subr.mxu0 0.0
    %503 = vmatpush2.xpose.msra.mxu0 0.0
    %504 = vmatprep.subr.mxu0 0.0
    %505 = vmatpush2.xpose.msra.mxu0 0.0
    %506 = vmatprep.subr.mxu0 0.0
    %507 = vmatpush2.xpose.msra.mxu0 0.0
    %508 = vmatprep.subr.mxu0 0.0
    %509 = vmatpush2.xpose.msra.mxu0 0.0
    %510 = vmatprep.subr.mxu0 0.0
    %511 = vmatpush2.xpose.msra.mxu0 0.0
    %512 = vmatprep.mubr.f32.mxu0 0.0
    %513 = vmatmul.mubr.f32.gmra.mxu0 %v443
    %v514 = vpop.f32.mrf.mxu0
    %v515 = vadd.f32 0.0, %v514
    %v516 = vpop.f32.mrf.mxu0
    %517 = vdwg.mxu0
    %v519 = vsel %vm441, %v396, 0
    %v522 = vsel %vm441, %v398, 0
    %524 = vmatprep.subr.mxu0 0.0
    %525 = vmatpush1.xpose.msra.mxu0 0.0
    %526 = vmatprep.subr.mxu0 0.0
    %527 = vmatpush1.xpose.msra.mxu0 0.0
    %528 = vmatprep.subr.mxu0 0.0
    %529 = vmatpush1.xpose.msra.mxu0 0.0
    %530 = vmatprep.subr.mxu0 0.0
    %531 = vmatpush1.xpose.msra.mxu0 0.0
    %532 = vmatprep.subr.mxu0 0.0
    %533 = vmatpush1.xpose.msra.mxu0 0.0
    %534 = vmatprep.subr.mxu0 0.0
    %535 = vmatpush1.xpose.msra.mxu0 0.0
    %536 = vmatprep.subr.mxu0 0.0
    %537 = vmatpush1.xpose.msra.mxu0 0.0
    %538 = vmatprep.subr.mxu0 0.0
    %539 = vmatpush1.xpose.msra.mxu0 0.0
    %540 = vmatprep.subr.mxu0 0.0
    %541 = vmatpush1.xpose.msra.mxu0 0.0
    %542 = vmatprep.subr.mxu0 0.0
    %543 = vmatpush1.xpose.msra.mxu0 0.0
    %544 = vmatprep.subr.mxu0 0.0
    %545 = vmatpush1.xpose.msra.mxu0 0.0
    %546 = vmatprep.subr.mxu0 0.0
    %547 = vmatpush1.xpose.msra.mxu0 0.0
    %548 = vmatprep.subr.mxu0 0.0
    %549 = vmatpush1.xpose.msra.mxu0 0.0
    %550 = vmatprep.subr.mxu0 0.0
    %551 = vmatpush1.xpose.msra.mxu0 0.0
    %552 = vmatprep.subr.mxu0 0.0
    %553 = vmatpush1.xpose.msra.mxu0 0.0
    %554 = vmatprep.subr.mxu0 0.0
    %555 = vmatpush1.xpose.msra.mxu0 %v522
    %556 = vmatprep.subr.mxu0 0.0
    %557 = vmatpush2.xpose.msra.mxu0 0.0
    %558 = vmatprep.subr.mxu0 0.0
    %559 = vmatpush2.xpose.msra.mxu0 0.0
    %560 = vmatprep.subr.mxu0 0.0
    %561 = vmatpush2.xpose.msra.mxu0 0.0
    %562 = vmatprep.subr.mxu0 0.0
    %563 = vmatpush2.xpose.msra.mxu0 0.0
    %564 = vmatprep.subr.mxu0 0.0
    %565 = vmatpush2.xpose.msra.mxu0 0.0
    %566 = vmatprep.subr.mxu0 0.0
    %567 = vmatpush2.xpose.msra.mxu0 0.0
    %568 = vmatprep.subr.mxu0 0.0
    %569 = vmatpush2.xpose.msra.mxu0 0.0
    %570 = vmatprep.subr.mxu0 0.0
    %571 = vmatpush2.xpose.msra.mxu0 0.0
    %572 = vmatprep.subr.mxu0 0.0
    %573 = vmatpush2.xpose.msra.mxu0 0.0
    %574 = vmatprep.subr.mxu0 0.0
    %575 = vmatpush2.xpose.msra.mxu0 0.0
    %576 = vmatprep.subr.mxu0 0.0
    %577 = vmatpush2.xpose.msra.mxu0 0.0
    %578 = vmatprep.subr.mxu0 0.0
    %579 = vmatpush2.xpose.msra.mxu0 0.0
    %580 = vmatprep.subr.mxu0 0.0
    %581 = vmatpush2.xpose.msra.mxu0 0.0
    %582 = vmatprep.subr.mxu0 0.0
    %583 = vmatpush2.xpose.msra.mxu0 0.0
    %584 = vmatprep.subr.mxu0 0.0
    %585 = vmatpush2.xpose.msra.mxu0 0.0
    %586 = vmatprep.subr.mxu0 0.0
    %587 = vmatpush2.xpose.msra.mxu0 0.0
    %588 = vmatprep.mubr.f32.mxu0 0.0
    %589 = vmatmul.mubr.f32.gmra.mxu0 %v519
    %v590 = vpop.f32.mrf.mxu0
    %v591 = vadd.f32 0.0, %v590
    %v592 = vpop.f32.mrf.mxu0
    %593 = vdwg.mxu0
    %v594 = vmul.f32 %v515, 0.17677669
    %v595 = vmul.f32 %v591, 0.17677669
    %v596 = vlaneseq
    %v597 = vshrl.u32 %v596, 7
    %v598 = vsub.s32 0, %v597
    %v599 = vrot.slane %v128, %v598
    %v600 = vlaneseq
    %v601 = vshrl.u32 %v600, 7
    %v602 = vsub.s32 0, %v601
    %v603 = vrot.slane %v135, %v602
    %v606 = vadd.f32 %v594, %v599
    %v607 = vadd.f32 %v595, %v603
    %vm608 = vcmask 64512
    %v609 = vsel %vm608, %v606, -inf
    %610 = vmax.xlane.f32.xlu0 %v609
    %v611 = vpop.xlane.xlu0 %610
    %v612 = vsel %vm608, %v607, -inf
    %613 = vmax.xlane.f32.xlu0 %v612
    %v614 = vpop.xlane.xlu0 %613
    %v615 = vsub.f32 %v606, %v611
    %v616 = vsub.f32 %v607, %v614
    %v617 = vmul.f32 %v615, 1.442695
    %v618 = vpow.pop %v617
    %v619 = vmul.f32 %v616, 1.442695
    %v620 = vpow.pop %v619
    %v621 = vsel %vm608, %v618, 0.0
    %622 = vadd.xlane.f32.xlu0 %v621
    %v623 = vpop.xlane.xlu0 %622
    %v624 = vsel %vm608, %v620, 0.0
    %625 = vadd.xlane.f32.xlu0 %v624
    %v626 = vpop.xlane.xlu0 %625
    %v627 = vrcp.pop %v623
    %v628 = vmul.f32 %v618, %v627
    %v629 = vrcp.pop %v626
    %v630 = vmul.f32 %v620, %v629
    %v632 = vsel %vm608, %v628, 0
    %634 = vmatprep.subr.mxu0 0.0
    %635 = vmatpush1.msra.mxu0 0.0
    %636 = vmatprep.subr.mxu0 0.0
    %637 = vmatpush1.msra.mxu0 0.0
    %638 = vmatprep.subr.mxu0 0.0
    %639 = vmatpush1.msra.mxu0 0.0
    %640 = vmatprep.subr.mxu0 0.0
    %641 = vmatpush1.msra.mxu0 0.0
    %642 = vmatprep.subr.mxu0 0.0
    %643 = vmatpush1.msra.mxu0 0.0
    %644 = vmatprep.subr.mxu0 0.0
    %645 = vmatpush1.msra.mxu0 0.0
    %646 = vmatprep.subr.mxu0 0.0
    %647 = vmatpush1.msra.mxu0 0.0
    %648 = vmatprep.subr.mxu0 0.0
    %649 = vmatpush1.msra.mxu0 0.0
    %650 = vmatprep.subr.mxu0 0.0
    %651 = vmatpush1.msra.mxu0 0.0
    %652 = vmatprep.subr.mxu0 0.0
    %653 = vmatpush1.msra.mxu0 0.0
    %654 = vmatprep.subr.mxu0 0.0
    %655 = vmatpush1.msra.mxu0 0.0
    %656 = vmatprep.subr.mxu0 0.0
    %657 = vmatpush1.msra.mxu0 0.0
    %658 = vmatprep.subr.mxu0 0.0
    %659 = vmatpush1.msra.mxu0 0.0
    %660 = vmatprep.subr.mxu0 0.0
    %661 = vmatpush1.msra.mxu0 0.0
    %662 = vmatprep.subr.mxu0 0.0
    %663 = vmatpush1.msra.mxu0 0.0
    %664 = vmatprep.subr.mxu0 0.0
    %665 = vmatpush1.msra.mxu0 %v435
    %666 = vmatprep.subr.mxu0 0.0
    %667 = vmatpush2.msra.mxu0 0.0
    %668 = vmatprep.subr.mxu0 0.0
    %669 = vmatpush2.msra.mxu0 0.0
    %670 = vmatprep.subr.mxu0 0.0
    %671 = vmatpush2.msra.mxu0 0.0
    %672 = vmatprep.subr.mxu0 0.0
    %673 = vmatpush2.msra.mxu0 0.0
    %674 = vmatprep.subr.mxu0 0.0
    %675 = vmatpush2.msra.mxu0 0.0
    %676 = vmatprep.subr.mxu0 0.0
    %677 = vmatpush2.msra.mxu0 0.0
    %678 = vmatprep.subr.mxu0 0.0
    %679 = vmatpush2.msra.mxu0 0.0
    %680 = vmatprep.subr.mxu0 0.0
    %681 = vmatpush2.msra.mxu0 0.0
    %682 = vmatprep.subr.mxu0 0.0
    %683 = vmatpush2.msra.mxu0 0.0
    %684 = vmatprep.subr.mxu0 0.0
    %685 = vmatpush2.msra.mxu0 0.0
    %686 = vmatprep.subr.mxu0 0.0
    %687 = vmatpush2.msra.mxu0 0.0
    %688 = vmatprep.subr.mxu0 0.0
    %689 = vmatpush2.msra.mxu0 0.0
    %690 = vmatprep.subr.mxu0 0.0
    %691 = vmatpush2.msra.mxu0 0.0
    %692 = vmatprep.subr.mxu0 0.0
    %693 = vmatpush2.msra.mxu0 0.0
    %694 = vmatprep.subr.mxu0 0.0
    %695 = vmatpush2.msra.mxu0 0.0
    %696 = vmatprep.subr.mxu0 0.0
    %697 = vmatpush2.msra.mxu0 0.0
    %698 = vmatprep.mubr.f32.mxu0 0.0
    %699 = vmatmul.mubr.f32.gmra.mxu0 %v632
    %v700 = vpop.f32.mrf.mxu0
    %v701 = vadd.f32 0.0, %v700
    %v702 = vpop.f32.mrf.mxu0
    %703 = vdwg.mxu0
    %v705 = vsel %vm608, %v630, 0
    %707 = vmatprep.subr.mxu0 0.0
    %708 = vmatpush1.msra.mxu0 0.0
    %709 = vmatprep.subr.mxu0 0.0
    %710 = vmatpush1.msra.mxu0 0.0
    %711 = vmatprep.subr.mxu0 0.0
    %712 = vmatpush1.msra.mxu0 0.0
    %713 = vmatprep.subr.mxu0 0.0
    %714 = vmatpush1.msra.mxu0 0.0
    %715 = vmatprep.subr.mxu0 0.0
    %716 = vmatpush1.msra.mxu0 0.0
    %717 = vmatprep.subr.mxu0 0.0
    %718 = vmatpush1.msra.mxu0 0.0
    %719 = vmatprep.subr.mxu0 0.0
    %720 = vmatpush1.msra.mxu0 0.0
    %721 = vmatprep.subr.mxu0 0.0
    %722 = vmatpush1.msra.mxu0 0.0
    %723 = vmatprep.subr.mxu0 0.0
    %724 = vmatpush1.msra.mxu0 0.0
    %725 = vmatprep.subr.mxu0 0.0
    %726 = vmatpush1.msra.mxu0 0.0
    %727 = vmatprep.subr.mxu0 0.0
    %728 = vmatpush1.msra.mxu0 0.0
    %729 = vmatprep.subr.mxu0 0.0
    %730 = vmatpush1.msra.mxu0 0.0
    %731 = vmatprep.subr.mxu0 0.0
    %732 = vmatpush1.msra.mxu0 0.0
    %733 = vmatprep.subr.mxu0 0.0
    %734 = vmatpush1.msra.mxu0 0.0
    %735 = vmatprep.subr.mxu0 0.0
    %736 = vmatpush1.msra.mxu0 0.0
    %737 = vmatprep.subr.mxu0 0.0
    %738 = vmatpush1.msra.mxu0 %v438
    %739 = vmatprep.subr.mxu0 0.0
    %740 = vmatpush2.msra.mxu0 0.0
    %741 = vmatprep.subr.mxu0 0.0
    %742 = vmatpush2.msra.mxu0 0.0
    %743 = vmatprep.subr.mxu0 0.0
    %744 = vmatpush2.msra.mxu0 0.0
    %745 = vmatprep.subr.mxu0 0.0
    %746 = vmatpush2.msra.mxu0 0.0
    %747 = vmatprep.subr.mxu0 0.0
    %748 = vmatpush2.msra.mxu0 0.0
    %749 = vmatprep.subr.mxu0 0.0
    %750 = vmatpush2.msra.mxu0 0.0
    %751 = vmatprep.subr.mxu0 0.0
    %752 = vmatpush2.msra.mxu0 0.0
    %753 = vmatprep.subr.mxu0 0.0
    %754 = vmatpush2.msra.mxu0 0.0
    %755 = vmatprep.subr.mxu0 0.0
    %756 = vmatpush2.msra.mxu0 0.0
    %757 = vmatprep.subr.mxu0 0.0
    %758 = vmatpush2.msra.mxu0 0.0
    %759 = vmatprep.subr.mxu0 0.0
    %760 = vmatpush2.msra.mxu0 0.0
    %761 = vmatprep.subr.mxu0 0.0
    %762 = vmatpush2.msra.mxu0 0.0
    %763 = vmatprep.subr.mxu0 0.0
    %764 = vmatpush2.msra.mxu0 0.0
    %765 = vmatprep.subr.mxu0 0.0
    %766 = vmatpush2.msra.mxu0 0.0
    %767 = vmatprep.subr.mxu0 0.0
    %768 = vmatpush2.msra.mxu0 0.0
    %769 = vmatprep.subr.mxu0 0.0
    %770 = vmatpush2.msra.mxu0 0.0
    %771 = vmatprep.mubr.f32.mxu0 0.0
    %772 = vmatmul.mubr.f32.gmra.mxu0 %v705
    %v773 = vpop.f32.mrf.mxu0
    %v774 = vadd.f32 0.0, %v773
    %v775 = vpop.f32.mrf.mxu0
    %776 = vdwg.mxu0
    %v777 = vpack.c.bf16 %v774, %v701
    %v778 = vld [vmem:[#allocation6] sm:$0xf]
    %v779 = vld [vmem:[#allocation6 + $0x4] sm:$0xf]
    %v780 = vld [vmem:[#allocation6 + $0x8] sm:$0xf]
    %v781 = vld [vmem:[#allocation6 + $0xc] sm:$0xf]
    %782 = vrot.lane.b32.xlu0 %v392, 96
    %v783 = vpop.permute.xlu0 %782
    %784 = vrot.lane.b32.xlu0 %v394, 96
    %v785 = vpop.permute.xlu0 %784
    %v786 = vsel %vm441, %v783, 0
    %v788 = vsel %vm441, %v785, 0
    %790 = vmatprep.subr.mxu0 0.0
    %791 = vmatpush1.xpose.msra.mxu0 0.0
    %792 = vmatprep.subr.mxu0 0.0
    %793 = vmatpush1.xpose.msra.mxu0 0.0
    %794 = vmatprep.subr.mxu0 0.0
    %795 = vmatpush1.xpose.msra.mxu0 0.0
    %796 = vmatprep.subr.mxu0 0.0
    %797 = vmatpush1.xpose.msra.mxu0 0.0
    %798 = vmatprep.subr.mxu0 0.0
    %799 = vmatpush1.xpose.msra.mxu0 0.0
    %800 = vmatprep.subr.mxu0 0.0
    %801 = vmatpush1.xpose.msra.mxu0 0.0
    %802 = vmatprep.subr.mxu0 0.0
    %803 = vmatpush1.xpose.msra.mxu0 0.0
    %804 = vmatprep.subr.mxu0 0.0
    %805 = vmatpush1.xpose.msra.mxu0 0.0
    %806 = vmatprep.subr.mxu0 0.0
    %807 = vmatpush1.xpose.msra.mxu0 0.0
    %808 = vmatprep.subr.mxu0 0.0
    %809 = vmatpush1.xpose.msra.mxu0 0.0
    %810 = vmatprep.subr.mxu0 0.0
    %811 = vmatpush1.xpose.msra.mxu0 0.0
    %812 = vmatprep.subr.mxu0 0.0
    %813 = vmatpush1.xpose.msra.mxu0 0.0
    %814 = vmatprep.subr.mxu0 0.0
    %815 = vmatpush1.xpose.msra.mxu0 0.0
    %816 = vmatprep.subr.mxu0 0.0
    %817 = vmatpush1.xpose.msra.mxu0 0.0
    %818 = vmatprep.subr.mxu0 0.0
    %819 = vmatpush1.xpose.msra.mxu0 0.0
    %820 = vmatprep.subr.mxu0 0.0
    %821 = vmatpush1.xpose.msra.mxu0 %v788
    %822 = vmatprep.subr.mxu0 0.0
    %823 = vmatpush2.xpose.msra.mxu0 0.0
    %824 = vmatprep.subr.mxu0 0.0
    %825 = vmatpush2.xpose.msra.mxu0 0.0
    %826 = vmatprep.subr.mxu0 0.0
    %827 = vmatpush2.xpose.msra.mxu0 0.0
    %828 = vmatprep.subr.mxu0 0.0
    %829 = vmatpush2.xpose.msra.mxu0 0.0
    %830 = vmatprep.subr.mxu0 0.0
    %831 = vmatpush2.xpose.msra.mxu0 0.0
    %832 = vmatprep.subr.mxu0 0.0
    %833 = vmatpush2.xpose.msra.mxu0 0.0
    %834 = vmatprep.subr.mxu0 0.0
    %835 = vmatpush2.xpose.msra.mxu0 0.0
    %836 = vmatprep.subr.mxu0 0.0
    %837 = vmatpush2.xpose.msra.mxu0 0.0
    %838 = vmatprep.subr.mxu0 0.0
    %839 = vmatpush2.xpose.msra.mxu0 0.0
    %840 = vmatprep.subr.mxu0 0.0
    %841 = vmatpush2.xpose.msra.mxu0 0.0
    %842 = vmatprep.subr.mxu0 0.0
    %843 = vmatpush2.xpose.msra.mxu0 0.0
    %844 = vmatprep.subr.mxu0 0.0
    %845 = vmatpush2.xpose.msra.mxu0 0.0
    %846 = vmatprep.subr.mxu0 0.0
    %847 = vmatpush2.xpose.msra.mxu0 0.0
    %848 = vmatprep.subr.mxu0 0.0
    %849 = vmatpush2.xpose.msra.mxu0 0.0
    %850 = vmatprep.subr.mxu0 0.0
    %851 = vmatpush2.xpose.msra.mxu0 0.0
    %852 = vmatprep.subr.mxu0 0.0
    %853 = vmatpush2.xpose.msra.mxu0 0.0
    %854 = vmatprep.mubr.f32.mxu0 0.0
    %855 = vmatmul.mubr.f32.gmra.mxu0 %v786
    %v856 = vpop.f32.mrf.mxu0
    %v857 = vadd.f32 0.0, %v856
    %v858 = vpop.f32.mrf.mxu0
    %859 = vdwg.mxu0
    %860 = vrot.lane.b32.xlu0 %v396, 96
    %v861 = vpop.permute.xlu0 %860
    %862 = vrot.lane.b32.xlu0 %v398, 96
    %v863 = vpop.permute.xlu0 %862
    %v864 = vsel %vm441, %v861, 0
    %v866 = vsel %vm441, %v863, 0
    %868 = vmatprep.subr.mxu0 0.0
    %869 = vmatpush1.xpose.msra.mxu0 0.0
    %870 = vmatprep.subr.mxu0 0.0
    %871 = vmatpush1.xpose.msra.mxu0 0.0
    %872 = vmatprep.subr.mxu0 0.0
    %873 = vmatpush1.xpose.msra.mxu0 0.0
    %874 = vmatprep.subr.mxu0 0.0
    %875 = vmatpush1.xpose.msra.mxu0 0.0
    %876 = vmatprep.subr.mxu0 0.0
    %877 = vmatpush1.xpose.msra.mxu0 0.0
    %878 = vmatprep.subr.mxu0 0.0
    %879 = vmatpush1.xpose.msra.mxu0 0.0
    %880 = vmatprep.subr.mxu0 0.0
    %881 = vmatpush1.xpose.msra.mxu0 0.0
    %882 = vmatprep.subr.mxu0 0.0
    %883 = vmatpush1.xpose.msra.mxu0 0.0
    %884 = vmatprep.subr.mxu0 0.0
    %885 = vmatpush1.xpose.msra.mxu0 0.0
    %886 = vmatprep.subr.mxu0 0.0
    %887 = vmatpush1.xpose.msra.mxu0 0.0
    %888 = vmatprep.subr.mxu0 0.0
    %889 = vmatpush1.xpose.msra.mxu0 0.0
    %890 = vmatprep.subr.mxu0 0.0
    %891 = vmatpush1.xpose.msra.mxu0 0.0
    %892 = vmatprep.subr.mxu0 0.0
    %893 = vmatpush1.xpose.msra.mxu0 0.0
    %894 = vmatprep.subr.mxu0 0.0
    %895 = vmatpush1.xpose.msra.mxu0 0.0
    %896 = vmatprep.subr.mxu0 0.0
    %897 = vmatpush1.xpose.msra.mxu0 0.0
    %898 = vmatprep.subr.mxu0 0.0
    %899 = vmatpush1.xpose.msra.mxu0 %v866
    %900 = vmatprep.subr.mxu0 0.0
    %901 = vmatpush2.xpose.msra.mxu0 0.0
    %902 = vmatprep.subr.mxu0 0.0
    %903 = vmatpush2.xpose.msra.mxu0 0.0
    %904 = vmatprep.subr.mxu0 0.0
    %905 = vmatpush2.xpose.msra.mxu0 0.0
    %906 = vmatprep.subr.mxu0 0.0
    %907 = vmatpush2.xpose.msra.mxu0 0.0
    %908 = vmatprep.subr.mxu0 0.0
    %909 = vmatpush2.xpose.msra.mxu0 0.0
    %910 = vmatprep.subr.mxu0 0.0
    %911 = vmatpush2.xpose.msra.mxu0 0.0
    %912 = vmatprep.subr.mxu0 0.0
    %913 = vmatpush2.xpose.msra.mxu0 0.0
    %914 = vmatprep.subr.mxu0 0.0
    %915 = vmatpush2.xpose.msra.mxu0 0.0
    %916 = vmatprep.subr.mxu0 0.0
    %917 = vmatpush2.xpose.msra.mxu0 0.0
    %918 = vmatprep.subr.mxu0 0.0
    %919 = vmatpush2.xpose.msra.mxu0 0.0
    %920 = vmatprep.subr.mxu0 0.0
    %921 = vmatpush2.xpose.msra.mxu0 0.0
    %922 = vmatprep.subr.mxu0 0.0
    %923 = vmatpush2.xpose.msra.mxu0 0.0
    %924 = vmatprep.subr.mxu0 0.0
    %925 = vmatpush2.xpose.msra.mxu0 0.0
    %926 = vmatprep.subr.mxu0 0.0
    %927 = vmatpush2.xpose.msra.mxu0 0.0
    %928 = vmatprep.subr.mxu0 0.0
    %929 = vmatpush2.xpose.msra.mxu0 0.0
    %930 = vmatprep.subr.mxu0 0.0
    %931 = vmatpush2.xpose.msra.mxu0 0.0
    %932 = vmatprep.mubr.f32.mxu0 0.0
    %933 = vmatmul.mubr.f32.gmra.mxu0 %v864
    %v934 = vpop.f32.mrf.mxu0
    %v935 = vadd.f32 0.0, %v934
    %v936 = vpop.f32.mrf.mxu0
    %937 = vdwg.mxu0
    %v938 = vmul.f32 %v857, 0.17677669
    %v939 = vmul.f32 %v935, 0.17677669
    %v940 = vadd.f32 %v938, %v599
    %v941 = vadd.f32 %v939, %v603
    %v942 = vsel %vm608, %v940, -inf
    %943 = vmax.xlane.f32.xlu0 %v942
    %v944 = vpop.xlane.xlu0 %943
    %v945 = vsel %vm608, %v941, -inf
    %946 = vmax.xlane.f32.xlu0 %v945
    %v947 = vpop.xlane.xlu0 %946
    %v948 = vsub.f32 %v940, %v944
    %v949 = vsub.f32 %v941, %v947
    %v950 = vmul.f32 %v948, 1.442695
    %v951 = vpow.pop %v950
    %v952 = vmul.f32 %v949, 1.442695
    %v953 = vpow.pop %v952
    %v954 = vsel %vm608, %v951, 0.0
    %955 = vadd.xlane.f32.xlu0 %v954
    %v956 = vpop.xlane.xlu0 %955
    %v957 = vsel %vm608, %v953, 0.0
    %958 = vadd.xlane.f32.xlu0 %v957
    %v959 = vpop.xlane.xlu0 %958
    %v960 = vrcp.pop %v956
    %v961 = vmul.f32 %v951, %v960
    %v962 = vrcp.pop %v959
    %v963 = vmul.f32 %v953, %v962
    %965 = vrot.lane.b32.xlu0 %v435, 96
    %v966 = vpop.permute.xlu0 %965
    %v969 = vsel %vm608, %v961, 0
    %971 = vmatprep.subr.mxu0 0.0
    %972 = vmatpush1.msra.mxu0 0.0
    %973 = vmatprep.subr.mxu0 0.0
    %974 = vmatpush1.msra.mxu0 0.0
    %975 = vmatprep.subr.mxu0 0.0
    %976 = vmatpush1.msra.mxu0 0.0
    %977 = vmatprep.subr.mxu0 0.0
    %978 = vmatpush1.msra.mxu0 0.0
    %979 = vmatprep.subr.mxu0 0.0
    %980 = vmatpush1.msra.mxu0 0.0
    %981 = vmatprep.subr.mxu0 0.0
    %982 = vmatpush1.msra.mxu0 0.0
    %983 = vmatprep.subr.mxu0 0.0
    %984 = vmatpush1.msra.mxu0 0.0
    %985 = vmatprep.subr.mxu0 0.0
    %986 = vmatpush1.msra.mxu0 0.0
    %987 = vmatprep.subr.mxu0 0.0
    %988 = vmatpush1.msra.mxu0 0.0
    %989 = vmatprep.subr.mxu0 0.0
    %990 = vmatpush1.msra.mxu0 0.0
    %991 = vmatprep.subr.mxu0 0.0
    %992 = vmatpush1.msra.mxu0 0.0
    %993 = vmatprep.subr.mxu0 0.0
    %994 = vmatpush1.msra.mxu0 0.0
    %995 = vmatprep.subr.mxu0 0.0
    %996 = vmatpush1.msra.mxu0 0.0
    %997 = vmatprep.subr.mxu0 0.0
    %998 = vmatpush1.msra.mxu0 0.0
    %999 = vmatprep.subr.mxu0 0.0
    %1000 = vmatpush1.msra.mxu0 0.0
    %1001 = vmatprep.subr.mxu0 0.0
    %1002 = vmatpush1.msra.mxu0 %v966
    %1003 = vmatprep.subr.mxu0 0.0
    %1004 = vmatpush2.msra.mxu0 0.0
    %1005 = vmatprep.subr.mxu0 0.0
    %1006 = vmatpush2.msra.mxu0 0.0
    %1007 = vmatprep.subr.mxu0 0.0
    %1008 = vmatpush2.msra.mxu0 0.0
    %1009 = vmatprep.subr.mxu0 0.0
    %1010 = vmatpush2.msra.mxu0 0.0
    %1011 = vmatprep.subr.mxu0 0.0
    %1012 = vmatpush2.msra.mxu0 0.0
    %1013 = vmatprep.subr.mxu0 0.0
    %1014 = vmatpush2.msra.mxu0 0.0
    %1015 = vmatprep.subr.mxu0 0.0
    %1016 = vmatpush2.msra.mxu0 0.0
    %1017 = vmatprep.subr.mxu0 0.0
    %1018 = vmatpush2.msra.mxu0 0.0
    %1019 = vmatprep.subr.mxu0 0.0
    %1020 = vmatpush2.msra.mxu0 0.0
    %1021 = vmatprep.subr.mxu0 0.0
    %1022 = vmatpush2.msra.mxu0 0.0
    %1023 = vmatprep.subr.mxu0 0.0
    %1024 = vmatpush2.msra.mxu0 0.0
    %1025 = vmatprep.subr.mxu0 0.0
    %1026 = vmatpush2.msra.mxu0 0.0
    %1027 = vmatprep.subr.mxu0 0.0
    %1028 = vmatpush2.msra.mxu0 0.0
    %1029 = vmatprep.subr.mxu0 0.0
    %1030 = vmatpush2.msra.mxu0 0.0
    %1031 = vmatprep.subr.mxu0 0.0
    %1032 = vmatpush2.msra.mxu0 0.0
    %1033 = vmatprep.subr.mxu0 0.0
    %1034 = vmatpush2.msra.mxu0 0.0
    %1035 = vmatprep.mubr.f32.mxu0 0.0
    %1036 = vmatmul.mubr.f32.gmra.mxu0 %v969
    %v1037 = vpop.f32.mrf.mxu0
    %v1038 = vadd.f32 0.0, %v1037
    %v1039 = vpop.f32.mrf.mxu0
    %1040 = vdwg.mxu0
    %1042 = vrot.lane.b32.xlu0 %v438, 96
    %v1043 = vpop.permute.xlu0 %1042
    %v1046 = vsel %vm608, %v963, 0
    %1048 = vmatprep.subr.mxu0 0.0
    %1049 = vmatpush1.msra.mxu0 0.0
    %1050 = vmatprep.subr.mxu0 0.0
    %1051 = vmatpush1.msra.mxu0 0.0
    %1052 = vmatprep.subr.mxu0 0.0
    %1053 = vmatpush1.msra.mxu0 0.0
    %1054 = vmatprep.subr.mxu0 0.0
    %1055 = vmatpush1.msra.mxu0 0.0
    %1056 = vmatprep.subr.mxu0 0.0
    %1057 = vmatpush1.msra.mxu0 0.0
    %1058 = vmatprep.subr.mxu0 0.0
    %1059 = vmatpush1.msra.mxu0 0.0
    %1060 = vmatprep.subr.mxu0 0.0
    %1061 = vmatpush1.msra.mxu0 0.0
    %1062 = vmatprep.subr.mxu0 0.0
    %1063 = vmatpush1.msra.mxu0 0.0
    %1064 = vmatprep.subr.mxu0 0.0
    %1065 = vmatpush1.msra.mxu0 0.0
    %1066 = vmatprep.subr.mxu0 0.0
    %1067 = vmatpush1.msra.mxu0 0.0
    %1068 = vmatprep.subr.mxu0 0.0
    %1069 = vmatpush1.msra.mxu0 0.0
    %1070 = vmatprep.subr.mxu0 0.0
    %1071 = vmatpush1.msra.mxu0 0.0
    %1072 = vmatprep.subr.mxu0 0.0
    %1073 = vmatpush1.msra.mxu0 0.0
    %1074 = vmatprep.subr.mxu0 0.0
    %1075 = vmatpush1.msra.mxu0 0.0
    %1076 = vmatprep.subr.mxu0 0.0
    %1077 = vmatpush1.msra.mxu0 0.0
    %1078 = vmatprep.subr.mxu0 0.0
    %1079 = vmatpush1.msra.mxu0 %v1043
    %1080 = vmatprep.subr.mxu0 0.0
    %1081 = vmatpush2.msra.mxu0 0.0
    %1082 = vmatprep.subr.mxu0 0.0
    %1083 = vmatpush2.msra.mxu0 0.0
    %1084 = vmatprep.subr.mxu0 0.0
    %1085 = vmatpush2.msra.mxu0 0.0
    %1086 = vmatprep.subr.mxu0 0.0
    %1087 = vmatpush2.msra.mxu0 0.0
    %1088 = vmatprep.subr.mxu0 0.0
    %1089 = vmatpush2.msra.mxu0 0.0
    %1090 = vmatprep.subr.mxu0 0.0
    %1091 = vmatpush2.msra.mxu0 0.0
    %1092 = vmatprep.subr.mxu0 0.0
    %1093 = vmatpush2.msra.mxu0 0.0
    %1094 = vmatprep.subr.mxu0 0.0
    %1095 = vmatpush2.msra.mxu0 0.0
    %1096 = vmatprep.subr.mxu0 0.0
    %1097 = vmatpush2.msra.mxu0 0.0
    %1098 = vmatprep.subr.mxu0 0.0
    %1099 = vmatpush2.msra.mxu0 0.0
    %1100 = vmatprep.subr.mxu0 0.0
    %1101 = vmatpush2.msra.mxu0 0.0
    %1102 = vmatprep.subr.mxu0 0.0
    %1103 = vmatpush2.msra.mxu0 0.0
    %1104 = vmatprep.subr.mxu0 0.0
    %1105 = vmatpush2.msra.mxu0 0.0
    %1106 = vmatprep.subr.mxu0 0.0
    %1107 = vmatpush2.msra.mxu0 0.0
    %1108 = vmatprep.subr.mxu0 0.0
    %1109 = vmatpush2.msra.mxu0 0.0
    %1110 = vmatprep.subr.mxu0 0.0
    %1111 = vmatpush2.msra.mxu0 0.0
    %1112 = vmatprep.mubr.f32.mxu0 0.0
    %1113 = vmatmul.mubr.f32.gmra.mxu0 %v1046
    %v1114 = vpop.f32.mrf.mxu0
    %v1115 = vadd.f32 0.0, %v1114
    %v1116 = vpop.f32.mrf.mxu0
    %1117 = vdwg.mxu0
    %v1118 = vpack.c.bf16 %v1115, %v1038
    %s1119 = scalar_lea.vmem [#allocation6], 16
    %v1120 = vld [vmem:[%s1119] sm:$0xf]
    %v1121 = vld [vmem:[%s1119 + $0x4] sm:$0xf]
    %v1122 = vld [vmem:[%s1119 + $0x8] sm:$0xf]
    %v1123 = vld [vmem:[%s1119 + $0xc] sm:$0xf]
    %v1128 = vunpack.c.l.b16 %v1120
    %v1129 = vunpack.c.l.b16 %v1121
    %v1130 = vunpack.c.l.b16 %v1122
    %v1131 = vunpack.c.l.b16 %v1123
    %v1132 = vpack.c.b16 %v1129, %v1128
    %v1133 = vpack.c.b16 %v1131, %v1130
    %v1137 = vsel %vm441, %v1118, 0
    %1139 = vmatprep.subr.bf16.mxu0 0
    %1140 = vmatpush1.bf16.msra.mxu0 0
    %1141 = vmatprep.subr.bf16.mxu0 0
    %1142 = vmatpush1.bf16.msra.mxu0 0
    %1143 = vmatprep.subr.bf16.mxu0 0
    %1144 = vmatpush1.bf16.msra.mxu0 0
    %1145 = vmatprep.subr.bf16.mxu0 0
    %1146 = vmatpush1.bf16.msra.mxu0 0
    %1147 = vmatprep.subr.bf16.mxu0 0
    %1148 = vmatpush1.bf16.msra.mxu0 0
    %1149 = vmatprep.subr.bf16.mxu0 0
    %1150 = vmatpush1.bf16.msra.mxu0 0
    %1151 = vmatprep.subr.bf16.mxu0 0
    %1152 = vmatpush1.bf16.msra.mxu0 %v1133
    %1153 = vmatprep.subr.bf16.mxu0 0
    %1154 = vmatpush1.bf16.msra.mxu0 %v1132
    %1155 = vmatprep.subr.bf16.mxu0 0
    %1156 = vmatpush2.bf16.msra.mxu0 0
    %1157 = vmatprep.subr.bf16.mxu0 0
    %1158 = vmatpush2.bf16.msra.mxu0 0
    %1159 = vmatprep.subr.bf16.mxu0 0
    %1160 = vmatpush2.bf16.msra.mxu0 0
    %1161 = vmatprep.subr.bf16.mxu0 0
    %1162 = vmatpush2.bf16.msra.mxu0 0
    %1163 = vmatprep.subr.bf16.mxu0 0
    %1164 = vmatpush2.bf16.msra.mxu0 0
    %1165 = vmatprep.subr.bf16.mxu0 0
    %1166 = vmatpush2.bf16.msra.mxu0 0
    %1167 = vmatprep.subr.bf16.mxu0 0
    %1168 = vmatpush2.bf16.msra.mxu0 0
    %1169 = vmatprep.subr.bf16.mxu0 0
    %1170 = vmatpush2.bf16.msra.mxu0 0
    %1171 = vmatprep.mubr.bf16.mxu0 0
    %1172 = vmatmul.mubr.bf16.gmra.mxu0 %v1137
    %v1173 = vpop.f32.mrf.mxu0
    %v1174 = vadd.f32 0.0, %v1173
    %v1175 = vpop.f32.mrf.mxu0
    %v1176 = vpop.f32.mrf.mxu0
    %v1177 = vadd.f32 0.0, %v1176
    %v1178 = vpop.f32.mrf.mxu0
    %1179 = vdwg.mxu0
    %v1184 = vunpack.c.l.b16 %v778
    %v1185 = vunpack.c.l.b16 %v779
    %v1186 = vunpack.c.l.b16 %v780
    %v1187 = vunpack.c.l.b16 %v781
    %v1188 = vpack.c.b16 %v1185, %v1184
    %v1189 = vpack.c.b16 %v1187, %v1186
    %v1193 = vsel %vm441, %v777, 0
    %1195 = vmatprep.subr.bf16.mxu0 0
    %1196 = vmatpush1.bf16.msra.mxu0 0
    %1197 = vmatprep.subr.bf16.mxu0 0
    %1198 = vmatpush1.bf16.msra.mxu0 0
    %1199 = vmatprep.subr.bf16.mxu0 0
    %1200 = vmatpush1.bf16.msra.mxu0 0
    %1201 = vmatprep.subr.bf16.mxu0 0
    %1202 = vmatpush1.bf16.msra.mxu0 0
    %1203 = vmatprep.subr.bf16.mxu0 0
    %1204 = vmatpush1.bf16.msra.mxu0 0
    %1205 = vmatprep.subr.bf16.mxu0 0
    %1206 = vmatpush1.bf16.msra.mxu0 0
    %1207 = vmatprep.subr.bf16.mxu0 0
    %1208 = vmatpush1.bf16.msra.mxu0 %v1189
    %1209 = vmatprep.subr.bf16.mxu0 0
    %1210 = vmatpush1.bf16.msra.mxu0 %v1188
    %1211 = vmatprep.subr.bf16.mxu0 0
    %1212 = vmatpush2.bf16.msra.mxu0 0
    %1213 = vmatprep.subr.bf16.mxu0 0
    %1214 = vmatpush2.bf16.msra.mxu0 0
    %1215 = vmatprep.subr.bf16.mxu0 0
    %1216 = vmatpush2.bf16.msra.mxu0 0
    %1217 = vmatprep.subr.bf16.mxu0 0
    %1218 = vmatpush2.bf16.msra.mxu0 0
    %1219 = vmatprep.subr.bf16.mxu0 0
    %1220 = vmatpush2.bf16.msra.mxu0 0
    %1221 = vmatprep.subr.bf16.mxu0 0
    %1222 = vmatpush2.bf16.msra.mxu0 0
    %1223 = vmatprep.subr.bf16.mxu0 0
    %1224 = vmatpush2.bf16.msra.mxu0 0
    %1225 = vmatprep.subr.bf16.mxu0 0
    %1226 = vmatpush2.bf16.msra.mxu0 0
    %1227 = vmatprep.mubr.bf16.mxu0 0
    %1228 = vmatmul.mubr.bf16.gmra.mxu0 %v1193
    %v1229 = vpop.f32.mrf.mxu0
    %v1230 = vadd.f32 %v1174, %v1229
    %v1231 = vpop.f32.mrf.mxu0
    %v1232 = vpop.f32.mrf.mxu0
    %v1233 = vadd.f32 %v1177, %v1232
    %v1234 = vpop.f32.mrf.mxu0
    %1235 = vdwg.mxu0
    %1236 = vrot.lane.b32.xlu0 %v392, 64
    %v1237 = vpop.permute.xlu0 %1236
    %1238 = vrot.lane.b32.xlu0 %v394, 64
    %v1239 = vpop.permute.xlu0 %1238
    %v1240 = vsel %vm441, %v1237, 0
    %v1242 = vsel %vm441, %v1239, 0
    %1244 = vmatprep.subr.mxu0 0.0
    %1245 = vmatpush1.xpose.msra.mxu0 0.0
    %1246 = vmatprep.subr.mxu0 0.0
    %1247 = vmatpush1.xpose.msra.mxu0 0.0
    %1248 = vmatprep.subr.mxu0 0.0
    %1249 = vmatpush1.xpose.msra.mxu0 0.0
    %1250 = vmatprep.subr.mxu0 0.0
    %1251 = vmatpush1.xpose.msra.mxu0 0.0
    %1252 = vmatprep.subr.mxu0 0.0
    %1253 = vmatpush1.xpose.msra.mxu0 0.0
    %1254 = vmatprep.subr.mxu0 0.0
    %1255 = vmatpush1.xpose.msra.mxu0 0.0
    %1256 = vmatprep.subr.mxu0 0.0
    %1257 = vmatpush1.xpose.msra.mxu0 0.0
    %1258 = vmatprep.subr.mxu0 0.0
    %1259 = vmatpush1.xpose.msra.mxu0 0.0
    %1260 = vmatprep.subr.mxu0 0.0
    %1261 = vmatpush1.xpose.msra.mxu0 0.0
    %1262 = vmatprep.subr.mxu0 0.0
    %1263 = vmatpush1.xpose.msra.mxu0 0.0
    %1264 = vmatprep.subr.mxu0 0.0
    %1265 = vmatpush1.xpose.msra.mxu0 0.0
    %1266 = vmatprep.subr.mxu0 0.0
    %1267 = vmatpush1.xpose.msra.mxu0 0.0
    %1268 = vmatprep.subr.mxu0 0.0
    %1269 = vmatpush1.xpose.msra.mxu0 0.0
    %1270 = vmatprep.subr.mxu0 0.0
    %1271 = vmatpush1.xpose.msra.mxu0 0.0
    %1272 = vmatprep.subr.mxu0 0.0
    %1273 = vmatpush1.xpose.msra.mxu0 0.0
    %1274 = vmatprep.subr.mxu0 0.0
    %1275 = vmatpush1.xpose.msra.mxu0 %v1242
    %1276 = vmatprep.subr.mxu0 0.0
    %1277 = vmatpush2.xpose.msra.mxu0 0.0
    %1278 = vmatprep.subr.mxu0 0.0
    %1279 = vmatpush2.xpose.msra.mxu0 0.0
    %1280 = vmatprep.subr.mxu0 0.0
    %1281 = vmatpush2.xpose.msra.mxu0 0.0
    %1282 = vmatprep.subr.mxu0 0.0
    %1283 = vmatpush2.xpose.msra.mxu0 0.0
    %1284 = vmatprep.subr.mxu0 0.0
    %1285 = vmatpush2.xpose.msra.mxu0 0.0
    %1286 = vmatprep.subr.mxu0 0.0
    %1287 = vmatpush2.xpose.msra.mxu0 0.0
    %1288 = vmatprep.subr.mxu0 0.0
    %1289 = vmatpush2.xpose.msra.mxu0 0.0
    %1290 = vmatprep.subr.mxu0 0.0
    %1291 = vmatpush2.xpose.msra.mxu0 0.0
    %1292 = vmatprep.subr.mxu0 0.0
    %1293 = vmatpush2.xpose.msra.mxu0 0.0
    %1294 = vmatprep.subr.mxu0 0.0
    %1295 = vmatpush2.xpose.msra.mxu0 0.0
    %1296 = vmatprep.subr.mxu0 0.0
    %1297 = vmatpush2.xpose.msra.mxu0 0.0
    %1298 = vmatprep.subr.mxu0 0.0
    %1299 = vmatpush2.xpose.msra.mxu0 0.0
    %1300 = vmatprep.subr.mxu0 0.0
    %1301 = vmatpush2.xpose.msra.mxu0 0.0
    %1302 = vmatprep.subr.mxu0 0.0
    %1303 = vmatpush2.xpose.msra.mxu0 0.0
    %1304 = vmatprep.subr.mxu0 0.0
    %1305 = vmatpush2.xpose.msra.mxu0 0.0
    %1306 = vmatprep.subr.mxu0 0.0
    %1307 = vmatpush2.xpose.msra.mxu0 0.0
    %1308 = vmatprep.mubr.f32.mxu0 0.0
    %1309 = vmatmul.mubr.f32.gmra.mxu0 %v1240
    %v1310 = vpop.f32.mrf.mxu0
    %v1311 = vadd.f32 0.0, %v1310
    %v1312 = vpop.f32.mrf.mxu0
    %1313 = vdwg.mxu0
    %1314 = vrot.lane.b32.xlu0 %v396, 64
    %v1315 = vpop.permute.xlu0 %1314
    %1316 = vrot.lane.b32.xlu0 %v398, 64
    %v1317 = vpop.permute.xlu0 %1316
    %v1318 = vsel %vm441, %v1315, 0
    %v1320 = vsel %vm441, %v1317, 0
    %1322 = vmatprep.subr.mxu0 0.0
    %1323 = vmatpush1.xpose.msra.mxu0 0.0
    %1324 = vmatprep.subr.mxu0 0.0
    %1325 = vmatpush1.xpose.msra.mxu0 0.0
    %1326 = vmatprep.subr.mxu0 0.0
    %1327 = vmatpush1.xpose.msra.mxu0 0.0
    %1328 = vmatprep.subr.mxu0 0.0
    %1329 = vmatpush1.xpose.msra.mxu0 0.0
    %1330 = vmatprep.subr.mxu0 0.0
    %1331 = vmatpush1.xpose.msra.mxu0 0.0
    %1332 = vmatprep.subr.mxu0 0.0
    %1333 = vmatpush1.xpose.msra.mxu0 0.0
    %1334 = vmatprep.subr.mxu0 0.0
    %1335 = vmatpush1.xpose.msra.mxu0 0.0
    %1336 = vmatprep.subr.mxu0 0.0
    %1337 = vmatpush1.xpose.msra.mxu0 0.0
    %1338 = vmatprep.subr.mxu0 0.0
    %1339 = vmatpush1.xpose.msra.mxu0 0.0
    %1340 = vmatprep.subr.mxu0 0.0
    %1341 = vmatpush1.xpose.msra.mxu0 0.0
    %1342 = vmatprep.subr.mxu0 0.0
    %1343 = vmatpush1.xpose.msra.mxu0 0.0
    %1344 = vmatprep.subr.mxu0 0.0
    %1345 = vmatpush1.xpose.msra.mxu0 0.0
    %1346 = vmatprep.subr.mxu0 0.0
    %1347 = vmatpush1.xpose.msra.mxu0 0.0
    %1348 = vmatprep.subr.mxu0 0.0
    %1349 = vmatpush1.xpose.msra.mxu0 0.0
    %1350 = vmatprep.subr.mxu0 0.0
    %1351 = vmatpush1.xpose.msra.mxu0 0.0
    %1352 = vmatprep.subr.mxu0 0.0
    %1353 = vmatpush1.xpose.msra.mxu0 %v1320
    %1354 = vmatprep.subr.mxu0 0.0
    %1355 = vmatpush2.xpose.msra.mxu0 0.0
    %1356 = vmatprep.subr.mxu0 0.0
    %1357 = vmatpush2.xpose.msra.mxu0 0.0
    %1358 = vmatprep.subr.mxu0 0.0
    %1359 = vmatpush2.xpose.msra.mxu0 0.0
    %1360 = vmatprep.subr.mxu0 0.0
    %1361 = vmatpush2.xpose.msra.mxu0 0.0
    %1362 = vmatprep.subr.mxu0 0.0
    %1363 = vmatpush2.xpose.msra.mxu0 0.0
    %1364 = vmatprep.subr.mxu0 0.0
    %1365 = vmatpush2.xpose.msra.mxu0 0.0
    %1366 = vmatprep.subr.mxu0 0.0
    %1367 = vmatpush2.xpose.msra.mxu0 0.0
    %1368 = vmatprep.subr.mxu0 0.0
    %1369 = vmatpush2.xpose.msra.mxu0 0.0
    %1370 = vmatprep.subr.mxu0 0.0
    %1371 = vmatpush2.xpose.msra.mxu0 0.0
    %1372 = vmatprep.subr.mxu0 0.0
    %1373 = vmatpush2.xpose.msra.mxu0 0.0
    %1374 = vmatprep.subr.mxu0 0.0
    %1375 = vmatpush2.xpose.msra.mxu0 0.0
    %1376 = vmatprep.subr.mxu0 0.0
    %1377 = vmatpush2.xpose.msra.mxu0 0.0
    %1378 = vmatprep.subr.mxu0 0.0
    %1379 = vmatpush2.xpose.msra.mxu0 0.0
    %1380 = vmatprep.subr.mxu0 0.0
    %1381 = vmatpush2.xpose.msra.mxu0 0.0
    %1382 = vmatprep.subr.mxu0 0.0
    %1383 = vmatpush2.xpose.msra.mxu0 0.0
    %1384 = vmatprep.subr.mxu0 0.0
    %1385 = vmatpush2.xpose.msra.mxu0 0.0
    %1386 = vmatprep.mubr.f32.mxu0 0.0
    %1387 = vmatmul.mubr.f32.gmra.mxu0 %v1318
    %v1388 = vpop.f32.mrf.mxu0
    %v1389 = vadd.f32 0.0, %v1388
    %v1390 = vpop.f32.mrf.mxu0
    %1391 = vdwg.mxu0
    %v1392 = vmul.f32 %v1311, 0.17677669
    %v1393 = vmul.f32 %v1389, 0.17677669
    %v1394 = vadd.f32 %v1392, %v599
    %v1395 = vadd.f32 %v1393, %v603
    %v1396 = vsel %vm608, %v1394, -inf
    %1397 = vmax.xlane.f32.xlu0 %v1396
    %v1398 = vpop.xlane.xlu0 %1397
    %v1399 = vsel %vm608, %v1395, -inf
    %1400 = vmax.xlane.f32.xlu0 %v1399
    %v1401 = vpop.xlane.xlu0 %1400
    %v1402 = vsub.f32 %v1394, %v1398
    %v1403 = vsub.f32 %v1395, %v1401
    %v1404 = vmul.f32 %v1402, 1.442695
    %v1405 = vpow.pop %v1404
    %v1406 = vmul.f32 %v1403, 1.442695
    %v1407 = vpow.pop %v1406
    %v1408 = vsel %vm608, %v1405, 0.0
    %1409 = vadd.xlane.f32.xlu0 %v1408
    %v1410 = vpop.xlane.xlu0 %1409
    %v1411 = vsel %vm608, %v1407, 0.0
    %1412 = vadd.xlane.f32.xlu0 %v1411
    %v1413 = vpop.xlane.xlu0 %1412
    %v1414 = vrcp.pop %v1410
    %v1415 = vmul.f32 %v1405, %v1414
    %v1416 = vrcp.pop %v1413
    %v1417 = vmul.f32 %v1407, %v1416
    %1418 = vrot.lane.b32.xlu0 %v435, 64
    %v1419 = vpop.permute.xlu0 %1418
    %v1422 = vsel %vm608, %v1415, 0
    %1424 = vmatprep.subr.mxu0 0.0
    %1425 = vmatpush1.msra.mxu0 0.0
    %1426 = vmatprep.subr.mxu0 0.0
    %1427 = vmatpush1.msra.mxu0 0.0
    %1428 = vmatprep.subr.mxu0 0.0
    %1429 = vmatpush1.msra.mxu0 0.0
    %1430 = vmatprep.subr.mxu0 0.0
    %1431 = vmatpush1.msra.mxu0 0.0
    %1432 = vmatprep.subr.mxu0 0.0
    %1433 = vmatpush1.msra.mxu0 0.0
    %1434 = vmatprep.subr.mxu0 0.0
    %1435 = vmatpush1.msra.mxu0 0.0
    %1436 = vmatprep.subr.mxu0 0.0
    %1437 = vmatpush1.msra.mxu0 0.0
    %1438 = vmatprep.subr.mxu0 0.0
    %1439 = vmatpush1.msra.mxu0 0.0
    %1440 = vmatprep.subr.mxu0 0.0
    %1441 = vmatpush1.msra.mxu0 0.0
    %1442 = vmatprep.subr.mxu0 0.0
    %1443 = vmatpush1.msra.mxu0 0.0
    %1444 = vmatprep.subr.mxu0 0.0
    %1445 = vmatpush1.msra.mxu0 0.0
    %1446 = vmatprep.subr.mxu0 0.0
    %1447 = vmatpush1.msra.mxu0 0.0
    %1448 = vmatprep.subr.mxu0 0.0
    %1449 = vmatpush1.msra.mxu0 0.0
    %1450 = vmatprep.subr.mxu0 0.0
    %1451 = vmatpush1.msra.mxu0 0.0
    %1452 = vmatprep.subr.mxu0 0.0
    %1453 = vmatpush1.msra.mxu0 0.0
    %1454 = vmatprep.subr.mxu0 0.0
    %1455 = vmatpush1.msra.mxu0 %v1419
    %1456 = vmatprep.subr.mxu0 0.0
    %1457 = vmatpush2.msra.mxu0 0.0
    %1458 = vmatprep.subr.mxu0 0.0
    %1459 = vmatpush2.msra.mxu0 0.0
    %1460 = vmatprep.subr.mxu0 0.0
    %1461 = vmatpush2.msra.mxu0 0.0
    %1462 = vmatprep.subr.mxu0 0.0
    %1463 = vmatpush2.msra.mxu0 0.0
    %1464 = vmatprep.subr.mxu0 0.0
    %1465 = vmatpush2.msra.mxu0 0.0
    %1466 = vmatprep.subr.mxu0 0.0
    %1467 = vmatpush2.msra.mxu0 0.0
    %1468 = vmatprep.subr.mxu0 0.0
    %1469 = vmatpush2.msra.mxu0 0.0
    %1470 = vmatprep.subr.mxu0 0.0
    %1471 = vmatpush2.msra.mxu0 0.0
    %1472 = vmatprep.subr.mxu0 0.0
    %1473 = vmatpush2.msra.mxu0 0.0
    %1474 = vmatprep.subr.mxu0 0.0
    %1475 = vmatpush2.msra.mxu0 0.0
    %1476 = vmatprep.subr.mxu0 0.0
    %1477 = vmatpush2.msra.mxu0 0.0
    %1478 = vmatprep.subr.mxu0 0.0
    %1479 = vmatpush2.msra.mxu0 0.0
    %1480 = vmatprep.subr.mxu0 0.0
    %1481 = vmatpush2.msra.mxu0 0.0
    %1482 = vmatprep.subr.mxu0 0.0
    %1483 = vmatpush2.msra.mxu0 0.0
    %1484 = vmatprep.subr.mxu0 0.0
    %1485 = vmatpush2.msra.mxu0 0.0
    %1486 = vmatprep.subr.mxu0 0.0
    %1487 = vmatpush2.msra.mxu0 0.0
    %1488 = vmatprep.mubr.f32.mxu0 0.0
    %1489 = vmatmul.mubr.f32.gmra.mxu0 %v1422
    %v1490 = vpop.f32.mrf.mxu0
    %v1491 = vadd.f32 0.0, %v1490
    %v1492 = vpop.f32.mrf.mxu0
    %1493 = vdwg.mxu0
    %1494 = vrot.lane.b32.xlu0 %v438, 64
    %v1495 = vpop.permute.xlu0 %1494
    %v1498 = vsel %vm608, %v1417, 0
    %1500 = vmatprep.subr.mxu0 0.0
    %1501 = vmatpush1.msra.mxu0 0.0
    %1502 = vmatprep.subr.mxu0 0.0
    %1503 = vmatpush1.msra.mxu0 0.0
    %1504 = vmatprep.subr.mxu0 0.0
    %1505 = vmatpush1.msra.mxu0 0.0
    %1506 = vmatprep.subr.mxu0 0.0
    %1507 = vmatpush1.msra.mxu0 0.0
    %1508 = vmatprep.subr.mxu0 0.0
    %1509 = vmatpush1.msra.mxu0 0.0
    %1510 = vmatprep.subr.mxu0 0.0
    %1511 = vmatpush1.msra.mxu0 0.0
    %1512 = vmatprep.subr.mxu0 0.0
    %1513 = vmatpush1.msra.mxu0 0.0
    %1514 = vmatprep.subr.mxu0 0.0
    %1515 = vmatpush1.msra.mxu0 0.0
    %1516 = vmatprep.subr.mxu0 0.0
    %1517 = vmatpush1.msra.mxu0 0.0
    %1518 = vmatprep.subr.mxu0 0.0
    %1519 = vmatpush1.msra.mxu0 0.0
    %1520 = vmatprep.subr.mxu0 0.0
    %1521 = vmatpush1.msra.mxu0 0.0
    %1522 = vmatprep.subr.mxu0 0.0
    %1523 = vmatpush1.msra.mxu0 0.0
    %1524 = vmatprep.subr.mxu0 0.0
    %1525 = vmatpush1.msra.mxu0 0.0
    %1526 = vmatprep.subr.mxu0 0.0
    %1527 = vmatpush1.msra.mxu0 0.0
    %1528 = vmatprep.subr.mxu0 0.0
    %1529 = vmatpush1.msra.mxu0 0.0
    %1530 = vmatprep.subr.mxu0 0.0
    %1531 = vmatpush1.msra.mxu0 %v1495
    %1532 = vmatprep.subr.mxu0 0.0
    %1533 = vmatpush2.msra.mxu0 0.0
    %1534 = vmatprep.subr.mxu0 0.0
    %1535 = vmatpush2.msra.mxu0 0.0
    %1536 = vmatprep.subr.mxu0 0.0
    %1537 = vmatpush2.msra.mxu0 0.0
    %1538 = vmatprep.subr.mxu0 0.0
    %1539 = vmatpush2.msra.mxu0 0.0
    %1540 = vmatprep.subr.mxu0 0.0
    %1541 = vmatpush2.msra.mxu0 0.0
    %1542 = vmatprep.subr.mxu0 0.0
    %1543 = vmatpush2.msra.mxu0 0.0
    %1544 = vmatprep.subr.mxu0 0.0
    %1545 = vmatpush2.msra.mxu0 0.0
    %1546 = vmatprep.subr.mxu0 0.0
    %1547 = vmatpush2.msra.mxu0 0.0
    %1548 = vmatprep.subr.mxu0 0.0
    %1549 = vmatpush2.msra.mxu0 0.0
    %1550 = vmatprep.subr.mxu0 0.0
    %1551 = vmatpush2.msra.mxu0 0.0
    %1552 = vmatprep.subr.mxu0 0.0
    %1553 = vmatpush2.msra.mxu0 0.0
    %1554 = vmatprep.subr.mxu0 0.0
    %1555 = vmatpush2.msra.mxu0 0.0
    %1556 = vmatprep.subr.mxu0 0.0
    %1557 = vmatpush2.msra.mxu0 0.0
    %1558 = vmatprep.subr.mxu0 0.0
    %1559 = vmatpush2.msra.mxu0 0.0
    %1560 = vmatprep.subr.mxu0 0.0
    %1561 = vmatpush2.msra.mxu0 0.0
    %1562 = vmatprep.subr.mxu0 0.0
    %1563 = vmatpush2.msra.mxu0 0.0
    %1564 = vmatprep.mubr.f32.mxu0 0.0
    %1565 = vmatmul.mubr.f32.gmra.mxu0 %v1498
    %v1566 = vpop.f32.mrf.mxu0
    %v1567 = vadd.f32 0.0, %v1566
    %v1568 = vpop.f32.mrf.mxu0
    %1569 = vdwg.mxu0
    %v1570 = vpack.c.bf16 %v1567, %v1491
    %s1571 = scalar_lea.vmem [#allocation6], 32
    %v1572 = vld [vmem:[%s1571] sm:$0xf]
    %v1573 = vld [vmem:[%s1571 + $0x4] sm:$0xf]
    %v1574 = vld [vmem:[%s1571 + $0x8] sm:$0xf]
    %v1575 = vld [vmem:[%s1571 + $0xc] sm:$0xf]
    %v1580 = vunpack.c.l.b16 %v1572
    %v1581 = vunpack.c.l.b16 %v1573
    %v1582 = vunpack.c.l.b16 %v1574
    %v1583 = vunpack.c.l.b16 %v1575
    %v1584 = vpack.c.b16 %v1581, %v1580
    %v1585 = vpack.c.b16 %v1583, %v1582
    %v1589 = vsel %vm441, %v1570, 0
    %1591 = vmatprep.subr.bf16.mxu0 0
    %1592 = vmatpush1.bf16.msra.mxu0 0
    %1593 = vmatprep.subr.bf16.mxu0 0
    %1594 = vmatpush1.bf16.msra.mxu0 0
    %1595 = vmatprep.subr.bf16.mxu0 0
    %1596 = vmatpush1.bf16.msra.mxu0 0
    %1597 = vmatprep.subr.bf16.mxu0 0
    %1598 = vmatpush1.bf16.msra.mxu0 0
    %1599 = vmatprep.subr.bf16.mxu0 0
    %1600 = vmatpush1.bf16.msra.mxu0 0
    %1601 = vmatprep.subr.bf16.mxu0 0
    %1602 = vmatpush1.bf16.msra.mxu0 0
    %1603 = vmatprep.subr.bf16.mxu0 0
    %1604 = vmatpush1.bf16.msra.mxu0 %v1585
    %1605 = vmatprep.subr.bf16.mxu0 0
    %1606 = vmatpush1.bf16.msra.mxu0 %v1584
    %1607 = vmatprep.subr.bf16.mxu0 0
    %1608 = vmatpush2.bf16.msra.mxu0 0
    %1609 = vmatprep.subr.bf16.mxu0 0
    %1610 = vmatpush2.bf16.msra.mxu0 0
    %1611 = vmatprep.subr.bf16.mxu0 0
    %1612 = vmatpush2.bf16.msra.mxu0 0
    %1613 = vmatprep.subr.bf16.mxu0 0
    %1614 = vmatpush2.bf16.msra.mxu0 0
    %1615 = vmatprep.subr.bf16.mxu0 0
    %1616 = vmatpush2.bf16.msra.mxu0 0
    %1617 = vmatprep.subr.bf16.mxu0 0
    %1618 = vmatpush2.bf16.msra.mxu0 0
    %1619 = vmatprep.subr.bf16.mxu0 0
    %1620 = vmatpush2.bf16.msra.mxu0 0
    %1621 = vmatprep.subr.bf16.mxu0 0
    %1622 = vmatpush2.bf16.msra.mxu0 0
    %1623 = vmatprep.mubr.bf16.mxu0 0
    %1624 = vmatmul.mubr.bf16.gmra.mxu0 %v1589
    %v1625 = vpop.f32.mrf.mxu0
    %v1626 = vadd.f32 0.0, %v1625
    %v1627 = vpop.f32.mrf.mxu0
    %v1628 = vpop.f32.mrf.mxu0
    %v1629 = vadd.f32 0.0, %v1628
    %v1630 = vpop.f32.mrf.mxu0
    %1631 = vdwg.mxu0
    %v1632 = vadd.f32 %v1230, %v1626
    %v1633 = vadd.f32 %v1233, %v1629
    %1634 = vrot.lane.b32.xlu0 %v392, 32
    %v1635 = vpop.permute.xlu0 %1634
    %1636 = vrot.lane.b32.xlu0 %v394, 32
    %v1637 = vpop.permute.xlu0 %1636
    %v1638 = vsel %vm441, %v1635, 0
    %v1640 = vsel %vm441, %v1637, 0
    %1642 = vmatprep.subr.mxu0 0.0
    %1643 = vmatpush1.xpose.msra.mxu0 0.0
    %1644 = vmatprep.subr.mxu0 0.0
    %1645 = vmatpush1.xpose.msra.mxu0 0.0
    %1646 = vmatprep.subr.mxu0 0.0
    %1647 = vmatpush1.xpose.msra.mxu0 0.0
    %1648 = vmatprep.subr.mxu0 0.0
    %1649 = vmatpush1.xpose.msra.mxu0 0.0
    %1650 = vmatprep.subr.mxu0 0.0
    %1651 = vmatpush1.xpose.msra.mxu0 0.0
    %1652 = vmatprep.subr.mxu0 0.0
    %1653 = vmatpush1.xpose.msra.mxu0 0.0
    %1654 = vmatprep.subr.mxu0 0.0
    %1655 = vmatpush1.xpose.msra.mxu0 0.0
    %1656 = vmatprep.subr.mxu0 0.0
    %1657 = vmatpush1.xpose.msra.mxu0 0.0
    %1658 = vmatprep.subr.mxu0 0.0
    %1659 = vmatpush1.xpose.msra.mxu0 0.0
    %1660 = vmatprep.subr.mxu0 0.0
    %1661 = vmatpush1.xpose.msra.mxu0 0.0
    %1662 = vmatprep.subr.mxu0 0.0
    %1663 = vmatpush1.xpose.msra.mxu0 0.0
    %1664 = vmatprep.subr.mxu0 0.0
    %1665 = vmatpush1.xpose.msra.mxu0 0.0
    %1666 = vmatprep.subr.mxu0 0.0
    %1667 = vmatpush1.xpose.msra.mxu0 0.0
    %1668 = vmatprep.subr.mxu0 0.0
    %1669 = vmatpush1.xpose.msra.mxu0 0.0
    %1670 = vmatprep.subr.mxu0 0.0
    %1671 = vmatpush1.xpose.msra.mxu0 0.0
    %1672 = vmatprep.subr.mxu0 0.0
    %1673 = vmatpush1.xpose.msra.mxu0 %v1640
    %1674 = vmatprep.subr.mxu0 0.0
    %1675 = vmatpush2.xpose.msra.mxu0 0.0
    %1676 = vmatprep.subr.mxu0 0.0
    %1677 = vmatpush2.xpose.msra.mxu0 0.0
    %1678 = vmatprep.subr.mxu0 0.0
    %1679 = vmatpush2.xpose.msra.mxu0 0.0
    %1680 = vmatprep.subr.mxu0 0.0
    %1681 = vmatpush2.xpose.msra.mxu0 0.0
    %1682 = vmatprep.subr.mxu0 0.0
    %1683 = vmatpush2.xpose.msra.mxu0 0.0
    %1684 = vmatprep.subr.mxu0 0.0
    %1685 = vmatpush2.xpose.msra.mxu0 0.0
    %1686 = vmatprep.subr.mxu0 0.0
    %1687 = vmatpush2.xpose.msra.mxu0 0.0
    %1688 = vmatprep.subr.mxu0 0.0
    %1689 = vmatpush2.xpose.msra.mxu0 0.0
    %1690 = vmatprep.subr.mxu0 0.0
    %1691 = vmatpush2.xpose.msra.mxu0 0.0
    %1692 = vmatprep.subr.mxu0 0.0
    %1693 = vmatpush2.xpose.msra.mxu0 0.0
    %1694 = vmatprep.subr.mxu0 0.0
    %1695 = vmatpush2.xpose.msra.mxu0 0.0
    %1696 = vmatprep.subr.mxu0 0.0
    %1697 = vmatpush2.xpose.msra.mxu0 0.0
    %1698 = vmatprep.subr.mxu0 0.0
    %1699 = vmatpush2.xpose.msra.mxu0 0.0
    %1700 = vmatprep.subr.mxu0 0.0
    %1701 = vmatpush2.xpose.msra.mxu0 0.0
    %1702 = vmatprep.subr.mxu0 0.0
    %1703 = vmatpush2.xpose.msra.mxu0 0.0
    %1704 = vmatprep.subr.mxu0 0.0
    %1705 = vmatpush2.xpose.msra.mxu0 0.0
    %1706 = vmatprep.mubr.f32.mxu0 0.0
    %1707 = vmatmul.mubr.f32.gmra.mxu0 %v1638
    %v1708 = vpop.f32.mrf.mxu0
    %v1709 = vadd.f32 0.0, %v1708
    %v1710 = vpop.f32.mrf.mxu0
    %1711 = vdwg.mxu0
    %1712 = vrot.lane.b32.xlu0 %v396, 32
    %v1713 = vpop.permute.xlu0 %1712
    %1714 = vrot.lane.b32.xlu0 %v398, 32
    %v1715 = vpop.permute.xlu0 %1714
    %v1716 = vsel %vm441, %v1713, 0
    %v1718 = vsel %vm441, %v1715, 0
    %1720 = vmatprep.subr.mxu0 0.0
    %1721 = vmatpush1.xpose.msra.mxu0 0.0
    %1722 = vmatprep.subr.mxu0 0.0
    %1723 = vmatpush1.xpose.msra.mxu0 0.0
    %1724 = vmatprep.subr.mxu0 0.0
    %1725 = vmatpush1.xpose.msra.mxu0 0.0
    %1726 = vmatprep.subr.mxu0 0.0
    %1727 = vmatpush1.xpose.msra.mxu0 0.0
    %1728 = vmatprep.subr.mxu0 0.0
    %1729 = vmatpush1.xpose.msra.mxu0 0.0
    %1730 = vmatprep.subr.mxu0 0.0
    %1731 = vmatpush1.xpose.msra.mxu0 0.0
    %1732 = vmatprep.subr.mxu0 0.0
    %1733 = vmatpush1.xpose.msra.mxu0 0.0
    %1734 = vmatprep.subr.mxu0 0.0
    %1735 = vmatpush1.xpose.msra.mxu0 0.0
    %1736 = vmatprep.subr.mxu0 0.0
    %1737 = vmatpush1.xpose.msra.mxu0 0.0
    %1738 = vmatprep.subr.mxu0 0.0
    %1739 = vmatpush1.xpose.msra.mxu0 0.0
    %1740 = vmatprep.subr.mxu0 0.0
    %1741 = vmatpush1.xpose.msra.mxu0 0.0
    %1742 = vmatprep.subr.mxu0 0.0
    %1743 = vmatpush1.xpose.msra.mxu0 0.0
    %1744 = vmatprep.subr.mxu0 0.0
    %1745 = vmatpush1.xpose.msra.mxu0 0.0
    %1746 = vmatprep.subr.mxu0 0.0
    %1747 = vmatpush1.xpose.msra.mxu0 0.0
    %1748 = vmatprep.subr.mxu0 0.0
    %1749 = vmatpush1.xpose.msra.mxu0 0.0
    %1750 = vmatprep.subr.mxu0 0.0
    %1751 = vmatpush1.xpose.msra.mxu0 %v1718
    %1752 = vmatprep.subr.mxu0 0.0
    %1753 = vmatpush2.xpose.msra.mxu0 0.0
    %1754 = vmatprep.subr.mxu0 0.0
    %1755 = vmatpush2.xpose.msra.mxu0 0.0
    %1756 = vmatprep.subr.mxu0 0.0
    %1757 = vmatpush2.xpose.msra.mxu0 0.0
    %1758 = vmatprep.subr.mxu0 0.0
    %1759 = vmatpush2.xpose.msra.mxu0 0.0
    %1760 = vmatprep.subr.mxu0 0.0
    %1761 = vmatpush2.xpose.msra.mxu0 0.0
    %1762 = vmatprep.subr.mxu0 0.0
    %1763 = vmatpush2.xpose.msra.mxu0 0.0
    %1764 = vmatprep.subr.mxu0 0.0
    %1765 = vmatpush2.xpose.msra.mxu0 0.0
    %1766 = vmatprep.subr.mxu0 0.0
    %1767 = vmatpush2.xpose.msra.mxu0 0.0
    %1768 = vmatprep.subr.mxu0 0.0
    %1769 = vmatpush2.xpose.msra.mxu0 0.0
    %1770 = vmatprep.subr.mxu0 0.0
    %1771 = vmatpush2.xpose.msra.mxu0 0.0
    %1772 = vmatprep.subr.mxu0 0.0
    %1773 = vmatpush2.xpose.msra.mxu0 0.0
    %1774 = vmatprep.subr.mxu0 0.0
    %1775 = vmatpush2.xpose.msra.mxu0 0.0
    %1776 = vmatprep.subr.mxu0 0.0
    %1777 = vmatpush2.xpose.msra.mxu0 0.0
    %1778 = vmatprep.subr.mxu0 0.0
    %1779 = vmatpush2.xpose.msra.mxu0 0.0
    %1780 = vmatprep.subr.mxu0 0.0
    %1781 = vmatpush2.xpose.msra.mxu0 0.0
    %1782 = vmatprep.subr.mxu0 0.0
    %1783 = vmatpush2.xpose.msra.mxu0 0.0
    %1784 = vmatprep.mubr.f32.mxu0 0.0
    %1785 = vmatmul.mubr.f32.gmra.mxu0 %v1716
    %v1786 = vpop.f32.mrf.mxu0
    %v1787 = vadd.f32 0.0, %v1786
    %v1788 = vpop.f32.mrf.mxu0
    %1789 = vdwg.mxu0
    %v1790 = vmul.f32 %v1709, 0.17677669
    %v1791 = vmul.f32 %v1787, 0.17677669
    %v1792 = vadd.f32 %v1790, %v599
    %v1793 = vadd.f32 %v1791, %v603
    %v1794 = vsel %vm608, %v1792, -inf
    %1795 = vmax.xlane.f32.xlu0 %v1794
    %v1796 = vpop.xlane.xlu0 %1795
    %v1797 = vsel %vm608, %v1793, -inf
    %1798 = vmax.xlane.f32.xlu0 %v1797
    %v1799 = vpop.xlane.xlu0 %1798
    %v1800 = vsub.f32 %v1792, %v1796
    %v1801 = vsub.f32 %v1793, %v1799
    %v1802 = vmul.f32 %v1800, 1.442695
    %v1803 = vpow.pop %v1802
    %v1804 = vmul.f32 %v1801, 1.442695
    %v1805 = vpow.pop %v1804
    %v1806 = vsel %vm608, %v1803, 0.0
    %1807 = vadd.xlane.f32.xlu0 %v1806
    %v1808 = vpop.xlane.xlu0 %1807
    %v1809 = vsel %vm608, %v1805, 0.0
    %1810 = vadd.xlane.f32.xlu0 %v1809
    %v1811 = vpop.xlane.xlu0 %1810
    %v1812 = vrcp.pop %v1808
    %v1813 = vmul.f32 %v1803, %v1812
    %v1814 = vrcp.pop %v1811
    %v1815 = vmul.f32 %v1805, %v1814
    %1816 = vrot.lane.b32.xlu0 %v435, 32
    %v1817 = vpop.permute.xlu0 %1816
    %v1820 = vsel %vm608, %v1813, 0
    %1822 = vmatprep.subr.mxu0 0.0
    %1823 = vmatpush1.msra.mxu0 0.0
    %1824 = vmatprep.subr.mxu0 0.0
    %1825 = vmatpush1.msra.mxu0 0.0
    %1826 = vmatprep.subr.mxu0 0.0
    %1827 = vmatpush1.msra.mxu0 0.0
    %1828 = vmatprep.subr.mxu0 0.0
    %1829 = vmatpush1.msra.mxu0 0.0
    %1830 = vmatprep.subr.mxu0 0.0
    %1831 = vmatpush1.msra.mxu0 0.0
    %1832 = vmatprep.subr.mxu0 0.0
    %1833 = vmatpush1.msra.mxu0 0.0
    %1834 = vmatprep.subr.mxu0 0.0
    %1835 = vmatpush1.msra.mxu0 0.0
    %1836 = vmatprep.subr.mxu0 0.0
    %1837 = vmatpush1.msra.mxu0 0.0
    %1838 = vmatprep.subr.mxu0 0.0
    %1839 = vmatpush1.msra.mxu0 0.0
    %1840 = vmatprep.subr.mxu0 0.0
    %1841 = vmatpush1.msra.mxu0 0.0
    %1842 = vmatprep.subr.mxu0 0.0
    %1843 = vmatpush1.msra.mxu0 0.0
    %1844 = vmatprep.subr.mxu0 0.0
    %1845 = vmatpush1.msra.mxu0 0.0
    %1846 = vmatprep.subr.mxu0 0.0
    %1847 = vmatpush1.msra.mxu0 0.0
    %1848 = vmatprep.subr.mxu0 0.0
    %1849 = vmatpush1.msra.mxu0 0.0
    %1850 = vmatprep.subr.mxu0 0.0
    %1851 = vmatpush1.msra.mxu0 0.0
    %1852 = vmatprep.subr.mxu0 0.0
    %1853 = vmatpush1.msra.mxu0 %v1817
    %1854 = vmatprep.subr.mxu0 0.0
    %1855 = vmatpush2.msra.mxu0 0.0
    %1856 = vmatprep.subr.mxu0 0.0
    %1857 = vmatpush2.msra.mxu0 0.0
    %1858 = vmatprep.subr.mxu0 0.0
    %1859 = vmatpush2.msra.mxu0 0.0
    %1860 = vmatprep.subr.mxu0 0.0
    %1861 = vmatpush2.msra.mxu0 0.0
    %1862 = vmatprep.subr.mxu0 0.0
    %1863 = vmatpush2.msra.mxu0 0.0
    %1864 = vmatprep.subr.mxu0 0.0
    %1865 = vmatpush2.msra.mxu0 0.0
    %1866 = vmatprep.subr.mxu0 0.0
    %1867 = vmatpush2.msra.mxu0 0.0
    %1868 = vmatprep.subr.mxu0 0.0
    %1869 = vmatpush2.msra.mxu0 0.0
    %1870 = vmatprep.subr.mxu0 0.0
    %1871 = vmatpush2.msra.mxu0 0.0
    %1872 = vmatprep.subr.mxu0 0.0
    %1873 = vmatpush2.msra.mxu0 0.0
    %1874 = vmatprep.subr.mxu0 0.0
    %1875 = vmatpush2.msra.mxu0 0.0
    %1876 = vmatprep.subr.mxu0 0.0
    %1877 = vmatpush2.msra.mxu0 0.0
    %1878 = vmatprep.subr.mxu0 0.0
    %1879 = vmatpush2.msra.mxu0 0.0
    %1880 = vmatprep.subr.mxu0 0.0
    %1881 = vmatpush2.msra.mxu0 0.0
    %1882 = vmatprep.subr.mxu0 0.0
    %1883 = vmatpush2.msra.mxu0 0.0
    %1884 = vmatprep.subr.mxu0 0.0
    %1885 = vmatpush2.msra.mxu0 0.0
    %1886 = vmatprep.mubr.f32.mxu0 0.0
    %1887 = vmatmul.mubr.f32.gmra.mxu0 %v1820
    %v1888 = vpop.f32.mrf.mxu0
    %v1889 = vadd.f32 0.0, %v1888
    %v1890 = vpop.f32.mrf.mxu0
    %1891 = vdwg.mxu0
    %1892 = vrot.lane.b32.xlu0 %v438, 32
    %v1893 = vpop.permute.xlu0 %1892
    %v1896 = vsel %vm608, %v1815, 0
    %1898 = vmatprep.subr.mxu0 0.0
    %1899 = vmatpush1.msra.mxu0 0.0
    %1900 = vmatprep.subr.mxu0 0.0
    %1901 = vmatpush1.msra.mxu0 0.0
    %1902 = vmatprep.subr.mxu0 0.0
    %1903 = vmatpush1.msra.mxu0 0.0
    %1904 = vmatprep.subr.mxu0 0.0
    %1905 = vmatpush1.msra.mxu0 0.0
    %1906 = vmatprep.subr.mxu0 0.0
    %1907 = vmatpush1.msra.mxu0 0.0
    %1908 = vmatprep.subr.mxu0 0.0
    %1909 = vmatpush1.msra.mxu0 0.0
    %1910 = vmatprep.subr.mxu0 0.0
    %1911 = vmatpush1.msra.mxu0 0.0
    %1912 = vmatprep.subr.mxu0 0.0
    %1913 = vmatpush1.msra.mxu0 0.0
    %1914 = vmatprep.subr.mxu0 0.0
    %1915 = vmatpush1.msra.mxu0 0.0
    %1916 = vmatprep.subr.mxu0 0.0
    %1917 = vmatpush1.msra.mxu0 0.0
    %1918 = vmatprep.subr.mxu0 0.0
    %1919 = vmatpush1.msra.mxu0 0.0
    %1920 = vmatprep.subr.mxu0 0.0
    %1921 = vmatpush1.msra.mxu0 0.0
    %1922 = vmatprep.subr.mxu0 0.0
    %1923 = vmatpush1.msra.mxu0 0.0
    %1924 = vmatprep.subr.mxu0 0.0
    %1925 = vmatpush1.msra.mxu0 0.0
    %1926 = vmatprep.subr.mxu0 0.0
    %1927 = vmatpush1.msra.mxu0 0.0
    %1928 = vmatprep.subr.mxu0 0.0
    %1929 = vmatpush1.msra.mxu0 %v1893
    %1930 = vmatprep.subr.mxu0 0.0
    %1931 = vmatpush2.msra.mxu0 0.0
    %1932 = vmatprep.subr.mxu0 0.0
    %1933 = vmatpush2.msra.mxu0 0.0
    %1934 = vmatprep.subr.mxu0 0.0
    %1935 = vmatpush2.msra.mxu0 0.0
    %1936 = vmatprep.subr.mxu0 0.0
    %1937 = vmatpush2.msra.mxu0 0.0
    %1938 = vmatprep.subr.mxu0 0.0
    %1939 = vmatpush2.msra.mxu0 0.0
    %1940 = vmatprep.subr.mxu0 0.0
    %1941 = vmatpush2.msra.mxu0 0.0
    %1942 = vmatprep.subr.mxu0 0.0
    %1943 = vmatpush2.msra.mxu0 0.0
    %1944 = vmatprep.subr.mxu0 0.0
    %1945 = vmatpush2.msra.mxu0 0.0
    %1946 = vmatprep.subr.mxu0 0.0
    %1947 = vmatpush2.msra.mxu0 0.0
    %1948 = vmatprep.subr.mxu0 0.0
    %1949 = vmatpush2.msra.mxu0 0.0
    %1950 = vmatprep.subr.mxu0 0.0
    %1951 = vmatpush2.msra.mxu0 0.0
    %1952 = vmatprep.subr.mxu0 0.0
    %1953 = vmatpush2.msra.mxu0 0.0
    %1954 = vmatprep.subr.mxu0 0.0
    %1955 = vmatpush2.msra.mxu0 0.0
    %1956 = vmatprep.subr.mxu0 0.0
    %1957 = vmatpush2.msra.mxu0 0.0
    %1958 = vmatprep.subr.mxu0 0.0
    %1959 = vmatpush2.msra.mxu0 0.0
    %1960 = vmatprep.subr.mxu0 0.0
    %1961 = vmatpush2.msra.mxu0 0.0
    %1962 = vmatprep.mubr.f32.mxu0 0.0
    %1963 = vmatmul.mubr.f32.gmra.mxu0 %v1896
    %v1964 = vpop.f32.mrf.mxu0
    %v1965 = vadd.f32 0.0, %v1964
    %v1966 = vpop.f32.mrf.mxu0
    %1967 = vdwg.mxu0
    %v1968 = vpack.c.bf16 %v1965, %v1889
    %s1969 = scalar_lea.vmem [#allocation6], 48
    %v1970 = vld [vmem:[%s1969] sm:$0xf]
    %v1971 = vld [vmem:[%s1969 + $0x4] sm:$0xf]
    %v1972 = vld [vmem:[%s1969 + $0x8] sm:$0xf]
    %v1973 = vld [vmem:[%s1969 + $0xc] sm:$0xf]
    %v1978 = vunpack.c.l.b16 %v1970
    %v1979 = vunpack.c.l.b16 %v1971
    %v1980 = vunpack.c.l.b16 %v1972
    %v1981 = vunpack.c.l.b16 %v1973
    %v1982 = vpack.c.b16 %v1979, %v1978
    %v1983 = vpack.c.b16 %v1981, %v1980
    %v1987 = vsel %vm441, %v1968, 0
    %1989 = vmatprep.subr.bf16.mxu0 0
    %1990 = vmatpush1.bf16.msra.mxu0 0
    %1991 = vmatprep.subr.bf16.mxu0 0
    %1992 = vmatpush1.bf16.msra.mxu0 0
    %1993 = vmatprep.subr.bf16.mxu0 0
    %1994 = vmatpush1.bf16.msra.mxu0 0
    %1995 = vmatprep.subr.bf16.mxu0 0
    %1996 = vmatpush1.bf16.msra.mxu0 0
    %1997 = vmatprep.subr.bf16.mxu0 0
    %1998 = vmatpush1.bf16.msra.mxu0 0
    %1999 = vmatprep.subr.bf16.mxu0 0
    %2000 = vmatpush1.bf16.msra.mxu0 0
    %2001 = vmatprep.subr.bf16.mxu0 0
    %2002 = vmatpush1.bf16.msra.mxu0 %v1983
    %2003 = vmatprep.subr.bf16.mxu0 0
    %2004 = vmatpush1.bf16.msra.mxu0 %v1982
    %2005 = vmatprep.subr.bf16.mxu0 0
    %2006 = vmatpush2.bf16.msra.mxu0 0
    %2007 = vmatprep.subr.bf16.mxu0 0
    %2008 = vmatpush2.bf16.msra.mxu0 0
    %2009 = vmatprep.subr.bf16.mxu0 0
    %2010 = vmatpush2.bf16.msra.mxu0 0
    %2011 = vmatprep.subr.bf16.mxu0 0
    %2012 = vmatpush2.bf16.msra.mxu0 0
    %2013 = vmatprep.subr.bf16.mxu0 0
    %2014 = vmatpush2.bf16.msra.mxu0 0
    %2015 = vmatprep.subr.bf16.mxu0 0
    %2016 = vmatpush2.bf16.msra.mxu0 0
    %2017 = vmatprep.subr.bf16.mxu0 0
    %2018 = vmatpush2.bf16.msra.mxu0 0
    %2019 = vmatprep.subr.bf16.mxu0 0
    %2020 = vmatpush2.bf16.msra.mxu0 0
    %2021 = vmatprep.mubr.bf16.mxu0 0
    %2022 = vmatmul.mubr.bf16.gmra.mxu0 %v1987
    %v2023 = vpop.f32.mrf.mxu0
    %v2024 = vadd.f32 0.0, %v2023
    %v2025 = vpop.f32.mrf.mxu0
    %v2026 = vpop.f32.mrf.mxu0
    %v2027 = vadd.f32 0.0, %v2026
    %v2028 = vpop.f32.mrf.mxu0
    %2029 = vdwg.mxu0
    %v2030 = vadd.f32 %v1632, %v2024
    %v2031 = vadd.f32 %v1633, %v2027
    %v2032 = vld [vmem:[%s7] sm:$0x1]
    %v2034 = vlaneseq
    %v2035 = vshrl.u32 %v2034, 7
    %v2036 = vsub.s32 0, %v2035
    %v2037 = vrot.slane %v2032, %v2036
    %v2039 = vadd.f32 %v2030, %v2037
    %v2040 = vadd.f32 %v2031, %v2037
    %v2041 = vadd.f32 %v2039, %v177
    %v2042 = vadd.f32 %v2040, %v178
    %v2043 = vld [vmem:[%s8] sm:$0x1]
    %v2044 = vld [vmem:[%s9] sm:$0x1]
    %2045 = vadd.xlane.f32.xlu0 %v2041
    %v2046 = vpop.xlane.xlu0 %2045
    %2047 = vadd.xlane.f32.xlu0 %v2042
    %v2048 = vpop.xlane.xlu0 %2047
    %v2049 = vmul.f32 %v2046, %v144
    %v2050 = vmul.f32 %v2048, %v144
    %v2051 = vsub.f32 %v2041, %v2049
    %v2052 = vsub.f32 %v2042, %v2050
    %v2053 = vmul.f32 %v2051, %v2051
    %v2054 = vmul.f32 %v2052, %v2052
    %2055 = vadd.xlane.f32.xlu0 %v2053
    %v2056 = vpop.xlane.xlu0 %2055
    %2057 = vadd.xlane.f32.xlu0 %v2054
    %v2058 = vpop.xlane.xlu0 %2057
    %v2059 = vmul.f32 %v2056, %v144
    %v2060 = vmul.f32 %v2058, %v144
    %v2061 = vadd.f32 %v2059, 1e-05
    %v2062 = vadd.f32 %v2060, 1e-05
    %v2063 = vrsqrt.pop %v2061
    %v2064 = vrsqrt.pop %v2062
    %v2065 = vmul.f32 %v2051, %v2063
    %v2066 = vmul.f32 %v2052, %v2064
    %v2068 = vlaneseq
    %v2069 = vshrl.u32 %v2068, 7
    %v2070 = vsub.s32 0, %v2069
    %v2071 = vrot.slane %v2043, %v2070
    %v2073 = vmul.f32 %v2065, %v2071
    %v2074 = vmul.f32 %v2066, %v2071
    %v2076 = vlaneseq
    %v2077 = vshrl.u32 %v2076, 7
    %v2078 = vsub.s32 0, %v2077
    %v2079 = vrot.slane %v2044, %v2078
    %v2081 = vadd.f32 %v2073, %v2079
    %v2082 = vadd.f32 %v2074, %v2079
    %v2083 = vpack.c.bf16 %v2082, %v2081
    %v2084 = vld [vmem:[%s10] sm:$0xff]
    %v2085 = vld [vmem:[%s10 + $0x8] sm:$0xff]
    %v2086 = vld [vmem:[%s10 + $0x10] sm:$0xff]
    %v2087 = vld [vmem:[%s10 + $0x18] sm:$0xff]
    %v2088 = vld [vmem:[%s10 + $0x20] sm:$0xff]
    %v2089 = vld [vmem:[%s10 + $0x28] sm:$0xff]
    %v2090 = vld [vmem:[%s10 + $0x30] sm:$0xff]
    %v2091 = vld [vmem:[%s10 + $0x38] sm:$0xff]
    %v2092 = vld [vmem:[%s10 + $0x40] sm:$0xff]
    %v2093 = vld [vmem:[%s10 + $0x48] sm:$0xff]
    %v2094 = vld [vmem:[%s10 + $0x50] sm:$0xff]
    %v2095 = vld [vmem:[%s10 + $0x58] sm:$0xff]
    %v2096 = vld [vmem:[%s10 + $0x60] sm:$0xff]
    %v2097 = vld [vmem:[%s10 + $0x68] sm:$0xff]
    %v2098 = vld [vmem:[%s10 + $0x70] sm:$0xff]
    %v2099 = vld [vmem:[%s10 + $0x78] sm:$0xff]
    %v2100 = vld [vmem:[%s11] sm:$0x3]
    %v2102 = vlaneseq
    %v2103 = vshrl.u32 %v2102, 7
    %v2104 = vsub.s32 0, %v2103
    %v2105 = vrot.slane %v2100, %v2104
    %v2106 = vlaneseq
    %v2107 = vshrl.u32 %v2106, 7
    %v2108 = vsub.s32 1, %v2107
    %v2109 = vrot.slane %v2100, %v2108
    %v2128 = vunpack.c.l.b16 %v2084
    %v2129 = vunpack.c.h.b16 %v2084
    %v2130 = vunpack.c.l.b16 %v2085
    %v2131 = vunpack.c.h.b16 %v2085
    %v2132 = vunpack.c.l.b16 %v2086
    %v2133 = vunpack.c.h.b16 %v2086
    %v2134 = vunpack.c.l.b16 %v2087
    %v2135 = vunpack.c.h.b16 %v2087
    %v2136 = vunpack.c.l.b16 %v2088
    %v2137 = vunpack.c.h.b16 %v2088
    %v2138 = vunpack.c.l.b16 %v2089
    %v2139 = vunpack.c.h.b16 %v2089
    %v2140 = vunpack.c.l.b16 %v2090
    %v2141 = vunpack.c.h.b16 %v2090
    %v2142 = vunpack.c.l.b16 %v2091
    %v2143 = vunpack.c.h.b16 %v2091
    %v2144 = vunpack.c.l.b16 %v2092
    %v2145 = vunpack.c.h.b16 %v2092
    %v2146 = vunpack.c.l.b16 %v2093
    %v2147 = vunpack.c.h.b16 %v2093
    %v2148 = vunpack.c.l.b16 %v2094
    %v2149 = vunpack.c.h.b16 %v2094
    %v2150 = vunpack.c.l.b16 %v2095
    %v2151 = vunpack.c.h.b16 %v2095
    %v2152 = vunpack.c.l.b16 %v2096
    %v2153 = vunpack.c.h.b16 %v2096
    %v2154 = vunpack.c.l.b16 %v2097
    %v2155 = vunpack.c.h.b16 %v2097
    %v2156 = vunpack.c.l.b16 %v2098
    %v2157 = vunpack.c.h.b16 %v2098
    %v2158 = vunpack.c.l.b16 %v2099
    %v2159 = vunpack.c.h.b16 %v2099
    %v2160 = vpack.c.b16 %v2130, %v2128
    %v2161 = vpack.c.b16 %v2131, %v2129
    %v2162 = vpack.c.b16 %v2134, %v2132
    %v2163 = vpack.c.b16 %v2135, %v2133
    %v2164 = vpack.c.b16 %v2138, %v2136
    %v2165 = vpack.c.b16 %v2139, %v2137
    %v2166 = vpack.c.b16 %v2142, %v2140
    %v2167 = vpack.c.b16 %v2143, %v2141
    %v2168 = vpack.c.b16 %v2146, %v2144
    %v2169 = vpack.c.b16 %v2147, %v2145
    %v2170 = vpack.c.b16 %v2150, %v2148
    %v2171 = vpack.c.b16 %v2151, %v2149
    %v2172 = vpack.c.b16 %v2154, %v2152
    %v2173 = vpack.c.b16 %v2155, %v2153
    %v2174 = vpack.c.b16 %v2158, %v2156
    %v2175 = vpack.c.b16 %v2159, %v2157
    %2192 = vmatprep.subr.bf16.mxu0 %v2175
    %2193 = vmatpush1.bf16.msra.mxu0 %v2174
    %2194 = vmatprep.subr.bf16.mxu0 %v2173
    %2195 = vmatpush1.bf16.msra.mxu0 %v2172
    %2196 = vmatprep.subr.bf16.mxu0 %v2171
    %2197 = vmatpush1.bf16.msra.mxu0 %v2170
    %2198 = vmatprep.subr.bf16.mxu0 %v2169
    %2199 = vmatpush1.bf16.msra.mxu0 %v2168
    %2200 = vmatprep.subr.bf16.mxu0 %v2167
    %2201 = vmatpush1.bf16.msra.mxu0 %v2166
    %2202 = vmatprep.subr.bf16.mxu0 %v2165
    %2203 = vmatpush1.bf16.msra.mxu0 %v2164
    %2204 = vmatprep.subr.bf16.mxu0 %v2163
    %2205 = vmatpush1.bf16.msra.mxu0 %v2162
    %2206 = vmatprep.subr.bf16.mxu0 %v2161
    %2207 = vmatpush1.bf16.msra.mxu0 %v2160
    %2208 = vmatprep.subr.bf16.mxu0 0
    %2209 = vmatpush2.bf16.msra.mxu0 0
    %2210 = vmatprep.subr.bf16.mxu0 0
    %2211 = vmatpush2.bf16.msra.mxu0 0
    %2212 = vmatprep.subr.bf16.mxu0 0
    %2213 = vmatpush2.bf16.msra.mxu0 0
    %2214 = vmatprep.subr.bf16.mxu0 0
    %2215 = vmatpush2.bf16.msra.mxu0 0
    %2216 = vmatprep.subr.bf16.mxu0 0
    %2217 = vmatpush2.bf16.msra.mxu0 0
    %2218 = vmatprep.subr.bf16.mxu0 0
    %2219 = vmatpush2.bf16.msra.mxu0 0
    %2220 = vmatprep.subr.bf16.mxu0 0
    %2221 = vmatpush2.bf16.msra.mxu0 0
    %2222 = vmatprep.subr.bf16.mxu0 0
    %2223 = vmatpush2.bf16.msra.mxu0 0
    %2224 = vmatprep.mubr.bf16.mxu0 0
    %2225 = vmatmul.mubr.bf16.gmra.mxu0 %v2083
    %v2226 = vpop.f32.mrf.mxu0
    %v2227 = vadd.f32 %v2105, %v2226
    %v2228 = vpop.f32.mrf.mxu0
    %v2229 = vadd.f32 %v2109, %v2228
    %v2230 = vpop.f32.mrf.mxu0
    %v2231 = vadd.f32 %v2105, %v2230
    %v2232 = vpop.f32.mrf.mxu0
    %v2233 = vadd.f32 %v2109, %v2232
    %2234 = vdwg.mxu0
    %v2235 = vmul.f32 %v2227, 0.5
    %v2236 = vmul.f32 %v2229, 0.5
    %v2237 = vmul.f32 %v2231, 0.5
    %v2238 = vmul.f32 %v2233, 0.5
    %v2239 = vmul.f32 %v2227, 0.044715
    %v2240 = vmul.f32 %v2229, 0.044715
    %v2241 = vmul.f32 %v2231, 0.044715
    %v2242 = vmul.f32 %v2233, 0.044715
    %v2243 = vmul.f32 %v2239, %v2227
    %v2244 = vmul.f32 %v2240, %v2229
    %v2245 = vmul.f32 %v2241, %v2231
    %v2246 = vmul.f32 %v2242, %v2233
    %v2247 = vmul.f32 %v2243, %v2227
    %v2248 = vmul.f32 %v2244, %v2229
    %v2249 = vmul.f32 %v2245, %v2231
    %v2250 = vmul.f32 %v2246, %v2233
    %v2251 = vadd.f32 %v2227, %v2247
    %v2252 = vadd.f32 %v2229, %v2248
    %v2253 = vadd.f32 %v2231, %v2249
    %v2254 = vadd.f32 %v2233, %v2250
    %v2255 = vmul.f32 %v2251, 0.7978846
    %v2256 = vmul.f32 %v2252, 0.7978846
    %v2257 = vmul.f32 %v2253, 0.7978846
    %v2258 = vmul.f32 %v2254, 0.7978846
    %v2259 = vtanh.pop %v2255
    %v2260 = vtanh.pop %v2256
    %v2261 = vtanh.pop %v2257
    %v2262 = vtanh.pop %v2258
    %v2263 = vadd.f32 %v2259, 1.0
    %v2264 = vadd.f32 %v2260, 1.0
    %v2265 = vadd.f32 %v2261, 1.0
    %v2266 = vadd.f32 %v2262, 1.0
    %v2267 = vmul.f32 %v2235, %v2263
    %v2268 = vmul.f32 %v2236, %v2264
    %v2269 = vmul.f32 %v2237, %v2265
    %v2270 = vmul.f32 %v2238, %v2266
    %v2271 = vpack.c.bf16 %v2269, %v2267
    %v2272 = vpack.c.bf16 %v2270, %v2268
    %v2273 = vld [vmem:[#allocation8] sm:$0xf]
    %v2274 = vld [vmem:[#allocation8 + $0x4] sm:$0xf]
    %v2275 = vld [vmem:[#allocation8 + $0x8] sm:$0xf]
    %v2276 = vld [vmem:[#allocation8 + $0xc] sm:$0xf]
    %v2277 = vld [vmem:[#allocation8 + $0x10] sm:$0xf]
    %v2278 = vld [vmem:[#allocation8 + $0x14] sm:$0xf]
    %v2279 = vld [vmem:[#allocation8 + $0x18] sm:$0xf]
    %v2280 = vld [vmem:[#allocation8 + $0x1c] sm:$0xf]
    %v2281 = vld [vmem:[#allocation8 + $0x20] sm:$0xf]
    %v2282 = vld [vmem:[#allocation8 + $0x24] sm:$0xf]
    %v2283 = vld [vmem:[#allocation8 + $0x28] sm:$0xf]
    %v2284 = vld [vmem:[#allocation8 + $0x2c] sm:$0xf]
    %v2285 = vld [vmem:[#allocation8 + $0x30] sm:$0xf]
    %v2286 = vld [vmem:[#allocation8 + $0x34] sm:$0xf]
    %v2287 = vld [vmem:[#allocation8 + $0x38] sm:$0xf]
    %v2288 = vld [vmem:[#allocation8 + $0x3c] sm:$0xf]
    %v2289 = vld [vmem:[#allocation8 + $0x40] sm:$0xf]
    %v2290 = vld [vmem:[#allocation8 + $0x44] sm:$0xf]
    %v2291 = vld [vmem:[#allocation8 + $0x48] sm:$0xf]
    %v2292 = vld [vmem:[#allocation8 + $0x4c] sm:$0xf]
    %v2293 = vld [vmem:[#allocation8 + $0x50] sm:$0xf]
    %v2294 = vld [vmem:[#allocation8 + $0x54] sm:$0xf]
    %v2295 = vld [vmem:[#allocation8 + $0x58] sm:$0xf]
    %v2296 = vld [vmem:[#allocation8 + $0x5c] sm:$0xf]
    %v2297 = vld [vmem:[#allocation8 + $0x60] sm:$0xf]
    %v2298 = vld [vmem:[#allocation8 + $0x64] sm:$0xf]
    %v2299 = vld [vmem:[#allocation8 + $0x68] sm:$0xf]
    %v2300 = vld [vmem:[#allocation8 + $0x6c] sm:$0xf]
    %v2301 = vld [vmem:[#allocation8 + $0x70] sm:$0xf]
    %v2302 = vld [vmem:[#allocation8 + $0x74] sm:$0xf]
    %v2303 = vld [vmem:[#allocation8 + $0x78] sm:$0xf]
    %v2304 = vld [vmem:[#allocation8 + $0x7c] sm:$0xf]
    %v2305 = vld [vmem:[%s13] sm:$0x1]
    %v2307 = vlaneseq
    %v2308 = vshrl.u32 %v2307, 7
    %v2309 = vsub.s32 0, %v2308
    %v2310 = vrot.slane %v2305, %v2309
    %v2344 = vunpack.c.l.b16 %v2273
    %v2345 = vunpack.c.l.b16 %v2274
    %v2346 = vunpack.c.l.b16 %v2275
    %v2347 = vunpack.c.l.b16 %v2276
    %v2348 = vunpack.c.l.b16 %v2277
    %v2349 = vunpack.c.l.b16 %v2278
    %v2350 = vunpack.c.l.b16 %v2279
    %v2351 = vunpack.c.l.b16 %v2280
    %v2352 = vunpack.c.l.b16 %v2281
    %v2353 = vunpack.c.l.b16 %v2282
    %v2354 = vunpack.c.l.b16 %v2283
    %v2355 = vunpack.c.l.b16 %v2284
    %v2356 = vunpack.c.l.b16 %v2285
    %v2357 = vunpack.c.l.b16 %v2286
    %v2358 = vunpack.c.l.b16 %v2287
    %v2359 = vunpack.c.l.b16 %v2288
    %v2360 = vunpack.c.l.b16 %v2289
    %v2361 = vunpack.c.l.b16 %v2290
    %v2362 = vunpack.c.l.b16 %v2291
    %v2363 = vunpack.c.l.b16 %v2292
    %v2364 = vunpack.c.l.b16 %v2293
    %v2365 = vunpack.c.l.b16 %v2294
    %v2366 = vunpack.c.l.b16 %v2295
    %v2367 = vunpack.c.l.b16 %v2296
    %v2368 = vunpack.c.l.b16 %v2297
    %v2369 = vunpack.c.l.b16 %v2298
    %v2370 = vunpack.c.l.b16 %v2299
    %v2371 = vunpack.c.l.b16 %v2300
    %v2372 = vunpack.c.l.b16 %v2301
    %v2373 = vunpack.c.l.b16 %v2302
    %v2374 = vunpack.c.l.b16 %v2303
    %v2375 = vunpack.c.l.b16 %v2304
    %v2376 = vpack.c.b16 %v2345, %v2344
    %v2377 = vpack.c.b16 %v2347, %v2346
    %v2378 = vpack.c.b16 %v2349, %v2348
    %v2379 = vpack.c.b16 %v2351, %v2350
    %v2380 = vpack.c.b16 %v2353, %v2352
    %v2381 = vpack.c.b16 %v2355, %v2354
    %v2382 = vpack.c.b16 %v2357, %v2356
    %v2383 = vpack.c.b16 %v2359, %v2358
    %v2384 = vpack.c.b16 %v2361, %v2360
    %v2385 = vpack.c.b16 %v2363, %v2362
    %v2386 = vpack.c.b16 %v2365, %v2364
    %v2387 = vpack.c.b16 %v2367, %v2366
    %v2388 = vpack.c.b16 %v2369, %v2368
    %v2389 = vpack.c.b16 %v2371, %v2370
    %v2390 = vpack.c.b16 %v2373, %v2372
    %v2391 = vpack.c.b16 %v2375, %v2374
    %2408 = vmatprep.subr.bf16.mxu0 0
    %2409 = vmatpush1.bf16.msra.mxu0 %v2383
    %2410 = vmatprep.subr.bf16.mxu0 0
    %2411 = vmatpush1.bf16.msra.mxu0 %v2382
    %2412 = vmatprep.subr.bf16.mxu0 0
    %2413 = vmatpush1.bf16.msra.mxu0 %v2381
    %2414 = vmatprep.subr.bf16.mxu0 0
    %2415 = vmatpush1.bf16.msra.mxu0 %v2380
    %2416 = vmatprep.subr.bf16.mxu0 0
    %2417 = vmatpush1.bf16.msra.mxu0 %v2379
    %2418 = vmatprep.subr.bf16.mxu0 0
    %2419 = vmatpush1.bf16.msra.mxu0 %v2378
    %2420 = vmatprep.subr.bf16.mxu0 0
    %2421 = vmatpush1.bf16.msra.mxu0 %v2377
    %2422 = vmatprep.subr.bf16.mxu0 0
    %2423 = vmatpush1.bf16.msra.mxu0 %v2376
    %2424 = vmatprep.subr.bf16.mxu0 0
    %2425 = vmatpush2.bf16.msra.mxu0 %v2391
    %2426 = vmatprep.subr.bf16.mxu0 0
    %2427 = vmatpush2.bf16.msra.mxu0 %v2390
    %2428 = vmatprep.subr.bf16.mxu0 0
    %2429 = vmatpush2.bf16.msra.mxu0 %v2389
    %2430 = vmatprep.subr.bf16.mxu0 0
    %2431 = vmatpush2.bf16.msra.mxu0 %v2388
    %2432 = vmatprep.subr.bf16.mxu0 0
    %2433 = vmatpush2.bf16.msra.mxu0 %v2387
    %2434 = vmatprep.subr.bf16.mxu0 0
    %2435 = vmatpush2.bf16.msra.mxu0 %v2386
    %2436 = vmatprep.subr.bf16.mxu0 0
    %2437 = vmatpush2.bf16.msra.mxu0 %v2385
    %2438 = vmatprep.subr.bf16.mxu0 0
    %2439 = vmatpush2.bf16.msra.mxu0 %v2384
    %2440 = vmatprep.mubr.bf16.mxu0 %v2272
    %2441 = vmatmul.mubr.bf16.gmra.mxu0 %v2271
    %v2442 = vpop.f32.mrf.mxu0
    %v2443 = vadd.f32 %v2310, %v2442
    %v2444 = vpop.f32.mrf.mxu0
    %v2445 = vpop.f32.mrf.mxu0
    %v2446 = vadd.f32 %v2310, %v2445
    %v2447 = vpop.f32.mrf.mxu0
    %2448 = vdwg.mxu0
    %v2449 = vadd.f32 %v2443, %v2081
    %v2450 = vadd.f32 %v2446, %v2082
    %v2451 = vld [vmem:[%s14] sm:$0x1]
    %v2452 = vld [vmem:[%s15] sm:$0x1]
    %2453 = vadd.xlane.f32.xlu0 %v2449
    %v2454 = vpop.xlane.xlu0 %2453
    %2455 = vadd.xlane.f32.xlu0 %v2450
    %v2456 = vpop.xlane.xlu0 %2455
    %v2457 = vmul.f32 %v2454, %v144
    %v2458 = vmul.f32 %v2456, %v144
    %v2459 = vsub.f32 %v2449, %v2457
    %v2460 = vsub.f32 %v2450, %v2458
    %v2461 = vmul.f32 %v2459, %v2459
    %v2462 = vmul.f32 %v2460, %v2460
    %2463 = vadd.xlane.f32.xlu0 %v2461
    %v2464 = vpop.xlane.xlu0 %2463
    %2465 = vadd.xlane.f32.xlu0 %v2462
    %v2466 = vpop.xlane.xlu0 %2465
    %v2467 = vmul.f32 %v2464, %v144
    %v2468 = vmul.f32 %v2466, %v144
    %v2469 = vadd.f32 %v2467, 1e-05
    %v2470 = vadd.f32 %v2468, 1e-05
    %v2471 = vrsqrt.pop %v2469
    %v2472 = vrsqrt.pop %v2470
    %v2473 = vmul.f32 %v2459, %v2471
    %v2474 = vmul.f32 %v2460, %v2472
    %v2476 = vlaneseq
    %v2477 = vshrl.u32 %v2476, 7
    %v2478 = vsub.s32 0, %v2477
    %v2479 = vrot.slane %v2451, %v2478
    %v2481 = vmul.f32 %v2473, %v2479
    %v2482 = vmul.f32 %v2474, %v2479
    %v2484 = vlaneseq
    %v2485 = vshrl.u32 %v2484, 7
    %v2486 = vsub.s32 0, %v2485
    %v2487 = vrot.slane %v2452, %v2486
    %v2489 = vadd.f32 %v2481, %v2487
    %v2490 = vadd.f32 %v2482, %v2487
    %v2491 = vpack.c.bf16 %v2490, %v2489
    %s2492 = scalar_lea.vmem [#allocation3], 192
    %v2493 = vld [vmem:[%s2492] sm:$0xff]
    %v2494 = vld [vmem:[%s2492 + $0x8] sm:$0xf]
    %v2495 = vld [vmem:[%s2492 + $0xc] sm:$0xff]
    %v2496 = vld [vmem:[%s2492 + $0x14] sm:$0xf]
    %v2497 = vld [vmem:[%s2492 + $0x18] sm:$0xff]
    %v2498 = vld [vmem:[%s2492 + $0x20] sm:$0xf]
    %v2499 = vld [vmem:[%s2492 + $0x24] sm:$0xff]
    %v2500 = vld [vmem:[%s2492 + $0x2c] sm:$0xf]
    %v2501 = vld [vmem:[%s2492 + $0x30] sm:$0xff]
    %v2502 = vld [vmem:[%s2492 + $0x38] sm:$0xf]
    %v2503 = vld [vmem:[%s2492 + $0x3c] sm:$0xff]
    %v2504 = vld [vmem:[%s2492 + $0x44] sm:$0xf]
    %v2505 = vld [vmem:[%s2492 + $0x48] sm:$0xff]
    %v2506 = vld [vmem:[%s2492 + $0x50] sm:$0xf]
    %v2507 = vld [vmem:[%s2492 + $0x54] sm:$0xff]
    %v2508 = vld [vmem:[%s2492 + $0x5c] sm:$0xf]
    %v2509 = vld [vmem:[%s2492 + $0x60] sm:$0xff]
    %v2510 = vld [vmem:[%s2492 + $0x68] sm:$0xf]
    %v2511 = vld [vmem:[%s2492 + $0x6c] sm:$0xff]
    %v2512 = vld [vmem:[%s2492 + $0x74] sm:$0xf]
    %v2513 = vld [vmem:[%s2492 + $0x78] sm:$0xff]
    %v2514 = vld [vmem:[%s2492 + $0x80] sm:$0xf]
    %v2515 = vld [vmem:[%s2492 + $0x84] sm:$0xff]
    %v2516 = vld [vmem:[%s2492 + $0x8c] sm:$0xf]
    %v2517 = vld [vmem:[%s2492 + $0x90] sm:$0xff]
    %v2518 = vld [vmem:[%s2492 + $0x98] sm:$0xf]
    %v2519 = vld [vmem:[%s2492 + $0x9c] sm:$0xff]
    %v2520 = vld [vmem:[%s2492 + $0xa4] sm:$0xf]
    %v2521 = vld [vmem:[%s2492 + $0xa8] sm:$0xff]
    %v2522 = vld [vmem:[%s2492 + $0xb0] sm:$0xf]
    %v2523 = vld [vmem:[%s2492 + $0xb4] sm:$0xff]
    %v2524 = vld [vmem:[%s2492 + $0xbc] sm:$0xf]
    %s2525 = scalar_lea.vmem %s5, 3
    %v2526 = vld [vmem:[%s2525] sm:$0x7]
    %v2528 = vlaneseq
    %v2529 = vshrl.u32 %v2528, 7
    %v2530 = vsub.s32 0, %v2529
    %v2531 = vrot.slane %v2526, %v2530
    %v2532 = vlaneseq
    %v2533 = vshrl.u32 %v2532, 7
    %v2534 = vsub.s32 1, %v2533
    %v2535 = vrot.slane %v2526, %v2534
    %v2536 = vlaneseq
    %v2537 = vshrl.u32 %v2536, 7
    %v2538 = vsub.s32 2, %v2537
    %v2539 = vrot.slane %v2526, %v2538
    %v2575 = vunpack.c.l.b16 %v2493
    %v2576 = vunpack.c.h.b16 %v2493
    %v2577 = vunpack.c.l.b16 %v2494
    %v2578 = vunpack.c.l.b16 %v2495
    %v2579 = vunpack.c.h.b16 %v2495
    %v2580 = vunpack.c.l.b16 %v2496
    %v2581 = vunpack.c.l.b16 %v2497
    %v2582 = vunpack.c.h.b16 %v2497
    %v2583 = vunpack.c.l.b16 %v2498
    %v2584 = vunpack.c.l.b16 %v2499
    %v2585 = vunpack.c.h.b16 %v2499
    %v2586 = vunpack.c.l.b16 %v2500
    %v2587 = vunpack.c.l.b16 %v2501
    %v2588 = vunpack.c.h.b16 %v2501
    %v2589 = vunpack.c.l.b16 %v2502
    %v2590 = vunpack.c.l.b16 %v2503
    %v2591 = vunpack.c.h.b16 %v2503
    %v2592 = vunpack.c.l.b16 %v2504
    %v2593 = vunpack.c.l.b16 %v2505
    %v2594 = vunpack.c.h.b16 %v2505
    %v2595 = vunpack.c.l.b16 %v2506
    %v2596 = vunpack.c.l.b16 %v2507
    %v2597 = vunpack.c.h.b16 %v2507
    %v2598 = vunpack.c.l.b16 %v2508
    %v2599 = vunpack.c.l.b16 %v2509
    %v2600 = vunpack.c.h.b16 %v2509
    %v2601 = vunpack.c.l.b16 %v2510
    %v2602 = vunpack.c.l.b16 %v2511
    %v2603 = vunpack.c.h.b16 %v2511
    %v2604 = vunpack.c.l.b16 %v2512
    %v2605 = vunpack.c.l.b16 %v2513
    %v2606 = vunpack.c.h.b16 %v2513
    %v2607 = vunpack.c.l.b16 %v2514
    %v2608 = vunpack.c.l.b16 %v2515
    %v2609 = vunpack.c.h.b16 %v2515
    %v2610 = vunpack.c.l.b16 %v2516
    %v2611 = vunpack.c.l.b16 %v2517
    %v2612 = vunpack.c.h.b16 %v2517
    %v2613 = vunpack.c.l.b16 %v2518
    %v2614 = vunpack.c.l.b16 %v2519
    %v2615 = vunpack.c.h.b16 %v2519
    %v2616 = vunpack.c.l.b16 %v2520
    %v2617 = vunpack.c.l.b16 %v2521
    %v2618 = vunpack.c.h.b16 %v2521
    %v2619 = vunpack.c.l.b16 %v2522
    %v2620 = vunpack.c.l.b16 %v2523
    %v2621 = vunpack.c.h.b16 %v2523
    %v2622 = vunpack.c.l.b16 %v2524
    %v2623 = vpack.c.b16 %v2578, %v2575
    %v2624 = vpack.c.b16 %v2579, %v2576
    %v2625 = vpack.c.b16 %v2580, %v2577
    %v2626 = vpack.c.b16 %v2584, %v2581
    %v2627 = vpack.c.b16 %v2585, %v2582
    %v2628 = vpack.c.b16 %v2586, %v2583
    %v2629 = vpack.c.b16 %v2590, %v2587
    %v2630 = vpack.c.b16 %v2591, %v2588
    %v2631 = vpack.c.b16 %v2592, %v2589
    %v2632 = vpack.c.b16 %v2596, %v2593
    %v2633 = vpack.c.b16 %v2597, %v2594
    %v2634 = vpack.c.b16 %v2598, %v2595
    %v2635 = vpack.c.b16 %v2602, %v2599
    %v2636 = vpack.c.b16 %v2603, %v2600
    %v2637 = vpack.c.b16 %v2604, %v2601
    %v2638 = vpack.c.b16 %v2608, %v2605
    %v2639 = vpack.c.b16 %v2609, %v2606
    %v2640 = vpack.c.b16 %v2610, %v2607
    %v2641 = vpack.c.b16 %v2614, %v2611
    %v2642 = vpack.c.b16 %v2615, %v2612
    %v2643 = vpack.c.b16 %v2616, %v2613
    %v2644 = vpack.c.b16 %v2620, %v2617
    %v2645 = vpack.c.b16 %v2621, %v2618
    %v2646 = vpack.c.b16 %v2622, %v2619
    %2671 = vmatprep.subr.bf16.mxu0 %v2645
    %2672 = vmatpush1.bf16.msra.mxu0 %v2644
    %2673 = vmatprep.subr.bf16.mxu0 %v2642
    %2674 = vmatpush1.bf16.msra.mxu0 %v2641
    %2675 = vmatprep.subr.bf16.mxu0 %v2639
    %2676 = vmatpush1.bf16.msra.mxu0 %v2638
    %2677 = vmatprep.subr.bf16.mxu0 %v2636
    %2678 = vmatpush1.bf16.msra.mxu0 %v2635
    %2679 = vmatprep.subr.bf16.mxu0 %v2633
    %2680 = vmatpush1.bf16.msra.mxu0 %v2632
    %2681 = vmatprep.subr.bf16.mxu0 %v2630
    %2682 = vmatpush1.bf16.msra.mxu0 %v2629
    %2683 = vmatprep.subr.bf16.mxu0 %v2627
    %2684 = vmatpush1.bf16.msra.mxu0 %v2626
    %2685 = vmatprep.subr.bf16.mxu0 %v2624
    %2686 = vmatpush1.bf16.msra.mxu0 %v2623
    %2687 = vmatprep.subr.bf16.mxu0 0
    %2688 = vmatpush2.bf16.msra.mxu0 0
    %2689 = vmatprep.subr.bf16.mxu0 0
    %2690 = vmatpush2.bf16.msra.mxu0 0
    %2691 = vmatprep.subr.bf16.mxu0 0
    %2692 = vmatpush2.bf16.msra.mxu0 0
    %2693 = vmatprep.subr.bf16.mxu0 0
    %2694 = vmatpush2.bf16.msra.mxu0 0
    %2695 = vmatprep.subr.bf16.mxu0 0
    %2696 = vmatpush2.bf16.msra.mxu0 0
    %2697 = vmatprep.subr.bf16.mxu0 0
    %2698 = vmatpush2.bf16.msra.mxu0 0
    %2699 = vmatprep.subr.bf16.mxu0 0
    %2700 = vmatpush2.bf16.msra.mxu0 0
    %2701 = vmatprep.subr.bf16.mxu0 0
    %2702 = vmatpush2.bf16.msra.mxu0 0
    %2703 = vmatprep.mubr.bf16.mxu0 0
    %2704 = vmatmul.mubr.bf16.gmra.mxu0 %v2491
    %v2705 = vpop.f32.mrf.mxu0
    %v2706 = vadd.f32 %v2531, %v2705
    %v2707 = vpop.f32.mrf.mxu0
    %v2708 = vadd.f32 %v2535, %v2707
    %v2709 = vpop.f32.mrf.mxu0
    %v2710 = vadd.f32 %v2531, %v2709
    %v2711 = vpop.f32.mrf.mxu0
    %v2712 = vadd.f32 %v2535, %v2711
    %2713 = vdwg.mxu0
    %2714 = vmatprep.subr.bf16.mxu0 0
    %2715 = vmatpush1.bf16.msra.mxu0 %v2646
    %2716 = vmatprep.subr.bf16.mxu0 0
    %2717 = vmatpush1.bf16.msra.mxu0 %v2643
    %2718 = vmatprep.subr.bf16.mxu0 0
    %2719 = vmatpush1.bf16.msra.mxu0 %v2640
    %2720 = vmatprep.subr.bf16.mxu0 0
    %2721 = vmatpush1.bf16.msra.mxu0 %v2637
    %2722 = vmatprep.subr.bf16.mxu0 0
    %2723 = vmatpush1.bf16.msra.mxu0 %v2634
    %2724 = vmatprep.subr.bf16.mxu0 0
    %2725 = vmatpush1.bf16.msra.mxu0 %v2631
    %2726 = vmatprep.subr.bf16.mxu0 0
    %2727 = vmatpush1.bf16.msra.mxu0 %v2628
    %2728 = vmatprep.subr.bf16.mxu0 0
    %2729 = vmatpush1.bf16.msra.mxu0 %v2625
    %2730 = vmatprep.subr.bf16.mxu0 0
    %2731 = vmatpush2.bf16.msra.mxu0 0
    %2732 = vmatprep.subr.bf16.mxu0 0
    %2733 = vmatpush2.bf16.msra.mxu0 0
    %2734 = vmatprep.subr.bf16.mxu0 0
    %2735 = vmatpush2.bf16.msra.mxu0 0
    %2736 = vmatprep.subr.bf16.mxu0 0
    %2737 = vmatpush2.bf16.msra.mxu0 0
    %2738 = vmatprep.subr.bf16.mxu0 0
    %2739 = vmatpush2.bf16.msra.mxu0 0
    %2740 = vmatprep.subr.bf16.mxu0 0
    %2741 = vmatpush2.bf16.msra.mxu0 0
    %2742 = vmatprep.subr.bf16.mxu0 0
    %2743 = vmatpush2.bf16.msra.mxu0 0
    %2744 = vmatprep.subr.bf16.mxu0 0
    %2745 = vmatpush2.bf16.msra.mxu0 0
    %2746 = vmatprep.mubr.bf16.mxu0 0
    %2747 = vmatmul.mubr.bf16.gmra.mxu0 %v2491
    %v2748 = vpop.f32.mrf.mxu0
    %v2749 = vadd.f32 %v2539, %v2748
    %v2750 = vpop.f32.mrf.mxu0
    %v2751 = vpop.f32.mrf.mxu0
    %v2752 = vadd.f32 %v2539, %v2751
    %v2753 = vpop.f32.mrf.mxu0
    %2754 = vdwg.mxu0
    %v2756 = vsel %vm441, %v2706, 0
    %v2759 = vsel %vm441, %v2708, 0
    %2761 = vmatprep.subr.mxu0 0.0
    %2762 = vmatpush1.xpose.msra.mxu0 0.0
    %2763 = vmatprep.subr.mxu0 0.0
    %2764 = vmatpush1.xpose.msra.mxu0 0.0
    %2765 = vmatprep.subr.mxu0 0.0
    %2766 = vmatpush1.xpose.msra.mxu0 0.0
    %2767 = vmatprep.subr.mxu0 0.0
    %2768 = vmatpush1.xpose.msra.mxu0 0.0
    %2769 = vmatprep.subr.mxu0 0.0
    %2770 = vmatpush1.xpose.msra.mxu0 0.0
    %2771 = vmatprep.subr.mxu0 0.0
    %2772 = vmatpush1.xpose.msra.mxu0 0.0
    %2773 = vmatprep.subr.mxu0 0.0
    %2774 = vmatpush1.xpose.msra.mxu0 0.0
    %2775 = vmatprep.subr.mxu0 0.0
    %2776 = vmatpush1.xpose.msra.mxu0 0.0
    %2777 = vmatprep.subr.mxu0 0.0
    %2778 = vmatpush1.xpose.msra.mxu0 0.0
    %2779 = vmatprep.subr.mxu0 0.0
    %2780 = vmatpush1.xpose.msra.mxu0 0.0
    %2781 = vmatprep.subr.mxu0 0.0
    %2782 = vmatpush1.xpose.msra.mxu0 0.0
    %2783 = vmatprep.subr.mxu0 0.0
    %2784 = vmatpush1.xpose.msra.mxu0 0.0
    %2785 = vmatprep.subr.mxu0 0.0
    %2786 = vmatpush1.xpose.msra.mxu0 0.0
    %2787 = vmatprep.subr.mxu0 0.0
    %2788 = vmatpush1.xpose.msra.mxu0 0.0
    %2789 = vmatprep.subr.mxu0 0.0
    %2790 = vmatpush1.xpose.msra.mxu0 0.0
    %2791 = vmatprep.subr.mxu0 0.0
    %2792 = vmatpush1.xpose.msra.mxu0 %v2759
    %2793 = vmatprep.subr.mxu0 0.0
    %2794 = vmatpush2.xpose.msra.mxu0 0.0
    %2795 = vmatprep.subr.mxu0 0.0
    %2796 = vmatpush2.xpose.msra.mxu0 0.0
    %2797 = vmatprep.subr.mxu0 0.0
    %2798 = vmatpush2.xpose.msra.mxu0 0.0
    %2799 = vmatprep.subr.mxu0 0.0
    %2800 = vmatpush2.xpose.msra.mxu0 0.0
    %2801 = vmatprep.subr.mxu0 0.0
    %2802 = vmatpush2.xpose.msra.mxu0 0.0
    %2803 = vmatprep.subr.mxu0 0.0
    %2804 = vmatpush2.xpose.msra.mxu0 0.0
    %2805 = vmatprep.subr.mxu0 0.0
    %2806 = vmatpush2.xpose.msra.mxu0 0.0
    %2807 = vmatprep.subr.mxu0 0.0
    %2808 = vmatpush2.xpose.msra.mxu0 0.0
    %2809 = vmatprep.subr.mxu0 0.0
    %2810 = vmatpush2.xpose.msra.mxu0 0.0
    %2811 = vmatprep.subr.mxu0 0.0
    %2812 = vmatpush2.xpose.msra.mxu0 0.0
    %2813 = vmatprep.subr.mxu0 0.0
    %2814 = vmatpush2.xpose.msra.mxu0 0.0
    %2815 = vmatprep.subr.mxu0 0.0
    %2816 = vmatpush2.xpose.msra.mxu0 0.0
    %2817 = vmatprep.subr.mxu0 0.0
    %2818 = vmatpush2.xpose.msra.mxu0 0.0
    %2819 = vmatprep.subr.mxu0 0.0
    %2820 = vmatpush2.xpose.msra.mxu0 0.0
    %2821 = vmatprep.subr.mxu0 0.0
    %2822 = vmatpush2.xpose.msra.mxu0 0.0
    %2823 = vmatprep.subr.mxu0 0.0
    %2824 = vmatpush2.xpose.msra.mxu0 0.0
    %2825 = vmatprep.mubr.f32.mxu0 0.0
    %2826 = vmatmul.mubr.f32.gmra.mxu0 %v2756
    %v2827 = vpop.f32.mrf.mxu0
    %v2828 = vadd.f32 0.0, %v2827
    %v2829 = vpop.f32.mrf.mxu0
    %2830 = vdwg.mxu0
    %v2832 = vsel %vm441, %v2710, 0
    %v2835 = vsel %vm441, %v2712, 0
    %2837 = vmatprep.subr.mxu0 0.0
    %2838 = vmatpush1.xpose.msra.mxu0 0.0
    %2839 = vmatprep.subr.mxu0 0.0
    %2840 = vmatpush1.xpose.msra.mxu0 0.0
    %2841 = vmatprep.subr.mxu0 0.0
    %2842 = vmatpush1.xpose.msra.mxu0 0.0
    %2843 = vmatprep.subr.mxu0 0.0
    %2844 = vmatpush1.xpose.msra.mxu0 0.0
    %2845 = vmatprep.subr.mxu0 0.0
    %2846 = vmatpush1.xpose.msra.mxu0 0.0
    %2847 = vmatprep.subr.mxu0 0.0
    %2848 = vmatpush1.xpose.msra.mxu0 0.0
    %2849 = vmatprep.subr.mxu0 0.0
    %2850 = vmatpush1.xpose.msra.mxu0 0.0
    %2851 = vmatprep.subr.mxu0 0.0
    %2852 = vmatpush1.xpose.msra.mxu0 0.0
    %2853 = vmatprep.subr.mxu0 0.0
    %2854 = vmatpush1.xpose.msra.mxu0 0.0
    %2855 = vmatprep.subr.mxu0 0.0
    %2856 = vmatpush1.xpose.msra.mxu0 0.0
    %2857 = vmatprep.subr.mxu0 0.0
    %2858 = vmatpush1.xpose.msra.mxu0 0.0
    %2859 = vmatprep.subr.mxu0 0.0
    %2860 = vmatpush1.xpose.msra.mxu0 0.0
    %2861 = vmatprep.subr.mxu0 0.0
    %2862 = vmatpush1.xpose.msra.mxu0 0.0
    %2863 = vmatprep.subr.mxu0 0.0
    %2864 = vmatpush1.xpose.msra.mxu0 0.0
    %2865 = vmatprep.subr.mxu0 0.0
    %2866 = vmatpush1.xpose.msra.mxu0 0.0
    %2867 = vmatprep.subr.mxu0 0.0
    %2868 = vmatpush1.xpose.msra.mxu0 %v2835
    %2869 = vmatprep.subr.mxu0 0.0
    %2870 = vmatpush2.xpose.msra.mxu0 0.0
    %2871 = vmatprep.subr.mxu0 0.0
    %2872 = vmatpush2.xpose.msra.mxu0 0.0
    %2873 = vmatprep.subr.mxu0 0.0
    %2874 = vmatpush2.xpose.msra.mxu0 0.0
    %2875 = vmatprep.subr.mxu0 0.0
    %2876 = vmatpush2.xpose.msra.mxu0 0.0
    %2877 = vmatprep.subr.mxu0 0.0
    %2878 = vmatpush2.xpose.msra.mxu0 0.0
    %2879 = vmatprep.subr.mxu0 0.0
    %2880 = vmatpush2.xpose.msra.mxu0 0.0
    %2881 = vmatprep.subr.mxu0 0.0
    %2882 = vmatpush2.xpose.msra.mxu0 0.0
    %2883 = vmatprep.subr.mxu0 0.0
    %2884 = vmatpush2.xpose.msra.mxu0 0.0
    %2885 = vmatprep.subr.mxu0 0.0
    %2886 = vmatpush2.xpose.msra.mxu0 0.0
    %2887 = vmatprep.subr.mxu0 0.0
    %2888 = vmatpush2.xpose.msra.mxu0 0.0
    %2889 = vmatprep.subr.mxu0 0.0
    %2890 = vmatpush2.xpose.msra.mxu0 0.0
    %2891 = vmatprep.subr.mxu0 0.0
    %2892 = vmatpush2.xpose.msra.mxu0 0.0
    %2893 = vmatprep.subr.mxu0 0.0
    %2894 = vmatpush2.xpose.msra.mxu0 0.0
    %2895 = vmatprep.subr.mxu0 0.0
    %2896 = vmatpush2.xpose.msra.mxu0 0.0
    %2897 = vmatprep.subr.mxu0 0.0
    %2898 = vmatpush2.xpose.msra.mxu0 0.0
    %2899 = vmatprep.subr.mxu0 0.0
    %2900 = vmatpush2.xpose.msra.mxu0 0.0
    %2901 = vmatprep.mubr.f32.mxu0 0.0
    %2902 = vmatmul.mubr.f32.gmra.mxu0 %v2832
    %v2903 = vpop.f32.mrf.mxu0
    %v2904 = vadd.f32 0.0, %v2903
    %v2905 = vpop.f32.mrf.mxu0
    %2906 = vdwg.mxu0
    %v2907 = vmul.f32 %v2828, 0.17677669
    %v2908 = vmul.f32 %v2904, 0.17677669
    %v2909 = vadd.f32 %v2907, %v599
    %v2910 = vadd.f32 %v2908, %v603
    %v2911 = vsel %vm608, %v2909, -inf
    %2912 = vmax.xlane.f32.xlu0 %v2911
    %v2913 = vpop.xlane.xlu0 %2912
    %v2914 = vsel %vm608, %v2910, -inf
    %2915 = vmax.xlane.f32.xlu0 %v2914
    %v2916 = vpop.xlane.xlu0 %2915
    %v2917 = vsub.f32 %v2909, %v2913
    %v2918 = vsub.f32 %v2910, %v2916
    %v2919 = vmul.f32 %v2917, 1.442695
    %v2920 = vpow.pop %v2919
    %v2921 = vmul.f32 %v2918, 1.442695
    %v2922 = vpow.pop %v2921
    %v2923 = vsel %vm608, %v2920, 0.0
    %2924 = vadd.xlane.f32.xlu0 %v2923
    %v2925 = vpop.xlane.xlu0 %2924
    %v2926 = vsel %vm608, %v2922, 0.0
    %2927 = vadd.xlane.f32.xlu0 %v2926
    %v2928 = vpop.xlane.xlu0 %2927
    %v2929 = vrcp.pop %v2925
    %v2930 = vmul.f32 %v2920, %v2929
    %v2931 = vrcp.pop %v2928
    %v2932 = vmul.f32 %v2922, %v2931
    %v2934 = vsel %vm608, %v2930, 0
    %2936 = vmatprep.subr.mxu0 0.0
    %2937 = vmatpush1.msra.mxu0 0.0
    %2938 = vmatprep.subr.mxu0 0.0
    %2939 = vmatpush1.msra.mxu0 0.0
    %2940 = vmatprep.subr.mxu0 0.0
    %2941 = vmatpush1.msra.mxu0 0.0
    %2942 = vmatprep.subr.mxu0 0.0
    %2943 = vmatpush1.msra.mxu0 0.0
    %2944 = vmatprep.subr.mxu0 0.0
    %2945 = vmatpush1.msra.mxu0 0.0
    %2946 = vmatprep.subr.mxu0 0.0
    %2947 = vmatpush1.msra.mxu0 0.0
    %2948 = vmatprep.subr.mxu0 0.0
    %2949 = vmatpush1.msra.mxu0 0.0
    %2950 = vmatprep.subr.mxu0 0.0
    %2951 = vmatpush1.msra.mxu0 0.0
    %2952 = vmatprep.subr.mxu0 0.0
    %2953 = vmatpush1.msra.mxu0 0.0
    %2954 = vmatprep.subr.mxu0 0.0
    %2955 = vmatpush1.msra.mxu0 0.0
    %2956 = vmatprep.subr.mxu0 0.0
    %2957 = vmatpush1.msra.mxu0 0.0
    %2958 = vmatprep.subr.mxu0 0.0
    %2959 = vmatpush1.msra.mxu0 0.0
    %2960 = vmatprep.subr.mxu0 0.0
    %2961 = vmatpush1.msra.mxu0 0.0
    %2962 = vmatprep.subr.mxu0 0.0
    %2963 = vmatpush1.msra.mxu0 0.0
    %2964 = vmatprep.subr.mxu0 0.0
    %2965 = vmatpush1.msra.mxu0 0.0
    %2966 = vmatprep.subr.mxu0 0.0
    %2967 = vmatpush1.msra.mxu0 %v2749
    %2968 = vmatprep.subr.mxu0 0.0
    %2969 = vmatpush2.msra.mxu0 0.0
    %2970 = vmatprep.subr.mxu0 0.0
    %2971 = vmatpush2.msra.mxu0 0.0
    %2972 = vmatprep.subr.mxu0 0.0
    %2973 = vmatpush2.msra.mxu0 0.0
    %2974 = vmatprep.subr.mxu0 0.0
    %2975 = vmatpush2.msra.mxu0 0.0
    %2976 = vmatprep.subr.mxu0 0.0
    %2977 = vmatpush2.msra.mxu0 0.0
    %2978 = vmatprep.subr.mxu0 0.0
    %2979 = vmatpush2.msra.mxu0 0.0
    %2980 = vmatprep.subr.mxu0 0.0
    %2981 = vmatpush2.msra.mxu0 0.0
    %2982 = vmatprep.subr.mxu0 0.0
    %2983 = vmatpush2.msra.mxu0 0.0
    %2984 = vmatprep.subr.mxu0 0.0
    %2985 = vmatpush2.msra.mxu0 0.0
    %2986 = vmatprep.subr.mxu0 0.0
    %2987 = vmatpush2.msra.mxu0 0.0
    %2988 = vmatprep.subr.mxu0 0.0
    %2989 = vmatpush2.msra.mxu0 0.0
    %2990 = vmatprep.subr.mxu0 0.0
    %2991 = vmatpush2.msra.mxu0 0.0
    %2992 = vmatprep.subr.mxu0 0.0
    %2993 = vmatpush2.msra.mxu0 0.0
    %2994 = vmatprep.subr.mxu0 0.0
    %2995 = vmatpush2.msra.mxu0 0.0
    %2996 = vmatprep.subr.mxu0 0.0
    %2997 = vmatpush2.msra.mxu0 0.0
    %2998 = vmatprep.subr.mxu0 0.0
    %2999 = vmatpush2.msra.mxu0 0.0
    %3000 = vmatprep.mubr.f32.mxu0 0.0
    %3001 = vmatmul.mubr.f32.gmra.mxu0 %v2934
    %v3002 = vpop.f32.mrf.mxu0
    %v3003 = vadd.f32 0.0, %v3002
    %v3004 = vpop.f32.mrf.mxu0
    %3005 = vdwg.mxu0
    %v3007 = vsel %vm608, %v2932, 0
    %3009 = vmatprep.subr.mxu0 0.0
    %3010 = vmatpush1.msra.mxu0 0.0
    %3011 = vmatprep.subr.mxu0 0.0
    %3012 = vmatpush1.msra.mxu0 0.0
    %3013 = vmatprep.subr.mxu0 0.0
    %3014 = vmatpush1.msra.mxu0 0.0
    %3015 = vmatprep.subr.mxu0 0.0
    %3016 = vmatpush1.msra.mxu0 0.0
    %3017 = vmatprep.subr.mxu0 0.0
    %3018 = vmatpush1.msra.mxu0 0.0
    %3019 = vmatprep.subr.mxu0 0.0
    %3020 = vmatpush1.msra.mxu0 0.0
    %3021 = vmatprep.subr.mxu0 0.0
    %3022 = vmatpush1.msra.mxu0 0.0
    %3023 = vmatprep.subr.mxu0 0.0
    %3024 = vmatpush1.msra.mxu0 0.0
    %3025 = vmatprep.subr.mxu0 0.0
    %3026 = vmatpush1.msra.mxu0 0.0
    %3027 = vmatprep.subr.mxu0 0.0
    %3028 = vmatpush1.msra.mxu0 0.0
    %3029 = vmatprep.subr.mxu0 0.0
    %3030 = vmatpush1.msra.mxu0 0.0
    %3031 = vmatprep.subr.mxu0 0.0
    %3032 = vmatpush1.msra.mxu0 0.0
    %3033 = vmatprep.subr.mxu0 0.0
    %3034 = vmatpush1.msra.mxu0 0.0
    %3035 = vmatprep.subr.mxu0 0.0
    %3036 = vmatpush1.msra.mxu0 0.0
    %3037 = vmatprep.subr.mxu0 0.0
    %3038 = vmatpush1.msra.mxu0 0.0
    %3039 = vmatprep.subr.mxu0 0.0
    %3040 = vmatpush1.msra.mxu0 %v2752
    %3041 = vmatprep.subr.mxu0 0.0
    %3042 = vmatpush2.msra.mxu0 0.0
    %3043 = vmatprep.subr.mxu0 0.0
    %3044 = vmatpush2.msra.mxu0 0.0
    %3045 = vmatprep.subr.mxu0 0.0
    %3046 = vmatpush2.msra.mxu0 0.0
    %3047 = vmatprep.subr.mxu0 0.0
    %3048 = vmatpush2.msra.mxu0 0.0
    %3049 = vmatprep.subr.mxu0 0.0
    %3050 = vmatpush2.msra.mxu0 0.0
    %3051 = vmatprep.subr.mxu0 0.0
    %3052 = vmatpush2.msra.mxu0 0.0
    %3053 = vmatprep.subr.mxu0 0.0
    %3054 = vmatpush2.msra.mxu0 0.0
    %3055 = vmatprep.subr.mxu0 0.0
    %3056 = vmatpush2.msra.mxu0 0.0
    %3057 = vmatprep.subr.mxu0 0.0
    %3058 = vmatpush2.msra.mxu0 0.0
    %3059 = vmatprep.subr.mxu0 0.0
    %3060 = vmatpush2.msra.mxu0 0.0
    %3061 = vmatprep.subr.mxu0 0.0
    %3062 = vmatpush2.msra.mxu0 0.0
    %3063 = vmatprep.subr.mxu0 0.0
    %3064 = vmatpush2.msra.mxu0 0.0
    %3065 = vmatprep.subr.mxu0 0.0
    %3066 = vmatpush2.msra.mxu0 0.0
    %3067 = vmatprep.subr.mxu0 0.0
    %3068 = vmatpush2.msra.mxu0 0.0
    %3069 = vmatprep.subr.mxu0 0.0
    %3070 = vmatpush2.msra.mxu0 0.0
    %3071 = vmatprep.subr.mxu0 0.0
    %3072 = vmatpush2.msra.mxu0 0.0
    %3073 = vmatprep.mubr.f32.mxu0 0.0
    %3074 = vmatmul.mubr.f32.gmra.mxu0 %v3007
    %v3075 = vpop.f32.mrf.mxu0
    %v3076 = vadd.f32 0.0, %v3075
    %v3077 = vpop.f32.mrf.mxu0
    %3078 = vdwg.mxu0
    %v3079 = vpack.c.bf16 %v3076, %v3003
    %s3080 = scalar_lea.vmem [#allocation6], 64
    %v3081 = vld [vmem:[%s3080] sm:$0xf]
    %v3082 = vld [vmem:[%s3080 + $0x4] sm:$0xf]
    %v3083 = vld [vmem:[%s3080 + $0x8] sm:$0xf]
    %v3084 = vld [vmem:[%s3080 + $0xc] sm:$0xf]
    %3085 = vrot.lane.b32.xlu0 %v2706, 96
    %v3086 = vpop.permute.xlu0 %3085
    %3087 = vrot.lane.b32.xlu0 %v2708, 96
    %v3088 = vpop.permute.xlu0 %3087
    %v3089 = vsel %vm441, %v3086, 0
    %v3091 = vsel %vm441, %v3088, 0
    %3093 = vmatprep.subr.mxu0 0.0
    %3094 = vmatpush1.xpose.msra.mxu0 0.0
    %3095 = vmatprep.subr.mxu0 0.0
    %3096 = vmatpush1.xpose.msra.mxu0 0.0
    %3097 = vmatprep.subr.mxu0 0.0
    %3098 = vmatpush1.xpose.msra.mxu0 0.0
    %3099 = vmatprep.subr.mxu0 0.0
    %3100 = vmatpush1.xpose.msra.mxu0 0.0
    %3101 = vmatprep.subr.mxu0 0.0
    %3102 = vmatpush1.xpose.msra.mxu0 0.0
    %3103 = vmatprep.subr.mxu0 0.0
    %3104 = vmatpush1.xpose.msra.mxu0 0.0
    %3105 = vmatprep.subr.mxu0 0.0
    %3106 = vmatpush1.xpose.msra.mxu0 0.0
    %3107 = vmatprep.subr.mxu0 0.0
    %3108 = vmatpush1.xpose.msra.mxu0 0.0
    %3109 = vmatprep.subr.mxu0 0.0
    %3110 = vmatpush1.xpose.msra.mxu0 0.0
    %3111 = vmatprep.subr.mxu0 0.0
    %3112 = vmatpush1.xpose.msra.mxu0 0.0
    %3113 = vmatprep.subr.mxu0 0.0
    %3114 = vmatpush1.xpose.msra.mxu0 0.0
    %3115 = vmatprep.subr.mxu0 0.0
    %3116 = vmatpush1.xpose.msra.mxu0 0.0
    %3117 = vmatprep.subr.mxu0 0.0
    %3118 = vmatpush1.xpose.msra.mxu0 0.0
    %3119 = vmatprep.subr.mxu0 0.0
    %3120 = vmatpush1.xpose.msra.mxu0 0.0
    %3121 = vmatprep.subr.mxu0 0.0
    %3122 = vmatpush1.xpose.msra.mxu0 0.0
    %3123 = vmatprep.subr.mxu0 0.0
    %3124 = vmatpush1.xpose.msra.mxu0 %v3091
    %3125 = vmatprep.subr.mxu0 0.0
    %3126 = vmatpush2.xpose.msra.mxu0 0.0
    %3127 = vmatprep.subr.mxu0 0.0
    %3128 = vmatpush2.xpose.msra.mxu0 0.0
    %3129 = vmatprep.subr.mxu0 0.0
    %3130 = vmatpush2.xpose.msra.mxu0 0.0
    %3131 = vmatprep.subr.mxu0 0.0
    %3132 = vmatpush2.xpose.msra.mxu0 0.0
    %3133 = vmatprep.subr.mxu0 0.0
    %3134 = vmatpush2.xpose.msra.mxu0 0.0
    %3135 = vmatprep.subr.mxu0 0.0
    %3136 = vmatpush2.xpose.msra.mxu0 0.0
    %3137 = vmatprep.subr.mxu0 0.0
    %3138 = vmatpush2.xpose.msra.mxu0 0.0
    %3139 = vmatprep.subr.mxu0 0.0
    %3140 = vmatpush2.xpose.msra.mxu0 0.0
    %3141 = vmatprep.subr.mxu0 0.0
    %3142 = vmatpush2.xpose.msra.mxu0 0.0
    %3143 = vmatprep.subr.mxu0 0.0
    %3144 = vmatpush2.xpose.msra.mxu0 0.0
    %3145 = vmatprep.subr.mxu0 0.0
    %3146 = vmatpush2.xpose.msra.mxu0 0.0
    %3147 = vmatprep.subr.mxu0 0.0
    %3148 = vmatpush2.xpose.msra.mxu0 0.0
    %3149 = vmatprep.subr.mxu0 0.0
    %3150 = vmatpush2.xpose.msra.mxu0 0.0
    %3151 = vmatprep.subr.mxu0 0.0
    %3152 = vmatpush2.xpose.msra.mxu0 0.0
    %3153 = vmatprep.subr.mxu0 0.0
    %3154 = vmatpush2.xpose.msra.mxu0 0.0
    %3155 = vmatprep.subr.mxu0 0.0
    %3156 = vmatpush2.xpose.msra.mxu0 0.0
    %3157 = vmatprep.mubr.f32.mxu0 0.0
    %3158 = vmatmul.mubr.f32.gmra.mxu0 %v3089
    %v3159 = vpop.f32.mrf.mxu0
    %v3160 = vadd.f32 0.0, %v3159
    %v3161 = vpop.f32.mrf.mxu0
    %3162 = vdwg.mxu0
    %3163 = vrot.lane.b32.xlu0 %v2710, 96
    %v3164 = vpop.permute.xlu0 %3163
    %3165 = vrot.lane.b32.xlu0 %v2712, 96
    %v3166 = vpop.permute.xlu0 %3165
    %v3167 = vsel %vm441, %v3164, 0
    %v3169 = vsel %vm441, %v3166, 0
    %3171 = vmatprep.subr.mxu0 0.0
    %3172 = vmatpush1.xpose.msra.mxu0 0.0
    %3173 = vmatprep.subr.mxu0 0.0
    %3174 = vmatpush1.xpose.msra.mxu0 0.0
    %3175 = vmatprep.subr.mxu0 0.0
    %3176 = vmatpush1.xpose.msra.mxu0 0.0
    %3177 = vmatprep.subr.mxu0 0.0
    %3178 = vmatpush1.xpose.msra.mxu0 0.0
    %3179 = vmatprep.subr.mxu0 0.0
    %3180 = vmatpush1.xpose.msra.mxu0 0.0
    %3181 = vmatprep.subr.mxu0 0.0
    %3182 = vmatpush1.xpose.msra.mxu0 0.0
    %3183 = vmatprep.subr.mxu0 0.0
    %3184 = vmatpush1.xpose.msra.mxu0 0.0
    %3185 = vmatprep.subr.mxu0 0.0
    %3186 = vmatpush1.xpose.msra.mxu0 0.0
    %3187 = vmatprep.subr.mxu0 0.0
    %3188 = vmatpush1.xpose.msra.mxu0 0.0
    %3189 = vmatprep.subr.mxu0 0.0
    %3190 = vmatpush1.xpose.msra.mxu0 0.0
    %3191 = vmatprep.subr.mxu0 0.0
    %3192 = vmatpush1.xpose.msra.mxu0 0.0
    %3193 = vmatprep.subr.mxu0 0.0
    %3194 = vmatpush1.xpose.msra.mxu0 0.0
    %3195 = vmatprep.subr.mxu0 0.0
    %3196 = vmatpush1.xpose.msra.mxu0 0.0
    %3197 = vmatprep.subr.mxu0 0.0
    %3198 = vmatpush1.xpose.msra.mxu0 0.0
    %3199 = vmatprep.subr.mxu0 0.0
    %3200 = vmatpush1.xpose.msra.mxu0 0.0
    %3201 = vmatprep.subr.mxu0 0.0
    %3202 = vmatpush1.xpose.msra.mxu0 %v3169
    %3203 = vmatprep.subr.mxu0 0.0
    %3204 = vmatpush2.xpose.msra.mxu0 0.0
    %3205 = vmatprep.subr.mxu0 0.0
    %3206 = vmatpush2.xpose.msra.mxu0 0.0
    %3207 = vmatprep.subr.mxu0 0.0
    %3208 = vmatpush2.xpose.msra.mxu0 0.0
    %3209 = vmatprep.subr.mxu0 0.0
    %3210 = vmatpush2.xpose.msra.mxu0 0.0
    %3211 = vmatprep.subr.mxu0 0.0
    %3212 = vmatpush2.xpose.msra.mxu0 0.0
    %3213 = vmatprep.subr.mxu0 0.0
    %3214 = vmatpush2.xpose.msra.mxu0 0.0
    %3215 = vmatprep.subr.mxu0 0.0
    %3216 = vmatpush2.xpose.msra.mxu0 0.0
    %3217 = vmatprep.subr.mxu0 0.0
    %3218 = vmatpush2.xpose.msra.mxu0 0.0
    %3219 = vmatprep.subr.mxu0 0.0
    %3220 = vmatpush2.xpose.msra.mxu0 0.0
    %3221 = vmatprep.subr.mxu0 0.0
    %3222 = vmatpush2.xpose.msra.mxu0 0.0
    %3223 = vmatprep.subr.mxu0 0.0
    %3224 = vmatpush2.xpose.msra.mxu0 0.0
    %3225 = vmatprep.subr.mxu0 0.0
    %3226 = vmatpush2.xpose.msra.mxu0 0.0
    %3227 = vmatprep.subr.mxu0 0.0
    %3228 = vmatpush2.xpose.msra.mxu0 0.0
    %3229 = vmatprep.subr.mxu0 0.0
    %3230 = vmatpush2.xpose.msra.mxu0 0.0
    %3231 = vmatprep.subr.mxu0 0.0
    %3232 = vmatpush2.xpose.msra.mxu0 0.0
    %3233 = vmatprep.subr.mxu0 0.0
    %3234 = vmatpush2.xpose.msra.mxu0 0.0
    %3235 = vmatprep.mubr.f32.mxu0 0.0
    %3236 = vmatmul.mubr.f32.gmra.mxu0 %v3167
    %v3237 = vpop.f32.mrf.mxu0
    %v3238 = vadd.f32 0.0, %v3237
    %v3239 = vpop.f32.mrf.mxu0
    %3240 = vdwg.mxu0
    %v3241 = vmul.f32 %v3160, 0.17677669
    %v3242 = vmul.f32 %v3238, 0.17677669
    %v3243 = vadd.f32 %v3241, %v599
    %v3244 = vadd.f32 %v3242, %v603
    %v3245 = vsel %vm608, %v3243, -inf
    %3246 = vmax.xlane.f32.xlu0 %v3245
    %v3247 = vpop.xlane.xlu0 %3246
    %v3248 = vsel %vm608, %v3244, -inf
    %3249 = vmax.xlane.f32.xlu0 %v3248
    %v3250 = vpop.xlane.xlu0 %3249
    %v3251 = vsub.f32 %v3243, %v3247
    %v3252 = vsub.f32 %v3244, %v3250
    %v3253 = vmul.f32 %v3251, 1.442695
    %v3254 = vpow.pop %v3253
    %v3255 = vmul.f32 %v3252, 1.442695
    %v3256 = vpow.pop %v3255
    %v3257 = vsel %vm608, %v3254, 0.0
    %3258 = vadd.xlane.f32.xlu0 %v3257
    %v3259 = vpop.xlane.xlu0 %3258
    %v3260 = vsel %vm608, %v3256, 0.0
    %3261 = vadd.xlane.f32.xlu0 %v3260
    %v3262 = vpop.xlane.xlu0 %3261
    %v3263 = vrcp.pop %v3259
    %v3264 = vmul.f32 %v3254, %v3263
    %v3265 = vrcp.pop %v3262
    %v3266 = vmul.f32 %v3256, %v3265
    %3268 = vrot.lane.b32.xlu0 %v2749, 96
    %v3269 = vpop.permute.xlu0 %3268
    %v3272 = vsel %vm608, %v3264, 0
    %3274 = vmatprep.subr.mxu0 0.0
    %3275 = vmatpush1.msra.mxu0 0.0
    %3276 = vmatprep.subr.mxu0 0.0
    %3277 = vmatpush1.msra.mxu0 0.0
    %3278 = vmatprep.subr.mxu0 0.0
    %3279 = vmatpush1.msra.mxu0 0.0
    %3280 = vmatprep.subr.mxu0 0.0
    %3281 = vmatpush1.msra.mxu0 0.0
    %3282 = vmatprep.subr.mxu0 0.0
    %3283 = vmatpush1.msra.mxu0 0.0
    %3284 = vmatprep.subr.mxu0 0.0
    %3285 = vmatpush1.msra.mxu0 0.0
    %3286 = vmatprep.subr.mxu0 0.0
    %3287 = vmatpush1.msra.mxu0 0.0
    %3288 = vmatprep.subr.mxu0 0.0
    %3289 = vmatpush1.msra.mxu0 0.0
    %3290 = vmatprep.subr.mxu0 0.0
    %3291 = vmatpush1.msra.mxu0 0.0
    %3292 = vmatprep.subr.mxu0 0.0
    %3293 = vmatpush1.msra.mxu0 0.0
    %3294 = vmatprep.subr.mxu0 0.0
    %3295 = vmatpush1.msra.mxu0 0.0
    %3296 = vmatprep.subr.mxu0 0.0
    %3297 = vmatpush1.msra.mxu0 0.0
    %3298 = vmatprep.subr.mxu0 0.0
    %3299 = vmatpush1.msra.mxu0 0.0
    %3300 = vmatprep.subr.mxu0 0.0
    %3301 = vmatpush1.msra.mxu0 0.0
    %3302 = vmatprep.subr.mxu0 0.0
    %3303 = vmatpush1.msra.mxu0 0.0
    %3304 = vmatprep.subr.mxu0 0.0
    %3305 = vmatpush1.msra.mxu0 %v3269
    %3306 = vmatprep.subr.mxu0 0.0
    %3307 = vmatpush2.msra.mxu0 0.0
    %3308 = vmatprep.subr.mxu0 0.0
    %3309 = vmatpush2.msra.mxu0 0.0
    %3310 = vmatprep.subr.mxu0 0.0
    %3311 = vmatpush2.msra.mxu0 0.0
    %3312 = vmatprep.subr.mxu0 0.0
    %3313 = vmatpush2.msra.mxu0 0.0
    %3314 = vmatprep.subr.mxu0 0.0
    %3315 = vmatpush2.msra.mxu0 0.0
    %3316 = vmatprep.subr.mxu0 0.0
    %3317 = vmatpush2.msra.mxu0 0.0
    %3318 = vmatprep.subr.mxu0 0.0
    %3319 = vmatpush2.msra.mxu0 0.0
    %3320 = vmatprep.subr.mxu0 0.0
    %3321 = vmatpush2.msra.mxu0 0.0
    %3322 = vmatprep.subr.mxu0 0.0
    %3323 = vmatpush2.msra.mxu0 0.0
    %3324 = vmatprep.subr.mxu0 0.0
    %3325 = vmatpush2.msra.mxu0 0.0
    %3326 = vmatprep.subr.mxu0 0.0
    %3327 = vmatpush2.msra.mxu0 0.0
    %3328 = vmatprep.subr.mxu0 0.0
    %3329 = vmatpush2.msra.mxu0 0.0
    %3330 = vmatprep.subr.mxu0 0.0
    %3331 = vmatpush2.msra.mxu0 0.0
    %3332 = vmatprep.subr.mxu0 0.0
    %3333 = vmatpush2.msra.mxu0 0.0
    %3334 = vmatprep.subr.mxu0 0.0
    %3335 = vmatpush2.msra.mxu0 0.0
    %3336 = vmatprep.subr.mxu0 0.0
    %3337 = vmatpush2.msra.mxu0 0.0
    %3338 = vmatprep.mubr.f32.mxu0 0.0
    %3339 = vmatmul.mubr.f32.gmra.mxu0 %v3272
    %v3340 = vpop.f32.mrf.mxu0
    %v3341 = vadd.f32 0.0, %v3340
    %v3342 = vpop.f32.mrf.mxu0
    %3343 = vdwg.mxu0
    %3345 = vrot.lane.b32.xlu0 %v2752, 96
    %v3346 = vpop.permute.xlu0 %3345
    %v3349 = vsel %vm608, %v3266, 0
    %3351 = vmatprep.subr.mxu0 0.0
    %3352 = vmatpush1.msra.mxu0 0.0
    %3353 = vmatprep.subr.mxu0 0.0
    %3354 = vmatpush1.msra.mxu0 0.0
    %3355 = vmatprep.subr.mxu0 0.0
    %3356 = vmatpush1.msra.mxu0 0.0
    %3357 = vmatprep.subr.mxu0 0.0
    %3358 = vmatpush1.msra.mxu0 0.0
    %3359 = vmatprep.subr.mxu0 0.0
    %3360 = vmatpush1.msra.mxu0 0.0
    %3361 = vmatprep.subr.mxu0 0.0
    %3362 = vmatpush1.msra.mxu0 0.0
    %3363 = vmatprep.subr.mxu0 0.0
    %3364 = vmatpush1.msra.mxu0 0.0
    %3365 = vmatprep.subr.mxu0 0.0
    %3366 = vmatpush1.msra.mxu0 0.0
    %3367 = vmatprep.subr.mxu0 0.0
    %3368 = vmatpush1.msra.mxu0 0.0
    %3369 = vmatprep.subr.mxu0 0.0
    %3370 = vmatpush1.msra.mxu0 0.0
    %3371 = vmatprep.subr.mxu0 0.0
    %3372 = vmatpush1.msra.mxu0 0.0
    %3373 = vmatprep.subr.mxu0 0.0
    %3374 = vmatpush1.msra.mxu0 0.0
    %3375 = vmatprep.subr.mxu0 0.0
    %3376 = vmatpush1.msra.mxu0 0.0
    %3377 = vmatprep.subr.mxu0 0.0
    %3378 = vmatpush1.msra.mxu0 0.0
    %3379 = vmatprep.subr.mxu0 0.0
    %3380 = vmatpush1.msra.mxu0 0.0
    %3381 = vmatprep.subr.mxu0 0.0
    %3382 = vmatpush1.msra.mxu0 %v3346
    %3383 = vmatprep.subr.mxu0 0.0
    %3384 = vmatpush2.msra.mxu0 0.0
    %3385 = vmatprep.subr.mxu0 0.0
    %3386 = vmatpush2.msra.mxu0 0.0
    %3387 = vmatprep.subr.mxu0 0.0
    %3388 = vmatpush2.msra.mxu0 0.0
    %3389 = vmatprep.subr.mxu0 0.0
    %3390 = vmatpush2.msra.mxu0 0.0
    %3391 = vmatprep.subr.mxu0 0.0
    %3392 = vmatpush2.msra.mxu0 0.0
    %3393 = vmatprep.subr.mxu0 0.0
    %3394 = vmatpush2.msra.mxu0 0.0
    %3395 = vmatprep.subr.mxu0 0.0
    %3396 = vmatpush2.msra.mxu0 0.0
    %3397 = vmatprep.subr.mxu0 0.0
    %3398 = vmatpush2.msra.mxu0 0.0
    %3399 = vmatprep.subr.mxu0 0.0
    %3400 = vmatpush2.msra.mxu0 0.0
    %3401 = vmatprep.subr.mxu0 0.0
    %3402 = vmatpush2.msra.mxu0 0.0
    %3403 = vmatprep.subr.mxu0 0.0
    %3404 = vmatpush2.msra.mxu0 0.0
    %3405 = vmatprep.subr.mxu0 0.0
    %3406 = vmatpush2.msra.mxu0 0.0
    %3407 = vmatprep.subr.mxu0 0.0
    %3408 = vmatpush2.msra.mxu0 0.0
    %3409 = vmatprep.subr.mxu0 0.0
    %3410 = vmatpush2.msra.mxu0 0.0
    %3411 = vmatprep.subr.mxu0 0.0
    %3412 = vmatpush2.msra.mxu0 0.0
    %3413 = vmatprep.subr.mxu0 0.0
    %3414 = vmatpush2.msra.mxu0 0.0
    %3415 = vmatprep.mubr.f32.mxu0 0.0
    %3416 = vmatmul.mubr.f32.gmra.mxu0 %v3349
    %v3417 = vpop.f32.mrf.mxu0
    %v3418 = vadd.f32 0.0, %v3417
    %v3419 = vpop.f32.mrf.mxu0
    %3420 = vdwg.mxu0
    %v3421 = vpack.c.bf16 %v3418, %v3341
    %s3422 = scalar_lea.vmem [#allocation6], 80
    %v3423 = vld [vmem:[%s3422] sm:$0xf]
    %v3424 = vld [vmem:[%s3422 + $0x4] sm:$0xf]
    %v3425 = vld [vmem:[%s3422 + $0x8] sm:$0xf]
    %v3426 = vld [vmem:[%s3422 + $0xc] sm:$0xf]
    %v3431 = vunpack.c.l.b16 %v3423
    %v3432 = vunpack.c.l.b16 %v3424
    %v3433 = vunpack.c.l.b16 %v3425
    %v3434 = vunpack.c.l.b16 %v3426
    %v3435 = vpack.c.b16 %v3432, %v3431
    %v3436 = vpack.c.b16 %v3434, %v3433
    %v3440 = vsel %vm441, %v3421, 0
    %3442 = vmatprep.subr.bf16.mxu0 0
    %3443 = vmatpush1.bf16.msra.mxu0 0
    %3444 = vmatprep.subr.bf16.mxu0 0
    %3445 = vmatpush1.bf16.msra.mxu0 0
    %3446 = vmatprep.subr.bf16.mxu0 0
    %3447 = vmatpush1.bf16.msra.mxu0 0
    %3448 = vmatprep.subr.bf16.mxu0 0
    %3449 = vmatpush1.bf16.msra.mxu0 0
    %3450 = vmatprep.subr.bf16.mxu0 0
    %3451 = vmatpush1.bf16.msra.mxu0 0
    %3452 = vmatprep.subr.bf16.mxu0 0
    %3453 = vmatpush1.bf16.msra.mxu0 0
    %3454 = vmatprep.subr.bf16.mxu0 0
    %3455 = vmatpush1.bf16.msra.mxu0 %v3436
    %3456 = vmatprep.subr.bf16.mxu0 0
    %3457 = vmatpush1.bf16.msra.mxu0 %v3435
    %3458 = vmatprep.subr.bf16.mxu0 0
    %3459 = vmatpush2.bf16.msra.mxu0 0
    %3460 = vmatprep.subr.bf16.mxu0 0
    %3461 = vmatpush2.bf16.msra.mxu0 0
    %3462 = vmatprep.subr.bf16.mxu0 0
    %3463 = vmatpush2.bf16.msra.mxu0 0
    %3464 = vmatprep.subr.bf16.mxu0 0
    %3465 = vmatpush2.bf16.msra.mxu0 0
    %3466 = vmatprep.subr.bf16.mxu0 0
    %3467 = vmatpush2.bf16.msra.mxu0 0
    %3468 = vmatprep.subr.bf16.mxu0 0
    %3469 = vmatpush2.bf16.msra.mxu0 0
    %3470 = vmatprep.subr.bf16.mxu0 0
    %3471 = vmatpush2.bf16.msra.mxu0 0
    %3472 = vmatprep.subr.bf16.mxu0 0
    %3473 = vmatpush2.bf16.msra.mxu0 0
    %3474 = vmatprep.mubr.bf16.mxu0 0
    %3475 = vmatmul.mubr.bf16.gmra.mxu0 %v3440
    %v3476 = vpop.f32.mrf.mxu0
    %v3477 = vadd.f32 0.0, %v3476
    %v3478 = vpop.f32.mrf.mxu0
    %v3479 = vpop.f32.mrf.mxu0
    %v3480 = vadd.f32 0.0, %v3479
    %v3481 = vpop.f32.mrf.mxu0
    %3482 = vdwg.mxu0
    %v3487 = vunpack.c.l.b16 %v3081
    %v3488 = vunpack.c.l.b16 %v3082
    %v3489 = vunpack.c.l.b16 %v3083
    %v3490 = vunpack.c.l.b16 %v3084
    %v3491 = vpack.c.b16 %v3488, %v3487
    %v3492 = vpack.c.b16 %v3490, %v3489
    %v3496 = vsel %vm441, %v3079, 0
    %3498 = vmatprep.subr.bf16.mxu0 0
    %3499 = vmatpush1.bf16.msra.mxu0 0
    %3500 = vmatprep.subr.bf16.mxu0 0
    %3501 = vmatpush1.bf16.msra.mxu0 0
    %3502 = vmatprep.subr.bf16.mxu0 0
    %3503 = vmatpush1.bf16.msra.mxu0 0
    %3504 = vmatprep.subr.bf16.mxu0 0
    %3505 = vmatpush1.bf16.msra.mxu0 0
    %3506 = vmatprep.subr.bf16.mxu0 0
    %3507 = vmatpush1.bf16.msra.mxu0 0
    %3508 = vmatprep.subr.bf16.mxu0 0
    %3509 = vmatpush1.bf16.msra.mxu0 0
    %3510 = vmatprep.subr.bf16.mxu0 0
    %3511 = vmatpush1.bf16.msra.mxu0 %v3492
    %3512 = vmatprep.subr.bf16.mxu0 0
    %3513 = vmatpush1.bf16.msra.mxu0 %v3491
    %3514 = vmatprep.subr.bf16.mxu0 0
    %3515 = vmatpush2.bf16.msra.mxu0 0
    %3516 = vmatprep.subr.bf16.mxu0 0
    %3517 = vmatpush2.bf16.msra.mxu0 0
    %3518 = vmatprep.subr.bf16.mxu0 0
    %3519 = vmatpush2.bf16.msra.mxu0 0
    %3520 = vmatprep.subr.bf16.mxu0 0
    %3521 = vmatpush2.bf16.msra.mxu0 0
    %3522 = vmatprep.subr.bf16.mxu0 0
    %3523 = vmatpush2.bf16.msra.mxu0 0
    %3524 = vmatprep.subr.bf16.mxu0 0
    %3525 = vmatpush2.bf16.msra.mxu0 0
    %3526 = vmatprep.subr.bf16.mxu0 0
    %3527 = vmatpush2.bf16.msra.mxu0 0
    %3528 = vmatprep.subr.bf16.mxu0 0
    %3529 = vmatpush2.bf16.msra.mxu0 0
    %3530 = vmatprep.mubr.bf16.mxu0 0
    %3531 = vmatmul.mubr.bf16.gmra.mxu0 %v3496
    %v3532 = vpop.f32.mrf.mxu0
    %v3533 = vadd.f32 %v3477, %v3532
    %v3534 = vpop.f32.mrf.mxu0
    %v3535 = vpop.f32.mrf.mxu0
    %v3536 = vadd.f32 %v3480, %v3535
    %v3537 = vpop.f32.mrf.mxu0
    %3538 = vdwg.mxu0
    %3539 = vrot.lane.b32.xlu0 %v2706, 64
    %v3540 = vpop.permute.xlu0 %3539
    %3541 = vrot.lane.b32.xlu0 %v2708, 64
    %v3542 = vpop.permute.xlu0 %3541
    %v3543 = vsel %vm441, %v3540, 0
    %v3545 = vsel %vm441, %v3542, 0
    %3547 = vmatprep.subr.mxu0 0.0
    %3548 = vmatpush1.xpose.msra.mxu0 0.0
    %3549 = vmatprep.subr.mxu0 0.0
    %3550 = vmatpush1.xpose.msra.mxu0 0.0
    %3551 = vmatprep.subr.mxu0 0.0
    %3552 = vmatpush1.xpose.msra.mxu0 0.0
    %3553 = vmatprep.subr.mxu0 0.0
    %3554 = vmatpush1.xpose.msra.mxu0 0.0
    %3555 = vmatprep.subr.mxu0 0.0
    %3556 = vmatpush1.xpose.msra.mxu0 0.0
    %3557 = vmatprep.subr.mxu0 0.0
    %3558 = vmatpush1.xpose.msra.mxu0 0.0
    %3559 = vmatprep.subr.mxu0 0.0
    %3560 = vmatpush1.xpose.msra.mxu0 0.0
    %3561 = vmatprep.subr.mxu0 0.0
    %3562 = vmatpush1.xpose.msra.mxu0 0.0
    %3563 = vmatprep.subr.mxu0 0.0
    %3564 = vmatpush1.xpose.msra.mxu0 0.0
    %3565 = vmatprep.subr.mxu0 0.0
    %3566 = vmatpush1.xpose.msra.mxu0 0.0
    %3567 = vmatprep.subr.mxu0 0.0
    %3568 = vmatpush1.xpose.msra.mxu0 0.0
    %3569 = vmatprep.subr.mxu0 0.0
    %3570 = vmatpush1.xpose.msra.mxu0 0.0
    %3571 = vmatprep.subr.mxu0 0.0
    %3572 = vmatpush1.xpose.msra.mxu0 0.0
    %3573 = vmatprep.subr.mxu0 0.0
    %3574 = vmatpush1.xpose.msra.mxu0 0.0
    %3575 = vmatprep.subr.mxu0 0.0
    %3576 = vmatpush1.xpose.msra.mxu0 0.0
    %3577 = vmatprep.subr.mxu0 0.0
    %3578 = vmatpush1.xpose.msra.mxu0 %v3545
    %3579 = vmatprep.subr.mxu0 0.0
    %3580 = vmatpush2.xpose.msra.mxu0 0.0
    %3581 = vmatprep.subr.mxu0 0.0
    %3582 = vmatpush2.xpose.msra.mxu0 0.0
    %3583 = vmatprep.subr.mxu0 0.0
    %3584 = vmatpush2.xpose.msra.mxu0 0.0
    %3585 = vmatprep.subr.mxu0 0.0
    %3586 = vmatpush2.xpose.msra.mxu0 0.0
    %3587 = vmatprep.subr.mxu0 0.0
    %3588 = vmatpush2.xpose.msra.mxu0 0.0
    %3589 = vmatprep.subr.mxu0 0.0
    %3590 = vmatpush2.xpose.msra.mxu0 0.0
    %3591 = vmatprep.subr.mxu0 0.0
    %3592 = vmatpush2.xpose.msra.mxu0 0.0
    %3593 = vmatprep.subr.mxu0 0.0
    %3594 = vmatpush2.xpose.msra.mxu0 0.0
    %3595 = vmatprep.subr.mxu0 0.0
    %3596 = vmatpush2.xpose.msra.mxu0 0.0
    %3597 = vmatprep.subr.mxu0 0.0
    %3598 = vmatpush2.xpose.msra.mxu0 0.0
    %3599 = vmatprep.subr.mxu0 0.0
    %3600 = vmatpush2.xpose.msra.mxu0 0.0
    %3601 = vmatprep.subr.mxu0 0.0
    %3602 = vmatpush2.xpose.msra.mxu0 0.0
    %3603 = vmatprep.subr.mxu0 0.0
    %3604 = vmatpush2.xpose.msra.mxu0 0.0
    %3605 = vmatprep.subr.mxu0 0.0
    %3606 = vmatpush2.xpose.msra.mxu0 0.0
    %3607 = vmatprep.subr.mxu0 0.0
    %3608 = vmatpush2.xpose.msra.mxu0 0.0
    %3609 = vmatprep.subr.mxu0 0.0
    %3610 = vmatpush2.xpose.msra.mxu0 0.0
    %3611 = vmatprep.mubr.f32.mxu0 0.0
    %3612 = vmatmul.mubr.f32.gmra.mxu0 %v3543
    %v3613 = vpop.f32.mrf.mxu0
    %v3614 = vadd.f32 0.0, %v3613
    %v3615 = vpop.f32.mrf.mxu0
    %3616 = vdwg.mxu0
    %3617 = vrot.lane.b32.xlu0 %v2710, 64
    %v3618 = vpop.permute.xlu0 %3617
    %3619 = vrot.lane.b32.xlu0 %v2712, 64
    %v3620 = vpop.permute.xlu0 %3619
    %v3621 = vsel %vm441, %v3618, 0
    %v3623 = vsel %vm441, %v3620, 0
    %3625 = vmatprep.subr.mxu0 0.0
    %3626 = vmatpush1.xpose.msra.mxu0 0.0
    %3627 = vmatprep.subr.mxu0 0.0
    %3628 = vmatpush1.xpose.msra.mxu0 0.0
    %3629 = vmatprep.subr.mxu0 0.0
    %3630 = vmatpush1.xpose.msra.mxu0 0.0
    %3631 = vmatprep.subr.mxu0 0.0
    %3632 = vmatpush1.xpose.msra.mxu0 0.0
    %3633 = vmatprep.subr.mxu0 0.0
    %3634 = vmatpush1.xpose.msra.mxu0 0.0
    %3635 = vmatprep.subr.mxu0 0.0
    %3636 = vmatpush1.xpose.msra.mxu0 0.0
    %3637 = vmatprep.subr.mxu0 0.0
    %3638 = vmatpush1.xpose.msra.mxu0 0.0
    %3639 = vmatprep.subr.mxu0 0.0
    %3640 = vmatpush1.xpose.msra.mxu0 0.0
    %3641 = vmatprep.subr.mxu0 0.0
    %3642 = vmatpush1.xpose.msra.mxu0 0.0
    %3643 = vmatprep.subr.mxu0 0.0
    %3644 = vmatpush1.xpose.msra.mxu0 0.0
    %3645 = vmatprep.subr.mxu0 0.0
    %3646 = vmatpush1.xpose.msra.mxu0 0.0
    %3647 = vmatprep.subr.mxu0 0.0
    %3648 = vmatpush1.xpose.msra.mxu0 0.0
    %3649 = vmatprep.subr.mxu0 0.0
    %3650 = vmatpush1.xpose.msra.mxu0 0.0
    %3651 = vmatprep.subr.mxu0 0.0
    %3652 = vmatpush1.xpose.msra.mxu0 0.0
    %3653 = vmatprep.subr.mxu0 0.0
    %3654 = vmatpush1.xpose.msra.mxu0 0.0
    %3655 = vmatprep.subr.mxu0 0.0
    %3656 = vmatpush1.xpose.msra.mxu0 %v3623
    %3657 = vmatprep.subr.mxu0 0.0
    %3658 = vmatpush2.xpose.msra.mxu0 0.0
    %3659 = vmatprep.subr.mxu0 0.0
    %3660 = vmatpush2.xpose.msra.mxu0 0.0
    %3661 = vmatprep.subr.mxu0 0.0
    %3662 = vmatpush2.xpose.msra.mxu0 0.0
    %3663 = vmatprep.subr.mxu0 0.0
    %3664 = vmatpush2.xpose.msra.mxu0 0.0
    %3665 = vmatprep.subr.mxu0 0.0
    %3666 = vmatpush2.xpose.msra.mxu0 0.0
    %3667 = vmatprep.subr.mxu0 0.0
    %3668 = vmatpush2.xpose.msra.mxu0 0.0
    %3669 = vmatprep.subr.mxu0 0.0
    %3670 = vmatpush2.xpose.msra.mxu0 0.0
    %3671 = vmatprep.subr.mxu0 0.0
    %3672 = vmatpush2.xpose.msra.mxu0 0.0
    %3673 = vmatprep.subr.mxu0 0.0
    %3674 = vmatpush2.xpose.msra.mxu0 0.0
    %3675 = vmatprep.subr.mxu0 0.0
    %3676 = vmatpush2.xpose.msra.mxu0 0.0
    %3677 = vmatprep.subr.mxu0 0.0
    %3678 = vmatpush2.xpose.msra.mxu0 0.0
    %3679 = vmatprep.subr.mxu0 0.0
    %3680 = vmatpush2.xpose.msra.mxu0 0.0
    %3681 = vmatprep.subr.mxu0 0.0
    %3682 = vmatpush2.xpose.msra.mxu0 0.0
    %3683 = vmatprep.subr.mxu0 0.0
    %3684 = vmatpush2.xpose.msra.mxu0 0.0
    %3685 = vmatprep.subr.mxu0 0.0
    %3686 = vmatpush2.xpose.msra.mxu0 0.0
    %3687 = vmatprep.subr.mxu0 0.0
    %3688 = vmatpush2.xpose.msra.mxu0 0.0
    %3689 = vmatprep.mubr.f32.mxu0 0.0
    %3690 = vmatmul.mubr.f32.gmra.mxu0 %v3621
    %v3691 = vpop.f32.mrf.mxu0
    %v3692 = vadd.f32 0.0, %v3691
    %v3693 = vpop.f32.mrf.mxu0
    %3694 = vdwg.mxu0
    %v3695 = vmul.f32 %v3614, 0.17677669
    %v3696 = vmul.f32 %v3692, 0.17677669
    %v3697 = vadd.f32 %v3695, %v599
    %v3698 = vadd.f32 %v3696, %v603
    %v3699 = vsel %vm608, %v3697, -inf
    %3700 = vmax.xlane.f32.xlu0 %v3699
    %v3701 = vpop.xlane.xlu0 %3700
    %v3702 = vsel %vm608, %v3698, -inf
    %3703 = vmax.xlane.f32.xlu0 %v3702
    %v3704 = vpop.xlane.xlu0 %3703
    %v3705 = vsub.f32 %v3697, %v3701
    %v3706 = vsub.f32 %v3698, %v3704
    %v3707 = vmul.f32 %v3705, 1.442695
    %v3708 = vpow.pop %v3707
    %v3709 = vmul.f32 %v3706, 1.442695
    %v3710 = vpow.pop %v3709
    %v3711 = vsel %vm608, %v3708, 0.0
    %3712 = vadd.xlane.f32.xlu0 %v3711
    %v3713 = vpop.xlane.xlu0 %3712
    %v3714 = vsel %vm608, %v3710, 0.0
    %3715 = vadd.xlane.f32.xlu0 %v3714
    %v3716 = vpop.xlane.xlu0 %3715
    %v3717 = vrcp.pop %v3713
    %v3718 = vmul.f32 %v3708, %v3717
    %v3719 = vrcp.pop %v3716
    %v3720 = vmul.f32 %v3710, %v3719
    %3721 = vrot.lane.b32.xlu0 %v2749, 64
    %v3722 = vpop.permute.xlu0 %3721
    %v3725 = vsel %vm608, %v3718, 0
    %3727 = vmatprep.subr.mxu0 0.0
    %3728 = vmatpush1.msra.mxu0 0.0
    %3729 = vmatprep.subr.mxu0 0.0
    %3730 = vmatpush1.msra.mxu0 0.0
    %3731 = vmatprep.subr.mxu0 0.0
    %3732 = vmatpush1.msra.mxu0 0.0
    %3733 = vmatprep.subr.mxu0 0.0
    %3734 = vmatpush1.msra.mxu0 0.0
    %3735 = vmatprep.subr.mxu0 0.0
    %3736 = vmatpush1.msra.mxu0 0.0
    %3737 = vmatprep.subr.mxu0 0.0
    %3738 = vmatpush1.msra.mxu0 0.0
    %3739 = vmatprep.subr.mxu0 0.0
    %3740 = vmatpush1.msra.mxu0 0.0
    %3741 = vmatprep.subr.mxu0 0.0
    %3742 = vmatpush1.msra.mxu0 0.0
    %3743 = vmatprep.subr.mxu0 0.0
    %3744 = vmatpush1.msra.mxu0 0.0
    %3745 = vmatprep.subr.mxu0 0.0
    %3746 = vmatpush1.msra.mxu0 0.0
    %3747 = vmatprep.subr.mxu0 0.0
    %3748 = vmatpush1.msra.mxu0 0.0
    %3749 = vmatprep.subr.mxu0 0.0
    %3750 = vmatpush1.msra.mxu0 0.0
    %3751 = vmatprep.subr.mxu0 0.0
    %3752 = vmatpush1.msra.mxu0 0.0
    %3753 = vmatprep.subr.mxu0 0.0
    %3754 = vmatpush1.msra.mxu0 0.0
    %3755 = vmatprep.subr.mxu0 0.0
    %3756 = vmatpush1.msra.mxu0 0.0
    %3757 = vmatprep.subr.mxu0 0.0
    %3758 = vmatpush1.msra.mxu0 %v3722
    %3759 = vmatprep.subr.mxu0 0.0
    %3760 = vmatpush2.msra.mxu0 0.0
    %3761 = vmatprep.subr.mxu0 0.0
    %3762 = vmatpush2.msra.mxu0 0.0
    %3763 = vmatprep.subr.mxu0 0.0
    %3764 = vmatpush2.msra.mxu0 0.0
    %3765 = vmatprep.subr.mxu0 0.0
    %3766 = vmatpush2.msra.mxu0 0.0
    %3767 = vmatprep.subr.mxu0 0.0
    %3768 = vmatpush2.msra.mxu0 0.0
    %3769 = vmatprep.subr.mxu0 0.0
    %3770 = vmatpush2.msra.mxu0 0.0
    %3771 = vmatprep.subr.mxu0 0.0
    %3772 = vmatpush2.msra.mxu0 0.0
    %3773 = vmatprep.subr.mxu0 0.0
    %3774 = vmatpush2.msra.mxu0 0.0
    %3775 = vmatprep.subr.mxu0 0.0
    %3776 = vmatpush2.msra.mxu0 0.0
    %3777 = vmatprep.subr.mxu0 0.0
    %3778 = vmatpush2.msra.mxu0 0.0
    %3779 = vmatprep.subr.mxu0 0.0
    %3780 = vmatpush2.msra.mxu0 0.0
    %3781 = vmatprep.subr.mxu0 0.0
    %3782 = vmatpush2.msra.mxu0 0.0
    %3783 = vmatprep.subr.mxu0 0.0
    %3784 = vmatpush2.msra.mxu0 0.0
    %3785 = vmatprep.subr.mxu0 0.0
    %3786 = vmatpush2.msra.mxu0 0.0
    %3787 = vmatprep.subr.mxu0 0.0
    %3788 = vmatpush2.msra.mxu0 0.0
    %3789 = vmatprep.subr.mxu0 0.0
    %3790 = vmatpush2.msra.mxu0 0.0
    %3791 = vmatprep.mubr.f32.mxu0 0.0
    %3792 = vmatmul.mubr.f32.gmra.mxu0 %v3725
    %v3793 = vpop.f32.mrf.mxu0
    %v3794 = vadd.f32 0.0, %v3793
    %v3795 = vpop.f32.mrf.mxu0
    %3796 = vdwg.mxu0
    %3797 = vrot.lane.b32.xlu0 %v2752, 64
    %v3798 = vpop.permute.xlu0 %3797
    %v3801 = vsel %vm608, %v3720, 0
    %3803 = vmatprep.subr.mxu0 0.0
    %3804 = vmatpush1.msra.mxu0 0.0
    %3805 = vmatprep.subr.mxu0 0.0
    %3806 = vmatpush1.msra.mxu0 0.0
    %3807 = vmatprep.subr.mxu0 0.0
    %3808 = vmatpush1.msra.mxu0 0.0
    %3809 = vmatprep.subr.mxu0 0.0
    %3810 = vmatpush1.msra.mxu0 0.0
    %3811 = vmatprep.subr.mxu0 0.0
    %3812 = vmatpush1.msra.mxu0 0.0
    %3813 = vmatprep.subr.mxu0 0.0
    %3814 = vmatpush1.msra.mxu0 0.0
    %3815 = vmatprep.subr.mxu0 0.0
    %3816 = vmatpush1.msra.mxu0 0.0
    %3817 = vmatprep.subr.mxu0 0.0
    %3818 = vmatpush1.msra.mxu0 0.0
    %3819 = vmatprep.subr.mxu0 0.0
    %3820 = vmatpush1.msra.mxu0 0.0
    %3821 = vmatprep.subr.mxu0 0.0
    %3822 = vmatpush1.msra.mxu0 0.0
    %3823 = vmatprep.subr.mxu0 0.0
    %3824 = vmatpush1.msra.mxu0 0.0
    %3825 = vmatprep.subr.mxu0 0.0
    %3826 = vmatpush1.msra.mxu0 0.0
    %3827 = vmatprep.subr.mxu0 0.0
    %3828 = vmatpush1.msra.mxu0 0.0
    %3829 = vmatprep.subr.mxu0 0.0
    %3830 = vmatpush1.msra.mxu0 0.0
    %3831 = vmatprep.subr.mxu0 0.0
    %3832 = vmatpush1.msra.mxu0 0.0
    %3833 = vmatprep.subr.mxu0 0.0
    %3834 = vmatpush1.msra.mxu0 %v3798
    %3835 = vmatprep.subr.mxu0 0.0
    %3836 = vmatpush2.msra.mxu0 0.0
    %3837 = vmatprep.subr.mxu0 0.0
    %3838 = vmatpush2.msra.mxu0 0.0
    %3839 = vmatprep.subr.mxu0 0.0
    %3840 = vmatpush2.msra.mxu0 0.0
    %3841 = vmatprep.subr.mxu0 0.0
    %3842 = vmatpush2.msra.mxu0 0.0
    %3843 = vmatprep.subr.mxu0 0.0
    %3844 = vmatpush2.msra.mxu0 0.0
    %3845 = vmatprep.subr.mxu0 0.0
    %3846 = vmatpush2.msra.mxu0 0.0
    %3847 = vmatprep.subr.mxu0 0.0
    %3848 = vmatpush2.msra.mxu0 0.0
    %3849 = vmatprep.subr.mxu0 0.0
    %3850 = vmatpush2.msra.mxu0 0.0
    %3851 = vmatprep.subr.mxu0 0.0
    %3852 = vmatpush2.msra.mxu0 0.0
    %3853 = vmatprep.subr.mxu0 0.0
    %3854 = vmatpush2.msra.mxu0 0.0
    %3855 = vmatprep.subr.mxu0 0.0
    %3856 = vmatpush2.msra.mxu0 0.0
    %3857 = vmatprep.subr.mxu0 0.0
    %3858 = vmatpush2.msra.mxu0 0.0
    %3859 = vmatprep.subr.mxu0 0.0
    %3860 = vmatpush2.msra.mxu0 0.0
    %3861 = vmatprep.subr.mxu0 0.0
    %3862 = vmatpush2.msra.mxu0 0.0
    %3863 = vmatprep.subr.mxu0 0.0
    %3864 = vmatpush2.msra.mxu0 0.0
    %3865 = vmatprep.subr.mxu0 0.0
    %3866 = vmatpush2.msra.mxu0 0.0
    %3867 = vmatprep.mubr.f32.mxu0 0.0
    %3868 = vmatmul.mubr.f32.gmra.mxu0 %v3801
    %v3869 = vpop.f32.mrf.mxu0
    %v3870 = vadd.f32 0.0, %v3869
    %v3871 = vpop.f32.mrf.mxu0
    %3872 = vdwg.mxu0
    %v3873 = vpack.c.bf16 %v3870, %v3794
    %s3874 = scalar_lea.vmem [#allocation6], 96
    %v3875 = vld [vmem:[%s3874] sm:$0xf]
    %v3876 = vld [vmem:[%s3874 + $0x4] sm:$0xf]
    %v3877 = vld [vmem:[%s3874 + $0x8] sm:$0xf]
    %v3878 = vld [vmem:[%s3874 + $0xc] sm:$0xf]
    %v3883 = vunpack.c.l.b16 %v3875
    %v3884 = vunpack.c.l.b16 %v3876
    %v3885 = vunpack.c.l.b16 %v3877
    %v3886 = vunpack.c.l.b16 %v3878
    %v3887 = vpack.c.b16 %v3884, %v3883
    %v3888 = vpack.c.b16 %v3886, %v3885
    %v3892 = vsel %vm441, %v3873, 0
    %3894 = vmatprep.subr.bf16.mxu0 0
    %3895 = vmatpush1.bf16.msra.mxu0 0
    %3896 = vmatprep.subr.bf16.mxu0 0
    %3897 = vmatpush1.bf16.msra.mxu0 0
    %3898 = vmatprep.subr.bf16.mxu0 0
    %3899 = vmatpush1.bf16.msra.mxu0 0
    %3900 = vmatprep.subr.bf16.mxu0 0
    %3901 = vmatpush1.bf16.msra.mxu0 0
    %3902 = vmatprep.subr.bf16.mxu0 0
    %3903 = vmatpush1.bf16.msra.mxu0 0
    %3904 = vmatprep.subr.bf16.mxu0 0
    %3905 = vmatpush1.bf16.msra.mxu0 0
    %3906 = vmatprep.subr.bf16.mxu0 0
    %3907 = vmatpush1.bf16.msra.mxu0 %v3888
    %3908 = vmatprep.subr.bf16.mxu0 0
    %3909 = vmatpush1.bf16.msra.mxu0 %v3887
    %3910 = vmatprep.subr.bf16.mxu0 0
    %3911 = vmatpush2.bf16.msra.mxu0 0
    %3912 = vmatprep.subr.bf16.mxu0 0
    %3913 = vmatpush2.bf16.msra.mxu0 0
    %3914 = vmatprep.subr.bf16.mxu0 0
    %3915 = vmatpush2.bf16.msra.mxu0 0
    %3916 = vmatprep.subr.bf16.mxu0 0
    %3917 = vmatpush2.bf16.msra.mxu0 0
    %3918 = vmatprep.subr.bf16.mxu0 0
    %3919 = vmatpush2.bf16.msra.mxu0 0
    %3920 = vmatprep.subr.bf16.mxu0 0
    %3921 = vmatpush2.bf16.msra.mxu0 0
    %3922 = vmatprep.subr.bf16.mxu0 0
    %3923 = vmatpush2.bf16.msra.mxu0 0
    %3924 = vmatprep.subr.bf16.mxu0 0
    %3925 = vmatpush2.bf16.msra.mxu0 0
    %3926 = vmatprep.mubr.bf16.mxu0 0
    %3927 = vmatmul.mubr.bf16.gmra.mxu0 %v3892
    %v3928 = vpop.f32.mrf.mxu0
    %v3929 = vadd.f32 0.0, %v3928
    %v3930 = vpop.f32.mrf.mxu0
    %v3931 = vpop.f32.mrf.mxu0
    %v3932 = vadd.f32 0.0, %v3931
    %v3933 = vpop.f32.mrf.mxu0
    %3934 = vdwg.mxu0
    %v3935 = vadd.f32 %v3533, %v3929
    %v3936 = vadd.f32 %v3536, %v3932
    %3937 = vrot.lane.b32.xlu0 %v2706, 32
    %v3938 = vpop.permute.xlu0 %3937
    %3939 = vrot.lane.b32.xlu0 %v2708, 32
    %v3940 = vpop.permute.xlu0 %3939
    %v3941 = vsel %vm441, %v3938, 0
    %v3943 = vsel %vm441, %v3940, 0
    %3945 = vmatprep.subr.mxu0 0.0
    %3946 = vmatpush1.xpose.msra.mxu0 0.0
    %3947 = vmatprep.subr.mxu0 0.0
    %3948 = vmatpush1.xpose.msra.mxu0 0.0
    %3949 = vmatprep.subr.mxu0 0.0
    %3950 = vmatpush1.xpose.msra.mxu0 0.0
    %3951 = vmatprep.subr.mxu0 0.0
    %3952 = vmatpush1.xpose.msra.mxu0 0.0
    %3953 = vmatprep.subr.mxu0 0.0
    %3954 = vmatpush1.xpose.msra.mxu0 0.0
    %3955 = vmatprep.subr.mxu0 0.0
    %3956 = vmatpush1.xpose.msra.mxu0 0.0
    %3957 = vmatprep.subr.mxu0 0.0
    %3958 = vmatpush1.xpose.msra.mxu0 0.0
    %3959 = vmatprep.subr.mxu0 0.0
    %3960 = vmatpush1.xpose.msra.mxu0 0.0
    %3961 = vmatprep.subr.mxu0 0.0
    %3962 = vmatpush1.xpose.msra.mxu0 0.0
    %3963 = vmatprep.subr.mxu0 0.0
    %3964 = vmatpush1.xpose.msra.mxu0 0.0
    %3965 = vmatprep.subr.mxu0 0.0
    %3966 = vmatpush1.xpose.msra.mxu0 0.0
    %3967 = vmatprep.subr.mxu0 0.0
    %3968 = vmatpush1.xpose.msra.mxu0 0.0
    %3969 = vmatprep.subr.mxu0 0.0
    %3970 = vmatpush1.xpose.msra.mxu0 0.0
    %3971 = vmatprep.subr.mxu0 0.0
    %3972 = vmatpush1.xpose.msra.mxu0 0.0
    %3973 = vmatprep.subr.mxu0 0.0
    %3974 = vmatpush1.xpose.msra.mxu0 0.0
    %3975 = vmatprep.subr.mxu0 0.0
    %3976 = vmatpush1.xpose.msra.mxu0 %v3943
    %3977 = vmatprep.subr.mxu0 0.0
    %3978 = vmatpush2.xpose.msra.mxu0 0.0
    %3979 = vmatprep.subr.mxu0 0.0
    %3980 = vmatpush2.xpose.msra.mxu0 0.0
    %3981 = vmatprep.subr.mxu0 0.0
    %3982 = vmatpush2.xpose.msra.mxu0 0.0
    %3983 = vmatprep.subr.mxu0 0.0
    %3984 = vmatpush2.xpose.msra.mxu0 0.0
    %3985 = vmatprep.subr.mxu0 0.0
    %3986 = vmatpush2.xpose.msra.mxu0 0.0
    %3987 = vmatprep.subr.mxu0 0.0
    %3988 = vmatpush2.xpose.msra.mxu0 0.0
    %3989 = vmatprep.subr.mxu0 0.0
    %3990 = vmatpush2.xpose.msra.mxu0 0.0
    %3991 = vmatprep.subr.mxu0 0.0
    %3992 = vmatpush2.xpose.msra.mxu0 0.0
    %3993 = vmatprep.subr.mxu0 0.0
    %3994 = vmatpush2.xpose.msra.mxu0 0.0
    %3995 = vmatprep.subr.mxu0 0.0
    %3996 = vmatpush2.xpose.msra.mxu0 0.0
    %3997 = vmatprep.subr.mxu0 0.0
    %3998 = vmatpush2.xpose.msra.mxu0 0.0
    %3999 = vmatprep.subr.mxu0 0.0
    %4000 = vmatpush2.xpose.msra.mxu0 0.0
    %4001 = vmatprep.subr.mxu0 0.0
    %4002 = vmatpush2.xpose.msra.mxu0 0.0
    %4003 = vmatprep.subr.mxu0 0.0
    %4004 = vmatpush2.xpose.msra.mxu0 0.0
    %4005 = vmatprep.subr.mxu0 0.0
    %4006 = vmatpush2.xpose.msra.mxu0 0.0
    %4007 = vmatprep.subr.mxu0 0.0
    %4008 = vmatpush2.xpose.msra.mxu0 0.0
    %4009 = vmatprep.mubr.f32.mxu0 0.0
    %4010 = vmatmul.mubr.f32.gmra.mxu0 %v3941
    %v4011 = vpop.f32.mrf.mxu0
    %v4012 = vadd.f32 0.0, %v4011
    %v4013 = vpop.f32.mrf.mxu0
    %4014 = vdwg.mxu0
    %4015 = vrot.lane.b32.xlu0 %v2710, 32
    %v4016 = vpop.permute.xlu0 %4015
    %4017 = vrot.lane.b32.xlu0 %v2712, 32
    %v4018 = vpop.permute.xlu0 %4017
    %v4019 = vsel %vm441, %v4016, 0
    %v4021 = vsel %vm441, %v4018, 0
    %4023 = vmatprep.subr.mxu0 0.0
    %4024 = vmatpush1.xpose.msra.mxu0 0.0
    %4025 = vmatprep.subr.mxu0 0.0
    %4026 = vmatpush1.xpose.msra.mxu0 0.0
    %4027 = vmatprep.subr.mxu0 0.0
    %4028 = vmatpush1.xpose.msra.mxu0 0.0
    %4029 = vmatprep.subr.mxu0 0.0
    %4030 = vmatpush1.xpose.msra.mxu0 0.0
    %4031 = vmatprep.subr.mxu0 0.0
    %4032 = vmatpush1.xpose.msra.mxu0 0.0
    %4033 = vmatprep.subr.mxu0 0.0
    %4034 = vmatpush1.xpose.msra.mxu0 0.0
    %4035 = vmatprep.subr.mxu0 0.0
    %4036 = vmatpush1.xpose.msra.mxu0 0.0
    %4037 = vmatprep.subr.mxu0 0.0
    %4038 = vmatpush1.xpose.msra.mxu0 0.0
    %4039 = vmatprep.subr.mxu0 0.0
    %4040 = vmatpush1.xpose.msra.mxu0 0.0
    %4041 = vmatprep.subr.mxu0 0.0
    %4042 = vmatpush1.xpose.msra.mxu0 0.0
    %4043 = vmatprep.subr.mxu0 0.0
    %4044 = vmatpush1.xpose.msra.mxu0 0.0
    %4045 = vmatprep.subr.mxu0 0.0
    %4046 = vmatpush1.xpose.msra.mxu0 0.0
    %4047 = vmatprep.subr.mxu0 0.0
    %4048 = vmatpush1.xpose.msra.mxu0 0.0
    %4049 = vmatprep.subr.mxu0 0.0
    %4050 = vmatpush1.xpose.msra.mxu0 0.0
    %4051 = vmatprep.subr.mxu0 0.0
    %4052 = vmatpush1.xpose.msra.mxu0 0.0
    %4053 = vmatprep.subr.mxu0 0.0
    %4054 = vmatpush1.xpose.msra.mxu0 %v4021
    %4055 = vmatprep.subr.mxu0 0.0
    %4056 = vmatpush2.xpose.msra.mxu0 0.0
    %4057 = vmatprep.subr.mxu0 0.0
    %4058 = vmatpush2.xpose.msra.mxu0 0.0
    %4059 = vmatprep.subr.mxu0 0.0
    %4060 = vmatpush2.xpose.msra.mxu0 0.0
    %4061 = vmatprep.subr.mxu0 0.0
    %4062 = vmatpush2.xpose.msra.mxu0 0.0
    %4063 = vmatprep.subr.mxu0 0.0
    %4064 = vmatpush2.xpose.msra.mxu0 0.0
    %4065 = vmatprep.subr.mxu0 0.0
    %4066 = vmatpush2.xpose.msra.mxu0 0.0
    %4067 = vmatprep.subr.mxu0 0.0
    %4068 = vmatpush2.xpose.msra.mxu0 0.0
    %4069 = vmatprep.subr.mxu0 0.0
    %4070 = vmatpush2.xpose.msra.mxu0 0.0
    %4071 = vmatprep.subr.mxu0 0.0
    %4072 = vmatpush2.xpose.msra.mxu0 0.0
    %4073 = vmatprep.subr.mxu0 0.0
    %4074 = vmatpush2.xpose.msra.mxu0 0.0
    %4075 = vmatprep.subr.mxu0 0.0
    %4076 = vmatpush2.xpose.msra.mxu0 0.0
    %4077 = vmatprep.subr.mxu0 0.0
    %4078 = vmatpush2.xpose.msra.mxu0 0.0
    %4079 = vmatprep.subr.mxu0 0.0
    %4080 = vmatpush2.xpose.msra.mxu0 0.0
    %4081 = vmatprep.subr.mxu0 0.0
    %4082 = vmatpush2.xpose.msra.mxu0 0.0
    %4083 = vmatprep.subr.mxu0 0.0
    %4084 = vmatpush2.xpose.msra.mxu0 0.0
    %4085 = vmatprep.subr.mxu0 0.0
    %4086 = vmatpush2.xpose.msra.mxu0 0.0
    %4087 = vmatprep.mubr.f32.mxu0 0.0
    %4088 = vmatmul.mubr.f32.gmra.mxu0 %v4019
    %v4089 = vpop.f32.mrf.mxu0
    %v4090 = vadd.f32 0.0, %v4089
    %v4091 = vpop.f32.mrf.mxu0
    %4092 = vdwg.mxu0
    %v4093 = vmul.f32 %v4012, 0.17677669
    %v4094 = vmul.f32 %v4090, 0.17677669
    %v4095 = vadd.f32 %v4093, %v599
    %v4096 = vadd.f32 %v4094, %v603
    %v4097 = vsel %vm608, %v4095, -inf
    %4098 = vmax.xlane.f32.xlu0 %v4097
    %v4099 = vpop.xlane.xlu0 %4098
    %v4100 = vsel %vm608, %v4096, -inf
    %4101 = vmax.xlane.f32.xlu0 %v4100
    %v4102 = vpop.xlane.xlu0 %4101
    %v4103 = vsub.f32 %v4095, %v4099
    %v4104 = vsub.f32 %v4096, %v4102
    %v4105 = vmul.f32 %v4103, 1.442695
    %v4106 = vpow.pop %v4105
    %v4107 = vmul.f32 %v4104, 1.442695
    %v4108 = vpow.pop %v4107
    %v4109 = vsel %vm608, %v4106, 0.0
    %4110 = vadd.xlane.f32.xlu0 %v4109
    %v4111 = vpop.xlane.xlu0 %4110
    %v4112 = vsel %vm608, %v4108, 0.0
    %4113 = vadd.xlane.f32.xlu0 %v4112
    %v4114 = vpop.xlane.xlu0 %4113
    %v4115 = vrcp.pop %v4111
    %v4116 = vmul.f32 %v4106, %v4115
    %v4117 = vrcp.pop %v4114
    %v4118 = vmul.f32 %v4108, %v4117
    %4119 = vrot.lane.b32.xlu0 %v2749, 32
    %v4120 = vpop.permute.xlu0 %4119
    %v4123 = vsel %vm608, %v4116, 0
    %4125 = vmatprep.subr.mxu0 0.0
    %4126 = vmatpush1.msra.mxu0 0.0
    %4127 = vmatprep.subr.mxu0 0.0
    %4128 = vmatpush1.msra.mxu0 0.0
    %4129 = vmatprep.subr.mxu0 0.0
    %4130 = vmatpush1.msra.mxu0 0.0
    %4131 = vmatprep.subr.mxu0 0.0
    %4132 = vmatpush1.msra.mxu0 0.0
    %4133 = vmatprep.subr.mxu0 0.0
    %4134 = vmatpush1.msra.mxu0 0.0
    %4135 = vmatprep.subr.mxu0 0.0
    %4136 = vmatpush1.msra.mxu0 0.0
    %4137 = vmatprep.subr.mxu0 0.0
    %4138 = vmatpush1.msra.mxu0 0.0
    %4139 = vmatprep.subr.mxu0 0.0
    %4140 = vmatpush1.msra.mxu0 0.0
    %4141 = vmatprep.subr.mxu0 0.0
    %4142 = vmatpush1.msra.mxu0 0.0
    %4143 = vmatprep.subr.mxu0 0.0
    %4144 = vmatpush1.msra.mxu0 0.0
    %4145 = vmatprep.subr.mxu0 0.0
    %4146 = vmatpush1.msra.mxu0 0.0
    %4147 = vmatprep.subr.mxu0 0.0
    %4148 = vmatpush1.msra.mxu0 0.0
    %4149 = vmatprep.subr.mxu0 0.0
    %4150 = vmatpush1.msra.mxu0 0.0
    %4151 = vmatprep.subr.mxu0 0.0
    %4152 = vmatpush1.msra.mxu0 0.0
    %4153 = vmatprep.subr.mxu0 0.0
    %4154 = vmatpush1.msra.mxu0 0.0
    %4155 = vmatprep.subr.mxu0 0.0
    %4156 = vmatpush1.msra.mxu0 %v4120
    %4157 = vmatprep.subr.mxu0 0.0
    %4158 = vmatpush2.msra.mxu0 0.0
    %4159 = vmatprep.subr.mxu0 0.0
    %4160 = vmatpush2.msra.mxu0 0.0
    %4161 = vmatprep.subr.mxu0 0.0
    %4162 = vmatpush2.msra.mxu0 0.0
    %4163 = vmatprep.subr.mxu0 0.0
    %4164 = vmatpush2.msra.mxu0 0.0
    %4165 = vmatprep.subr.mxu0 0.0
    %4166 = vmatpush2.msra.mxu0 0.0
    %4167 = vmatprep.subr.mxu0 0.0
    %4168 = vmatpush2.msra.mxu0 0.0
    %4169 = vmatprep.subr.mxu0 0.0
    %4170 = vmatpush2.msra.mxu0 0.0
    %4171 = vmatprep.subr.mxu0 0.0
    %4172 = vmatpush2.msra.mxu0 0.0
    %4173 = vmatprep.subr.mxu0 0.0
    %4174 = vmatpush2.msra.mxu0 0.0
    %4175 = vmatprep.subr.mxu0 0.0
    %4176 = vmatpush2.msra.mxu0 0.0
    %4177 = vmatprep.subr.mxu0 0.0
    %4178 = vmatpush2.msra.mxu0 0.0
    %4179 = vmatprep.subr.mxu0 0.0
    %4180 = vmatpush2.msra.mxu0 0.0
    %4181 = vmatprep.subr.mxu0 0.0
    %4182 = vmatpush2.msra.mxu0 0.0
    %4183 = vmatprep.subr.mxu0 0.0
    %4184 = vmatpush2.msra.mxu0 0.0
    %4185 = vmatprep.subr.mxu0 0.0
    %4186 = vmatpush2.msra.mxu0 0.0
    %4187 = vmatprep.subr.mxu0 0.0
    %4188 = vmatpush2.msra.mxu0 0.0
    %4189 = vmatprep.mubr.f32.mxu0 0.0
    %4190 = vmatmul.mubr.f32.gmra.mxu0 %v4123
    %v4191 = vpop.f32.mrf.mxu0
    %v4192 = vadd.f32 0.0, %v4191
    %v4193 = vpop.f32.mrf.mxu0
    %4194 = vdwg.mxu0
    %4195 = vrot.lane.b32.xlu0 %v2752, 32
    %v4196 = vpop.permute.xlu0 %4195
    %v4199 = vsel %vm608, %v4118, 0
    %4201 = vmatprep.subr.mxu0 0.0
    %4202 = vmatpush1.msra.mxu0 0.0
    %4203 = vmatprep.subr.mxu0 0.0
    %4204 = vmatpush1.msra.mxu0 0.0
    %4205 = vmatprep.subr.mxu0 0.0
    %4206 = vmatpush1.msra.mxu0 0.0
    %4207 = vmatprep.subr.mxu0 0.0
    %4208 = vmatpush1.msra.mxu0 0.0
    %4209 = vmatprep.subr.mxu0 0.0
    %4210 = vmatpush1.msra.mxu0 0.0
    %4211 = vmatprep.subr.mxu0 0.0
    %4212 = vmatpush1.msra.mxu0 0.0
    %4213 = vmatprep.subr.mxu0 0.0
    %4214 = vmatpush1.msra.mxu0 0.0
    %4215 = vmatprep.subr.mxu0 0.0
    %4216 = vmatpush1.msra.mxu0 0.0
    %4217 = vmatprep.subr.mxu0 0.0
    %4218 = vmatpush1.msra.mxu0 0.0
    %4219 = vmatprep.subr.mxu0 0.0
    %4220 = vmatpush1.msra.mxu0 0.0
    %4221 = vmatprep.subr.mxu0 0.0
    %4222 = vmatpush1.msra.mxu0 0.0
    %4223 = vmatprep.subr.mxu0 0.0
    %4224 = vmatpush1.msra.mxu0 0.0
    %4225 = vmatprep.subr.mxu0 0.0
    %4226 = vmatpush1.msra.mxu0 0.0
    %4227 = vmatprep.subr.mxu0 0.0
    %4228 = vmatpush1.msra.mxu0 0.0
    %4229 = vmatprep.subr.mxu0 0.0
    %4230 = vmatpush1.msra.mxu0 0.0
    %4231 = vmatprep.subr.mxu0 0.0
    %4232 = vmatpush1.msra.mxu0 %v4196
    %4233 = vmatprep.subr.mxu0 0.0
    %4234 = vmatpush2.msra.mxu0 0.0
    %4235 = vmatprep.subr.mxu0 0.0
    %4236 = vmatpush2.msra.mxu0 0.0
    %4237 = vmatprep.subr.mxu0 0.0
    %4238 = vmatpush2.msra.mxu0 0.0
    %4239 = vmatprep.subr.mxu0 0.0
    %4240 = vmatpush2.msra.mxu0 0.0
    %4241 = vmatprep.subr.mxu0 0.0
    %4242 = vmatpush2.msra.mxu0 0.0
    %4243 = vmatprep.subr.mxu0 0.0
    %4244 = vmatpush2.msra.mxu0 0.0
    %4245 = vmatprep.subr.mxu0 0.0
    %4246 = vmatpush2.msra.mxu0 0.0
    %4247 = vmatprep.subr.mxu0 0.0
    %4248 = vmatpush2.msra.mxu0 0.0
    %4249 = vmatprep.subr.mxu0 0.0
    %4250 = vmatpush2.msra.mxu0 0.0
    %4251 = vmatprep.subr.mxu0 0.0
    %4252 = vmatpush2.msra.mxu0 0.0
    %4253 = vmatprep.subr.mxu0 0.0
    %4254 = vmatpush2.msra.mxu0 0.0
    %4255 = vmatprep.subr.mxu0 0.0
    %4256 = vmatpush2.msra.mxu0 0.0
    %4257 = vmatprep.subr.mxu0 0.0
    %4258 = vmatpush2.msra.mxu0 0.0
    %4259 = vmatprep.subr.mxu0 0.0
    %4260 = vmatpush2.msra.mxu0 0.0
    %4261 = vmatprep.subr.mxu0 0.0
    %4262 = vmatpush2.msra.mxu0 0.0
    %4263 = vmatprep.subr.mxu0 0.0
    %4264 = vmatpush2.msra.mxu0 0.0
    %4265 = vmatprep.mubr.f32.mxu0 0.0
    %4266 = vmatmul.mubr.f32.gmra.mxu0 %v4199
    %v4267 = vpop.f32.mrf.mxu0
    %v4268 = vadd.f32 0.0, %v4267
    %v4269 = vpop.f32.mrf.mxu0
    %4270 = vdwg.mxu0
    %v4271 = vpack.c.bf16 %v4268, %v4192
    %s4272 = scalar_lea.vmem [#allocation6], 112
    %v4273 = vld [vmem:[%s4272] sm:$0xf]
    %v4274 = vld [vmem:[%s4272 + $0x4] sm:$0xf]
    %v4275 = vld [vmem:[%s4272 + $0x8] sm:$0xf]
    %v4276 = vld [vmem:[%s4272 + $0xc] sm:$0xf]
    %v4281 = vunpack.c.l.b16 %v4273
    %v4282 = vunpack.c.l.b16 %v4274
    %v4283 = vunpack.c.l.b16 %v4275
    %v4284 = vunpack.c.l.b16 %v4276
    %v4285 = vpack.c.b16 %v4282, %v4281
    %v4286 = vpack.c.b16 %v4284, %v4283
    %v4290 = vsel %vm441, %v4271, 0
    %4292 = vmatprep.subr.bf16.mxu0 0
    %4293 = vmatpush1.bf16.msra.mxu0 0
    %4294 = vmatprep.subr.bf16.mxu0 0
    %4295 = vmatpush1.bf16.msra.mxu0 0
    %4296 = vmatprep.subr.bf16.mxu0 0
    %4297 = vmatpush1.bf16.msra.mxu0 0
    %4298 = vmatprep.subr.bf16.mxu0 0
    %4299 = vmatpush1.bf16.msra.mxu0 0
    %4300 = vmatprep.subr.bf16.mxu0 0
    %4301 = vmatpush1.bf16.msra.mxu0 0
    %4302 = vmatprep.subr.bf16.mxu0 0
    %4303 = vmatpush1.bf16.msra.mxu0 0
    %4304 = vmatprep.subr.bf16.mxu0 0
    %4305 = vmatpush1.bf16.msra.mxu0 %v4286
    %4306 = vmatprep.subr.bf16.mxu0 0
    %4307 = vmatpush1.bf16.msra.mxu0 %v4285
    %4308 = vmatprep.subr.bf16.mxu0 0
    %4309 = vmatpush2.bf16.msra.mxu0 0
    %4310 = vmatprep.subr.bf16.mxu0 0
    %4311 = vmatpush2.bf16.msra.mxu0 0
    %4312 = vmatprep.subr.bf16.mxu0 0
    %4313 = vmatpush2.bf16.msra.mxu0 0
    %4314 = vmatprep.subr.bf16.mxu0 0
    %4315 = vmatpush2.bf16.msra.mxu0 0
    %4316 = vmatprep.subr.bf16.mxu0 0
    %4317 = vmatpush2.bf16.msra.mxu0 0
    %4318 = vmatprep.subr.bf16.mxu0 0
    %4319 = vmatpush2.bf16.msra.mxu0 0
    %4320 = vmatprep.subr.bf16.mxu0 0
    %4321 = vmatpush2.bf16.msra.mxu0 0
    %4322 = vmatprep.subr.bf16.mxu0 0
    %4323 = vmatpush2.bf16.msra.mxu0 0
    %4324 = vmatprep.mubr.bf16.mxu0 0
    %4325 = vmatmul.mubr.bf16.gmra.mxu0 %v4290
    %v4326 = vpop.f32.mrf.mxu0
    %v4327 = vadd.f32 0.0, %v4326
    %v4328 = vpop.f32.mrf.mxu0
    %v4329 = vpop.f32.mrf.mxu0
    %v4330 = vadd.f32 0.0, %v4329
    %v4331 = vpop.f32.mrf.mxu0
    %4332 = vdwg.mxu0
    %v4333 = vadd.f32 %v3935, %v4327
    %v4334 = vadd.f32 %v3936, %v4330
    %s4335 = scalar_lea.vmem %s7, 1
    %v4336 = vld [vmem:[%s4335] sm:$0x1]
    %v4338 = vlaneseq
    %v4339 = vshrl.u32 %v4338, 7
    %v4340 = vsub.s32 0, %v4339
    %v4341 = vrot.slane %v4336, %v4340
    %v4343 = vadd.f32 %v4333, %v4341
    %v4344 = vadd.f32 %v4334, %v4341
    %v4345 = vadd.f32 %v4343, %v2489
    %v4346 = vadd.f32 %v4344, %v2490
    %s4347 = scalar_lea.vmem %s8, 1
    %v4348 = vld [vmem:[%s4347] sm:$0x1]
    %s4349 = scalar_lea.vmem %s9, 1
    %v4350 = vld [vmem:[%s4349] sm:$0x1]
    %4351 = vadd.xlane.f32.xlu0 %v4345
    %v4352 = vpop.xlane.xlu0 %4351
    %4353 = vadd.xlane.f32.xlu0 %v4346
    %v4354 = vpop.xlane.xlu0 %4353
    %v4355 = vmul.f32 %v4352, %v144
    %v4356 = vmul.f32 %v4354, %v144
    %v4357 = vsub.f32 %v4345, %v4355
    %v4358 = vsub.f32 %v4346, %v4356
    %v4359 = vmul.f32 %v4357, %v4357
    %v4360 = vmul.f32 %v4358, %v4358
    %4361 = vadd.xlane.f32.xlu0 %v4359
    %v4362 = vpop.xlane.xlu0 %4361
    %4363 = vadd.xlane.f32.xlu0 %v4360
    %v4364 = vpop.xlane.xlu0 %4363
    %v4365 = vmul.f32 %v4362, %v144
    %v4366 = vmul.f32 %v4364, %v144
    %v4367 = vadd.f32 %v4365, 1e-05
    %v4368 = vadd.f32 %v4366, 1e-05
    %v4369 = vrsqrt.pop %v4367
    %v4370 = vrsqrt.pop %v4368
    %v4371 = vmul.f32 %v4357, %v4369
    %v4372 = vmul.f32 %v4358, %v4370
    %v4374 = vlaneseq
    %v4375 = vshrl.u32 %v4374, 7
    %v4376 = vsub.s32 0, %v4375
    %v4377 = vrot.slane %v4348, %v4376
    %v4379 = vmul.f32 %v4371, %v4377
    %v4380 = vmul.f32 %v4372, %v4377
    %v4382 = vlaneseq
    %v4383 = vshrl.u32 %v4382, 7
    %v4384 = vsub.s32 0, %v4383
    %v4385 = vrot.slane %v4350, %v4384
    %v4387 = vadd.f32 %v4379, %v4385
    %v4388 = vadd.f32 %v4380, %v4385
    %v4389 = vpack.c.bf16 %v4388, %v4387
    %s4390 = scalar_lea.vmem %s10, 128
    %v4391 = vld [vmem:[%s4390] sm:$0xff]
    %v4392 = vld [vmem:[%s4390 + $0x8] sm:$0xff]
    %v4393 = vld [vmem:[%s4390 + $0x10] sm:$0xff]
    %v4394 = vld [vmem:[%s4390 + $0x18] sm:$0xff]
    %v4395 = vld [vmem:[%s4390 + $0x20] sm:$0xff]
    %v4396 = vld [vmem:[%s4390 + $0x28] sm:$0xff]
    %v4397 = vld [vmem:[%s4390 + $0x30] sm:$0xff]
    %v4398 = vld [vmem:[%s4390 + $0x38] sm:$0xff]
    %v4399 = vld [vmem:[%s4390 + $0x40] sm:$0xff]
    %v4400 = vld [vmem:[%s4390 + $0x48] sm:$0xff]
    %v4401 = vld [vmem:[%s4390 + $0x50] sm:$0xff]
    %v4402 = vld [vmem:[%s4390 + $0x58] sm:$0xff]
    %v4403 = vld [vmem:[%s4390 + $0x60] sm:$0xff]
    %v4404 = vld [vmem:[%s4390 + $0x68] sm:$0xff]
    %v4405 = vld [vmem:[%s4390 + $0x70] sm:$0xff]
    %v4406 = vld [vmem:[%s4390 + $0x78] sm:$0xff]
    %s4407 = scalar_lea.vmem %s11, 2
    %v4408 = vld [vmem:[%s4407] sm:$0x3]
    %v4410 = vlaneseq
    %v4411 = vshrl.u32 %v4410, 7
    %v4412 = vsub.s32 0, %v4411
    %v4413 = vrot.slane %v4408, %v4412
    %v4414 = vlaneseq
    %v4415 = vshrl.u32 %v4414, 7
    %v4416 = vsub.s32 1, %v4415
    %v4417 = vrot.slane %v4408, %v4416
    %v4436 = vunpack.c.l.b16 %v4391
    %v4437 = vunpack.c.h.b16 %v4391
    %v4438 = vunpack.c.l.b16 %v4392
    %v4439 = vunpack.c.h.b16 %v4392
    %v4440 = vunpack.c.l.b16 %v4393
    %v4441 = vunpack.c.h.b16 %v4393
    %v4442 = vunpack.c.l.b16 %v4394
    %v4443 = vunpack.c.h.b16 %v4394
    %v4444 = vunpack.c.l.b16 %v4395
    %v4445 = vunpack.c.h.b16 %v4395
    %v4446 = vunpack.c.l.b16 %v4396
    %v4447 = vunpack.c.h.b16 %v4396
    %v4448 = vunpack.c.l.b16 %v4397
    %v4449 = vunpack.c.h.b16 %v4397
    %v4450 = vunpack.c.l.b16 %v4398
    %v4451 = vunpack.c.h.b16 %v4398
    %v4452 = vunpack.c.l.b16 %v4399
    %v4453 = vunpack.c.h.b16 %v4399
    %v4454 = vunpack.c.l.b16 %v4400
    %v4455 = vunpack.c.h.b16 %v4400
    %v4456 = vunpack.c.l.b16 %v4401
    %v4457 = vunpack.c.h.b16 %v4401
    %v4458 = vunpack.c.l.b16 %v4402
    %v4459 = vunpack.c.h.b16 %v4402
    %v4460 = vunpack.c.l.b16 %v4403
    %v4461 = vunpack.c.h.b16 %v4403
    %v4462 = vunpack.c.l.b16 %v4404
    %v4463 = vunpack.c.h.b16 %v4404
    %v4464 = vunpack.c.l.b16 %v4405
    %v4465 = vunpack.c.h.b16 %v4405
    %v4466 = vunpack.c.l.b16 %v4406
    %v4467 = vunpack.c.h.b16 %v4406
    %v4468 = vpack.c.b16 %v4438, %v4436
    %v4469 = vpack.c.b16 %v4439, %v4437
    %v4470 = vpack.c.b16 %v4442, %v4440
    %v4471 = vpack.c.b16 %v4443, %v4441
    %v4472 = vpack.c.b16 %v4446, %v4444
    %v4473 = vpack.c.b16 %v4447, %v4445
    %v4474 = vpack.c.b16 %v4450, %v4448
    %v4475 = vpack.c.b16 %v4451, %v4449
    %v4476 = vpack.c.b16 %v4454, %v4452
    %v4477 = vpack.c.b16 %v4455, %v4453
    %v4478 = vpack.c.b16 %v4458, %v4456
    %v4479 = vpack.c.b16 %v4459, %v4457
    %v4480 = vpack.c.b16 %v4462, %v4460
    %v4481 = vpack.c.b16 %v4463, %v4461
    %v4482 = vpack.c.b16 %v4466, %v4464
    %v4483 = vpack.c.b16 %v4467, %v4465
    %4500 = vmatprep.subr.bf16.mxu0 %v4483
    %4501 = vmatpush1.bf16.msra.mxu0 %v4482
    %4502 = vmatprep.subr.bf16.mxu0 %v4481
    %4503 = vmatpush1.bf16.msra.mxu0 %v4480
    %4504 = vmatprep.subr.bf16.mxu0 %v4479
    %4505 = vmatpush1.bf16.msra.mxu0 %v4478
    %4506 = vmatprep.subr.bf16.mxu0 %v4477
    %4507 = vmatpush1.bf16.msra.mxu0 %v4476
    %4508 = vmatprep.subr.bf16.mxu0 %v4475
    %4509 = vmatpush1.bf16.msra.mxu0 %v4474
    %4510 = vmatprep.subr.bf16.mxu0 %v4473
    %4511 = vmatpush1.bf16.msra.mxu0 %v4472
    %4512 = vmatprep.subr.bf16.mxu0 %v4471
    %4513 = vmatpush1.bf16.msra.mxu0 %v4470
    %4514 = vmatprep.subr.bf16.mxu0 %v4469
    %4515 = vmatpush1.bf16.msra.mxu0 %v4468
    %4516 = vmatprep.subr.bf16.mxu0 0
    %4517 = vmatpush2.bf16.msra.mxu0 0
    %4518 = vmatprep.subr.bf16.mxu0 0
    %4519 = vmatpush2.bf16.msra.mxu0 0
    %4520 = vmatprep.subr.bf16.mxu0 0
    %4521 = vmatpush2.bf16.msra.mxu0 0
    %4522 = vmatprep.subr.bf16.mxu0 0
    %4523 = vmatpush2.bf16.msra.mxu0 0
    %4524 = vmatprep.subr.bf16.mxu0 0
    %4525 = vmatpush2.bf16.msra.mxu0 0
    %4526 = vmatprep.subr.bf16.mxu0 0
    %4527 = vmatpush2.bf16.msra.mxu0 0
    %4528 = vmatprep.subr.bf16.mxu0 0
    %4529 = vmatpush2.bf16.msra.mxu0 0
    %4530 = vmatprep.subr.bf16.mxu0 0
    %4531 = vmatpush2.bf16.msra.mxu0 0
    %4532 = vmatprep.mubr.bf16.mxu0 0
    %4533 = vmatmul.mubr.bf16.gmra.mxu0 %v4389
    %v4534 = vpop.f32.mrf.mxu0
    %v4535 = vadd.f32 %v4413, %v4534
    %v4536 = vpop.f32.mrf.mxu0
    %v4537 = vadd.f32 %v4417, %v4536
    %v4538 = vpop.f32.mrf.mxu0
    %v4539 = vadd.f32 %v4413, %v4538
    %v4540 = vpop.f32.mrf.mxu0
    %v4541 = vadd.f32 %v4417, %v4540
    %4542 = vdwg.mxu0
    %v4543 = vmul.f32 %v4535, 0.5
    %v4544 = vmul.f32 %v4537, 0.5
    %v4545 = vmul.f32 %v4539, 0.5
    %v4546 = vmul.f32 %v4541, 0.5
    %v4547 = vmul.f32 %v4535, 0.044715
    %v4548 = vmul.f32 %v4537, 0.044715
    %v4549 = vmul.f32 %v4539, 0.044715
    %v4550 = vmul.f32 %v4541, 0.044715
    %v4551 = vmul.f32 %v4547, %v4535
    %v4552 = vmul.f32 %v4548, %v4537
    %v4553 = vmul.f32 %v4549, %v4539
    %v4554 = vmul.f32 %v4550, %v4541
    %v4555 = vmul.f32 %v4551, %v4535
    %v4556 = vmul.f32 %v4552, %v4537
    %v4557 = vmul.f32 %v4553, %v4539
    %v4558 = vmul.f32 %v4554, %v4541
    %v4559 = vadd.f32 %v4535, %v4555
    %v4560 = vadd.f32 %v4537, %v4556
    %v4561 = vadd.f32 %v4539, %v4557
    %v4562 = vadd.f32 %v4541, %v4558
    %v4563 = vmul.f32 %v4559, 0.7978846
    %v4564 = vmul.f32 %v4560, 0.7978846
    %v4565 = vmul.f32 %v4561, 0.7978846
    %v4566 = vmul.f32 %v4562, 0.7978846
    %v4567 = vtanh.pop %v4563
    %v4568 = vtanh.pop %v4564
    %v4569 = vtanh.pop %v4565
    %v4570 = vtanh.pop %v4566
    %v4571 = vadd.f32 %v4567, 1.0
    %v4572 = vadd.f32 %v4568, 1.0
    %v4573 = vadd.f32 %v4569, 1.0
    %v4574 = vadd.f32 %v4570, 1.0
    %v4575 = vmul.f32 %v4543, %v4571
    %v4576 = vmul.f32 %v4544, %v4572
    %v4577 = vmul.f32 %v4545, %v4573
    %v4578 = vmul.f32 %v4546, %v4574
    %v4579 = vpack.c.bf16 %v4577, %v4575
    %v4580 = vpack.c.bf16 %v4578, %v4576
    %s4581 = scalar_lea.vmem [#allocation8], 128
    %v4582 = vld [vmem:[%s4581] sm:$0xf]
    %v4583 = vld [vmem:[%s4581 + $0x4] sm:$0xf]
    %v4584 = vld [vmem:[%s4581 + $0x8] sm:$0xf]
    %v4585 = vld [vmem:[%s4581 + $0xc] sm:$0xf]
    %v4586 = vld [vmem:[%s4581 + $0x10] sm:$0xf]
    %v4587 = vld [vmem:[%s4581 + $0x14] sm:$0xf]
    %v4588 = vld [vmem:[%s4581 + $0x18] sm:$0xf]
    %v4589 = vld [vmem:[%s4581 + $0x1c] sm:$0xf]
    %v4590 = vld [vmem:[%s4581 + $0x20] sm:$0xf]
    %v4591 = vld [vmem:[%s4581 + $0x24] sm:$0xf]
    %v4592 = vld [vmem:[%s4581 + $0x28] sm:$0xf]
    %v4593 = vld [vmem:[%s4581 + $0x2c] sm:$0xf]
    %v4594 = vld [vmem:[%s4581 + $0x30] sm:$0xf]
    %v4595 = vld [vmem:[%s4581 + $0x34] sm:$0xf]
    %v4596 = vld [vmem:[%s4581 + $0x38] sm:$0xf]
    %v4597 = vld [vmem:[%s4581 + $0x3c] sm:$0xf]
    %v4598 = vld [vmem:[%s4581 + $0x40] sm:$0xf]
    %v4599 = vld [vmem:[%s4581 + $0x44] sm:$0xf]
    %v4600 = vld [vmem:[%s4581 + $0x48] sm:$0xf]
    %v4601 = vld [vmem:[%s4581 + $0x4c] sm:$0xf]
    %v4602 = vld [vmem:[%s4581 + $0x50] sm:$0xf]
    %v4603 = vld [vmem:[%s4581 + $0x54] sm:$0xf]
    %v4604 = vld [vmem:[%s4581 + $0x58] sm:$0xf]
    %v4605 = vld [vmem:[%s4581 + $0x5c] sm:$0xf]
    %v4606 = vld [vmem:[%s4581 + $0x60] sm:$0xf]
    %v4607 = vld [vmem:[%s4581 + $0x64] sm:$0xf]
    %v4608 = vld [vmem:[%s4581 + $0x68] sm:$0xf]
    %v4609 = vld [vmem:[%s4581 + $0x6c] sm:$0xf]
    %v4610 = vld [vmem:[%s4581 + $0x70] sm:$0xf]
    %v4611 = vld [vmem:[%s4581 + $0x74] sm:$0xf]
    %v4612 = vld [vmem:[%s4581 + $0x78] sm:$0xf]
    %v4613 = vld [vmem:[%s4581 + $0x7c] sm:$0xf]
    %s4614 = scalar_lea.vmem %s13, 1
    %v4615 = vld [vmem:[%s4614] sm:$0x1]
    %v4617 = vlaneseq
    %v4618 = vshrl.u32 %v4617, 7
    %v4619 = vsub.s32 0, %v4618
    %v4620 = vrot.slane %v4615, %v4619
    %v4654 = vunpack.c.l.b16 %v4582
    %v4655 = vunpack.c.l.b16 %v4583
    %v4656 = vunpack.c.l.b16 %v4584
    %v4657 = vunpack.c.l.b16 %v4585
    %v4658 = vunpack.c.l.b16 %v4586
    %v4659 = vunpack.c.l.b16 %v4587
    %v4660 = vunpack.c.l.b16 %v4588
    %v4661 = vunpack.c.l.b16 %v4589
    %v4662 = vunpack.c.l.b16 %v4590
    %v4663 = vunpack.c.l.b16 %v4591
    %v4664 = vunpack.c.l.b16 %v4592
    %v4665 = vunpack.c.l.b16 %v4593
    %v4666 = vunpack.c.l.b16 %v4594
    %v4667 = vunpack.c.l.b16 %v4595
    %v4668 = vunpack.c.l.b16 %v4596
    %v4669 = vunpack.c.l.b16 %v4597
    %v4670 = vunpack.c.l.b16 %v4598
    %v4671 = vunpack.c.l.b16 %v4599
    %v4672 = vunpack.c.l.b16 %v4600
    %v4673 = vunpack.c.l.b16 %v4601
    %v4674 = vunpack.c.l.b16 %v4602
    %v4675 = vunpack.c.l.b16 %v4603
    %v4676 = vunpack.c.l.b16 %v4604
    %v4677 = vunpack.c.l.b16 %v4605
    %v4678 = vunpack.c.l.b16 %v4606
    %v4679 = vunpack.c.l.b16 %v4607
    %v4680 = vunpack.c.l.b16 %v4608
    %v4681 = vunpack.c.l.b16 %v4609
    %v4682 = vunpack.c.l.b16 %v4610
    %v4683 = vunpack.c.l.b16 %v4611
    %v4684 = vunpack.c.l.b16 %v4612
    %v4685 = vunpack.c.l.b16 %v4613
    %v4686 = vpack.c.b16 %v4655, %v4654
    %v4687 = vpack.c.b16 %v4657, %v4656
    %v4688 = vpack.c.b16 %v4659, %v4658
    %v4689 = vpack.c.b16 %v4661, %v4660
    %v4690 = vpack.c.b16 %v4663, %v4662
    %v4691 = vpack.c.b16 %v4665, %v4664
    %v4692 = vpack.c.b16 %v4667, %v4666
    %v4693 = vpack.c.b16 %v4669, %v4668
    %v4694 = vpack.c.b16 %v4671, %v4670
    %v4695 = vpack.c.b16 %v4673, %v4672
    %v4696 = vpack.c.b16 %v4675, %v4674
    %v4697 = vpack.c.b16 %v4677, %v4676
    %v4698 = vpack.c.b16 %v4679, %v4678
    %v4699 = vpack.c.b16 %v4681, %v4680
    %v4700 = vpack.c.b16 %v4683, %v4682
    %v4701 = vpack.c.b16 %v4685, %v4684
    %4718 = vmatprep.subr.bf16.mxu0 0
    %4719 = vmatpush1.bf16.msra.mxu0 %v4693
    %4720 = vmatprep.subr.bf16.mxu0 0
    %4721 = vmatpush1.bf16.msra.mxu0 %v4692
    %4722 = vmatprep.subr.bf16.mxu0 0
    %4723 = vmatpush1.bf16.msra.mxu0 %v4691
    %4724 = vmatprep.subr.bf16.mxu0 0
    %4725 = vmatpush1.bf16.msra.mxu0 %v4690
    %4726 = vmatprep.subr.bf16.mxu0 0
    %4727 = vmatpush1.bf16.msra.mxu0 %v4689
    %4728 = vmatprep.subr.bf16.mxu0 0
    %4729 = vmatpush1.bf16.msra.mxu0 %v4688
    %4730 = vmatprep.subr.bf16.mxu0 0
    %4731 = vmatpush1.bf16.msra.mxu0 %v4687
    %4732 = vmatprep.subr.bf16.mxu0 0
    %4733 = vmatpush1.bf16.msra.mxu0 %v4686
    %4734 = vmatprep.subr.bf16.mxu0 0
    %4735 = vmatpush2.bf16.msra.mxu0 %v4701
    %4736 = vmatprep.subr.bf16.mxu0 0
    %4737 = vmatpush2.bf16.msra.mxu0 %v4700
    %4738 = vmatprep.subr.bf16.mxu0 0
    %4739 = vmatpush2.bf16.msra.mxu0 %v4699
    %4740 = vmatprep.subr.bf16.mxu0 0
    %4741 = vmatpush2.bf16.msra.mxu0 %v4698
    %4742 = vmatprep.subr.bf16.mxu0 0
    %4743 = vmatpush2.bf16.msra.mxu0 %v4697
    %4744 = vmatprep.subr.bf16.mxu0 0
    %4745 = vmatpush2.bf16.msra.mxu0 %v4696
    %4746 = vmatprep.subr.bf16.mxu0 0
    %4747 = vmatpush2.bf16.msra.mxu0 %v4695
    %4748 = vmatprep.subr.bf16.mxu0 0
    %4749 = vmatpush2.bf16.msra.mxu0 %v4694
    %4750 = vmatprep.mubr.bf16.mxu0 %v4580
    %4751 = vmatmul.mubr.bf16.gmra.mxu0 %v4579
    %v4752 = vpop.f32.mrf.mxu0
    %v4753 = vadd.f32 %v4620, %v4752
    %v4754 = vpop.f32.mrf.mxu0
    %v4755 = vpop.f32.mrf.mxu0
    %v4756 = vadd.f32 %v4620, %v4755
    %v4757 = vpop.f32.mrf.mxu0
    %4758 = vdwg.mxu0
    %v4759 = vadd.f32 %v4753, %v4387
    %v4760 = vadd.f32 %v4756, %v4388
    %s4761 = scalar_lea.vmem %s14, 1
    %v4762 = vld [vmem:[%s4761] sm:$0x1]
    %s4763 = scalar_lea.vmem %s15, 1
    %v4764 = vld [vmem:[%s4763] sm:$0x1]
    %4765 = vadd.xlane.f32.xlu0 %v4759
    %v4766 = vpop.xlane.xlu0 %4765
    %4767 = vadd.xlane.f32.xlu0 %v4760
    %v4768 = vpop.xlane.xlu0 %4767
    %v4769 = vmul.f32 %v4766, %v144
    %v4770 = vmul.f32 %v4768, %v144
    %v4771 = vsub.f32 %v4759, %v4769
    %v4772 = vsub.f32 %v4760, %v4770
    %v4773 = vmul.f32 %v4771, %v4771
    %v4774 = vmul.f32 %v4772, %v4772
    %4775 = vadd.xlane.f32.xlu0 %v4773
    %v4776 = vpop.xlane.xlu0 %4775
    %4777 = vadd.xlane.f32.xlu0 %v4774
    %v4778 = vpop.xlane.xlu0 %4777
    %v4779 = vmul.f32 %v4776, %v144
    %v4780 = vmul.f32 %v4778, %v144
    %v4781 = vadd.f32 %v4779, 1e-05
    %v4782 = vadd.f32 %v4780, 1e-05
    %v4783 = vrsqrt.pop %v4781
    %v4784 = vrsqrt.pop %v4782
    %v4785 = vmul.f32 %v4771, %v4783
    %v4786 = vmul.f32 %v4772, %v4784
    %v4788 = vlaneseq
    %v4789 = vshrl.u32 %v4788, 7
    %v4790 = vsub.s32 0, %v4789
    %v4791 = vrot.slane %v4762, %v4790
    %v4793 = vmul.f32 %v4785, %v4791
    %v4794 = vmul.f32 %v4786, %v4791
    %v4796 = vlaneseq
    %v4797 = vshrl.u32 %v4796, 7
    %v4798 = vsub.s32 0, %v4797
    %v4799 = vrot.slane %v4764, %v4798
    %v4801 = vadd.f32 %v4793, %v4799
    %v4802 = vadd.f32 %v4794, %v4799
    %v4803 = vpack.c.bf16 %v4802, %v4801
    %s4804 = scalar_lea.vmem [#allocation3], 384
    %v4805 = vld [vmem:[%s4804] sm:$0xff]
    %v4806 = vld [vmem:[%s4804 + $0x8] sm:$0xf]
    %v4807 = vld [vmem:[%s4804 + $0xc] sm:$0xff]
    %v4808 = vld [vmem:[%s4804 + $0x14] sm:$0xf]
    %v4809 = vld [vmem:[%s4804 + $0x18] sm:$0xff]
    %v4810 = vld [vmem:[%s4804 + $0x20] sm:$0xf]
    %v4811 = vld [vmem:[%s4804 + $0x24] sm:$0xff]
    %v4812 = vld [vmem:[%s4804 + $0x2c] sm:$0xf]
    %v4813 = vld [vmem:[%s4804 + $0x30] sm:$0xff]
    %v4814 = vld [vmem:[%s4804 + $0x38] sm:$0xf]
    %v4815 = vld [vmem:[%s4804 + $0x3c] sm:$0xff]
    %v4816 = vld [vmem:[%s4804 + $0x44] sm:$0xf]
    %v4817 = vld [vmem:[%s4804 + $0x48] sm:$0xff]
    %v4818 = vld [vmem:[%s4804 + $0x50] sm:$0xf]
    %v4819 = vld [vmem:[%s4804 + $0x54] sm:$0xff]
    %v4820 = vld [vmem:[%s4804 + $0x5c] sm:$0xf]
    %v4821 = vld [vmem:[%s4804 + $0x60] sm:$0xff]
    %v4822 = vld [vmem:[%s4804 + $0x68] sm:$0xf]
    %v4823 = vld [vmem:[%s4804 + $0x6c] sm:$0xff]
    %v4824 = vld [vmem:[%s4804 + $0x74] sm:$0xf]
    %v4825 = vld [vmem:[%s4804 + $0x78] sm:$0xff]
    %v4826 = vld [vmem:[%s4804 + $0x80] sm:$0xf]
    %v4827 = vld [vmem:[%s4804 + $0x84] sm:$0xff]
    %v4828 = vld [vmem:[%s4804 + $0x8c] sm:$0xf]
    %v4829 = vld [vmem:[%s4804 + $0x90] sm:$0xff]
    %v4830 = vld [vmem:[%s4804 + $0x98] sm:$0xf]
    %v4831 = vld [vmem:[%s4804 + $0x9c] sm:$0xff]
    %v4832 = vld [vmem:[%s4804 + $0xa4] sm:$0xf]
    %v4833 = vld [vmem:[%s4804 + $0xa8] sm:$0xff]
    %v4834 = vld [vmem:[%s4804 + $0xb0] sm:$0xf]
    %v4835 = vld [vmem:[%s4804 + $0xb4] sm:$0xff]
    %v4836 = vld [vmem:[%s4804 + $0xbc] sm:$0xf]
    %s4837 = scalar_lea.vmem %s5, 6
    %v4838 = vld [vmem:[%s4837] sm:$0x7]
    %v4840 = vlaneseq
    %v4841 = vshrl.u32 %v4840, 7
    %v4842 = vsub.s32 0, %v4841
    %v4843 = vrot.slane %v4838, %v4842
    %v4844 = vlaneseq
    %v4845 = vshrl.u32 %v4844, 7
    %v4846 = vsub.s32 1, %v4845
    %v4847 = vrot.slane %v4838, %v4846
    %v4848 = vlaneseq
    %v4849 = vshrl.u32 %v4848, 7
    %v4850 = vsub.s32 2, %v4849
    %v4851 = vrot.slane %v4838, %v4850
    %v4887 = vunpack.c.l.b16 %v4805
    %v4888 = vunpack.c.h.b16 %v4805
    %v4889 = vunpack.c.l.b16 %v4806
    %v4890 = vunpack.c.l.b16 %v4807
    %v4891 = vunpack.c.h.b16 %v4807
    %v4892 = vunpack.c.l.b16 %v4808
    %v4893 = vunpack.c.l.b16 %v4809
    %v4894 = vunpack.c.h.b16 %v4809
    %v4895 = vunpack.c.l.b16 %v4810
    %v4896 = vunpack.c.l.b16 %v4811
    %v4897 = vunpack.c.h.b16 %v4811
    %v4898 = vunpack.c.l.b16 %v4812
    %v4899 = vunpack.c.l.b16 %v4813
    %v4900 = vunpack.c.h.b16 %v4813
    %v4901 = vunpack.c.l.b16 %v4814
    %v4902 = vunpack.c.l.b16 %v4815
    %v4903 = vunpack.c.h.b16 %v4815
    %v4904 = vunpack.c.l.b16 %v4816
    %v4905 = vunpack.c.l.b16 %v4817
    %v4906 = vunpack.c.h.b16 %v4817
    %v4907 = vunpack.c.l.b16 %v4818
    %v4908 = vunpack.c.l.b16 %v4819
    %v4909 = vunpack.c.h.b16 %v4819
    %v4910 = vunpack.c.l.b16 %v4820
    %v4911 = vunpack.c.l.b16 %v4821
    %v4912 = vunpack.c.h.b16 %v4821
    %v4913 = vunpack.c.l.b16 %v4822
    %v4914 = vunpack.c.l.b16 %v4823
    %v4915 = vunpack.c.h.b16 %v4823
    %v4916 = vunpack.c.l.b16 %v4824
    %v4917 = vunpack.c.l.b16 %v4825
    %v4918 = vunpack.c.h.b16 %v4825
    %v4919 = vunpack.c.l.b16 %v4826
    %v4920 = vunpack.c.l.b16 %v4827
    %v4921 = vunpack.c.h.b16 %v4827
    %v4922 = vunpack.c.l.b16 %v4828
    %v4923 = vunpack.c.l.b16 %v4829
    %v4924 = vunpack.c.h.b16 %v4829
    %v4925 = vunpack.c.l.b16 %v4830
    %v4926 = vunpack.c.l.b16 %v4831
    %v4927 = vunpack.c.h.b16 %v4831
    %v4928 = vunpack.c.l.b16 %v4832
    %v4929 = vunpack.c.l.b16 %v4833
    %v4930 = vunpack.c.h.b16 %v4833
    %v4931 = vunpack.c.l.b16 %v4834
    %v4932 = vunpack.c.l.b16 %v4835
    %v4933 = vunpack.c.h.b16 %v4835
    %v4934 = vunpack.c.l.b16 %v4836
    %v4935 = vpack.c.b16 %v4890, %v4887
    %v4936 = vpack.c.b16 %v4891, %v4888
    %v4937 = vpack.c.b16 %v4892, %v4889
    %v4938 = vpack.c.b16 %v4896, %v4893
    %v4939 = vpack.c.b16 %v4897, %v4894
    %v4940 = vpack.c.b16 %v4898, %v4895
    %v4941 = vpack.c.b16 %v4902, %v4899
    %v4942 = vpack.c.b16 %v4903, %v4900
    %v4943 = vpack.c.b16 %v4904, %v4901
    %v4944 = vpack.c.b16 %v4908, %v4905
    %v4945 = vpack.c.b16 %v4909, %v4906
    %v4946 = vpack.c.b16 %v4910, %v4907
    %v4947 = vpack.c.b16 %v4914, %v4911
    %v4948 = vpack.c.b16 %v4915, %v4912
    %v4949 = vpack.c.b16 %v4916, %v4913
    %v4950 = vpack.c.b16 %v4920, %v4917
    %v4951 = vpack.c.b16 %v4921, %v4918
    %v4952 = vpack.c.b16 %v4922, %v4919
    %v4953 = vpack.c.b16 %v4926, %v4923
    %v4954 = vpack.c.b16 %v4927, %v4924
    %v4955 = vpack.c.b16 %v4928, %v4925
    %v4956 = vpack.c.b16 %v4932, %v4929
    %v4957 = vpack.c.b16 %v4933, %v4930
    %v4958 = vpack.c.b16 %v4934, %v4931
    %4983 = vmatprep.subr.bf16.mxu0 %v4957
    %4984 = vmatpush1.bf16.msra.mxu0 %v4956
    %4985 = vmatprep.subr.bf16.mxu0 %v4954
    %4986 = vmatpush1.bf16.msra.mxu0 %v4953
    %4987 = vmatprep.subr.bf16.mxu0 %v4951
    %4988 = vmatpush1.bf16.msra.mxu0 %v4950
    %4989 = vmatprep.subr.bf16.mxu0 %v4948
    %4990 = vmatpush1.bf16.msra.mxu0 %v4947
    %4991 = vmatprep.subr.bf16.mxu0 %v4945
    %4992 = vmatpush1.bf16.msra.mxu0 %v4944
    %4993 = vmatprep.subr.bf16.mxu0 %v4942
    %4994 = vmatpush1.bf16.msra.mxu0 %v4941
    %4995 = vmatprep.subr.bf16.mxu0 %v4939
    %4996 = vmatpush1.bf16.msra.mxu0 %v4938
    %4997 = vmatprep.subr.bf16.mxu0 %v4936
    %4998 = vmatpush1.bf16.msra.mxu0 %v4935
    %4999 = vmatprep.subr.bf16.mxu0 0
    %5000 = vmatpush2.bf16.msra.mxu0 0
    %5001 = vmatprep.subr.bf16.mxu0 0
    %5002 = vmatpush2.bf16.msra.mxu0 0
    %5003 = vmatprep.subr.bf16.mxu0 0
    %5004 = vmatpush2.bf16.msra.mxu0 0
    %5005 = vmatprep.subr.bf16.mxu0 0
    %5006 = vmatpush2.bf16.msra.mxu0 0
    %5007 = vmatprep.subr.bf16.mxu0 0
    %5008 = vmatpush2.bf16.msra.mxu0 0
    %5009 = vmatprep.subr.bf16.mxu0 0
    %5010 = vmatpush2.bf16.msra.mxu0 0
    %5011 = vmatprep.subr.bf16.mxu0 0
    %5012 = vmatpush2.bf16.msra.mxu0 0
    %5013 = vmatprep.subr.bf16.mxu0 0
    %5014 = vmatpush2.bf16.msra.mxu0 0
    %5015 = vmatprep.mubr.bf16.mxu0 0
    %5016 = vmatmul.mubr.bf16.gmra.mxu0 %v4803
    %v5017 = vpop.f32.mrf.mxu0
    %v5018 = vadd.f32 %v4843, %v5017
    %v5019 = vpop.f32.mrf.mxu0
    %v5020 = vadd.f32 %v4847, %v5019
    %v5021 = vpop.f32.mrf.mxu0
    %v5022 = vadd.f32 %v4843, %v5021
    %v5023 = vpop.f32.mrf.mxu0
    %v5024 = vadd.f32 %v4847, %v5023
    %5025 = vdwg.mxu0
    %5026 = vmatprep.subr.bf16.mxu0 0
    %5027 = vmatpush1.bf16.msra.mxu0 %v4958
    %5028 = vmatprep.subr.bf16.mxu0 0
    %5029 = vmatpush1.bf16.msra.mxu0 %v4955
    %5030 = vmatprep.subr.bf16.mxu0 0
    %5031 = vmatpush1.bf16.msra.mxu0 %v4952
    %5032 = vmatprep.subr.bf16.mxu0 0
    %5033 = vmatpush1.bf16.msra.mxu0 %v4949
    %5034 = vmatprep.subr.bf16.mxu0 0
    %5035 = vmatpush1.bf16.msra.mxu0 %v4946
    %5036 = vmatprep.subr.bf16.mxu0 0
    %5037 = vmatpush1.bf16.msra.mxu0 %v4943
    %5038 = vmatprep.subr.bf16.mxu0 0
    %5039 = vmatpush1.bf16.msra.mxu0 %v4940
    %5040 = vmatprep.subr.bf16.mxu0 0
    %5041 = vmatpush1.bf16.msra.mxu0 %v4937
    %5042 = vmatprep.subr.bf16.mxu0 0
    %5043 = vmatpush2.bf16.msra.mxu0 0
    %5044 = vmatprep.subr.bf16.mxu0 0
    %5045 = vmatpush2.bf16.msra.mxu0 0
    %5046 = vmatprep.subr.bf16.mxu0 0
    %5047 = vmatpush2.bf16.msra.mxu0 0
    %5048 = vmatprep.subr.bf16.mxu0 0
    %5049 = vmatpush2.bf16.msra.mxu0 0
    %5050 = vmatprep.subr.bf16.mxu0 0
    %5051 = vmatpush2.bf16.msra.mxu0 0
    %5052 = vmatprep.subr.bf16.mxu0 0
    %5053 = vmatpush2.bf16.msra.mxu0 0
    %5054 = vmatprep.subr.bf16.mxu0 0
    %5055 = vmatpush2.bf16.msra.mxu0 0
    %5056 = vmatprep.subr.bf16.mxu0 0
    %5057 = vmatpush2.bf16.msra.mxu0 0
    %5058 = vmatprep.mubr.bf16.mxu0 0
    %5059 = vmatmul.mubr.bf16.gmra.mxu0 %v4803
    %v5060 = vpop.f32.mrf.mxu0
    %v5061 = vadd.f32 %v4851, %v5060
    %v5062 = vpop.f32.mrf.mxu0
    %v5063 = vpop.f32.mrf.mxu0
    %v5064 = vadd.f32 %v4851, %v5063
    %v5065 = vpop.f32.mrf.mxu0
    %5066 = vdwg.mxu0
    %v5068 = vsel %vm441, %v5018, 0
    %v5071 = vsel %vm441, %v5020, 0
    %5073 = vmatprep.subr.mxu0 0.0
    %5074 = vmatpush1.xpose.msra.mxu0 0.0
    %5075 = vmatprep.subr.mxu0 0.0
    %5076 = vmatpush1.xpose.msra.mxu0 0.0
    %5077 = vmatprep.subr.mxu0 0.0
    %5078 = vmatpush1.xpose.msra.mxu0 0.0
    %5079 = vmatprep.subr.mxu0 0.0
    %5080 = vmatpush1.xpose.msra.mxu0 0.0
    %5081 = vmatprep.subr.mxu0 0.0
    %5082 = vmatpush1.xpose.msra.mxu0 0.0
    %5083 = vmatprep.subr.mxu0 0.0
    %5084 = vmatpush1.xpose.msra.mxu0 0.0
    %5085 = vmatprep.subr.mxu0 0.0
    %5086 = vmatpush1.xpose.msra.mxu0 0.0
    %5087 = vmatprep.subr.mxu0 0.0
    %5088 = vmatpush1.xpose.msra.mxu0 0.0
    %5089 = vmatprep.subr.mxu0 0.0
    %5090 = vmatpush1.xpose.msra.mxu0 0.0
    %5091 = vmatprep.subr.mxu0 0.0
    %5092 = vmatpush1.xpose.msra.mxu0 0.0
    %5093 = vmatprep.subr.mxu0 0.0
    %5094 = vmatpush1.xpose.msra.mxu0 0.0
    %5095 = vmatprep.subr.mxu0 0.0
    %5096 = vmatpush1.xpose.msra.mxu0 0.0
    %5097 = vmatprep.subr.mxu0 0.0
    %5098 = vmatpush1.xpose.msra.mxu0 0.0
    %5099 = vmatprep.subr.mxu0 0.0
    %5100 = vmatpush1.xpose.msra.mxu0 0.0
    %5101 = vmatprep.subr.mxu0 0.0
    %5102 = vmatpush1.xpose.msra.mxu0 0.0
    %5103 = vmatprep.subr.mxu0 0.0
    %5104 = vmatpush1.xpose.msra.mxu0 %v5071
    %5105 = vmatprep.subr.mxu0 0.0
    %5106 = vmatpush2.xpose.msra.mxu0 0.0
    %5107 = vmatprep.subr.mxu0 0.0
    %5108 = vmatpush2.xpose.msra.mxu0 0.0
    %5109 = vmatprep.subr.mxu0 0.0
    %5110 = vmatpush2.xpose.msra.mxu0 0.0
    %5111 = vmatprep.subr.mxu0 0.0
    %5112 = vmatpush2.xpose.msra.mxu0 0.0
    %5113 = vmatprep.subr.mxu0 0.0
    %5114 = vmatpush2.xpose.msra.mxu0 0.0
    %5115 = vmatprep.subr.mxu0 0.0
    %5116 = vmatpush2.xpose.msra.mxu0 0.0
    %5117 = vmatprep.subr.mxu0 0.0
    %5118 = vmatpush2.xpose.msra.mxu0 0.0
    %5119 = vmatprep.subr.mxu0 0.0
    %5120 = vmatpush2.xpose.msra.mxu0 0.0
    %5121 = vmatprep.subr.mxu0 0.0
    %5122 = vmatpush2.xpose.msra.mxu0 0.0
    %5123 = vmatprep.subr.mxu0 0.0
    %5124 = vmatpush2.xpose.msra.mxu0 0.0
    %5125 = vmatprep.subr.mxu0 0.0
    %5126 = vmatpush2.xpose.msra.mxu0 0.0
    %5127 = vmatprep.subr.mxu0 0.0
    %5128 = vmatpush2.xpose.msra.mxu0 0.0
    %5129 = vmatprep.subr.mxu0 0.0
    %5130 = vmatpush2.xpose.msra.mxu0 0.0
    %5131 = vmatprep.subr.mxu0 0.0
    %5132 = vmatpush2.xpose.msra.mxu0 0.0
    %5133 = vmatprep.subr.mxu0 0.0
    %5134 = vmatpush2.xpose.msra.mxu0 0.0
    %5135 = vmatprep.subr.mxu0 0.0
    %5136 = vmatpush2.xpose.msra.mxu0 0.0
    %5137 = vmatprep.mubr.f32.mxu0 0.0
    %5138 = vmatmul.mubr.f32.gmra.mxu0 %v5068
    %v5139 = vpop.f32.mrf.mxu0
    %v5140 = vadd.f32 0.0, %v5139
    %v5141 = vpop.f32.mrf.mxu0
    %5142 = vdwg.mxu0
    %v5144 = vsel %vm441, %v5022, 0
    %v5147 = vsel %vm441, %v5024, 0
    %5149 = vmatprep.subr.mxu0 0.0
    %5150 = vmatpush1.xpose.msra.mxu0 0.0
    %5151 = vmatprep.subr.mxu0 0.0
    %5152 = vmatpush1.xpose.msra.mxu0 0.0
    %5153 = vmatprep.subr.mxu0 0.0
    %5154 = vmatpush1.xpose.msra.mxu0 0.0
    %5155 = vmatprep.subr.mxu0 0.0
    %5156 = vmatpush1.xpose.msra.mxu0 0.0
    %5157 = vmatprep.subr.mxu0 0.0
    %5158 = vmatpush1.xpose.msra.mxu0 0.0
    %5159 = vmatprep.subr.mxu0 0.0
    %5160 = vmatpush1.xpose.msra.mxu0 0.0
    %5161 = vmatprep.subr.mxu0 0.0
    %5162 = vmatpush1.xpose.msra.mxu0 0.0
    %5163 = vmatprep.subr.mxu0 0.0
    %5164 = vmatpush1.xpose.msra.mxu0 0.0
    %5165 = vmatprep.subr.mxu0 0.0
    %5166 = vmatpush1.xpose.msra.mxu0 0.0
    %5167 = vmatprep.subr.mxu0 0.0
    %5168 = vmatpush1.xpose.msra.mxu0 0.0
    %5169 = vmatprep.subr.mxu0 0.0
    %5170 = vmatpush1.xpose.msra.mxu0 0.0
    %5171 = vmatprep.subr.mxu0 0.0
    %5172 = vmatpush1.xpose.msra.mxu0 0.0
    %5173 = vmatprep.subr.mxu0 0.0
    %5174 = vmatpush1.xpose.msra.mxu0 0.0
    %5175 = vmatprep.subr.mxu0 0.0
    %5176 = vmatpush1.xpose.msra.mxu0 0.0
    %5177 = vmatprep.subr.mxu0 0.0
    %5178 = vmatpush1.xpose.msra.mxu0 0.0
    %5179 = vmatprep.subr.mxu0 0.0
    %5180 = vmatpush1.xpose.msra.mxu0 %v5147
    %5181 = vmatprep.subr.mxu0 0.0
    %5182 = vmatpush2.xpose.msra.mxu0 0.0
    %5183 = vmatprep.subr.mxu0 0.0
    %5184 = vmatpush2.xpose.msra.mxu0 0.0
    %5185 = vmatprep.subr.mxu0 0.0
    %5186 = vmatpush2.xpose.msra.mxu0 0.0
    %5187 = vmatprep.subr.mxu0 0.0
    %5188 = vmatpush2.xpose.msra.mxu0 0.0
    %5189 = vmatprep.subr.mxu0 0.0
    %5190 = vmatpush2.xpose.msra.mxu0 0.0
    %5191 = vmatprep.subr.mxu0 0.0
    %5192 = vmatpush2.xpose.msra.mxu0 0.0
    %5193 = vmatprep.subr.mxu0 0.0
    %5194 = vmatpush2.xpose.msra.mxu0 0.0
    %5195 = vmatprep.subr.mxu0 0.0
    %5196 = vmatpush2.xpose.msra.mxu0 0.0
    %5197 = vmatprep.subr.mxu0 0.0
    %5198 = vmatpush2.xpose.msra.mxu0 0.0
    %5199 = vmatprep.subr.mxu0 0.0
    %5200 = vmatpush2.xpose.msra.mxu0 0.0
    %5201 = vmatprep.subr.mxu0 0.0
    %5202 = vmatpush2.xpose.msra.mxu0 0.0
    %5203 = vmatprep.subr.mxu0 0.0
    %5204 = vmatpush2.xpose.msra.mxu0 0.0
    %5205 = vmatprep.subr.mxu0 0.0
    %5206 = vmatpush2.xpose.msra.mxu0 0.0
    %5207 = vmatprep.subr.mxu0 0.0
    %5208 = vmatpush2.xpose.msra.mxu0 0.0
    %5209 = vmatprep.subr.mxu0 0.0
    %5210 = vmatpush2.xpose.msra.mxu0 0.0
    %5211 = vmatprep.subr.mxu0 0.0
    %5212 = vmatpush2.xpose.msra.mxu0 0.0
    %5213 = vmatprep.mubr.f32.mxu0 0.0
    %5214 = vmatmul.mubr.f32.gmra.mxu0 %v5144
    %v5215 = vpop.f32.mrf.mxu0
    %v5216 = vadd.f32 0.0, %v5215
    %v5217 = vpop.f32.mrf.mxu0
    %5218 = vdwg.mxu0
    %v5219 = vmul.f32 %v5140, 0.17677669
    %v5220 = vmul.f32 %v5216, 0.17677669
    %v5221 = vadd.f32 %v5219, %v599
    %v5222 = vadd.f32 %v5220, %v603
    %v5223 = vsel %vm608, %v5221, -inf
    %5224 = vmax.xlane.f32.xlu0 %v5223
    %v5225 = vpop.xlane.xlu0 %5224
    %v5226 = vsel %vm608, %v5222, -inf
    %5227 = vmax.xlane.f32.xlu0 %v5226
    %v5228 = vpop.xlane.xlu0 %5227
    %v5229 = vsub.f32 %v5221, %v5225
    %v5230 = vsub.f32 %v5222, %v5228
    %v5231 = vmul.f32 %v5229, 1.442695
    %v5232 = vpow.pop %v5231
    %v5233 = vmul.f32 %v5230, 1.442695
    %v5234 = vpow.pop %v5233
    %v5235 = vsel %vm608, %v5232, 0.0
    %5236 = vadd.xlane.f32.xlu0 %v5235
    %v5237 = vpop.xlane.xlu0 %5236
    %v5238 = vsel %vm608, %v5234, 0.0
    %5239 = vadd.xlane.f32.xlu0 %v5238
    %v5240 = vpop.xlane.xlu0 %5239
    %v5241 = vrcp.pop %v5237
    %v5242 = vmul.f32 %v5232, %v5241
    %v5243 = vrcp.pop %v5240
    %v5244 = vmul.f32 %v5234, %v5243
    %v5246 = vsel %vm608, %v5242, 0
    %5248 = vmatprep.subr.mxu0 0.0
    %5249 = vmatpush1.msra.mxu0 0.0
    %5250 = vmatprep.subr.mxu0 0.0
    %5251 = vmatpush1.msra.mxu0 0.0
    %5252 = vmatprep.subr.mxu0 0.0
    %5253 = vmatpush1.msra.mxu0 0.0
    %5254 = vmatprep.subr.mxu0 0.0
    %5255 = vmatpush1.msra.mxu0 0.0
    %5256 = vmatprep.subr.mxu0 0.0
    %5257 = vmatpush1.msra.mxu0 0.0
    %5258 = vmatprep.subr.mxu0 0.0
    %5259 = vmatpush1.msra.mxu0 0.0
    %5260 = vmatprep.subr.mxu0 0.0
    %5261 = vmatpush1.msra.mxu0 0.0
    %5262 = vmatprep.subr.mxu0 0.0
    %5263 = vmatpush1.msra.mxu0 0.0
    %5264 = vmatprep.subr.mxu0 0.0
    %5265 = vmatpush1.msra.mxu0 0.0
    %5266 = vmatprep.subr.mxu0 0.0
    %5267 = vmatpush1.msra.mxu0 0.0
    %5268 = vmatprep.subr.mxu0 0.0
    %5269 = vmatpush1.msra.mxu0 0.0
    %5270 = vmatprep.subr.mxu0 0.0
    %5271 = vmatpush1.msra.mxu0 0.0
    %5272 = vmatprep.subr.mxu0 0.0
    %5273 = vmatpush1.msra.mxu0 0.0
    %5274 = vmatprep.subr.mxu0 0.0
    %5275 = vmatpush1.msra.mxu0 0.0
    %5276 = vmatprep.subr.mxu0 0.0
    %5277 = vmatpush1.msra.mxu0 0.0
    %5278 = vmatprep.subr.mxu0 0.0
    %5279 = vmatpush1.msra.mxu0 %v5061
    %5280 = vmatprep.subr.mxu0 0.0
    %5281 = vmatpush2.msra.mxu0 0.0
    %5282 = vmatprep.subr.mxu0 0.0
    %5283 = vmatpush2.msra.mxu0 0.0
    %5284 = vmatprep.subr.mxu0 0.0
    %5285 = vmatpush2.msra.mxu0 0.0
    %5286 = vmatprep.subr.mxu0 0.0
    %5287 = vmatpush2.msra.mxu0 0.0
    %5288 = vmatprep.subr.mxu0 0.0
    %5289 = vmatpush2.msra.mxu0 0.0
    %5290 = vmatprep.subr.mxu0 0.0
    %5291 = vmatpush2.msra.mxu0 0.0
    %5292 = vmatprep.subr.mxu0 0.0
    %5293 = vmatpush2.msra.mxu0 0.0
    %5294 = vmatprep.subr.mxu0 0.0
    %5295 = vmatpush2.msra.mxu0 0.0
    %5296 = vmatprep.subr.mxu0 0.0
    %5297 = vmatpush2.msra.mxu0 0.0
    %5298 = vmatprep.subr.mxu0 0.0
    %5299 = vmatpush2.msra.mxu0 0.0
    %5300 = vmatprep.subr.mxu0 0.0
    %5301 = vmatpush2.msra.mxu0 0.0
    %5302 = vmatprep.subr.mxu0 0.0
    %5303 = vmatpush2.msra.mxu0 0.0
    %5304 = vmatprep.subr.mxu0 0.0
    %5305 = vmatpush2.msra.mxu0 0.0
    %5306 = vmatprep.subr.mxu0 0.0
    %5307 = vmatpush2.msra.mxu0 0.0
    %5308 = vmatprep.subr.mxu0 0.0
    %5309 = vmatpush2.msra.mxu0 0.0
    %5310 = vmatprep.subr.mxu0 0.0
    %5311 = vmatpush2.msra.mxu0 0.0
    %5312 = vmatprep.mubr.f32.mxu0 0.0
    %5313 = vmatmul.mubr.f32.gmra.mxu0 %v5246
    %v5314 = vpop.f32.mrf.mxu0
    %v5315 = vadd.f32 0.0, %v5314
    %v5316 = vpop.f32.mrf.mxu0
    %5317 = vdwg.mxu0
    %v5319 = vsel %vm608, %v5244, 0
    %5321 = vmatprep.subr.mxu0 0.0
    %5322 = vmatpush1.msra.mxu0 0.0
    %5323 = vmatprep.subr.mxu0 0.0
    %5324 = vmatpush1.msra.mxu0 0.0
    %5325 = vmatprep.subr.mxu0 0.0
    %5326 = vmatpush1.msra.mxu0 0.0
    %5327 = vmatprep.subr.mxu0 0.0
    %5328 = vmatpush1.msra.mxu0 0.0
    %5329 = vmatprep.subr.mxu0 0.0
    %5330 = vmatpush1.msra.mxu0 0.0
    %5331 = vmatprep.subr.mxu0 0.0
    %5332 = vmatpush1.msra.mxu0 0.0
    %5333 = vmatprep.subr.mxu0 0.0
    %5334 = vmatpush1.msra.mxu0 0.0
    %5335 = vmatprep.subr.mxu0 0.0
    %5336 = vmatpush1.msra.mxu0 0.0
    %5337 = vmatprep.subr.mxu0 0.0
    %5338 = vmatpush1.msra.mxu0 0.0
    %5339 = vmatprep.subr.mxu0 0.0
    %5340 = vmatpush1.msra.mxu0 0.0
    %5341 = vmatprep.subr.mxu0 0.0
    %5342 = vmatpush1.msra.mxu0 0.0
    %5343 = vmatprep.subr.mxu0 0.0
    %5344 = vmatpush1.msra.mxu0 0.0
    %5345 = vmatprep.subr.mxu0 0.0
    %5346 = vmatpush1.msra.mxu0 0.0
    %5347 = vmatprep.subr.mxu0 0.0
    %5348 = vmatpush1.msra.mxu0 0.0
    %5349 = vmatprep.subr.mxu0 0.0
    %5350 = vmatpush1.msra.mxu0 0.0
    %5351 = vmatprep.subr.mxu0 0.0
    %5352 = vmatpush1.msra.mxu0 %v5064
    %5353 = vmatprep.subr.mxu0 0.0
    %5354 = vmatpush2.msra.mxu0 0.0
    %5355 = vmatprep.subr.mxu0 0.0
    %5356 = vmatpush2.msra.mxu0 0.0
    %5357 = vmatprep.subr.mxu0 0.0
    %5358 = vmatpush2.msra.mxu0 0.0
    %5359 = vmatprep.subr.mxu0 0.0
    %5360 = vmatpush2.msra.mxu0 0.0
    %5361 = vmatprep.subr.mxu0 0.0
    %5362 = vmatpush2.msra.mxu0 0.0
    %5363 = vmatprep.subr.mxu0 0.0
    %5364 = vmatpush2.msra.mxu0 0.0
    %5365 = vmatprep.subr.mxu0 0.0
    %5366 = vmatpush2.msra.mxu0 0.0
    %5367 = vmatprep.subr.mxu0 0.0
    %5368 = vmatpush2.msra.mxu0 0.0
    %5369 = vmatprep.subr.mxu0 0.0
    %5370 = vmatpush2.msra.mxu0 0.0
    %5371 = vmatprep.subr.mxu0 0.0
    %5372 = vmatpush2.msra.mxu0 0.0
    %5373 = vmatprep.subr.mxu0 0.0
    %5374 = vmatpush2.msra.mxu0 0.0
    %5375 = vmatprep.subr.mxu0 0.0
    %5376 = vmatpush2.msra.mxu0 0.0
    %5377 = vmatprep.subr.mxu0 0.0
    %5378 = vmatpush2.msra.mxu0 0.0
    %5379 = vmatprep.subr.mxu0 0.0
    %5380 = vmatpush2.msra.mxu0 0.0
    %5381 = vmatprep.subr.mxu0 0.0
    %5382 = vmatpush2.msra.mxu0 0.0
    %5383 = vmatprep.subr.mxu0 0.0
    %5384 = vmatpush2.msra.mxu0 0.0
    %5385 = vmatprep.mubr.f32.mxu0 0.0
    %5386 = vmatmul.mubr.f32.gmra.mxu0 %v5319
    %v5387 = vpop.f32.mrf.mxu0
    %v5388 = vadd.f32 0.0, %v5387
    %v5389 = vpop.f32.mrf.mxu0
    %5390 = vdwg.mxu0
    %v5391 = vpack.c.bf16 %v5388, %v5315
    %s5392 = scalar_lea.vmem [#allocation6], 128
    %v5393 = vld [vmem:[%s5392] sm:$0xf]
    %v5394 = vld [vmem:[%s5392 + $0x4] sm:$0xf]
    %v5395 = vld [vmem:[%s5392 + $0x8] sm:$0xf]
    %v5396 = vld [vmem:[%s5392 + $0xc] sm:$0xf]
    %5397 = vrot.lane.b32.xlu0 %v5018, 96
    %v5398 = vpop.permute.xlu0 %5397
    %5399 = vrot.lane.b32.xlu0 %v5020, 96
    %v5400 = vpop.permute.xlu0 %5399
    %v5401 = vsel %vm441, %v5398, 0
    %v5403 = vsel %vm441, %v5400, 0
    %5405 = vmatprep.subr.mxu0 0.0
    %5406 = vmatpush1.xpose.msra.mxu0 0.0
    %5407 = vmatprep.subr.mxu0 0.0
    %5408 = vmatpush1.xpose.msra.mxu0 0.0
    %5409 = vmatprep.subr.mxu0 0.0
    %5410 = vmatpush1.xpose.msra.mxu0 0.0
    %5411 = vmatprep.subr.mxu0 0.0
    %5412 = vmatpush1.xpose.msra.mxu0 0.0
    %5413 = vmatprep.subr.mxu0 0.0
    %5414 = vmatpush1.xpose.msra.mxu0 0.0
    %5415 = vmatprep.subr.mxu0 0.0
    %5416 = vmatpush1.xpose.msra.mxu0 0.0
    %5417 = vmatprep.subr.mxu0 0.0
    %5418 = vmatpush1.xpose.msra.mxu0 0.0
    %5419 = vmatprep.subr.mxu0 0.0
    %5420 = vmatpush1.xpose.msra.mxu0 0.0
    %5421 = vmatprep.subr.mxu0 0.0
    %5422 = vmatpush1.xpose.msra.mxu0 0.0
    %5423 = vmatprep.subr.mxu0 0.0
    %5424 = vmatpush1.xpose.msra.mxu0 0.0
    %5425 = vmatprep.subr.mxu0 0.0
    %5426 = vmatpush1.xpose.msra.mxu0 0.0
    %5427 = vmatprep.subr.mxu0 0.0
    %5428 = vmatpush1.xpose.msra.mxu0 0.0
    %5429 = vmatprep.subr.mxu0 0.0
    %5430 = vmatpush1.xpose.msra.mxu0 0.0
    %5431 = vmatprep.subr.mxu0 0.0
    %5432 = vmatpush1.xpose.msra.mxu0 0.0
    %5433 = vmatprep.subr.mxu0 0.0
    %5434 = vmatpush1.xpose.msra.mxu0 0.0
    %5435 = vmatprep.subr.mxu0 0.0
    %5436 = vmatpush1.xpose.msra.mxu0 %v5403
    %5437 = vmatprep.subr.mxu0 0.0
    %5438 = vmatpush2.xpose.msra.mxu0 0.0
    %5439 = vmatprep.subr.mxu0 0.0
    %5440 = vmatpush2.xpose.msra.mxu0 0.0
    %5441 = vmatprep.subr.mxu0 0.0
    %5442 = vmatpush2.xpose.msra.mxu0 0.0
    %5443 = vmatprep.subr.mxu0 0.0
    %5444 = vmatpush2.xpose.msra.mxu0 0.0
    %5445 = vmatprep.subr.mxu0 0.0
    %5446 = vmatpush2.xpose.msra.mxu0 0.0
    %5447 = vmatprep.subr.mxu0 0.0
    %5448 = vmatpush2.xpose.msra.mxu0 0.0
    %5449 = vmatprep.subr.mxu0 0.0
    %5450 = vmatpush2.xpose.msra.mxu0 0.0
    %5451 = vmatprep.subr.mxu0 0.0
    %5452 = vmatpush2.xpose.msra.mxu0 0.0
    %5453 = vmatprep.subr.mxu0 0.0
    %5454 = vmatpush2.xpose.msra.mxu0 0.0
    %5455 = vmatprep.subr.mxu0 0.0
    %5456 = vmatpush2.xpose.msra.mxu0 0.0
    %5457 = vmatprep.subr.mxu0 0.0
    %5458 = vmatpush2.xpose.msra.mxu0 0.0
    %5459 = vmatprep.subr.mxu0 0.0
    %5460 = vmatpush2.xpose.msra.mxu0 0.0
    %5461 = vmatprep.subr.mxu0 0.0
    %5462 = vmatpush2.xpose.msra.mxu0 0.0
    %5463 = vmatprep.subr.mxu0 0.0
    %5464 = vmatpush2.xpose.msra.mxu0 0.0
    %5465 = vmatprep.subr.mxu0 0.0
    %5466 = vmatpush2.xpose.msra.mxu0 0.0
    %5467 = vmatprep.subr.mxu0 0.0
    %5468 = vmatpush2.xpose.msra.mxu0 0.0
    %5469 = vmatprep.mubr.f32.mxu0 0.0
    %5470 = vmatmul.mubr.f32.gmra.mxu0 %v5401
    %v5471 = vpop.f32.mrf.mxu0
    %v5472 = vadd.f32 0.0, %v5471
    %v5473 = vpop.f32.mrf.mxu0
    %5474 = vdwg.mxu0
    %5475 = vrot.lane.b32.xlu0 %v5022, 96
    %v5476 = vpop.permute.xlu0 %5475
    %5477 = vrot.lane.b32.xlu0 %v5024, 96
    %v5478 = vpop.permute.xlu0 %5477
    %v5479 = vsel %vm441, %v5476, 0
    %v5481 = vsel %vm441, %v5478, 0
    %5483 = vmatprep.subr.mxu0 0.0
    %5484 = vmatpush1.xpose.msra.mxu0 0.0
    %5485 = vmatprep.subr.mxu0 0.0
    %5486 = vmatpush1.xpose.msra.mxu0 0.0
    %5487 = vmatprep.subr.mxu0 0.0
    %5488 = vmatpush1.xpose.msra.mxu0 0.0
    %5489 = vmatprep.subr.mxu0 0.0
    %5490 = vmatpush1.xpose.msra.mxu0 0.0
    %5491 = vmatprep.subr.mxu0 0.0
    %5492 = vmatpush1.xpose.msra.mxu0 0.0
    %5493 = vmatprep.subr.mxu0 0.0
    %5494 = vmatpush1.xpose.msra.mxu0 0.0
    %5495 = vmatprep.subr.mxu0 0.0
    %5496 = vmatpush1.xpose.msra.mxu0 0.0
    %5497 = vmatprep.subr.mxu0 0.0
    %5498 = vmatpush1.xpose.msra.mxu0 0.0
    %5499 = vmatprep.subr.mxu0 0.0
    %5500 = vmatpush1.xpose.msra.mxu0 0.0
    %5501 = vmatprep.subr.mxu0 0.0
    %5502 = vmatpush1.xpose.msra.mxu0 0.0
    %5503 = vmatprep.subr.mxu0 0.0
    %5504 = vmatpush1.xpose.msra.mxu0 0.0
    %5505 = vmatprep.subr.mxu0 0.0
    %5506 = vmatpush1.xpose.msra.mxu0 0.0
    %5507 = vmatprep.subr.mxu0 0.0
    %5508 = vmatpush1.xpose.msra.mxu0 0.0
    %5509 = vmatprep.subr.mxu0 0.0
    %5510 = vmatpush1.xpose.msra.mxu0 0.0
    %5511 = vmatprep.subr.mxu0 0.0
    %5512 = vmatpush1.xpose.msra.mxu0 0.0
    %5513 = vmatprep.subr.mxu0 0.0
    %5514 = vmatpush1.xpose.msra.mxu0 %v5481
    %5515 = vmatprep.subr.mxu0 0.0
    %5516 = vmatpush2.xpose.msra.mxu0 0.0
    %5517 = vmatprep.subr.mxu0 0.0
    %5518 = vmatpush2.xpose.msra.mxu0 0.0
    %5519 = vmatprep.subr.mxu0 0.0
    %5520 = vmatpush2.xpose.msra.mxu0 0.0
    %5521 = vmatprep.subr.mxu0 0.0
    %5522 = vmatpush2.xpose.msra.mxu0 0.0
    %5523 = vmatprep.subr.mxu0 0.0
    %5524 = vmatpush2.xpose.msra.mxu0 0.0
    %5525 = vmatprep.subr.mxu0 0.0
    %5526 = vmatpush2.xpose.msra.mxu0 0.0
    %5527 = vmatprep.subr.mxu0 0.0
    %5528 = vmatpush2.xpose.msra.mxu0 0.0
    %5529 = vmatprep.subr.mxu0 0.0
    %5530 = vmatpush2.xpose.msra.mxu0 0.0
    %5531 = vmatprep.subr.mxu0 0.0
    %5532 = vmatpush2.xpose.msra.mxu0 0.0
    %5533 = vmatprep.subr.mxu0 0.0
    %5534 = vmatpush2.xpose.msra.mxu0 0.0
    %5535 = vmatprep.subr.mxu0 0.0
    %5536 = vmatpush2.xpose.msra.mxu0 0.0
    %5537 = vmatprep.subr.mxu0 0.0
    %5538 = vmatpush2.xpose.msra.mxu0 0.0
    %5539 = vmatprep.subr.mxu0 0.0
    %5540 = vmatpush2.xpose.msra.mxu0 0.0
    %5541 = vmatprep.subr.mxu0 0.0
    %5542 = vmatpush2.xpose.msra.mxu0 0.0
    %5543 = vmatprep.subr.mxu0 0.0
    %5544 = vmatpush2.xpose.msra.mxu0 0.0
    %5545 = vmatprep.subr.mxu0 0.0
    %5546 = vmatpush2.xpose.msra.mxu0 0.0
    %5547 = vmatprep.mubr.f32.mxu0 0.0
    %5548 = vmatmul.mubr.f32.gmra.mxu0 %v5479
    %v5549 = vpop.f32.mrf.mxu0
    %v5550 = vadd.f32 0.0, %v5549
    %v5551 = vpop.f32.mrf.mxu0
    %5552 = vdwg.mxu0
    %v5553 = vmul.f32 %v5472, 0.17677669
    %v5554 = vmul.f32 %v5550, 0.17677669
    %v5555 = vadd.f32 %v5553, %v599
    %v5556 = vadd.f32 %v5554, %v603
    %v5557 = vsel %vm608, %v5555, -inf
    %5558 = vmax.xlane.f32.xlu0 %v5557
    %v5559 = vpop.xlane.xlu0 %5558
    %v5560 = vsel %vm608, %v5556, -inf
    %5561 = vmax.xlane.f32.xlu0 %v5560
    %v5562 = vpop.xlane.xlu0 %5561
    %v5563 = vsub.f32 %v5555, %v5559
    %v5564 = vsub.f32 %v5556, %v5562
    %v5565 = vmul.f32 %v5563, 1.442695
    %v5566 = vpow.pop %v5565
    %v5567 = vmul.f32 %v5564, 1.442695
    %v5568 = vpow.pop %v5567
    %v5569 = vsel %vm608, %v5566, 0.0
    %5570 = vadd.xlane.f32.xlu0 %v5569
    %v5571 = vpop.xlane.xlu0 %5570
    %v5572 = vsel %vm608, %v5568, 0.0
    %5573 = vadd.xlane.f32.xlu0 %v5572
    %v5574 = vpop.xlane.xlu0 %5573
    %v5575 = vrcp.pop %v5571
    %v5576 = vmul.f32 %v5566, %v5575
    %v5577 = vrcp.pop %v5574
    %v5578 = vmul.f32 %v5568, %v5577
    %5580 = vrot.lane.b32.xlu0 %v5061, 96
    %v5581 = vpop.permute.xlu0 %5580
    %v5584 = vsel %vm608, %v5576, 0
    %5586 = vmatprep.subr.mxu0 0.0
    %5587 = vmatpush1.msra.mxu0 0.0
    %5588 = vmatprep.subr.mxu0 0.0
    %5589 = vmatpush1.msra.mxu0 0.0
    %5590 = vmatprep.subr.mxu0 0.0
    %5591 = vmatpush1.msra.mxu0 0.0
    %5592 = vmatprep.subr.mxu0 0.0
    %5593 = vmatpush1.msra.mxu0 0.0
    %5594 = vmatprep.subr.mxu0 0.0
    %5595 = vmatpush1.msra.mxu0 0.0
    %5596 = vmatprep.subr.mxu0 0.0
    %5597 = vmatpush1.msra.mxu0 0.0
    %5598 = vmatprep.subr.mxu0 0.0
    %5599 = vmatpush1.msra.mxu0 0.0
    %5600 = vmatprep.subr.mxu0 0.0
    %5601 = vmatpush1.msra.mxu0 0.0
    %5602 = vmatprep.subr.mxu0 0.0
    %5603 = vmatpush1.msra.mxu0 0.0
    %5604 = vmatprep.subr.mxu0 0.0
    %5605 = vmatpush1.msra.mxu0 0.0
    %5606 = vmatprep.subr.mxu0 0.0
    %5607 = vmatpush1.msra.mxu0 0.0
    %5608 = vmatprep.subr.mxu0 0.0
    %5609 = vmatpush1.msra.mxu0 0.0
    %5610 = vmatprep.subr.mxu0 0.0
    %5611 = vmatpush1.msra.mxu0 0.0
    %5612 = vmatprep.subr.mxu0 0.0
    %5613 = vmatpush1.msra.mxu0 0.0
    %5614 = vmatprep.subr.mxu0 0.0
    %5615 = vmatpush1.msra.mxu0 0.0
    %5616 = vmatprep.subr.mxu0 0.0
    %5617 = vmatpush1.msra.mxu0 %v5581
    %5618 = vmatprep.subr.mxu0 0.0
    %5619 = vmatpush2.msra.mxu0 0.0
    %5620 = vmatprep.subr.mxu0 0.0
    %5621 = vmatpush2.msra.mxu0 0.0
    %5622 = vmatprep.subr.mxu0 0.0
    %5623 = vmatpush2.msra.mxu0 0.0
    %5624 = vmatprep.subr.mxu0 0.0
    %5625 = vmatpush2.msra.mxu0 0.0
    %5626 = vmatprep.subr.mxu0 0.0
    %5627 = vmatpush2.msra.mxu0 0.0
    %5628 = vmatprep.subr.mxu0 0.0
    %5629 = vmatpush2.msra.mxu0 0.0
    %5630 = vmatprep.subr.mxu0 0.0
    %5631 = vmatpush2.msra.mxu0 0.0
    %5632 = vmatprep.subr.mxu0 0.0
    %5633 = vmatpush2.msra.mxu0 0.0
    %5634 = vmatprep.subr.mxu0 0.0
    %5635 = vmatpush2.msra.mxu0 0.0
    %5636 = vmatprep.subr.mxu0 0.0
    %5637 = vmatpush2.msra.mxu0 0.0
    %5638 = vmatprep.subr.mxu0 0.0
    %5639 = vmatpush2.msra.mxu0 0.0
    %5640 = vmatprep.subr.mxu0 0.0
    %5641 = vmatpush2.msra.mxu0 0.0
    %5642 = vmatprep.subr.mxu0 0.0
    %5643 = vmatpush2.msra.mxu0 0.0
    %5644 = vmatprep.subr.mxu0 0.0
    %5645 = vmatpush2.msra.mxu0 0.0
    %5646 = vmatprep.subr.mxu0 0.0
    %5647 = vmatpush2.msra.mxu0 0.0
    %5648 = vmatprep.subr.mxu0 0.0
    %5649 = vmatpush2.msra.mxu0 0.0
    %5650 = vmatprep.mubr.f32.mxu0 0.0
    %5651 = vmatmul.mubr.f32.gmra.mxu0 %v5584
    %v5652 = vpop.f32.mrf.mxu0
    %v5653 = vadd.f32 0.0, %v5652
    %v5654 = vpop.f32.mrf.mxu0
    %5655 = vdwg.mxu0
    %5657 = vrot.lane.b32.xlu0 %v5064, 96
    %v5658 = vpop.permute.xlu0 %5657
    %v5661 = vsel %vm608, %v5578, 0
    %5663 = vmatprep.subr.mxu0 0.0
    %5664 = vmatpush1.msra.mxu0 0.0
    %5665 = vmatprep.subr.mxu0 0.0
    %5666 = vmatpush1.msra.mxu0 0.0
    %5667 = vmatprep.subr.mxu0 0.0
    %5668 = vmatpush1.msra.mxu0 0.0
    %5669 = vmatprep.subr.mxu0 0.0
    %5670 = vmatpush1.msra.mxu0 0.0
    %5671 = vmatprep.subr.mxu0 0.0
    %5672 = vmatpush1.msra.mxu0 0.0
    %5673 = vmatprep.subr.mxu0 0.0
    %5674 = vmatpush1.msra.mxu0 0.0
    %5675 = vmatprep.subr.mxu0 0.0
    %5676 = vmatpush1.msra.mxu0 0.0
    %5677 = vmatprep.subr.mxu0 0.0
    %5678 = vmatpush1.msra.mxu0 0.0
    %5679 = vmatprep.subr.mxu0 0.0
    %5680 = vmatpush1.msra.mxu0 0.0
    %5681 = vmatprep.subr.mxu0 0.0
    %5682 = vmatpush1.msra.mxu0 0.0
    %5683 = vmatprep.subr.mxu0 0.0
    %5684 = vmatpush1.msra.mxu0 0.0
    %5685 = vmatprep.subr.mxu0 0.0
    %5686 = vmatpush1.msra.mxu0 0.0
    %5687 = vmatprep.subr.mxu0 0.0
    %5688 = vmatpush1.msra.mxu0 0.0
    %5689 = vmatprep.subr.mxu0 0.0
    %5690 = vmatpush1.msra.mxu0 0.0
    %5691 = vmatprep.subr.mxu0 0.0
    %5692 = vmatpush1.msra.mxu0 0.0
    %5693 = vmatprep.subr.mxu0 0.0
    %5694 = vmatpush1.msra.mxu0 %v5658
    %5695 = vmatprep.subr.mxu0 0.0
    %5696 = vmatpush2.msra.mxu0 0.0
    %5697 = vmatprep.subr.mxu0 0.0
    %5698 = vmatpush2.msra.mxu0 0.0
    %5699 = vmatprep.subr.mxu0 0.0
    %5700 = vmatpush2.msra.mxu0 0.0
    %5701 = vmatprep.subr.mxu0 0.0
    %5702 = vmatpush2.msra.mxu0 0.0
    %5703 = vmatprep.subr.mxu0 0.0
    %5704 = vmatpush2.msra.mxu0 0.0
    %5705 = vmatprep.subr.mxu0 0.0
    %5706 = vmatpush2.msra.mxu0 0.0
    %5707 = vmatprep.subr.mxu0 0.0
    %5708 = vmatpush2.msra.mxu0 0.0
    %5709 = vmatprep.subr.mxu0 0.0
    %5710 = vmatpush2.msra.mxu0 0.0
    %5711 = vmatprep.subr.mxu0 0.0
    %5712 = vmatpush2.msra.mxu0 0.0
    %5713 = vmatprep.subr.mxu0 0.0
    %5714 = vmatpush2.msra.mxu0 0.0
    %5715 = vmatprep.subr.mxu0 0.0
    %5716 = vmatpush2.msra.mxu0 0.0
    %5717 = vmatprep.subr.mxu0 0.0
    %5718 = vmatpush2.msra.mxu0 0.0
    %5719 = vmatprep.subr.mxu0 0.0
    %5720 = vmatpush2.msra.mxu0 0.0
    %5721 = vmatprep.subr.mxu0 0.0
    %5722 = vmatpush2.msra.mxu0 0.0
    %5723 = vmatprep.subr.mxu0 0.0
    %5724 = vmatpush2.msra.mxu0 0.0
    %5725 = vmatprep.subr.mxu0 0.0
    %5726 = vmatpush2.msra.mxu0 0.0
    %5727 = vmatprep.mubr.f32.mxu0 0.0
    %5728 = vmatmul.mubr.f32.gmra.mxu0 %v5661
    %v5729 = vpop.f32.mrf.mxu0
    %v5730 = vadd.f32 0.0, %v5729
    %v5731 = vpop.f32.mrf.mxu0
    %5732 = vdwg.mxu0
    %v5733 = vpack.c.bf16 %v5730, %v5653
    %s5734 = scalar_lea.vmem [#allocation6], 144
    %v5735 = vld [vmem:[%s5734] sm:$0xf]
    %v5736 = vld [vmem:[%s5734 + $0x4] sm:$0xf]
    %v5737 = vld [vmem:[%s5734 + $0x8] sm:$0xf]
    %v5738 = vld [vmem:[%s5734 + $0xc] sm:$0xf]
    %v5743 = vunpack.c.l.b16 %v5735
    %v5744 = vunpack.c.l.b16 %v5736
    %v5745 = vunpack.c.l.b16 %v5737
    %v5746 = vunpack.c.l.b16 %v5738
    %v5747 = vpack.c.b16 %v5744, %v5743
    %v5748 = vpack.c.b16 %v5746, %v5745
    %v5752 = vsel %vm441, %v5733, 0
    %5754 = vmatprep.subr.bf16.mxu0 0
    %5755 = vmatpush1.bf16.msra.mxu0 0
    %5756 = vmatprep.subr.bf16.mxu0 0
    %5757 = vmatpush1.bf16.msra.mxu0 0
    %5758 = vmatprep.subr.bf16.mxu0 0
    %5759 = vmatpush1.bf16.msra.mxu0 0
    %5760 = vmatprep.subr.bf16.mxu0 0
    %5761 = vmatpush1.bf16.msra.mxu0 0
    %5762 = vmatprep.subr.bf16.mxu0 0
    %5763 = vmatpush1.bf16.msra.mxu0 0
    %5764 = vmatprep.subr.bf16.mxu0 0
    %5765 = vmatpush1.bf16.msra.mxu0 0
    %5766 = vmatprep.subr.bf16.mxu0 0
    %5767 = vmatpush1.bf16.msra.mxu0 %v5748
    %5768 = vmatprep.subr.bf16.mxu0 0
    %5769 = vmatpush1.bf16.msra.mxu0 %v5747
    %5770 = vmatprep.subr.bf16.mxu0 0
    %5771 = vmatpush2.bf16.msra.mxu0 0
    %5772 = vmatprep.subr.bf16.mxu0 0
    %5773 = vmatpush2.bf16.msra.mxu0 0
    %5774 = vmatprep.subr.bf16.mxu0 0
    %5775 = vmatpush2.bf16.msra.mxu0 0
    %5776 = vmatprep.subr.bf16.mxu0 0
    %5777 = vmatpush2.bf16.msra.mxu0 0
    %5778 = vmatprep.subr.bf16.mxu0 0
    %5779 = vmatpush2.bf16.msra.mxu0 0
    %5780 = vmatprep.subr.bf16.mxu0 0
    %5781 = vmatpush2.bf16.msra.mxu0 0
    %5782 = vmatprep.subr.bf16.mxu0 0
    %5783 = vmatpush2.bf16.msra.mxu0 0
    %5784 = vmatprep.subr.bf16.mxu0 0
    %5785 = vmatpush2.bf16.msra.mxu0 0
    %5786 = vmatprep.mubr.bf16.mxu0 0
    %5787 = vmatmul.mubr.bf16.gmra.mxu0 %v5752
    %v5788 = vpop.f32.mrf.mxu0
    %v5789 = vadd.f32 0.0, %v5788
    %v5790 = vpop.f32.mrf.mxu0
    %v5791 = vpop.f32.mrf.mxu0
    %v5792 = vadd.f32 0.0, %v5791
    %v5793 = vpop.f32.mrf.mxu0
    %5794 = vdwg.mxu0
    %v5799 = vunpack.c.l.b16 %v5393
    %v5800 = vunpack.c.l.b16 %v5394
    %v5801 = vunpack.c.l.b16 %v5395
    %v5802 = vunpack.c.l.b16 %v5396
    %v5803 = vpack.c.b16 %v5800, %v5799
    %v5804 = vpack.c.b16 %v5802, %v5801
    %v5808 = vsel %vm441, %v5391, 0
    %5810 = vmatprep.subr.bf16.mxu0 0
    %5811 = vmatpush1.bf16.msra.mxu0 0
    %5812 = vmatprep.subr.bf16.mxu0 0
    %5813 = vmatpush1.bf16.msra.mxu0 0
    %5814 = vmatprep.subr.bf16.mxu0 0
    %5815 = vmatpush1.bf16.msra.mxu0 0
    %5816 = vmatprep.subr.bf16.mxu0 0
    %5817 = vmatpush1.bf16.msra.mxu0 0
    %5818 = vmatprep.subr.bf16.mxu0 0
    %5819 = vmatpush1.bf16.msra.mxu0 0
    %5820 = vmatprep.subr.bf16.mxu0 0
    %5821 = vmatpush1.bf16.msra.mxu0 0
    %5822 = vmatprep.subr.bf16.mxu0 0
    %5823 = vmatpush1.bf16.msra.mxu0 %v5804
    %5824 = vmatprep.subr.bf16.mxu0 0
    %5825 = vmatpush1.bf16.msra.mxu0 %v5803
    %5826 = vmatprep.subr.bf16.mxu0 0
    %5827 = vmatpush2.bf16.msra.mxu0 0
    %5828 = vmatprep.subr.bf16.mxu0 0
    %5829 = vmatpush2.bf16.msra.mxu0 0
    %5830 = vmatprep.subr.bf16.mxu0 0
    %5831 = vmatpush2.bf16.msra.mxu0 0
    %5832 = vmatprep.subr.bf16.mxu0 0
    %5833 = vmatpush2.bf16.msra.mxu0 0
    %5834 = vmatprep.subr.bf16.mxu0 0
    %5835 = vmatpush2.bf16.msra.mxu0 0
    %5836 = vmatprep.subr.bf16.mxu0 0
    %5837 = vmatpush2.bf16.msra.mxu0 0
    %5838 = vmatprep.subr.bf16.mxu0 0
    %5839 = vmatpush2.bf16.msra.mxu0 0
    %5840 = vmatprep.subr.bf16.mxu0 0
    %5841 = vmatpush2.bf16.msra.mxu0 0
    %5842 = vmatprep.mubr.bf16.mxu0 0
    %5843 = vmatmul.mubr.bf16.gmra.mxu0 %v5808
    %v5844 = vpop.f32.mrf.mxu0
    %v5845 = vadd.f32 %v5789, %v5844
    %v5846 = vpop.f32.mrf.mxu0
    %v5847 = vpop.f32.mrf.mxu0
    %v5848 = vadd.f32 %v5792, %v5847
    %v5849 = vpop.f32.mrf.mxu0
    %5850 = vdwg.mxu0
    %5851 = vrot.lane.b32.xlu0 %v5018, 64
    %v5852 = vpop.permute.xlu0 %5851
    %5853 = vrot.lane.b32.xlu0 %v5020, 64
    %v5854 = vpop.permute.xlu0 %5853
    %v5855 = vsel %vm441, %v5852, 0
    %v5857 = vsel %vm441, %v5854, 0
    %5859 = vmatprep.subr.mxu0 0.0
    %5860 = vmatpush1.xpose.msra.mxu0 0.0
    %5861 = vmatprep.subr.mxu0 0.0
    %5862 = vmatpush1.xpose.msra.mxu0 0.0
    %5863 = vmatprep.subr.mxu0 0.0
    %5864 = vmatpush1.xpose.msra.mxu0 0.0
    %5865 = vmatprep.subr.mxu0 0.0
    %5866 = vmatpush1.xpose.msra.mxu0 0.0
    %5867 = vmatprep.subr.mxu0 0.0
    %5868 = vmatpush1.xpose.msra.mxu0 0.0
    %5869 = vmatprep.subr.mxu0 0.0
    %5870 = vmatpush1.xpose.msra.mxu0 0.0
    %5871 = vmatprep.subr.mxu0 0.0
    %5872 = vmatpush1.xpose.msra.mxu0 0.0
    %5873 = vmatprep.subr.mxu0 0.0
    %5874 = vmatpush1.xpose.msra.mxu0 0.0
    %5875 = vmatprep.subr.mxu0 0.0
    %5876 = vmatpush1.xpose.msra.mxu0 0.0
    %5877 = vmatprep.subr.mxu0 0.0
    %5878 = vmatpush1.xpose.msra.mxu0 0.0
    %5879 = vmatprep.subr.mxu0 0.0
    %5880 = vmatpush1.xpose.msra.mxu0 0.0
    %5881 = vmatprep.subr.mxu0 0.0
    %5882 = vmatpush1.xpose.msra.mxu0 0.0
    %5883 = vmatprep.subr.mxu0 0.0
    %5884 = vmatpush1.xpose.msra.mxu0 0.0
    %5885 = vmatprep.subr.mxu0 0.0
    %5886 = vmatpush1.xpose.msra.mxu0 0.0
    %5887 = vmatprep.subr.mxu0 0.0
    %5888 = vmatpush1.xpose.msra.mxu0 0.0
    %5889 = vmatprep.subr.mxu0 0.0
    %5890 = vmatpush1.xpose.msra.mxu0 %v5857
    %5891 = vmatprep.subr.mxu0 0.0
    %5892 = vmatpush2.xpose.msra.mxu0 0.0
    %5893 = vmatprep.subr.mxu0 0.0
    %5894 = vmatpush2.xpose.msra.mxu0 0.0
    %5895 = vmatprep.subr.mxu0 0.0
    %5896 = vmatpush2.xpose.msra.mxu0 0.0
    %5897 = vmatprep.subr.mxu0 0.0
    %5898 = vmatpush2.xpose.msra.mxu0 0.0
    %5899 = vmatprep.subr.mxu0 0.0
    %5900 = vmatpush2.xpose.msra.mxu0 0.0
    %5901 = vmatprep.subr.mxu0 0.0
    %5902 = vmatpush2.xpose.msra.mxu0 0.0
    %5903 = vmatprep.subr.mxu0 0.0
    %5904 = vmatpush2.xpose.msra.mxu0 0.0
    %5905 = vmatprep.subr.mxu0 0.0
    %5906 = vmatpush2.xpose.msra.mxu0 0.0
    %5907 = vmatprep.subr.mxu0 0.0
    %5908 = vmatpush2.xpose.msra.mxu0 0.0
    %5909 = vmatprep.subr.mxu0 0.0
    %5910 = vmatpush2.xpose.msra.mxu0 0.0
    %5911 = vmatprep.subr.mxu0 0.0
    %5912 = vmatpush2.xpose.msra.mxu0 0.0
    %5913 = vmatprep.subr.mxu0 0.0
    %5914 = vmatpush2.xpose.msra.mxu0 0.0
    %5915 = vmatprep.subr.mxu0 0.0
    %5916 = vmatpush2.xpose.msra.mxu0 0.0
    %5917 = vmatprep.subr.mxu0 0.0
    %5918 = vmatpush2.xpose.msra.mxu0 0.0
    %5919 = vmatprep.subr.mxu0 0.0
    %5920 = vmatpush2.xpose.msra.mxu0 0.0
    %5921 = vmatprep.subr.mxu0 0.0
    %5922 = vmatpush2.xpose.msra.mxu0 0.0
    %5923 = vmatprep.mubr.f32.mxu0 0.0
    %5924 = vmatmul.mubr.f32.gmra.mxu0 %v5855
    %v5925 = vpop.f32.mrf.mxu0
    %v5926 = vadd.f32 0.0, %v5925
    %v5927 = vpop.f32.mrf.mxu0
    %5928 = vdwg.mxu0
    %5929 = vrot.lane.b32.xlu0 %v5022, 64
    %v5930 = vpop.permute.xlu0 %5929
    %5931 = vrot.lane.b32.xlu0 %v5024, 64
    %v5932 = vpop.permute.xlu0 %5931
    %v5933 = vsel %vm441, %v5930, 0
    %v5935 = vsel %vm441, %v5932, 0
    %5937 = vmatprep.subr.mxu0 0.0
    %5938 = vmatpush1.xpose.msra.mxu0 0.0
    %5939 = vmatprep.subr.mxu0 0.0
    %5940 = vmatpush1.xpose.msra.mxu0 0.0
    %5941 = vmatprep.subr.mxu0 0.0
    %5942 = vmatpush1.xpose.msra.mxu0 0.0
    %5943 = vmatprep.subr.mxu0 0.0
    %5944 = vmatpush1.xpose.msra.mxu0 0.0
    %5945 = vmatprep.subr.mxu0 0.0
    %5946 = vmatpush1.xpose.msra.mxu0 0.0
    %5947 = vmatprep.subr.mxu0 0.0
    %5948 = vmatpush1.xpose.msra.mxu0 0.0
    %5949 = vmatprep.subr.mxu0 0.0
    %5950 = vmatpush1.xpose.msra.mxu0 0.0
    %5951 = vmatprep.subr.mxu0 0.0
    %5952 = vmatpush1.xpose.msra.mxu0 0.0
    %5953 = vmatprep.subr.mxu0 0.0
    %5954 = vmatpush1.xpose.msra.mxu0 0.0
    %5955 = vmatprep.subr.mxu0 0.0
    %5956 = vmatpush1.xpose.msra.mxu0 0.0
    %5957 = vmatprep.subr.mxu0 0.0
    %5958 = vmatpush1.xpose.msra.mxu0 0.0
    %5959 = vmatprep.subr.mxu0 0.0
    %5960 = vmatpush1.xpose.msra.mxu0 0.0
    %5961 = vmatprep.subr.mxu0 0.0
    %5962 = vmatpush1.xpose.msra.mxu0 0.0
    %5963 = vmatprep.subr.mxu0 0.0
    %5964 = vmatpush1.xpose.msra.mxu0 0.0
    %5965 = vmatprep.subr.mxu0 0.0
    %5966 = vmatpush1.xpose.msra.mxu0 0.0
    %5967 = vmatprep.subr.mxu0 0.0
    %5968 = vmatpush1.xpose.msra.mxu0 %v5935
    %5969 = vmatprep.subr.mxu0 0.0
    %5970 = vmatpush2.xpose.msra.mxu0 0.0
    %5971 = vmatprep.subr.mxu0 0.0
    %5972 = vmatpush2.xpose.msra.mxu0 0.0
    %5973 = vmatprep.subr.mxu0 0.0
    %5974 = vmatpush2.xpose.msra.mxu0 0.0
    %5975 = vmatprep.subr.mxu0 0.0
    %5976 = vmatpush2.xpose.msra.mxu0 0.0
    %5977 = vmatprep.subr.mxu0 0.0
    %5978 = vmatpush2.xpose.msra.mxu0 0.0
    %5979 = vmatprep.subr.mxu0 0.0
    %5980 = vmatpush2.xpose.msra.mxu0 0.0
    %5981 = vmatprep.subr.mxu0 0.0
    %5982 = vmatpush2.xpose.msra.mxu0 0.0
    %5983 = vmatprep.subr.mxu0 0.0
    %5984 = vmatpush2.xpose.msra.mxu0 0.0
    %5985 = vmatprep.subr.mxu0 0.0
    %5986 = vmatpush2.xpose.msra.mxu0 0.0
    %5987 = vmatprep.subr.mxu0 0.0
    %5988 = vmatpush2.xpose.msra.mxu0 0.0
    %5989 = vmatprep.subr.mxu0 0.0
    %5990 = vmatpush2.xpose.msra.mxu0 0.0
    %5991 = vmatprep.subr.mxu0 0.0
    %5992 = vmatpush2.xpose.msra.mxu0 0.0
    %5993 = vmatprep.subr.mxu0 0.0
    %5994 = vmatpush2.xpose.msra.mxu0 0.0
    %5995 = vmatprep.subr.mxu0 0.0
    %5996 = vmatpush2.xpose.msra.mxu0 0.0
    %5997 = vmatprep.subr.mxu0 0.0
    %5998 = vmatpush2.xpose.msra.mxu0 0.0
    %5999 = vmatprep.subr.mxu0 0.0
    %6000 = vmatpush2.xpose.msra.mxu0 0.0
    %6001 = vmatprep.mubr.f32.mxu0 0.0
    %6002 = vmatmul.mubr.f32.gmra.mxu0 %v5933
    %v6003 = vpop.f32.mrf.mxu0
    %v6004 = vadd.f32 0.0, %v6003
    %v6005 = vpop.f32.mrf.mxu0
    %6006 = vdwg.mxu0
    %v6007 = vmul.f32 %v5926, 0.17677669
    %v6008 = vmul.f32 %v6004, 0.17677669
    %v6009 = vadd.f32 %v6007, %v599
    %v6010 = vadd.f32 %v6008, %v603
    %v6011 = vsel %vm608, %v6009, -inf
    %6012 = vmax.xlane.f32.xlu0 %v6011
    %v6013 = vpop.xlane.xlu0 %6012
    %v6014 = vsel %vm608, %v6010, -inf
    %6015 = vmax.xlane.f32.xlu0 %v6014
    %v6016 = vpop.xlane.xlu0 %6015
    %v6017 = vsub.f32 %v6009, %v6013
    %v6018 = vsub.f32 %v6010, %v6016
    %v6019 = vmul.f32 %v6017, 1.442695
    %v6020 = vpow.pop %v6019
    %v6021 = vmul.f32 %v6018, 1.442695
    %v6022 = vpow.pop %v6021
    %v6023 = vsel %vm608, %v6020, 0.0
    %6024 = vadd.xlane.f32.xlu0 %v6023
    %v6025 = vpop.xlane.xlu0 %6024
    %v6026 = vsel %vm608, %v6022, 0.0
    %6027 = vadd.xlane.f32.xlu0 %v6026
    %v6028 = vpop.xlane.xlu0 %6027
    %v6029 = vrcp.pop %v6025
    %v6030 = vmul.f32 %v6020, %v6029
    %v6031 = vrcp.pop %v6028
    %v6032 = vmul.f32 %v6022, %v6031
    %6033 = vrot.lane.b32.xlu0 %v5061, 64
    %v6034 = vpop.permute.xlu0 %6033
    %v6037 = vsel %vm608, %v6030, 0
    %6039 = vmatprep.subr.mxu0 0.0
    %6040 = vmatpush1.msra.mxu0 0.0
    %6041 = vmatprep.subr.mxu0 0.0
    %6042 = vmatpush1.msra.mxu0 0.0
    %6043 = vmatprep.subr.mxu0 0.0
    %6044 = vmatpush1.msra.mxu0 0.0
    %6045 = vmatprep.subr.mxu0 0.0
    %6046 = vmatpush1.msra.mxu0 0.0
    %6047 = vmatprep.subr.mxu0 0.0
    %6048 = vmatpush1.msra.mxu0 0.0
    %6049 = vmatprep.subr.mxu0 0.0
    %6050 = vmatpush1.msra.mxu0 0.0
    %6051 = vmatprep.subr.mxu0 0.0
    %6052 = vmatpush1.msra.mxu0 0.0
    %6053 = vmatprep.subr.mxu0 0.0
    %6054 = vmatpush1.msra.mxu0 0.0
    %6055 = vmatprep.subr.mxu0 0.0
    %6056 = vmatpush1.msra.mxu0 0.0
    %6057 = vmatprep.subr.mxu0 0.0
    %6058 = vmatpush1.msra.mxu0 0.0
    %6059 = vmatprep.subr.mxu0 0.0
    %6060 = vmatpush1.msra.mxu0 0.0
    %6061 = vmatprep.subr.mxu0 0.0
    %6062 = vmatpush1.msra.mxu0 0.0
    %6063 = vmatprep.subr.mxu0 0.0
    %6064 = vmatpush1.msra.mxu0 0.0
    %6065 = vmatprep.subr.mxu0 0.0
    %6066 = vmatpush1.msra.mxu0 0.0
    %6067 = vmatprep.subr.mxu0 0.0
    %6068 = vmatpush1.msra.mxu0 0.0
    %6069 = vmatprep.subr.mxu0 0.0
    %6070 = vmatpush1.msra.mxu0 %v6034
    %6071 = vmatprep.subr.mxu0 0.0
    %6072 = vmatpush2.msra.mxu0 0.0
    %6073 = vmatprep.subr.mxu0 0.0
    %6074 = vmatpush2.msra.mxu0 0.0
    %6075 = vmatprep.subr.mxu0 0.0
    %6076 = vmatpush2.msra.mxu0 0.0
    %6077 = vmatprep.subr.mxu0 0.0
    %6078 = vmatpush2.msra.mxu0 0.0
    %6079 = vmatprep.subr.mxu0 0.0
    %6080 = vmatpush2.msra.mxu0 0.0
    %6081 = vmatprep.subr.mxu0 0.0
    %6082 = vmatpush2.msra.mxu0 0.0
    %6083 = vmatprep.subr.mxu0 0.0
    %6084 = vmatpush2.msra.mxu0 0.0
    %6085 = vmatprep.subr.mxu0 0.0
    %6086 = vmatpush2.msra.mxu0 0.0
    %6087 = vmatprep.subr.mxu0 0.0
    %6088 = vmatpush2.msra.mxu0 0.0
    %6089 = vmatprep.subr.mxu0 0.0
    %6090 = vmatpush2.msra.mxu0 0.0
    %6091 = vmatprep.subr.mxu0 0.0
    %6092 = vmatpush2.msra.mxu0 0.0
    %6093 = vmatprep.subr.mxu0 0.0
    %6094 = vmatpush2.msra.mxu0 0.0
    %6095 = vmatprep.subr.mxu0 0.0
    %6096 = vmatpush2.msra.mxu0 0.0
    %6097 = vmatprep.subr.mxu0 0.0
    %6098 = vmatpush2.msra.mxu0 0.0
    %6099 = vmatprep.subr.mxu0 0.0
    %6100 = vmatpush2.msra.mxu0 0.0
    %6101 = vmatprep.subr.mxu0 0.0
    %6102 = vmatpush2.msra.mxu0 0.0
    %6103 = vmatprep.mubr.f32.mxu0 0.0
    %6104 = vmatmul.mubr.f32.gmra.mxu0 %v6037
    %v6105 = vpop.f32.mrf.mxu0
    %v6106 = vadd.f32 0.0, %v6105
    %v6107 = vpop.f32.mrf.mxu0
    %6108 = vdwg.mxu0
    %6109 = vrot.lane.b32.xlu0 %v5064, 64
    %v6110 = vpop.permute.xlu0 %6109
    %v6113 = vsel %vm608, %v6032, 0
    %6115 = vmatprep.subr.mxu0 0.0
    %6116 = vmatpush1.msra.mxu0 0.0
    %6117 = vmatprep.subr.mxu0 0.0
    %6118 = vmatpush1.msra.mxu0 0.0
    %6119 = vmatprep.subr.mxu0 0.0
    %6120 = vmatpush1.msra.mxu0 0.0
    %6121 = vmatprep.subr.mxu0 0.0
    %6122 = vmatpush1.msra.mxu0 0.0
    %6123 = vmatprep.subr.mxu0 0.0
    %6124 = vmatpush1.msra.mxu0 0.0
    %6125 = vmatprep.subr.mxu0 0.0
    %6126 = vmatpush1.msra.mxu0 0.0
    %6127 = vmatprep.subr.mxu0 0.0
    %6128 = vmatpush1.msra.mxu0 0.0
    %6129 = vmatprep.subr.mxu0 0.0
    %6130 = vmatpush1.msra.mxu0 0.0
    %6131 = vmatprep.subr.mxu0 0.0
    %6132 = vmatpush1.msra.mxu0 0.0
    %6133 = vmatprep.subr.mxu0 0.0
    %6134 = vmatpush1.msra.mxu0 0.0
    %6135 = vmatprep.subr.mxu0 0.0
    %6136 = vmatpush1.msra.mxu0 0.0
    %6137 = vmatprep.subr.mxu0 0.0
    %6138 = vmatpush1.msra.mxu0 0.0
    %6139 = vmatprep.subr.mxu0 0.0
    %6140 = vmatpush1.msra.mxu0 0.0
    %6141 = vmatprep.subr.mxu0 0.0
    %6142 = vmatpush1.msra.mxu0 0.0
    %6143 = vmatprep.subr.mxu0 0.0
    %6144 = vmatpush1.msra.mxu0 0.0
    %6145 = vmatprep.subr.mxu0 0.0
    %6146 = vmatpush1.msra.mxu0 %v6110
    %6147 = vmatprep.subr.mxu0 0.0
    %6148 = vmatpush2.msra.mxu0 0.0
    %6149 = vmatprep.subr.mxu0 0.0
    %6150 = vmatpush2.msra.mxu0 0.0
    %6151 = vmatprep.subr.mxu0 0.0
    %6152 = vmatpush2.msra.mxu0 0.0
    %6153 = vmatprep.subr.mxu0 0.0
    %6154 = vmatpush2.msra.mxu0 0.0
    %6155 = vmatprep.subr.mxu0 0.0
    %6156 = vmatpush2.msra.mxu0 0.0
    %6157 = vmatprep.subr.mxu0 0.0
    %6158 = vmatpush2.msra.mxu0 0.0
    %6159 = vmatprep.subr.mxu0 0.0
    %6160 = vmatpush2.msra.mxu0 0.0
    %6161 = vmatprep.subr.mxu0 0.0
    %6162 = vmatpush2.msra.mxu0 0.0
    %6163 = vmatprep.subr.mxu0 0.0
    %6164 = vmatpush2.msra.mxu0 0.0
    %6165 = vmatprep.subr.mxu0 0.0
    %6166 = vmatpush2.msra.mxu0 0.0
    %6167 = vmatprep.subr.mxu0 0.0
    %6168 = vmatpush2.msra.mxu0 0.0
    %6169 = vmatprep.subr.mxu0 0.0
    %6170 = vmatpush2.msra.mxu0 0.0
    %6171 = vmatprep.subr.mxu0 0.0
    %6172 = vmatpush2.msra.mxu0 0.0
    %6173 = vmatprep.subr.mxu0 0.0
    %6174 = vmatpush2.msra.mxu0 0.0
    %6175 = vmatprep.subr.mxu0 0.0
    %6176 = vmatpush2.msra.mxu0 0.0
    %6177 = vmatprep.subr.mxu0 0.0
    %6178 = vmatpush2.msra.mxu0 0.0
    %6179 = vmatprep.mubr.f32.mxu0 0.0
    %6180 = vmatmul.mubr.f32.gmra.mxu0 %v6113
    %v6181 = vpop.f32.mrf.mxu0
    %v6182 = vadd.f32 0.0, %v6181
    %v6183 = vpop.f32.mrf.mxu0
    %6184 = vdwg.mxu0
    %v6185 = vpack.c.bf16 %v6182, %v6106
    %s6186 = scalar_lea.vmem [#allocation6], 160
    %v6187 = vld [vmem:[%s6186] sm:$0xf]
    %v6188 = vld [vmem:[%s6186 + $0x4] sm:$0xf]
    %v6189 = vld [vmem:[%s6186 + $0x8] sm:$0xf]
    %v6190 = vld [vmem:[%s6186 + $0xc] sm:$0xf]
    %v6195 = vunpack.c.l.b16 %v6187
    %v6196 = vunpack.c.l.b16 %v6188
    %v6197 = vunpack.c.l.b16 %v6189
    %v6198 = vunpack.c.l.b16 %v6190
    %v6199 = vpack.c.b16 %v6196, %v6195
    %v6200 = vpack.c.b16 %v6198, %v6197
    %v6204 = vsel %vm441, %v6185, 0
    %6206 = vmatprep.subr.bf16.mxu0 0
    %6207 = vmatpush1.bf16.msra.mxu0 0
    %6208 = vmatprep.subr.bf16.mxu0 0
    %6209 = vmatpush1.bf16.msra.mxu0 0
    %6210 = vmatprep.subr.bf16.mxu0 0
    %6211 = vmatpush1.bf16.msra.mxu0 0
    %6212 = vmatprep.subr.bf16.mxu0 0
    %6213 = vmatpush1.bf16.msra.mxu0 0
    %6214 = vmatprep.subr.bf16.mxu0 0
    %6215 = vmatpush1.bf16.msra.mxu0 0
    %6216 = vmatprep.subr.bf16.mxu0 0
    %6217 = vmatpush1.bf16.msra.mxu0 0
    %6218 = vmatprep.subr.bf16.mxu0 0
    %6219 = vmatpush1.bf16.msra.mxu0 %v6200
    %6220 = vmatprep.subr.bf16.mxu0 0
    %6221 = vmatpush1.bf16.msra.mxu0 %v6199
    %6222 = vmatprep.subr.bf16.mxu0 0
    %6223 = vmatpush2.bf16.msra.mxu0 0
    %6224 = vmatprep.subr.bf16.mxu0 0
    %6225 = vmatpush2.bf16.msra.mxu0 0
    %6226 = vmatprep.subr.bf16.mxu0 0
    %6227 = vmatpush2.bf16.msra.mxu0 0
    %6228 = vmatprep.subr.bf16.mxu0 0
    %6229 = vmatpush2.bf16.msra.mxu0 0
    %6230 = vmatprep.subr.bf16.mxu0 0
    %6231 = vmatpush2.bf16.msra.mxu0 0
    %6232 = vmatprep.subr.bf16.mxu0 0
    %6233 = vmatpush2.bf16.msra.mxu0 0
    %6234 = vmatprep.subr.bf16.mxu0 0
    %6235 = vmatpush2.bf16.msra.mxu0 0
    %6236 = vmatprep.subr.bf16.mxu0 0
    %6237 = vmatpush2.bf16.msra.mxu0 0
    %6238 = vmatprep.mubr.bf16.mxu0 0
    %6239 = vmatmul.mubr.bf16.gmra.mxu0 %v6204
    %v6240 = vpop.f32.mrf.mxu0
    %v6241 = vadd.f32 0.0, %v6240
    %v6242 = vpop.f32.mrf.mxu0
    %v6243 = vpop.f32.mrf.mxu0
    %v6244 = vadd.f32 0.0, %v6243
    %v6245 = vpop.f32.mrf.mxu0
    %6246 = vdwg.mxu0
    %v6247 = vadd.f32 %v5845, %v6241
    %v6248 = vadd.f32 %v5848, %v6244
    %6249 = vrot.lane.b32.xlu0 %v5018, 32
    %v6250 = vpop.permute.xlu0 %6249
    %6251 = vrot.lane.b32.xlu0 %v5020, 32
    %v6252 = vpop.permute.xlu0 %6251
    %v6253 = vsel %vm441, %v6250, 0
    %v6255 = vsel %vm441, %v6252, 0
    %6257 = vmatprep.subr.mxu0 0.0
    %6258 = vmatpush1.xpose.msra.mxu0 0.0
    %6259 = vmatprep.subr.mxu0 0.0
    %6260 = vmatpush1.xpose.msra.mxu0 0.0
    %6261 = vmatprep.subr.mxu0 0.0
    %6262 = vmatpush1.xpose.msra.mxu0 0.0
    %6263 = vmatprep.subr.mxu0 0.0
    %6264 = vmatpush1.xpose.msra.mxu0 0.0
    %6265 = vmatprep.subr.mxu0 0.0
    %6266 = vmatpush1.xpose.msra.mxu0 0.0
    %6267 = vmatprep.subr.mxu0 0.0
    %6268 = vmatpush1.xpose.msra.mxu0 0.0
    %6269 = vmatprep.subr.mxu0 0.0
    %6270 = vmatpush1.xpose.msra.mxu0 0.0
    %6271 = vmatprep.subr.mxu0 0.0
    %6272 = vmatpush1.xpose.msra.mxu0 0.0
    %6273 = vmatprep.subr.mxu0 0.0
    %6274 = vmatpush1.xpose.msra.mxu0 0.0
    %6275 = vmatprep.subr.mxu0 0.0
    %6276 = vmatpush1.xpose.msra.mxu0 0.0
    %6277 = vmatprep.subr.mxu0 0.0
    %6278 = vmatpush1.xpose.msra.mxu0 0.0
    %6279 = vmatprep.subr.mxu0 0.0
    %6280 = vmatpush1.xpose.msra.mxu0 0.0
    %6281 = vmatprep.subr.mxu0 0.0
    %6282 = vmatpush1.xpose.msra.mxu0 0.0
    %6283 = vmatprep.subr.mxu0 0.0
    %6284 = vmatpush1.xpose.msra.mxu0 0.0
    %6285 = vmatprep.subr.mxu0 0.0
    %6286 = vmatpush1.xpose.msra.mxu0 0.0
    %6287 = vmatprep.subr.mxu0 0.0
    %6288 = vmatpush1.xpose.msra.mxu0 %v6255
    %6289 = vmatprep.subr.mxu0 0.0
    %6290 = vmatpush2.xpose.msra.mxu0 0.0
    %6291 = vmatprep.subr.mxu0 0.0
    %6292 = vmatpush2.xpose.msra.mxu0 0.0
    %6293 = vmatprep.subr.mxu0 0.0
    %6294 = vmatpush2.xpose.msra.mxu0 0.0
    %6295 = vmatprep.subr.mxu0 0.0
    %6296 = vmatpush2.xpose.msra.mxu0 0.0
    %6297 = vmatprep.subr.mxu0 0.0
    %6298 = vmatpush2.xpose.msra.mxu0 0.0
    %6299 = vmatprep.subr.mxu0 0.0
    %6300 = vmatpush2.xpose.msra.mxu0 0.0
    %6301 = vmatprep.subr.mxu0 0.0
    %6302 = vmatpush2.xpose.msra.mxu0 0.0
    %6303 = vmatprep.subr.mxu0 0.0
    %6304 = vmatpush2.xpose.msra.mxu0 0.0
    %6305 = vmatprep.subr.mxu0 0.0
    %6306 = vmatpush2.xpose.msra.mxu0 0.0
    %6307 = vmatprep.subr.mxu0 0.0
    %6308 = vmatpush2.xpose.msra.mxu0 0.0
    %6309 = vmatprep.subr.mxu0 0.0
    %6310 = vmatpush2.xpose.msra.mxu0 0.0
    %6311 = vmatprep.subr.mxu0 0.0
    %6312 = vmatpush2.xpose.msra.mxu0 0.0
    %6313 = vmatprep.subr.mxu0 0.0
    %6314 = vmatpush2.xpose.msra.mxu0 0.0
    %6315 = vmatprep.subr.mxu0 0.0
    %6316 = vmatpush2.xpose.msra.mxu0 0.0
    %6317 = vmatprep.subr.mxu0 0.0
    %6318 = vmatpush2.xpose.msra.mxu0 0.0
    %6319 = vmatprep.subr.mxu0 0.0
    %6320 = vmatpush2.xpose.msra.mxu0 0.0
    %6321 = vmatprep.mubr.f32.mxu0 0.0
    %6322 = vmatmul.mubr.f32.gmra.mxu0 %v6253
    %v6323 = vpop.f32.mrf.mxu0
    %v6324 = vadd.f32 0.0, %v6323
    %v6325 = vpop.f32.mrf.mxu0
    %6326 = vdwg.mxu0
    %6327 = vrot.lane.b32.xlu0 %v5022, 32
    %v6328 = vpop.permute.xlu0 %6327
    %6329 = vrot.lane.b32.xlu0 %v5024, 32
    %v6330 = vpop.permute.xlu0 %6329
    %v6331 = vsel %vm441, %v6328, 0
    %v6333 = vsel %vm441, %v6330, 0
    %6335 = vmatprep.subr.mxu0 0.0
    %6336 = vmatpush1.xpose.msra.mxu0 0.0
    %6337 = vmatprep.subr.mxu0 0.0
    %6338 = vmatpush1.xpose.msra.mxu0 0.0
    %6339 = vmatprep.subr.mxu0 0.0
    %6340 = vmatpush1.xpose.msra.mxu0 0.0
    %6341 = vmatprep.subr.mxu0 0.0
    %6342 = vmatpush1.xpose.msra.mxu0 0.0
    %6343 = vmatprep.subr.mxu0 0.0
    %6344 = vmatpush1.xpose.msra.mxu0 0.0
    %6345 = vmatprep.subr.mxu0 0.0
    %6346 = vmatpush1.xpose.msra.mxu0 0.0
    %6347 = vmatprep.subr.mxu0 0.0
    %6348 = vmatpush1.xpose.msra.mxu0 0.0
    %6349 = vmatprep.subr.mxu0 0.0
    %6350 = vmatpush1.xpose.msra.mxu0 0.0
    %6351 = vmatprep.subr.mxu0 0.0
    %6352 = vmatpush1.xpose.msra.mxu0 0.0
    %6353 = vmatprep.subr.mxu0 0.0
    %6354 = vmatpush1.xpose.msra.mxu0 0.0
    %6355 = vmatprep.subr.mxu0 0.0
    %6356 = vmatpush1.xpose.msra.mxu0 0.0
    %6357 = vmatprep.subr.mxu0 0.0
    %6358 = vmatpush1.xpose.msra.mxu0 0.0
    %6359 = vmatprep.subr.mxu0 0.0
    %6360 = vmatpush1.xpose.msra.mxu0 0.0
    %6361 = vmatprep.subr.mxu0 0.0
    %6362 = vmatpush1.xpose.msra.mxu0 0.0
    %6363 = vmatprep.subr.mxu0 0.0
    %6364 = vmatpush1.xpose.msra.mxu0 0.0
    %6365 = vmatprep.subr.mxu0 0.0
    %6366 = vmatpush1.xpose.msra.mxu0 %v6333
    %6367 = vmatprep.subr.mxu0 0.0
    %6368 = vmatpush2.xpose.msra.mxu0 0.0
    %6369 = vmatprep.subr.mxu0 0.0
    %6370 = vmatpush2.xpose.msra.mxu0 0.0
    %6371 = vmatprep.subr.mxu0 0.0
    %6372 = vmatpush2.xpose.msra.mxu0 0.0
    %6373 = vmatprep.subr.mxu0 0.0
    %6374 = vmatpush2.xpose.msra.mxu0 0.0
    %6375 = vmatprep.subr.mxu0 0.0
    %6376 = vmatpush2.xpose.msra.mxu0 0.0
    %6377 = vmatprep.subr.mxu0 0.0
    %6378 = vmatpush2.xpose.msra.mxu0 0.0
    %6379 = vmatprep.subr.mxu0 0.0
    %6380 = vmatpush2.xpose.msra.mxu0 0.0
    %6381 = vmatprep.subr.mxu0 0.0
    %6382 = vmatpush2.xpose.msra.mxu0 0.0
    %6383 = vmatprep.subr.mxu0 0.0
    %6384 = vmatpush2.xpose.msra.mxu0 0.0
    %6385 = vmatprep.subr.mxu0 0.0
    %6386 = vmatpush2.xpose.msra.mxu0 0.0
    %6387 = vmatprep.subr.mxu0 0.0
    %6388 = vmatpush2.xpose.msra.mxu0 0.0
    %6389 = vmatprep.subr.mxu0 0.0
    %6390 = vmatpush2.xpose.msra.mxu0 0.0
    %6391 = vmatprep.subr.mxu0 0.0
    %6392 = vmatpush2.xpose.msra.mxu0 0.0
    %6393 = vmatprep.subr.mxu0 0.0
    %6394 = vmatpush2.xpose.msra.mxu0 0.0
    %6395 = vmatprep.subr.mxu0 0.0
    %6396 = vmatpush2.xpose.msra.mxu0 0.0
    %6397 = vmatprep.subr.mxu0 0.0
    %6398 = vmatpush2.xpose.msra.mxu0 0.0
    %6399 = vmatprep.mubr.f32.mxu0 0.0
    %6400 = vmatmul.mubr.f32.gmra.mxu0 %v6331
    %v6401 = vpop.f32.mrf.mxu0
    %v6402 = vadd.f32 0.0, %v6401
    %v6403 = vpop.f32.mrf.mxu0
    %6404 = vdwg.mxu0
    %v6405 = vmul.f32 %v6324, 0.17677669
    %v6406 = vmul.f32 %v6402, 0.17677669
    %v6407 = vadd.f32 %v6405, %v599
    %v6408 = vadd.f32 %v6406, %v603
    %v6409 = vsel %vm608, %v6407, -inf
    %6410 = vmax.xlane.f32.xlu0 %v6409
    %v6411 = vpop.xlane.xlu0 %6410
    %v6412 = vsel %vm608, %v6408, -inf
    %6413 = vmax.xlane.f32.xlu0 %v6412
    %v6414 = vpop.xlane.xlu0 %6413
    %v6415 = vsub.f32 %v6407, %v6411
    %v6416 = vsub.f32 %v6408, %v6414
    %v6417 = vmul.f32 %v6415, 1.442695
    %v6418 = vpow.pop %v6417
    %v6419 = vmul.f32 %v6416, 1.442695
    %v6420 = vpow.pop %v6419
    %v6421 = vsel %vm608, %v6418, 0.0
    %6422 = vadd.xlane.f32.xlu0 %v6421
    %v6423 = vpop.xlane.xlu0 %6422
    %v6424 = vsel %vm608, %v6420, 0.0
    %6425 = vadd.xlane.f32.xlu0 %v6424
    %v6426 = vpop.xlane.xlu0 %6425
    %v6427 = vrcp.pop %v6423
    %v6428 = vmul.f32 %v6418, %v6427
    %v6429 = vrcp.pop %v6426
    %v6430 = vmul.f32 %v6420, %v6429
    %6431 = vrot.lane.b32.xlu0 %v5061, 32
    %v6432 = vpop.permute.xlu0 %6431
    %v6435 = vsel %vm608, %v6428, 0
    %6437 = vmatprep.subr.mxu0 0.0
    %6438 = vmatpush1.msra.mxu0 0.0
    %6439 = vmatprep.subr.mxu0 0.0
    %6440 = vmatpush1.msra.mxu0 0.0
    %6441 = vmatprep.subr.mxu0 0.0
    %6442 = vmatpush1.msra.mxu0 0.0
    %6443 = vmatprep.subr.mxu0 0.0
    %6444 = vmatpush1.msra.mxu0 0.0
    %6445 = vmatprep.subr.mxu0 0.0
    %6446 = vmatpush1.msra.mxu0 0.0
    %6447 = vmatprep.subr.mxu0 0.0
    %6448 = vmatpush1.msra.mxu0 0.0
    %6449 = vmatprep.subr.mxu0 0.0
    %6450 = vmatpush1.msra.mxu0 0.0
    %6451 = vmatprep.subr.mxu0 0.0
    %6452 = vmatpush1.msra.mxu0 0.0
    %6453 = vmatprep.subr.mxu0 0.0
    %6454 = vmatpush1.msra.mxu0 0.0
    %6455 = vmatprep.subr.mxu0 0.0
    %6456 = vmatpush1.msra.mxu0 0.0
    %6457 = vmatprep.subr.mxu0 0.0
    %6458 = vmatpush1.msra.mxu0 0.0
    %6459 = vmatprep.subr.mxu0 0.0
    %6460 = vmatpush1.msra.mxu0 0.0
    %6461 = vmatprep.subr.mxu0 0.0
    %6462 = vmatpush1.msra.mxu0 0.0
    %6463 = vmatprep.subr.mxu0 0.0
    %6464 = vmatpush1.msra.mxu0 0.0
    %6465 = vmatprep.subr.mxu0 0.0
    %6466 = vmatpush1.msra.mxu0 0.0
    %6467 = vmatprep.subr.mxu0 0.0
    %6468 = vmatpush1.msra.mxu0 %v6432
    %6469 = vmatprep.subr.mxu0 0.0
    %6470 = vmatpush2.msra.mxu0 0.0
    %6471 = vmatprep.subr.mxu0 0.0
    %6472 = vmatpush2.msra.mxu0 0.0
    %6473 = vmatprep.subr.mxu0 0.0
    %6474 = vmatpush2.msra.mxu0 0.0
    %6475 = vmatprep.subr.mxu0 0.0
    %6476 = vmatpush2.msra.mxu0 0.0
    %6477 = vmatprep.subr.mxu0 0.0
    %6478 = vmatpush2.msra.mxu0 0.0
    %6479 = vmatprep.subr.mxu0 0.0
    %6480 = vmatpush2.msra.mxu0 0.0
    %6481 = vmatprep.subr.mxu0 0.0
    %6482 = vmatpush2.msra.mxu0 0.0
    %6483 = vmatprep.subr.mxu0 0.0
    %6484 = vmatpush2.msra.mxu0 0.0
    %6485 = vmatprep.subr.mxu0 0.0
    %6486 = vmatpush2.msra.mxu0 0.0
    %6487 = vmatprep.subr.mxu0 0.0
    %6488 = vmatpush2.msra.mxu0 0.0
    %6489 = vmatprep.subr.mxu0 0.0
    %6490 = vmatpush2.msra.mxu0 0.0
    %6491 = vmatprep.subr.mxu0 0.0
    %6492 = vmatpush2.msra.mxu0 0.0
    %6493 = vmatprep.subr.mxu0 0.0
    %6494 = vmatpush2.msra.mxu0 0.0
    %6495 = vmatprep.subr.mxu0 0.0
    %6496 = vmatpush2.msra.mxu0 0.0
    %6497 = vmatprep.subr.mxu0 0.0
    %6498 = vmatpush2.msra.mxu0 0.0
    %6499 = vmatprep.subr.mxu0 0.0
    %6500 = vmatpush2.msra.mxu0 0.0
    %6501 = vmatprep.mubr.f32.mxu0 0.0
    %6502 = vmatmul.mubr.f32.gmra.mxu0 %v6435
    %v6503 = vpop.f32.mrf.mxu0
    %v6504 = vadd.f32 0.0, %v6503
    %v6505 = vpop.f32.mrf.mxu0
    %6506 = vdwg.mxu0
    %6507 = vrot.lane.b32.xlu0 %v5064, 32
    %v6508 = vpop.permute.xlu0 %6507
    %v6511 = vsel %vm608, %v6430, 0
    %6513 = vmatprep.subr.mxu0 0.0
    %6514 = vmatpush1.msra.mxu0 0.0
    %6515 = vmatprep.subr.mxu0 0.0
    %6516 = vmatpush1.msra.mxu0 0.0
    %6517 = vmatprep.subr.mxu0 0.0
    %6518 = vmatpush1.msra.mxu0 0.0
    %6519 = vmatprep.subr.mxu0 0.0
    %6520 = vmatpush1.msra.mxu0 0.0
    %6521 = vmatprep.subr.mxu0 0.0
    %6522 = vmatpush1.msra.mxu0 0.0
    %6523 = vmatprep.subr.mxu0 0.0
    %6524 = vmatpush1.msra.mxu0 0.0
    %6525 = vmatprep.subr.mxu0 0.0
    %6526 = vmatpush1.msra.mxu0 0.0
    %6527 = vmatprep.subr.mxu0 0.0
    %6528 = vmatpush1.msra.mxu0 0.0
    %6529 = vmatprep.subr.mxu0 0.0
    %6530 = vmatpush1.msra.mxu0 0.0
    %6531 = vmatprep.subr.mxu0 0.0
    %6532 = vmatpush1.msra.mxu0 0.0
    %6533 = vmatprep.subr.mxu0 0.0
    %6534 = vmatpush1.msra.mxu0 0.0
    %6535 = vmatprep.subr.mxu0 0.0
    %6536 = vmatpush1.msra.mxu0 0.0
    %6537 = vmatprep.subr.mxu0 0.0
    %6538 = vmatpush1.msra.mxu0 0.0
    %6539 = vmatprep.subr.mxu0 0.0
    %6540 = vmatpush1.msra.mxu0 0.0
    %6541 = vmatprep.subr.mxu0 0.0
    %6542 = vmatpush1.msra.mxu0 0.0
    %6543 = vmatprep.subr.mxu0 0.0
    %6544 = vmatpush1.msra.mxu0 %v6508
    %6545 = vmatprep.subr.mxu0 0.0
    %6546 = vmatpush2.msra.mxu0 0.0
    %6547 = vmatprep.subr.mxu0 0.0
    %6548 = vmatpush2.msra.mxu0 0.0
    %6549 = vmatprep.subr.mxu0 0.0
    %6550 = vmatpush2.msra.mxu0 0.0
    %6551 = vmatprep.subr.mxu0 0.0
    %6552 = vmatpush2.msra.mxu0 0.0
    %6553 = vmatprep.subr.mxu0 0.0
    %6554 = vmatpush2.msra.mxu0 0.0
    %6555 = vmatprep.subr.mxu0 0.0
    %6556 = vmatpush2.msra.mxu0 0.0
    %6557 = vmatprep.subr.mxu0 0.0
    %6558 = vmatpush2.msra.mxu0 0.0
    %6559 = vmatprep.subr.mxu0 0.0
    %6560 = vmatpush2.msra.mxu0 0.0
    %6561 = vmatprep.subr.mxu0 0.0
    %6562 = vmatpush2.msra.mxu0 0.0
    %6563 = vmatprep.subr.mxu0 0.0
    %6564 = vmatpush2.msra.mxu0 0.0
    %6565 = vmatprep.subr.mxu0 0.0
    %6566 = vmatpush2.msra.mxu0 0.0
    %6567 = vmatprep.subr.mxu0 0.0
    %6568 = vmatpush2.msra.mxu0 0.0
    %6569 = vmatprep.subr.mxu0 0.0
    %6570 = vmatpush2.msra.mxu0 0.0
    %6571 = vmatprep.subr.mxu0 0.0
    %6572 = vmatpush2.msra.mxu0 0.0
    %6573 = vmatprep.subr.mxu0 0.0
    %6574 = vmatpush2.msra.mxu0 0.0
    %6575 = vmatprep.subr.mxu0 0.0
    %6576 = vmatpush2.msra.mxu0 0.0
    %6577 = vmatprep.mubr.f32.mxu0 0.0
    %6578 = vmatmul.mubr.f32.gmra.mxu0 %v6511
    %v6579 = vpop.f32.mrf.mxu0
    %v6580 = vadd.f32 0.0, %v6579
    %v6581 = vpop.f32.mrf.mxu0
    %6582 = vdwg.mxu0
    %v6583 = vpack.c.bf16 %v6580, %v6504
    %s6584 = scalar_lea.vmem [#allocation6], 176
    %v6585 = vld [vmem:[%s6584] sm:$0xf]
    %v6586 = vld [vmem:[%s6584 + $0x4] sm:$0xf]
    %v6587 = vld [vmem:[%s6584 + $0x8] sm:$0xf]
    %v6588 = vld [vmem:[%s6584 + $0xc] sm:$0xf]
    %v6593 = vunpack.c.l.b16 %v6585
    %v6594 = vunpack.c.l.b16 %v6586
    %v6595 = vunpack.c.l.b16 %v6587
    %v6596 = vunpack.c.l.b16 %v6588
    %v6597 = vpack.c.b16 %v6594, %v6593
    %v6598 = vpack.c.b16 %v6596, %v6595
    %v6602 = vsel %vm441, %v6583, 0
    %6604 = vmatprep.subr.bf16.mxu0 0
    %6605 = vmatpush1.bf16.msra.mxu0 0
    %6606 = vmatprep.subr.bf16.mxu0 0
    %6607 = vmatpush1.bf16.msra.mxu0 0
    %6608 = vmatprep.subr.bf16.mxu0 0
    %6609 = vmatpush1.bf16.msra.mxu0 0
    %6610 = vmatprep.subr.bf16.mxu0 0
    %6611 = vmatpush1.bf16.msra.mxu0 0
    %6612 = vmatprep.subr.bf16.mxu0 0
    %6613 = vmatpush1.bf16.msra.mxu0 0
    %6614 = vmatprep.subr.bf16.mxu0 0
    %6615 = vmatpush1.bf16.msra.mxu0 0
    %6616 = vmatprep.subr.bf16.mxu0 0
    %6617 = vmatpush1.bf16.msra.mxu0 %v6598
    %6618 = vmatprep.subr.bf16.mxu0 0
    %6619 = vmatpush1.bf16.msra.mxu0 %v6597
    %6620 = vmatprep.subr.bf16.mxu0 0
    %6621 = vmatpush2.bf16.msra.mxu0 0
    %6622 = vmatprep.subr.bf16.mxu0 0
    %6623 = vmatpush2.bf16.msra.mxu0 0
    %6624 = vmatprep.subr.bf16.mxu0 0
    %6625 = vmatpush2.bf16.msra.mxu0 0
    %6626 = vmatprep.subr.bf16.mxu0 0
    %6627 = vmatpush2.bf16.msra.mxu0 0
    %6628 = vmatprep.subr.bf16.mxu0 0
    %6629 = vmatpush2.bf16.msra.mxu0 0
    %6630 = vmatprep.subr.bf16.mxu0 0
    %6631 = vmatpush2.bf16.msra.mxu0 0
    %6632 = vmatprep.subr.bf16.mxu0 0
    %6633 = vmatpush2.bf16.msra.mxu0 0
    %6634 = vmatprep.subr.bf16.mxu0 0
    %6635 = vmatpush2.bf16.msra.mxu0 0
    %6636 = vmatprep.mubr.bf16.mxu0 0
    %6637 = vmatmul.mubr.bf16.gmra.mxu0 %v6602
    %v6638 = vpop.f32.mrf.mxu0
    %v6639 = vadd.f32 0.0, %v6638
    %v6640 = vpop.f32.mrf.mxu0
    %v6641 = vpop.f32.mrf.mxu0
    %v6642 = vadd.f32 0.0, %v6641
    %v6643 = vpop.f32.mrf.mxu0
    %6644 = vdwg.mxu0
    %v6645 = vadd.f32 %v6247, %v6639
    %v6646 = vadd.f32 %v6248, %v6642
    %s6647 = scalar_lea.vmem %s7, 2
    %v6648 = vld [vmem:[%s6647] sm:$0x1]
    %v6650 = vlaneseq
    %v6651 = vshrl.u32 %v6650, 7
    %v6652 = vsub.s32 0, %v6651
    %v6653 = vrot.slane %v6648, %v6652
    %v6655 = vadd.f32 %v6645, %v6653
    %v6656 = vadd.f32 %v6646, %v6653
    %v6657 = vadd.f32 %v6655, %v4801
    %v6658 = vadd.f32 %v6656, %v4802
    %s6659 = scalar_lea.vmem %s8, 2
    %v6660 = vld [vmem:[%s6659] sm:$0x1]
    %s6661 = scalar_lea.vmem %s9, 2
    %v6662 = vld [vmem:[%s6661] sm:$0x1]
    %6663 = vadd.xlane.f32.xlu0 %v6657
    %v6664 = vpop.xlane.xlu0 %6663
    %6665 = vadd.xlane.f32.xlu0 %v6658
    %v6666 = vpop.xlane.xlu0 %6665
    %v6667 = vmul.f32 %v6664, %v144
    %v6668 = vmul.f32 %v6666, %v144
    %v6669 = vsub.f32 %v6657, %v6667
    %v6670 = vsub.f32 %v6658, %v6668
    %v6671 = vmul.f32 %v6669, %v6669
    %v6672 = vmul.f32 %v6670, %v6670
    %6673 = vadd.xlane.f32.xlu0 %v6671
    %v6674 = vpop.xlane.xlu0 %6673
    %6675 = vadd.xlane.f32.xlu0 %v6672
    %v6676 = vpop.xlane.xlu0 %6675
    %v6677 = vmul.f32 %v6674, %v144
    %v6678 = vmul.f32 %v6676, %v144
    %v6679 = vadd.f32 %v6677, 1e-05
    %v6680 = vadd.f32 %v6678, 1e-05
    %v6681 = vrsqrt.pop %v6679
    %v6682 = vrsqrt.pop %v6680
    %v6683 = vmul.f32 %v6669, %v6681
    %v6684 = vmul.f32 %v6670, %v6682
    %v6686 = vlaneseq
    %v6687 = vshrl.u32 %v6686, 7
    %v6688 = vsub.s32 0, %v6687
    %v6689 = vrot.slane %v6660, %v6688
    %v6691 = vmul.f32 %v6683, %v6689
    %v6692 = vmul.f32 %v6684, %v6689
    %v6694 = vlaneseq
    %v6695 = vshrl.u32 %v6694, 7
    %v6696 = vsub.s32 0, %v6695
    %v6697 = vrot.slane %v6662, %v6696
    %v6699 = vadd.f32 %v6691, %v6697
    %v6700 = vadd.f32 %v6692, %v6697
    %v6701 = vpack.c.bf16 %v6700, %v6699
    %s6702 = scalar_lea.vmem %s10, 256
    %v6703 = vld [vmem:[%s6702] sm:$0xff]
    %v6704 = vld [vmem:[%s6702 + $0x8] sm:$0xff]
    %v6705 = vld [vmem:[%s6702 + $0x10] sm:$0xff]
    %v6706 = vld [vmem:[%s6702 + $0x18] sm:$0xff]
    %v6707 = vld [vmem:[%s6702 + $0x20] sm:$0xff]
    %v6708 = vld [vmem:[%s6702 + $0x28] sm:$0xff]
    %v6709 = vld [vmem:[%s6702 + $0x30] sm:$0xff]
    %v6710 = vld [vmem:[%s6702 + $0x38] sm:$0xff]
    %v6711 = vld [vmem:[%s6702 + $0x40] sm:$0xff]
    %v6712 = vld [vmem:[%s6702 + $0x48] sm:$0xff]
    %v6713 = vld [vmem:[%s6702 + $0x50] sm:$0xff]
    %v6714 = vld [vmem:[%s6702 + $0x58] sm:$0xff]
    %v6715 = vld [vmem:[%s6702 + $0x60] sm:$0xff]
    %v6716 = vld [vmem:[%s6702 + $0x68] sm:$0xff]
    %v6717 = vld [vmem:[%s6702 + $0x70] sm:$0xff]
    %v6718 = vld [vmem:[%s6702 + $0x78] sm:$0xff]
    %s6719 = scalar_lea.vmem %s11, 4
    %v6720 = vld [vmem:[%s6719] sm:$0x3]
    %v6722 = vlaneseq
    %v6723 = vshrl.u32 %v6722, 7
    %v6724 = vsub.s32 0, %v6723
    %v6725 = vrot.slane %v6720, %v6724
    %v6726 = vlaneseq
    %v6727 = vshrl.u32 %v6726, 7
    %v6728 = vsub.s32 1, %v6727
    %v6729 = vrot.slane %v6720, %v6728
    %v6748 = vunpack.c.l.b16 %v6703
    %v6749 = vunpack.c.h.b16 %v6703
    %v6750 = vunpack.c.l.b16 %v6704
    %v6751 = vunpack.c.h.b16 %v6704
    %v6752 = vunpack.c.l.b16 %v6705
    %v6753 = vunpack.c.h.b16 %v6705
    %v6754 = vunpack.c.l.b16 %v6706
    %v6755 = vunpack.c.h.b16 %v6706
    %v6756 = vunpack.c.l.b16 %v6707
    %v6757 = vunpack.c.h.b16 %v6707
    %v6758 = vunpack.c.l.b16 %v6708
    %v6759 = vunpack.c.h.b16 %v6708
    %v6760 = vunpack.c.l.b16 %v6709
    %v6761 = vunpack.c.h.b16 %v6709
    %v6762 = vunpack.c.l.b16 %v6710
    %v6763 = vunpack.c.h.b16 %v6710
    %v6764 = vunpack.c.l.b16 %v6711
    %v6765 = vunpack.c.h.b16 %v6711
    %v6766 = vunpack.c.l.b16 %v6712
    %v6767 = vunpack.c.h.b16 %v6712
    %v6768 = vunpack.c.l.b16 %v6713
    %v6769 = vunpack.c.h.b16 %v6713
    %v6770 = vunpack.c.l.b16 %v6714
    %v6771 = vunpack.c.h.b16 %v6714
    %v6772 = vunpack.c.l.b16 %v6715
    %v6773 = vunpack.c.h.b16 %v6715
    %v6774 = vunpack.c.l.b16 %v6716
    %v6775 = vunpack.c.h.b16 %v6716
    %v6776 = vunpack.c.l.b16 %v6717
    %v6777 = vunpack.c.h.b16 %v6717
    %v6778 = vunpack.c.l.b16 %v6718
    %v6779 = vunpack.c.h.b16 %v6718
    %v6780 = vpack.c.b16 %v6750, %v6748
    %v6781 = vpack.c.b16 %v6751, %v6749
    %v6782 = vpack.c.b16 %v6754, %v6752
    %v6783 = vpack.c.b16 %v6755, %v6753
    %v6784 = vpack.c.b16 %v6758, %v6756
    %v6785 = vpack.c.b16 %v6759, %v6757
    %v6786 = vpack.c.b16 %v6762, %v6760
    %v6787 = vpack.c.b16 %v6763, %v6761
    %v6788 = vpack.c.b16 %v6766, %v6764
    %v6789 = vpack.c.b16 %v6767, %v6765
    %v6790 = vpack.c.b16 %v6770, %v6768
    %v6791 = vpack.c.b16 %v6771, %v6769
    %v6792 = vpack.c.b16 %v6774, %v6772
    %v6793 = vpack.c.b16 %v6775, %v6773
    %v6794 = vpack.c.b16 %v6778, %v6776
    %v6795 = vpack.c.b16 %v6779, %v6777
    %6812 = vmatprep.subr.bf16.mxu0 %v6795
    %6813 = vmatpush1.bf16.msra.mxu0 %v6794
    %6814 = vmatprep.subr.bf16.mxu0 %v6793
    %6815 = vmatpush1.bf16.msra.mxu0 %v6792
    %6816 = vmatprep.subr.bf16.mxu0 %v6791
    %6817 = vmatpush1.bf16.msra.mxu0 %v6790
    %6818 = vmatprep.subr.bf16.mxu0 %v6789
    %6819 = vmatpush1.bf16.msra.mxu0 %v6788
    %6820 = vmatprep.subr.bf16.mxu0 %v6787
    %6821 = vmatpush1.bf16.msra.mxu0 %v6786
    %6822 = vmatprep.subr.bf16.mxu0 %v6785
    %6823 = vmatpush1.bf16.msra.mxu0 %v6784
    %6824 = vmatprep.subr.bf16.mxu0 %v6783
    %6825 = vmatpush1.bf16.msra.mxu0 %v6782
    %6826 = vmatprep.subr.bf16.mxu0 %v6781
    %6827 = vmatpush1.bf16.msra.mxu0 %v6780
    %6828 = vmatprep.subr.bf16.mxu0 0
    %6829 = vmatpush2.bf16.msra.mxu0 0
    %6830 = vmatprep.subr.bf16.mxu0 0
    %6831 = vmatpush2.bf16.msra.mxu0 0
    %6832 = vmatprep.subr.bf16.mxu0 0
    %6833 = vmatpush2.bf16.msra.mxu0 0
    %6834 = vmatprep.subr.bf16.mxu0 0
    %6835 = vmatpush2.bf16.msra.mxu0 0
    %6836 = vmatprep.subr.bf16.mxu0 0
    %6837 = vmatpush2.bf16.msra.mxu0 0
    %6838 = vmatprep.subr.bf16.mxu0 0
    %6839 = vmatpush2.bf16.msra.mxu0 0
    %6840 = vmatprep.subr.bf16.mxu0 0
    %6841 = vmatpush2.bf16.msra.mxu0 0
    %6842 = vmatprep.subr.bf16.mxu0 0
    %6843 = vmatpush2.bf16.msra.mxu0 0
    %6844 = vmatprep.mubr.bf16.mxu0 0
    %6845 = vmatmul.mubr.bf16.gmra.mxu0 %v6701
    %v6846 = vpop.f32.mrf.mxu0
    %v6847 = vadd.f32 %v6725, %v6846
    %v6848 = vpop.f32.mrf.mxu0
    %v6849 = vadd.f32 %v6729, %v6848
    %v6850 = vpop.f32.mrf.mxu0
    %v6851 = vadd.f32 %v6725, %v6850
    %v6852 = vpop.f32.mrf.mxu0
    %v6853 = vadd.f32 %v6729, %v6852
    %6854 = vdwg.mxu0
    %v6855 = vmul.f32 %v6847, 0.5
    %v6856 = vmul.f32 %v6849, 0.5
    %v6857 = vmul.f32 %v6851, 0.5
    %v6858 = vmul.f32 %v6853, 0.5
    %v6859 = vmul.f32 %v6847, 0.044715
    %v6860 = vmul.f32 %v6849, 0.044715
    %v6861 = vmul.f32 %v6851, 0.044715
    %v6862 = vmul.f32 %v6853, 0.044715
    %v6863 = vmul.f32 %v6859, %v6847
    %v6864 = vmul.f32 %v6860, %v6849
    %v6865 = vmul.f32 %v6861, %v6851
    %v6866 = vmul.f32 %v6862, %v6853
    %v6867 = vmul.f32 %v6863, %v6847
    %v6868 = vmul.f32 %v6864, %v6849
    %v6869 = vmul.f32 %v6865, %v6851
    %v6870 = vmul.f32 %v6866, %v6853
    %v6871 = vadd.f32 %v6847, %v6867
    %v6872 = vadd.f32 %v6849, %v6868
    %v6873 = vadd.f32 %v6851, %v6869
    %v6874 = vadd.f32 %v6853, %v6870
    %v6875 = vmul.f32 %v6871, 0.7978846
    %v6876 = vmul.f32 %v6872, 0.7978846
    %v6877 = vmul.f32 %v6873, 0.7978846
    %v6878 = vmul.f32 %v6874, 0.7978846
    %v6879 = vtanh.pop %v6875
    %v6880 = vtanh.pop %v6876
    %v6881 = vtanh.pop %v6877
    %v6882 = vtanh.pop %v6878
    %v6883 = vadd.f32 %v6879, 1.0
    %v6884 = vadd.f32 %v6880, 1.0
    %v6885 = vadd.f32 %v6881, 1.0
    %v6886 = vadd.f32 %v6882, 1.0
    %v6887 = vmul.f32 %v6855, %v6883
    %v6888 = vmul.f32 %v6856, %v6884
    %v6889 = vmul.f32 %v6857, %v6885
    %v6890 = vmul.f32 %v6858, %v6886
    %v6891 = vpack.c.bf16 %v6889, %v6887
    %v6892 = vpack.c.bf16 %v6890, %v6888
    %s6893 = scalar_lea.vmem [#allocation8], 256
    %v6894 = vld [vmem:[%s6893] sm:$0xf]
    %v6895 = vld [vmem:[%s6893 + $0x4] sm:$0xf]
    %v6896 = vld [vmem:[%s6893 + $0x8] sm:$0xf]
    %v6897 = vld [vmem:[%s6893 + $0xc] sm:$0xf]
    %v6898 = vld [vmem:[%s6893 + $0x10] sm:$0xf]
    %v6899 = vld [vmem:[%s6893 + $0x14] sm:$0xf]
    %v6900 = vld [vmem:[%s6893 + $0x18] sm:$0xf]
    %v6901 = vld [vmem:[%s6893 + $0x1c] sm:$0xf]
    %v6902 = vld [vmem:[%s6893 + $0x20] sm:$0xf]
    %v6903 = vld [vmem:[%s6893 + $0x24] sm:$0xf]
    %v6904 = vld [vmem:[%s6893 + $0x28] sm:$0xf]
    %v6905 = vld [vmem:[%s6893 + $0x2c] sm:$0xf]
    %v6906 = vld [vmem:[%s6893 + $0x30] sm:$0xf]
    %v6907 = vld [vmem:[%s6893 + $0x34] sm:$0xf]
    %v6908 = vld [vmem:[%s6893 + $0x38] sm:$0xf]
    %v6909 = vld [vmem:[%s6893 + $0x3c] sm:$0xf]
    %v6910 = vld [vmem:[%s6893 + $0x40] sm:$0xf]
    %v6911 = vld [vmem:[%s6893 + $0x44] sm:$0xf]
    %v6912 = vld [vmem:[%s6893 + $0x48] sm:$0xf]
    %v6913 = vld [vmem:[%s6893 + $0x4c] sm:$0xf]
    %v6914 = vld [vmem:[%s6893 + $0x50] sm:$0xf]
    %v6915 = vld [vmem:[%s6893 + $0x54] sm:$0xf]
    %v6916 = vld [vmem:[%s6893 + $0x58] sm:$0xf]
    %v6917 = vld [vmem:[%s6893 + $0x5c] sm:$0xf]
    %v6918 = vld [vmem:[%s6893 + $0x60] sm:$0xf]
    %v6919 = vld [vmem:[%s6893 + $0x64] sm:$0xf]
    %v6920 = vld [vmem:[%s6893 + $0x68] sm:$0xf]
    %v6921 = vld [vmem:[%s6893 + $0x6c] sm:$0xf]
    %v6922 = vld [vmem:[%s6893 + $0x70] sm:$0xf]
    %v6923 = vld [vmem:[%s6893 + $0x74] sm:$0xf]
    %v6924 = vld [vmem:[%s6893 + $0x78] sm:$0xf]
    %v6925 = vld [vmem:[%s6893 + $0x7c] sm:$0xf]
    %s6926 = scalar_lea.vmem %s13, 2
    %v6927 = vld [vmem:[%s6926] sm:$0x1]
    %v6929 = vlaneseq
    %v6930 = vshrl.u32 %v6929, 7
    %v6931 = vsub.s32 0, %v6930
    %v6932 = vrot.slane %v6927, %v6931
    %v6966 = vunpack.c.l.b16 %v6894
    %v6967 = vunpack.c.l.b16 %v6895
    %v6968 = vunpack.c.l.b16 %v6896
    %v6969 = vunpack.c.l.b16 %v6897
    %v6970 = vunpack.c.l.b16 %v6898
    %v6971 = vunpack.c.l.b16 %v6899
    %v6972 = vunpack.c.l.b16 %v6900
    %v6973 = vunpack.c.l.b16 %v6901
    %v6974 = vunpack.c.l.b16 %v6902
    %v6975 = vunpack.c.l.b16 %v6903
    %v6976 = vunpack.c.l.b16 %v6904
    %v6977 = vunpack.c.l.b16 %v6905
    %v6978 = vunpack.c.l.b16 %v6906
    %v6979 = vunpack.c.l.b16 %v6907
    %v6980 = vunpack.c.l.b16 %v6908
    %v6981 = vunpack.c.l.b16 %v6909
    %v6982 = vunpack.c.l.b16 %v6910
    %v6983 = vunpack.c.l.b16 %v6911
    %v6984 = vunpack.c.l.b16 %v6912
    %v6985 = vunpack.c.l.b16 %v6913
    %v6986 = vunpack.c.l.b16 %v6914
    %v6987 = vunpack.c.l.b16 %v6915
    %v6988 = vunpack.c.l.b16 %v6916
    %v6989 = vunpack.c.l.b16 %v6917
    %v6990 = vunpack.c.l.b16 %v6918
    %v6991 = vunpack.c.l.b16 %v6919
    %v6992 = vunpack.c.l.b16 %v6920
    %v6993 = vunpack.c.l.b16 %v6921
    %v6994 = vunpack.c.l.b16 %v6922
    %v6995 = vunpack.c.l.b16 %v6923
    %v6996 = vunpack.c.l.b16 %v6924
    %v6997 = vunpack.c.l.b16 %v6925
    %v6998 = vpack.c.b16 %v6967, %v6966
    %v6999 = vpack.c.b16 %v6969, %v6968
    %v7000 = vpack.c.b16 %v6971, %v6970
    %v7001 = vpack.c.b16 %v6973, %v6972
    %v7002 = vpack.c.b16 %v6975, %v6974
    %v7003 = vpack.c.b16 %v6977, %v6976
    %v7004 = vpack.c.b16 %v6979, %v6978
    %v7005 = vpack.c.b16 %v6981, %v6980
    %v7006 = vpack.c.b16 %v6983, %v6982
    %v7007 = vpack.c.b16 %v6985, %v6984
    %v7008 = vpack.c.b16 %v6987, %v6986
    %v7009 = vpack.c.b16 %v6989, %v6988
    %v7010 = vpack.c.b16 %v6991, %v6990
    %v7011 = vpack.c.b16 %v6993, %v6992
    %v7012 = vpack.c.b16 %v6995, %v6994
    %v7013 = vpack.c.b16 %v6997, %v6996
    %7030 = vmatprep.subr.bf16.mxu0 0
    %7031 = vmatpush1.bf16.msra.mxu0 %v7005
    %7032 = vmatprep.subr.bf16.mxu0 0
    %7033 = vmatpush1.bf16.msra.mxu0 %v7004
    %7034 = vmatprep.subr.bf16.mxu0 0
    %7035 = vmatpush1.bf16.msra.mxu0 %v7003
    %7036 = vmatprep.subr.bf16.mxu0 0
    %7037 = vmatpush1.bf16.msra.mxu0 %v7002
    %7038 = vmatprep.subr.bf16.mxu0 0
    %7039 = vmatpush1.bf16.msra.mxu0 %v7001
    %7040 = vmatprep.subr.bf16.mxu0 0
    %7041 = vmatpush1.bf16.msra.mxu0 %v7000
    %7042 = vmatprep.subr.bf16.mxu0 0
    %7043 = vmatpush1.bf16.msra.mxu0 %v6999
    %7044 = vmatprep.subr.bf16.mxu0 0
    %7045 = vmatpush1.bf16.msra.mxu0 %v6998
    %7046 = vmatprep.subr.bf16.mxu0 0
    %7047 = vmatpush2.bf16.msra.mxu0 %v7013
    %7048 = vmatprep.subr.bf16.mxu0 0
    %7049 = vmatpush2.bf16.msra.mxu0 %v7012
    %7050 = vmatprep.subr.bf16.mxu0 0
    %7051 = vmatpush2.bf16.msra.mxu0 %v7011
    %7052 = vmatprep.subr.bf16.mxu0 0
    %7053 = vmatpush2.bf16.msra.mxu0 %v7010
    %7054 = vmatprep.subr.bf16.mxu0 0
    %7055 = vmatpush2.bf16.msra.mxu0 %v7009
    %7056 = vmatprep.subr.bf16.mxu0 0
    %7057 = vmatpush2.bf16.msra.mxu0 %v7008
    %7058 = vmatprep.subr.bf16.mxu0 0
    %7059 = vmatpush2.bf16.msra.mxu0 %v7007
    %7060 = vmatprep.subr.bf16.mxu0 0
    %7061 = vmatpush2.bf16.msra.mxu0 %v7006
    %7062 = vmatprep.mubr.bf16.mxu0 %v6892
    %7063 = vmatmul.mubr.bf16.gmra.mxu0 %v6891
    %v7064 = vpop.f32.mrf.mxu0
    %v7065 = vadd.f32 %v6932, %v7064
    %v7066 = vpop.f32.mrf.mxu0
    %v7067 = vpop.f32.mrf.mxu0
    %v7068 = vadd.f32 %v6932, %v7067
    %v7069 = vpop.f32.mrf.mxu0
    %7070 = vdwg.mxu0
    %v7071 = vadd.f32 %v7065, %v6699
    %v7072 = vadd.f32 %v7068, %v6700
    %s7073 = scalar_lea.vmem %s14, 2
    %v7074 = vld [vmem:[%s7073] sm:$0x1]
    %s7075 = scalar_lea.vmem %s15, 2
    %v7076 = vld [vmem:[%s7075] sm:$0x1]
    %7077 = vadd.xlane.f32.xlu0 %v7071
    %v7078 = vpop.xlane.xlu0 %7077
    %7079 = vadd.xlane.f32.xlu0 %v7072
    %v7080 = vpop.xlane.xlu0 %7079
    %v7081 = vmul.f32 %v7078, %v144
    %v7082 = vmul.f32 %v7080, %v144
    %v7083 = vsub.f32 %v7071, %v7081
    %v7084 = vsub.f32 %v7072, %v7082
    %v7085 = vmul.f32 %v7083, %v7083
    %v7086 = vmul.f32 %v7084, %v7084
    %7087 = vadd.xlane.f32.xlu0 %v7085
    %v7088 = vpop.xlane.xlu0 %7087
    %7089 = vadd.xlane.f32.xlu0 %v7086
    %v7090 = vpop.xlane.xlu0 %7089
    %v7091 = vmul.f32 %v7088, %v144
    %v7092 = vmul.f32 %v7090, %v144
    %v7093 = vadd.f32 %v7091, 1e-05
    %v7094 = vadd.f32 %v7092, 1e-05
    %v7095 = vrsqrt.pop %v7093
    %v7096 = vrsqrt.pop %v7094
    %v7097 = vmul.f32 %v7083, %v7095
    %v7098 = vmul.f32 %v7084, %v7096
    %v7100 = vlaneseq
    %v7101 = vshrl.u32 %v7100, 7
    %v7102 = vsub.s32 0, %v7101
    %v7103 = vrot.slane %v7074, %v7102
    %v7105 = vmul.f32 %v7097, %v7103
    %v7106 = vmul.f32 %v7098, %v7103
    %v7108 = vlaneseq
    %v7109 = vshrl.u32 %v7108, 7
    %v7110 = vsub.s32 0, %v7109
    %v7111 = vrot.slane %v7076, %v7110
    %v7113 = vadd.f32 %v7105, %v7111
    %v7114 = vadd.f32 %v7106, %v7111
    %v7115 = vpack.c.bf16 %v7114, %v7113
    %s7116 = scalar_lea.vmem [#allocation3], 576
    %v7117 = vld [vmem:[%s7116] sm:$0xff]
    %v7118 = vld [vmem:[%s7116 + $0x8] sm:$0xf]
    %v7119 = vld [vmem:[%s7116 + $0xc] sm:$0xff]
    %v7120 = vld [vmem:[%s7116 + $0x14] sm:$0xf]
    %v7121 = vld [vmem:[%s7116 + $0x18] sm:$0xff]
    %v7122 = vld [vmem:[%s7116 + $0x20] sm:$0xf]
    %v7123 = vld [vmem:[%s7116 + $0x24] sm:$0xff]
    %v7124 = vld [vmem:[%s7116 + $0x2c] sm:$0xf]
    %v7125 = vld [vmem:[%s7116 + $0x30] sm:$0xff]
    %v7126 = vld [vmem:[%s7116 + $0x38] sm:$0xf]
    %v7127 = vld [vmem:[%s7116 + $0x3c] sm:$0xff]
    %v7128 = vld [vmem:[%s7116 + $0x44] sm:$0xf]
    %v7129 = vld [vmem:[%s7116 + $0x48] sm:$0xff]
    %v7130 = vld [vmem:[%s7116 + $0x50] sm:$0xf]
    %v7131 = vld [vmem:[%s7116 + $0x54] sm:$0xff]
    %v7132 = vld [vmem:[%s7116 + $0x5c] sm:$0xf]
    %v7133 = vld [vmem:[%s7116 + $0x60] sm:$0xff]
    %v7134 = vld [vmem:[%s7116 + $0x68] sm:$0xf]
    %v7135 = vld [vmem:[%s7116 + $0x6c] sm:$0xff]
    %v7136 = vld [vmem:[%s7116 + $0x74] sm:$0xf]
    %v7137 = vld [vmem:[%s7116 + $0x78] sm:$0xff]
    %v7138 = vld [vmem:[%s7116 + $0x80] sm:$0xf]
    %v7139 = vld [vmem:[%s7116 + $0x84] sm:$0xff]
    %v7140 = vld [vmem:[%s7116 + $0x8c] sm:$0xf]
    %v7141 = vld [vmem:[%s7116 + $0x90] sm:$0xff]
    %v7142 = vld [vmem:[%s7116 + $0x98] sm:$0xf]
    %v7143 = vld [vmem:[%s7116 + $0x9c] sm:$0xff]
    %v7144 = vld [vmem:[%s7116 + $0xa4] sm:$0xf]
    %v7145 = vld [vmem:[%s7116 + $0xa8] sm:$0xff]
    %v7146 = vld [vmem:[%s7116 + $0xb0] sm:$0xf]
    %v7147 = vld [vmem:[%s7116 + $0xb4] sm:$0xff]
    %v7148 = vld [vmem:[%s7116 + $0xbc] sm:$0xf]
    %s7149 = scalar_lea.vmem %s5, 9
    %v7150 = vld [vmem:[%s7149] sm:$0x7]
    %v7152 = vlaneseq
    %v7153 = vshrl.u32 %v7152, 7
    %v7154 = vsub.s32 0, %v7153
    %v7155 = vrot.slane %v7150, %v7154
    %v7156 = vlaneseq
    %v7157 = vshrl.u32 %v7156, 7
    %v7158 = vsub.s32 1, %v7157
    %v7159 = vrot.slane %v7150, %v7158
    %v7160 = vlaneseq
    %v7161 = vshrl.u32 %v7160, 7
    %v7162 = vsub.s32 2, %v7161
    %v7163 = vrot.slane %v7150, %v7162
    %v7199 = vunpack.c.l.b16 %v7117
    %v7200 = vunpack.c.h.b16 %v7117
    %v7201 = vunpack.c.l.b16 %v7118
    %v7202 = vunpack.c.l.b16 %v7119
    %v7203 = vunpack.c.h.b16 %v7119
    %v7204 = vunpack.c.l.b16 %v7120
    %v7205 = vunpack.c.l.b16 %v7121
    %v7206 = vunpack.c.h.b16 %v7121
    %v7207 = vunpack.c.l.b16 %v7122
    %v7208 = vunpack.c.l.b16 %v7123
    %v7209 = vunpack.c.h.b16 %v7123
    %v7210 = vunpack.c.l.b16 %v7124
    %v7211 = vunpack.c.l.b16 %v7125
    %v7212 = vunpack.c.h.b16 %v7125
    %v7213 = vunpack.c.l.b16 %v7126
    %v7214 = vunpack.c.l.b16 %v7127
    %v7215 = vunpack.c.h.b16 %v7127
    %v7216 = vunpack.c.l.b16 %v7128
    %v7217 = vunpack.c.l.b16 %v7129
    %v7218 = vunpack.c.h.b16 %v7129
    %v7219 = vunpack.c.l.b16 %v7130
    %v7220 = vunpack.c.l.b16 %v7131
    %v7221 = vunpack.c.h.b16 %v7131
    %v7222 = vunpack.c.l.b16 %v7132
    %v7223 = vunpack.c.l.b16 %v7133
    %v7224 = vunpack.c.h.b16 %v7133
    %v7225 = vunpack.c.l.b16 %v7134
    %v7226 = vunpack.c.l.b16 %v7135
    %v7227 = vunpack.c.h.b16 %v7135
    %v7228 = vunpack.c.l.b16 %v7136
    %v7229 = vunpack.c.l.b16 %v7137
    %v7230 = vunpack.c.h.b16 %v7137
    %v7231 = vunpack.c.l.b16 %v7138
    %v7232 = vunpack.c.l.b16 %v7139
    %v7233 = vunpack.c.h.b16 %v7139
    %v7234 = vunpack.c.l.b16 %v7140
    %v7235 = vunpack.c.l.b16 %v7141
    %v7236 = vunpack.c.h.b16 %v7141
    %v7237 = vunpack.c.l.b16 %v7142
    %v7238 = vunpack.c.l.b16 %v7143
    %v7239 = vunpack.c.h.b16 %v7143
    %v7240 = vunpack.c.l.b16 %v7144
    %v7241 = vunpack.c.l.b16 %v7145
    %v7242 = vunpack.c.h.b16 %v7145
    %v7243 = vunpack.c.l.b16 %v7146
    %v7244 = vunpack.c.l.b16 %v7147
    %v7245 = vunpack.c.h.b16 %v7147
    %v7246 = vunpack.c.l.b16 %v7148
    %v7247 = vpack.c.b16 %v7202, %v7199
    %v7248 = vpack.c.b16 %v7203, %v7200
    %v7249 = vpack.c.b16 %v7204, %v7201
    %v7250 = vpack.c.b16 %v7208, %v7205
    %v7251 = vpack.c.b16 %v7209, %v7206
    %v7252 = vpack.c.b16 %v7210, %v7207
    %v7253 = vpack.c.b16 %v7214, %v7211
    %v7254 = vpack.c.b16 %v7215, %v7212
    %v7255 = vpack.c.b16 %v7216, %v7213
    %v7256 = vpack.c.b16 %v7220, %v7217
    %v7257 = vpack.c.b16 %v7221, %v7218
    %v7258 = vpack.c.b16 %v7222, %v7219
    %v7259 = vpack.c.b16 %v7226, %v7223
    %v7260 = vpack.c.b16 %v7227, %v7224
    %v7261 = vpack.c.b16 %v7228, %v7225
    %v7262 = vpack.c.b16 %v7232, %v7229
    %v7263 = vpack.c.b16 %v7233, %v7230
    %v7264 = vpack.c.b16 %v7234, %v7231
    %v7265 = vpack.c.b16 %v7238, %v7235
    %v7266 = vpack.c.b16 %v7239, %v7236
    %v7267 = vpack.c.b16 %v7240, %v7237
    %v7268 = vpack.c.b16 %v7244, %v7241
    %v7269 = vpack.c.b16 %v7245, %v7242
    %v7270 = vpack.c.b16 %v7246, %v7243
    %7295 = vmatprep.subr.bf16.mxu0 %v7269
    %7296 = vmatpush1.bf16.msra.mxu0 %v7268
    %7297 = vmatprep.subr.bf16.mxu0 %v7266
    %7298 = vmatpush1.bf16.msra.mxu0 %v7265
    %7299 = vmatprep.subr.bf16.mxu0 %v7263
    %7300 = vmatpush1.bf16.msra.mxu0 %v7262
    %7301 = vmatprep.subr.bf16.mxu0 %v7260
    %7302 = vmatpush1.bf16.msra.mxu0 %v7259
    %7303 = vmatprep.subr.bf16.mxu0 %v7257
    %7304 = vmatpush1.bf16.msra.mxu0 %v7256
    %7305 = vmatprep.subr.bf16.mxu0 %v7254
    %7306 = vmatpush1.bf16.msra.mxu0 %v7253
    %7307 = vmatprep.subr.bf16.mxu0 %v7251
    %7308 = vmatpush1.bf16.msra.mxu0 %v7250
    %7309 = vmatprep.subr.bf16.mxu0 %v7248
    %7310 = vmatpush1.bf16.msra.mxu0 %v7247
    %7311 = vmatprep.subr.bf16.mxu0 0
    %7312 = vmatpush2.bf16.msra.mxu0 0
    %7313 = vmatprep.subr.bf16.mxu0 0
    %7314 = vmatpush2.bf16.msra.mxu0 0
    %7315 = vmatprep.subr.bf16.mxu0 0
    %7316 = vmatpush2.bf16.msra.mxu0 0
    %7317 = vmatprep.subr.bf16.mxu0 0
    %7318 = vmatpush2.bf16.msra.mxu0 0
    %7319 = vmatprep.subr.bf16.mxu0 0
    %7320 = vmatpush2.bf16.msra.mxu0 0
    %7321 = vmatprep.subr.bf16.mxu0 0
    %7322 = vmatpush2.bf16.msra.mxu0 0
    %7323 = vmatprep.subr.bf16.mxu0 0
    %7324 = vmatpush2.bf16.msra.mxu0 0
    %7325 = vmatprep.subr.bf16.mxu0 0
    %7326 = vmatpush2.bf16.msra.mxu0 0
    %7327 = vmatprep.mubr.bf16.mxu0 0
    %7328 = vmatmul.mubr.bf16.gmra.mxu0 %v7115
    %v7329 = vpop.f32.mrf.mxu0
    %v7330 = vadd.f32 %v7155, %v7329
    %v7331 = vpop.f32.mrf.mxu0
    %v7332 = vadd.f32 %v7159, %v7331
    %v7333 = vpop.f32.mrf.mxu0
    %v7334 = vadd.f32 %v7155, %v7333
    %v7335 = vpop.f32.mrf.mxu0
    %v7336 = vadd.f32 %v7159, %v7335
    %7337 = vdwg.mxu0
    %7338 = vmatprep.subr.bf16.mxu0 0
    %7339 = vmatpush1.bf16.msra.mxu0 %v7270
    %7340 = vmatprep.subr.bf16.mxu0 0
    %7341 = vmatpush1.bf16.msra.mxu0 %v7267
    %7342 = vmatprep.subr.bf16.mxu0 0
    %7343 = vmatpush1.bf16.msra.mxu0 %v7264
    %7344 = vmatprep.subr.bf16.mxu0 0
    %7345 = vmatpush1.bf16.msra.mxu0 %v7261
    %7346 = vmatprep.subr.bf16.mxu0 0
    %7347 = vmatpush1.bf16.msra.mxu0 %v7258
    %7348 = vmatprep.subr.bf16.mxu0 0
    %7349 = vmatpush1.bf16.msra.mxu0 %v7255
    %7350 = vmatprep.subr.bf16.mxu0 0
    %7351 = vmatpush1.bf16.msra.mxu0 %v7252
    %7352 = vmatprep.subr.bf16.mxu0 0
    %7353 = vmatpush1.bf16.msra.mxu0 %v7249
    %7354 = vmatprep.subr.bf16.mxu0 0
    %7355 = vmatpush2.bf16.msra.mxu0 0
    %7356 = vmatprep.subr.bf16.mxu0 0
    %7357 = vmatpush2.bf16.msra.mxu0 0
    %7358 = vmatprep.subr.bf16.mxu0 0
    %7359 = vmatpush2.bf16.msra.mxu0 0
    %7360 = vmatprep.subr.bf16.mxu0 0
    %7361 = vmatpush2.bf16.msra.mxu0 0
    %7362 = vmatprep.subr.bf16.mxu0 0
    %7363 = vmatpush2.bf16.msra.mxu0 0
    %7364 = vmatprep.subr.bf16.mxu0 0
    %7365 = vmatpush2.bf16.msra.mxu0 0
    %7366 = vmatprep.subr.bf16.mxu0 0
    %7367 = vmatpush2.bf16.msra.mxu0 0
    %7368 = vmatprep.subr.bf16.mxu0 0
    %7369 = vmatpush2.bf16.msra.mxu0 0
    %7370 = vmatprep.mubr.bf16.mxu0 0
    %7371 = vmatmul.mubr.bf16.gmra.mxu0 %v7115
    %v7372 = vpop.f32.mrf.mxu0
    %v7373 = vadd.f32 %v7163, %v7372
    %v7374 = vpop.f32.mrf.mxu0
    %v7375 = vpop.f32.mrf.mxu0
    %v7376 = vadd.f32 %v7163, %v7375
    %v7377 = vpop.f32.mrf.mxu0
    %7378 = vdwg.mxu0
    %v7380 = vsel %vm441, %v7330, 0
    %v7383 = vsel %vm441, %v7332, 0
    %7385 = vmatprep.subr.mxu0 0.0
    %7386 = vmatpush1.xpose.msra.mxu0 0.0
    %7387 = vmatprep.subr.mxu0 0.0
    %7388 = vmatpush1.xpose.msra.mxu0 0.0
    %7389 = vmatprep.subr.mxu0 0.0
    %7390 = vmatpush1.xpose.msra.mxu0 0.0
    %7391 = vmatprep.subr.mxu0 0.0
    %7392 = vmatpush1.xpose.msra.mxu0 0.0
    %7393 = vmatprep.subr.mxu0 0.0
    %7394 = vmatpush1.xpose.msra.mxu0 0.0
    %7395 = vmatprep.subr.mxu0 0.0
    %7396 = vmatpush1.xpose.msra.mxu0 0.0
    %7397 = vmatprep.subr.mxu0 0.0
    %7398 = vmatpush1.xpose.msra.mxu0 0.0
    %7399 = vmatprep.subr.mxu0 0.0
    %7400 = vmatpush1.xpose.msra.mxu0 0.0
    %7401 = vmatprep.subr.mxu0 0.0
    %7402 = vmatpush1.xpose.msra.mxu0 0.0
    %7403 = vmatprep.subr.mxu0 0.0
    %7404 = vmatpush1.xpose.msra.mxu0 0.0
    %7405 = vmatprep.subr.mxu0 0.0
    %7406 = vmatpush1.xpose.msra.mxu0 0.0
    %7407 = vmatprep.subr.mxu0 0.0
    %7408 = vmatpush1.xpose.msra.mxu0 0.0
    %7409 = vmatprep.subr.mxu0 0.0
    %7410 = vmatpush1.xpose.msra.mxu0 0.0
    %7411 = vmatprep.subr.mxu0 0.0
    %7412 = vmatpush1.xpose.msra.mxu0 0.0
    %7413 = vmatprep.subr.mxu0 0.0
    %7414 = vmatpush1.xpose.msra.mxu0 0.0
    %7415 = vmatprep.subr.mxu0 0.0
    %7416 = vmatpush1.xpose.msra.mxu0 %v7383
    %7417 = vmatprep.subr.mxu0 0.0
    %7418 = vmatpush2.xpose.msra.mxu0 0.0
    %7419 = vmatprep.subr.mxu0 0.0
    %7420 = vmatpush2.xpose.msra.mxu0 0.0
    %7421 = vmatprep.subr.mxu0 0.0
    %7422 = vmatpush2.xpose.msra.mxu0 0.0
    %7423 = vmatprep.subr.mxu0 0.0
    %7424 = vmatpush2.xpose.msra.mxu0 0.0
    %7425 = vmatprep.subr.mxu0 0.0
    %7426 = vmatpush2.xpose.msra.mxu0 0.0
    %7427 = vmatprep.subr.mxu0 0.0
    %7428 = vmatpush2.xpose.msra.mxu0 0.0
    %7429 = vmatprep.subr.mxu0 0.0
    %7430 = vmatpush2.xpose.msra.mxu0 0.0
    %7431 = vmatprep.subr.mxu0 0.0
    %7432 = vmatpush2.xpose.msra.mxu0 0.0
    %7433 = vmatprep.subr.mxu0 0.0
    %7434 = vmatpush2.xpose.msra.mxu0 0.0
    %7435 = vmatprep.subr.mxu0 0.0
    %7436 = vmatpush2.xpose.msra.mxu0 0.0
    %7437 = vmatprep.subr.mxu0 0.0
    %7438 = vmatpush2.xpose.msra.mxu0 0.0
    %7439 = vmatprep.subr.mxu0 0.0
    %7440 = vmatpush2.xpose.msra.mxu0 0.0
    %7441 = vmatprep.subr.mxu0 0.0
    %7442 = vmatpush2.xpose.msra.mxu0 0.0
    %7443 = vmatprep.subr.mxu0 0.0
    %7444 = vmatpush2.xpose.msra.mxu0 0.0
    %7445 = vmatprep.subr.mxu0 0.0
    %7446 = vmatpush2.xpose.msra.mxu0 0.0
    %7447 = vmatprep.subr.mxu0 0.0
    %7448 = vmatpush2.xpose.msra.mxu0 0.0
    %7449 = vmatprep.mubr.f32.mxu0 0.0
    %7450 = vmatmul.mubr.f32.gmra.mxu0 %v7380
    %v7451 = vpop.f32.mrf.mxu0
    %v7452 = vadd.f32 0.0, %v7451
    %v7453 = vpop.f32.mrf.mxu0
    %7454 = vdwg.mxu0
    %v7456 = vsel %vm441, %v7334, 0
    %v7459 = vsel %vm441, %v7336, 0
    %7461 = vmatprep.subr.mxu0 0.0
    %7462 = vmatpush1.xpose.msra.mxu0 0.0
    %7463 = vmatprep.subr.mxu0 0.0
    %7464 = vmatpush1.xpose.msra.mxu0 0.0
    %7465 = vmatprep.subr.mxu0 0.0
    %7466 = vmatpush1.xpose.msra.mxu0 0.0
    %7467 = vmatprep.subr.mxu0 0.0
    %7468 = vmatpush1.xpose.msra.mxu0 0.0
    %7469 = vmatprep.subr.mxu0 0.0
    %7470 = vmatpush1.xpose.msra.mxu0 0.0
    %7471 = vmatprep.subr.mxu0 0.0
    %7472 = vmatpush1.xpose.msra.mxu0 0.0
    %7473 = vmatprep.subr.mxu0 0.0
    %7474 = vmatpush1.xpose.msra.mxu0 0.0
    %7475 = vmatprep.subr.mxu0 0.0
    %7476 = vmatpush1.xpose.msra.mxu0 0.0
    %7477 = vmatprep.subr.mxu0 0.0
    %7478 = vmatpush1.xpose.msra.mxu0 0.0
    %7479 = vmatprep.subr.mxu0 0.0
    %7480 = vmatpush1.xpose.msra.mxu0 0.0
    %7481 = vmatprep.subr.mxu0 0.0
    %7482 = vmatpush1.xpose.msra.mxu0 0.0
    %7483 = vmatprep.subr.mxu0 0.0
    %7484 = vmatpush1.xpose.msra.mxu0 0.0
    %7485 = vmatprep.subr.mxu0 0.0
    %7486 = vmatpush1.xpose.msra.mxu0 0.0
    %7487 = vmatprep.subr.mxu0 0.0
    %7488 = vmatpush1.xpose.msra.mxu0 0.0
    %7489 = vmatprep.subr.mxu0 0.0
    %7490 = vmatpush1.xpose.msra.mxu0 0.0
    %7491 = vmatprep.subr.mxu0 0.0
    %7492 = vmatpush1.xpose.msra.mxu0 %v7459
    %7493 = vmatprep.subr.mxu0 0.0
    %7494 = vmatpush2.xpose.msra.mxu0 0.0
    %7495 = vmatprep.subr.mxu0 0.0
    %7496 = vmatpush2.xpose.msra.mxu0 0.0
    %7497 = vmatprep.subr.mxu0 0.0
    %7498 = vmatpush2.xpose.msra.mxu0 0.0
    %7499 = vmatprep.subr.mxu0 0.0
    %7500 = vmatpush2.xpose.msra.mxu0 0.0
    %7501 = vmatprep.subr.mxu0 0.0
    %7502 = vmatpush2.xpose.msra.mxu0 0.0
    %7503 = vmatprep.subr.mxu0 0.0
    %7504 = vmatpush2.xpose.msra.mxu0 0.0
    %7505 = vmatprep.subr.mxu0 0.0
    %7506 = vmatpush2.xpose.msra.mxu0 0.0
    %7507 = vmatprep.subr.mxu0 0.0
    %7508 = vmatpush2.xpose.msra.mxu0 0.0
    %7509 = vmatprep.subr.mxu0 0.0
    %7510 = vmatpush2.xpose.msra.mxu0 0.0
    %7511 = vmatprep.subr.mxu0 0.0
    %7512 = vmatpush2.xpose.msra.mxu0 0.0
    %7513 = vmatprep.subr.mxu0 0.0
    %7514 = vmatpush2.xpose.msra.mxu0 0.0
    %7515 = vmatprep.subr.mxu0 0.0
    %7516 = vmatpush2.xpose.msra.mxu0 0.0
    %7517 = vmatprep.subr.mxu0 0.0
    %7518 = vmatpush2.xpose.msra.mxu0 0.0
    %7519 = vmatprep.subr.mxu0 0.0
    %7520 = vmatpush2.xpose.msra.mxu0 0.0
    %7521 = vmatprep.subr.mxu0 0.0
    %7522 = vmatpush2.xpose.msra.mxu0 0.0
    %7523 = vmatprep.subr.mxu0 0.0
    %7524 = vmatpush2.xpose.msra.mxu0 0.0
    %7525 = vmatprep.mubr.f32.mxu0 0.0
    %7526 = vmatmul.mubr.f32.gmra.mxu0 %v7456
    %v7527 = vpop.f32.mrf.mxu0
    %v7528 = vadd.f32 0.0, %v7527
    %v7529 = vpop.f32.mrf.mxu0
    %7530 = vdwg.mxu0
    %v7531 = vmul.f32 %v7452, 0.17677669
    %v7532 = vmul.f32 %v7528, 0.17677669
    %v7533 = vadd.f32 %v7531, %v599
    %v7534 = vadd.f32 %v7532, %v603
    %v7535 = vsel %vm608, %v7533, -inf
    %7536 = vmax.xlane.f32.xlu0 %v7535
    %v7537 = vpop.xlane.xlu0 %7536
    %v7538 = vsel %vm608, %v7534, -inf
    %7539 = vmax.xlane.f32.xlu0 %v7538
    %v7540 = vpop.xlane.xlu0 %7539
    %v7541 = vsub.f32 %v7533, %v7537
    %v7542 = vsub.f32 %v7534, %v7540
    %v7543 = vmul.f32 %v7541, 1.442695
    %v7544 = vpow.pop %v7543
    %v7545 = vmul.f32 %v7542, 1.442695
    %v7546 = vpow.pop %v7545
    %v7547 = vsel %vm608, %v7544, 0.0
    %7548 = vadd.xlane.f32.xlu0 %v7547
    %v7549 = vpop.xlane.xlu0 %7548
    %v7550 = vsel %vm608, %v7546, 0.0
    %7551 = vadd.xlane.f32.xlu0 %v7550
    %v7552 = vpop.xlane.xlu0 %7551
    %v7553 = vrcp.pop %v7549
    %v7554 = vmul.f32 %v7544, %v7553
    %v7555 = vrcp.pop %v7552
    %v7556 = vmul.f32 %v7546, %v7555
    %v7558 = vsel %vm608, %v7554, 0
    %7560 = vmatprep.subr.mxu0 0.0
    %7561 = vmatpush1.msra.mxu0 0.0
    %7562 = vmatprep.subr.mxu0 0.0
    %7563 = vmatpush1.msra.mxu0 0.0
    %7564 = vmatprep.subr.mxu0 0.0
    %7565 = vmatpush1.msra.mxu0 0.0
    %7566 = vmatprep.subr.mxu0 0.0
    %7567 = vmatpush1.msra.mxu0 0.0
    %7568 = vmatprep.subr.mxu0 0.0
    %7569 = vmatpush1.msra.mxu0 0.0
    %7570 = vmatprep.subr.mxu0 0.0
    %7571 = vmatpush1.msra.mxu0 0.0
    %7572 = vmatprep.subr.mxu0 0.0
    %7573 = vmatpush1.msra.mxu0 0.0
    %7574 = vmatprep.subr.mxu0 0.0
    %7575 = vmatpush1.msra.mxu0 0.0
    %7576 = vmatprep.subr.mxu0 0.0
    %7577 = vmatpush1.msra.mxu0 0.0
    %7578 = vmatprep.subr.mxu0 0.0
    %7579 = vmatpush1.msra.mxu0 0.0
    %7580 = vmatprep.subr.mxu0 0.0
    %7581 = vmatpush1.msra.mxu0 0.0
    %7582 = vmatprep.subr.mxu0 0.0
    %7583 = vmatpush1.msra.mxu0 0.0
    %7584 = vmatprep.subr.mxu0 0.0
    %7585 = vmatpush1.msra.mxu0 0.0
    %7586 = vmatprep.subr.mxu0 0.0
    %7587 = vmatpush1.msra.mxu0 0.0
    %7588 = vmatprep.subr.mxu0 0.0
    %7589 = vmatpush1.msra.mxu0 0.0
    %7590 = vmatprep.subr.mxu0 0.0
    %7591 = vmatpush1.msra.mxu0 %v7373
    %7592 = vmatprep.subr.mxu0 0.0
    %7593 = vmatpush2.msra.mxu0 0.0
    %7594 = vmatprep.subr.mxu0 0.0
    %7595 = vmatpush2.msra.mxu0 0.0
    %7596 = vmatprep.subr.mxu0 0.0
    %7597 = vmatpush2.msra.mxu0 0.0
    %7598 = vmatprep.subr.mxu0 0.0
    %7599 = vmatpush2.msra.mxu0 0.0
    %7600 = vmatprep.subr.mxu0 0.0
    %7601 = vmatpush2.msra.mxu0 0.0
    %7602 = vmatprep.subr.mxu0 0.0
    %7603 = vmatpush2.msra.mxu0 0.0
    %7604 = vmatprep.subr.mxu0 0.0
    %7605 = vmatpush2.msra.mxu0 0.0
    %7606 = vmatprep.subr.mxu0 0.0
    %7607 = vmatpush2.msra.mxu0 0.0
    %7608 = vmatprep.subr.mxu0 0.0
    %7609 = vmatpush2.msra.mxu0 0.0
    %7610 = vmatprep.subr.mxu0 0.0
    %7611 = vmatpush2.msra.mxu0 0.0
    %7612 = vmatprep.subr.mxu0 0.0
    %7613 = vmatpush2.msra.mxu0 0.0
    %7614 = vmatprep.subr.mxu0 0.0
    %7615 = vmatpush2.msra.mxu0 0.0
    %7616 = vmatprep.subr.mxu0 0.0
    %7617 = vmatpush2.msra.mxu0 0.0
    %7618 = vmatprep.subr.mxu0 0.0
    %7619 = vmatpush2.msra.mxu0 0.0
    %7620 = vmatprep.subr.mxu0 0.0
    %7621 = vmatpush2.msra.mxu0 0.0
    %7622 = vmatprep.subr.mxu0 0.0
    %7623 = vmatpush2.msra.mxu0 0.0
    %7624 = vmatprep.mubr.f32.mxu0 0.0
    %7625 = vmatmul.mubr.f32.gmra.mxu0 %v7558
    %v7626 = vpop.f32.mrf.mxu0
    %v7627 = vadd.f32 0.0, %v7626
    %v7628 = vpop.f32.mrf.mxu0
    %7629 = vdwg.mxu0
    %v7631 = vsel %vm608, %v7556, 0
    %7633 = vmatprep.subr.mxu0 0.0
    %7634 = vmatpush1.msra.mxu0 0.0
    %7635 = vmatprep.subr.mxu0 0.0
    %7636 = vmatpush1.msra.mxu0 0.0
    %7637 = vmatprep.subr.mxu0 0.0
    %7638 = vmatpush1.msra.mxu0 0.0
    %7639 = vmatprep.subr.mxu0 0.0
    %7640 = vmatpush1.msra.mxu0 0.0
    %7641 = vmatprep.subr.mxu0 0.0
    %7642 = vmatpush1.msra.mxu0 0.0
    %7643 = vmatprep.subr.mxu0 0.0
    %7644 = vmatpush1.msra.mxu0 0.0
    %7645 = vmatprep.subr.mxu0 0.0
    %7646 = vmatpush1.msra.mxu0 0.0
    %7647 = vmatprep.subr.mxu0 0.0
    %7648 = vmatpush1.msra.mxu0 0.0
    %7649 = vmatprep.subr.mxu0 0.0
    %7650 = vmatpush1.msra.mxu0 0.0
    %7651 = vmatprep.subr.mxu0 0.0
    %7652 = vmatpush1.msra.mxu0 0.0
    %7653 = vmatprep.subr.mxu0 0.0
    %7654 = vmatpush1.msra.mxu0 0.0
    %7655 = vmatprep.subr.mxu0 0.0
    %7656 = vmatpush1.msra.mxu0 0.0
    %7657 = vmatprep.subr.mxu0 0.0
    %7658 = vmatpush1.msra.mxu0 0.0
    %7659 = vmatprep.subr.mxu0 0.0
    %7660 = vmatpush1.msra.mxu0 0.0
    %7661 = vmatprep.subr.mxu0 0.0
    %7662 = vmatpush1.msra.mxu0 0.0
    %7663 = vmatprep.subr.mxu0 0.0
    %7664 = vmatpush1.msra.mxu0 %v7376
    %7665 = vmatprep.subr.mxu0 0.0
    %7666 = vmatpush2.msra.mxu0 0.0
    %7667 = vmatprep.subr.mxu0 0.0
    %7668 = vmatpush2.msra.mxu0 0.0
    %7669 = vmatprep.subr.mxu0 0.0
    %7670 = vmatpush2.msra.mxu0 0.0
    %7671 = vmatprep.subr.mxu0 0.0
    %7672 = vmatpush2.msra.mxu0 0.0
    %7673 = vmatprep.subr.mxu0 0.0
    %7674 = vmatpush2.msra.mxu0 0.0
    %7675 = vmatprep.subr.mxu0 0.0
    %7676 = vmatpush2.msra.mxu0 0.0
    %7677 = vmatprep.subr.mxu0 0.0
    %7678 = vmatpush2.msra.mxu0 0.0
    %7679 = vmatprep.subr.mxu0 0.0
    %7680 = vmatpush2.msra.mxu0 0.0
    %7681 = vmatprep.subr.mxu0 0.0
    %7682 = vmatpush2.msra.mxu0 0.0
    %7683 = vmatprep.subr.mxu0 0.0
    %7684 = vmatpush2.msra.mxu0 0.0
    %7685 = vmatprep.subr.mxu0 0.0
    %7686 = vmatpush2.msra.mxu0 0.0
    %7687 = vmatprep.subr.mxu0 0.0
    %7688 = vmatpush2.msra.mxu0 0.0
    %7689 = vmatprep.subr.mxu0 0.0
    %7690 = vmatpush2.msra.mxu0 0.0
    %7691 = vmatprep.subr.mxu0 0.0
    %7692 = vmatpush2.msra.mxu0 0.0
    %7693 = vmatprep.subr.mxu0 0.0
    %7694 = vmatpush2.msra.mxu0 0.0
    %7695 = vmatprep.subr.mxu0 0.0
    %7696 = vmatpush2.msra.mxu0 0.0
    %7697 = vmatprep.mubr.f32.mxu0 0.0
    %7698 = vmatmul.mubr.f32.gmra.mxu0 %v7631
    %v7699 = vpop.f32.mrf.mxu0
    %v7700 = vadd.f32 0.0, %v7699
    %v7701 = vpop.f32.mrf.mxu0
    %7702 = vdwg.mxu0
    %v7703 = vpack.c.bf16 %v7700, %v7627
    %s7704 = scalar_lea.vmem [#allocation6], 192
    %v7705 = vld [vmem:[%s7704] sm:$0xf]
    %v7706 = vld [vmem:[%s7704 + $0x4] sm:$0xf]
    %v7707 = vld [vmem:[%s7704 + $0x8] sm:$0xf]
    %v7708 = vld [vmem:[%s7704 + $0xc] sm:$0xf]
    %7709 = vrot.lane.b32.xlu0 %v7330, 96
    %v7710 = vpop.permute.xlu0 %7709
    %7711 = vrot.lane.b32.xlu0 %v7332, 96
    %v7712 = vpop.permute.xlu0 %7711
    %v7713 = vsel %vm441, %v7710, 0
    %v7715 = vsel %vm441, %v7712, 0
    %7717 = vmatprep.subr.mxu0 0.0
    %7718 = vmatpush1.xpose.msra.mxu0 0.0
    %7719 = vmatprep.subr.mxu0 0.0
    %7720 = vmatpush1.xpose.msra.mxu0 0.0
    %7721 = vmatprep.subr.mxu0 0.0
    %7722 = vmatpush1.xpose.msra.mxu0 0.0
    %7723 = vmatprep.subr.mxu0 0.0
    %7724 = vmatpush1.xpose.msra.mxu0 0.0
    %7725 = vmatprep.subr.mxu0 0.0
    %7726 = vmatpush1.xpose.msra.mxu0 0.0
    %7727 = vmatprep.subr.mxu0 0.0
    %7728 = vmatpush1.xpose.msra.mxu0 0.0
    %7729 = vmatprep.subr.mxu0 0.0
    %7730 = vmatpush1.xpose.msra.mxu0 0.0
    %7731 = vmatprep.subr.mxu0 0.0
    %7732 = vmatpush1.xpose.msra.mxu0 0.0
    %7733 = vmatprep.subr.mxu0 0.0
    %7734 = vmatpush1.xpose.msra.mxu0 0.0
    %7735 = vmatprep.subr.mxu0 0.0
    %7736 = vmatpush1.xpose.msra.mxu0 0.0
    %7737 = vmatprep.subr.mxu0 0.0
    %7738 = vmatpush1.xpose.msra.mxu0 0.0
    %7739 = vmatprep.subr.mxu0 0.0
    %7740 = vmatpush1.xpose.msra.mxu0 0.0
    %7741 = vmatprep.subr.mxu0 0.0
    %7742 = vmatpush1.xpose.msra.mxu0 0.0
    %7743 = vmatprep.subr.mxu0 0.0
    %7744 = vmatpush1.xpose.msra.mxu0 0.0
    %7745 = vmatprep.subr.mxu0 0.0
    %7746 = vmatpush1.xpose.msra.mxu0 0.0
    %7747 = vmatprep.subr.mxu0 0.0
    %7748 = vmatpush1.xpose.msra.mxu0 %v7715
    %7749 = vmatprep.subr.mxu0 0.0
    %7750 = vmatpush2.xpose.msra.mxu0 0.0
    %7751 = vmatprep.subr.mxu0 0.0
    %7752 = vmatpush2.xpose.msra.mxu0 0.0
    %7753 = vmatprep.subr.mxu0 0.0
    %7754 = vmatpush2.xpose.msra.mxu0 0.0
    %7755 = vmatprep.subr.mxu0 0.0
    %7756 = vmatpush2.xpose.msra.mxu0 0.0
    %7757 = vmatprep.subr.mxu0 0.0
    %7758 = vmatpush2.xpose.msra.mxu0 0.0
    %7759 = vmatprep.subr.mxu0 0.0
    %7760 = vmatpush2.xpose.msra.mxu0 0.0
    %7761 = vmatprep.subr.mxu0 0.0
    %7762 = vmatpush2.xpose.msra.mxu0 0.0
    %7763 = vmatprep.subr.mxu0 0.0
    %7764 = vmatpush2.xpose.msra.mxu0 0.0
    %7765 = vmatprep.subr.mxu0 0.0
    %7766 = vmatpush2.xpose.msra.mxu0 0.0
    %7767 = vmatprep.subr.mxu0 0.0
    %7768 = vmatpush2.xpose.msra.mxu0 0.0
    %7769 = vmatprep.subr.mxu0 0.0
    %7770 = vmatpush2.xpose.msra.mxu0 0.0
    %7771 = vmatprep.subr.mxu0 0.0
    %7772 = vmatpush2.xpose.msra.mxu0 0.0
    %7773 = vmatprep.subr.mxu0 0.0
    %7774 = vmatpush2.xpose.msra.mxu0 0.0
    %7775 = vmatprep.subr.mxu0 0.0
    %7776 = vmatpush2.xpose.msra.mxu0 0.0
    %7777 = vmatprep.subr.mxu0 0.0
    %7778 = vmatpush2.xpose.msra.mxu0 0.0
    %7779 = vmatprep.subr.mxu0 0.0
    %7780 = vmatpush2.xpose.msra.mxu0 0.0
    %7781 = vmatprep.mubr.f32.mxu0 0.0
    %7782 = vmatmul.mubr.f32.gmra.mxu0 %v7713
    %v7783 = vpop.f32.mrf.mxu0
    %v7784 = vadd.f32 0.0, %v7783
    %v7785 = vpop.f32.mrf.mxu0
    %7786 = vdwg.mxu0
    %7787 = vrot.lane.b32.xlu0 %v7334, 96
    %v7788 = vpop.permute.xlu0 %7787
    %7789 = vrot.lane.b32.xlu0 %v7336, 96
    %v7790 = vpop.permute.xlu0 %7789
    %v7791 = vsel %vm441, %v7788, 0
    %v7793 = vsel %vm441, %v7790, 0
    %7795 = vmatprep.subr.mxu0 0.0
    %7796 = vmatpush1.xpose.msra.mxu0 0.0
    %7797 = vmatprep.subr.mxu0 0.0
    %7798 = vmatpush1.xpose.msra.mxu0 0.0
    %7799 = vmatprep.subr.mxu0 0.0
    %7800 = vmatpush1.xpose.msra.mxu0 0.0
    %7801 = vmatprep.subr.mxu0 0.0
    %7802 = vmatpush1.xpose.msra.mxu0 0.0
    %7803 = vmatprep.subr.mxu0 0.0
    %7804 = vmatpush1.xpose.msra.mxu0 0.0
    %7805 = vmatprep.subr.mxu0 0.0
    %7806 = vmatpush1.xpose.msra.mxu0 0.0
    %7807 = vmatprep.subr.mxu0 0.0
    %7808 = vmatpush1.xpose.msra.mxu0 0.0
    %7809 = vmatprep.subr.mxu0 0.0
    %7810 = vmatpush1.xpose.msra.mxu0 0.0
    %7811 = vmatprep.subr.mxu0 0.0
    %7812 = vmatpush1.xpose.msra.mxu0 0.0
    %7813 = vmatprep.subr.mxu0 0.0
    %7814 = vmatpush1.xpose.msra.mxu0 0.0
    %7815 = vmatprep.subr.mxu0 0.0
    %7816 = vmatpush1.xpose.msra.mxu0 0.0
    %7817 = vmatprep.subr.mxu0 0.0
    %7818 = vmatpush1.xpose.msra.mxu0 0.0
    %7819 = vmatprep.subr.mxu0 0.0
    %7820 = vmatpush1.xpose.msra.mxu0 0.0
    %7821 = vmatprep.subr.mxu0 0.0
    %7822 = vmatpush1.xpose.msra.mxu0 0.0
    %7823 = vmatprep.subr.mxu0 0.0
    %7824 = vmatpush1.xpose.msra.mxu0 0.0
    %7825 = vmatprep.subr.mxu0 0.0
    %7826 = vmatpush1.xpose.msra.mxu0 %v7793
    %7827 = vmatprep.subr.mxu0 0.0
    %7828 = vmatpush2.xpose.msra.mxu0 0.0
    %7829 = vmatprep.subr.mxu0 0.0
    %7830 = vmatpush2.xpose.msra.mxu0 0.0
    %7831 = vmatprep.subr.mxu0 0.0
    %7832 = vmatpush2.xpose.msra.mxu0 0.0
    %7833 = vmatprep.subr.mxu0 0.0
    %7834 = vmatpush2.xpose.msra.mxu0 0.0
    %7835 = vmatprep.subr.mxu0 0.0
    %7836 = vmatpush2.xpose.msra.mxu0 0.0
    %7837 = vmatprep.subr.mxu0 0.0
    %7838 = vmatpush2.xpose.msra.mxu0 0.0
    %7839 = vmatprep.subr.mxu0 0.0
    %7840 = vmatpush2.xpose.msra.mxu0 0.0
    %7841 = vmatprep.subr.mxu0 0.0
    %7842 = vmatpush2.xpose.msra.mxu0 0.0
    %7843 = vmatprep.subr.mxu0 0.0
    %7844 = vmatpush2.xpose.msra.mxu0 0.0
    %7845 = vmatprep.subr.mxu0 0.0
    %7846 = vmatpush2.xpose.msra.mxu0 0.0
    %7847 = vmatprep.subr.mxu0 0.0
    %7848 = vmatpush2.xpose.msra.mxu0 0.0
    %7849 = vmatprep.subr.mxu0 0.0
    %7850 = vmatpush2.xpose.msra.mxu0 0.0
    %7851 = vmatprep.subr.mxu0 0.0
    %7852 = vmatpush2.xpose.msra.mxu0 0.0
    %7853 = vmatprep.subr.mxu0 0.0
    %7854 = vmatpush2.xpose.msra.mxu0 0.0
    %7855 = vmatprep.subr.mxu0 0.0
    %7856 = vmatpush2.xpose.msra.mxu0 0.0
    %7857 = vmatprep.subr.mxu0 0.0
    %7858 = vmatpush2.xpose.msra.mxu0 0.0
    %7859 = vmatprep.mubr.f32.mxu0 0.0
    %7860 = vmatmul.mubr.f32.gmra.mxu0 %v7791
    %v7861 = vpop.f32.mrf.mxu0
    %v7862 = vadd.f32 0.0, %v7861
    %v7863 = vpop.f32.mrf.mxu0
    %7864 = vdwg.mxu0
    %v7865 = vmul.f32 %v7784, 0.17677669
    %v7866 = vmul.f32 %v7862, 0.17677669
    %v7867 = vadd.f32 %v7865, %v599
    %v7868 = vadd.f32 %v7866, %v603
    %v7869 = vsel %vm608, %v7867, -inf
    %7870 = vmax.xlane.f32.xlu0 %v7869
    %v7871 = vpop.xlane.xlu0 %7870
    %v7872 = vsel %vm608, %v7868, -inf
    %7873 = vmax.xlane.f32.xlu0 %v7872
    %v7874 = vpop.xlane.xlu0 %7873
    %v7875 = vsub.f32 %v7867, %v7871
    %v7876 = vsub.f32 %v7868, %v7874
    %v7877 = vmul.f32 %v7875, 1.442695
    %v7878 = vpow.pop %v7877
    %v7879 = vmul.f32 %v7876, 1.442695
    %v7880 = vpow.pop %v7879
    %v7881 = vsel %vm608, %v7878, 0.0
    %7882 = vadd.xlane.f32.xlu0 %v7881
    %v7883 = vpop.xlane.xlu0 %7882
    %v7884 = vsel %vm608, %v7880, 0.0
    %7885 = vadd.xlane.f32.xlu0 %v7884
    %v7886 = vpop.xlane.xlu0 %7885
    %v7887 = vrcp.pop %v7883
    %v7888 = vmul.f32 %v7878, %v7887
    %v7889 = vrcp.pop %v7886
    %v7890 = vmul.f32 %v7880, %v7889
    %7892 = vrot.lane.b32.xlu0 %v7373, 96
    %v7893 = vpop.permute.xlu0 %7892
    %v7896 = vsel %vm608, %v7888, 0
    %7898 = vmatprep.subr.mxu0 0.0
    %7899 = vmatpush1.msra.mxu0 0.0
    %7900 = vmatprep.subr.mxu0 0.0
    %7901 = vmatpush1.msra.mxu0 0.0
    %7902 = vmatprep.subr.mxu0 0.0
    %7903 = vmatpush1.msra.mxu0 0.0
    %7904 = vmatprep.subr.mxu0 0.0
    %7905 = vmatpush1.msra.mxu0 0.0
    %7906 = vmatprep.subr.mxu0 0.0
    %7907 = vmatpush1.msra.mxu0 0.0
    %7908 = vmatprep.subr.mxu0 0.0
    %7909 = vmatpush1.msra.mxu0 0.0
    %7910 = vmatprep.subr.mxu0 0.0
    %7911 = vmatpush1.msra.mxu0 0.0
    %7912 = vmatprep.subr.mxu0 0.0
    %7913 = vmatpush1.msra.mxu0 0.0
    %7914 = vmatprep.subr.mxu0 0.0
    %7915 = vmatpush1.msra.mxu0 0.0
    %7916 = vmatprep.subr.mxu0 0.0
    %7917 = vmatpush1.msra.mxu0 0.0
    %7918 = vmatprep.subr.mxu0 0.0
    %7919 = vmatpush1.msra.mxu0 0.0
    %7920 = vmatprep.subr.mxu0 0.0
    %7921 = vmatpush1.msra.mxu0 0.0
    %7922 = vmatprep.subr.mxu0 0.0
    %7923 = vmatpush1.msra.mxu0 0.0
    %7924 = vmatprep.subr.mxu0 0.0
    %7925 = vmatpush1.msra.mxu0 0.0
    %7926 = vmatprep.subr.mxu0 0.0
    %7927 = vmatpush1.msra.mxu0 0.0
    %7928 = vmatprep.subr.mxu0 0.0
    %7929 = vmatpush1.msra.mxu0 %v7893
    %7930 = vmatprep.subr.mxu0 0.0
    %7931 = vmatpush2.msra.mxu0 0.0
    %7932 = vmatprep.subr.mxu0 0.0
    %7933 = vmatpush2.msra.mxu0 0.0
    %7934 = vmatprep.subr.mxu0 0.0
    %7935 = vmatpush2.msra.mxu0 0.0
    %7936 = vmatprep.subr.mxu0 0.0
    %7937 = vmatpush2.msra.mxu0 0.0
    %7938 = vmatprep.subr.mxu0 0.0
    %7939 = vmatpush2.msra.mxu0 0.0
    %7940 = vmatprep.subr.mxu0 0.0
    %7941 = vmatpush2.msra.mxu0 0.0
    %7942 = vmatprep.subr.mxu0 0.0
    %7943 = vmatpush2.msra.mxu0 0.0
    %7944 = vmatprep.subr.mxu0 0.0
    %7945 = vmatpush2.msra.mxu0 0.0
    %7946 = vmatprep.subr.mxu0 0.0
    %7947 = vmatpush2.msra.mxu0 0.0
    %7948 = vmatprep.subr.mxu0 0.0
    %7949 = vmatpush2.msra.mxu0 0.0
    %7950 = vmatprep.subr.mxu0 0.0
    %7951 = vmatpush2.msra.mxu0 0.0
    %7952 = vmatprep.subr.mxu0 0.0
    %7953 = vmatpush2.msra.mxu0 0.0
    %7954 = vmatprep.subr.mxu0 0.0
    %7955 = vmatpush2.msra.mxu0 0.0
    %7956 = vmatprep.subr.mxu0 0.0
    %7957 = vmatpush2.msra.mxu0 0.0
    %7958 = vmatprep.subr.mxu0 0.0
    %7959 = vmatpush2.msra.mxu0 0.0
    %7960 = vmatprep.subr.mxu0 0.0
    %7961 = vmatpush2.msra.mxu0 0.0
    %7962 = vmatprep.mubr.f32.mxu0 0.0
    %7963 = vmatmul.mubr.f32.gmra.mxu0 %v7896
    %v7964 = vpop.f32.mrf.mxu0
    %v7965 = vadd.f32 0.0, %v7964
    %v7966 = vpop.f32.mrf.mxu0
    %7967 = vdwg.mxu0
    %7969 = vrot.lane.b32.xlu0 %v7376, 96
    %v7970 = vpop.permute.xlu0 %7969
    %v7973 = vsel %vm608, %v7890, 0
    %7975 = vmatprep.subr.mxu0 0.0
    %7976 = vmatpush1.msra.mxu0 0.0
    %7977 = vmatprep.subr.mxu0 0.0
    %7978 = vmatpush1.msra.mxu0 0.0
    %7979 = vmatprep.subr.mxu0 0.0
    %7980 = vmatpush1.msra.mxu0 0.0
    %7981 = vmatprep.subr.mxu0 0.0
    %7982 = vmatpush1.msra.mxu0 0.0
    %7983 = vmatprep.subr.mxu0 0.0
    %7984 = vmatpush1.msra.mxu0 0.0
    %7985 = vmatprep.subr.mxu0 0.0
    %7986 = vmatpush1.msra.mxu0 0.0
    %7987 = vmatprep.subr.mxu0 0.0
    %7988 = vmatpush1.msra.mxu0 0.0
    %7989 = vmatprep.subr.mxu0 0.0
    %7990 = vmatpush1.msra.mxu0 0.0
    %7991 = vmatprep.subr.mxu0 0.0
    %7992 = vmatpush1.msra.mxu0 0.0
    %7993 = vmatprep.subr.mxu0 0.0
    %7994 = vmatpush1.msra.mxu0 0.0
    %7995 = vmatprep.subr.mxu0 0.0
    %7996 = vmatpush1.msra.mxu0 0.0
    %7997 = vmatprep.subr.mxu0 0.0
    %7998 = vmatpush1.msra.mxu0 0.0
    %7999 = vmatprep.subr.mxu0 0.0
    %8000 = vmatpush1.msra.mxu0 0.0
    %8001 = vmatprep.subr.mxu0 0.0
    %8002 = vmatpush1.msra.mxu0 0.0
    %8003 = vmatprep.subr.mxu0 0.0
    %8004 = vmatpush1.msra.mxu0 0.0
    %8005 = vmatprep.subr.mxu0 0.0
    %8006 = vmatpush1.msra.mxu0 %v7970
    %8007 = vmatprep.subr.mxu0 0.0
    %8008 = vmatpush2.msra.mxu0 0.0
    %8009 = vmatprep.subr.mxu0 0.0
    %8010 = vmatpush2.msra.mxu0 0.0
    %8011 = vmatprep.subr.mxu0 0.0
    %8012 = vmatpush2.msra.mxu0 0.0
    %8013 = vmatprep.subr.mxu0 0.0
    %8014 = vmatpush2.msra.mxu0 0.0
    %8015 = vmatprep.subr.mxu0 0.0
    %8016 = vmatpush2.msra.mxu0 0.0
    %8017 = vmatprep.subr.mxu0 0.0
    %8018 = vmatpush2.msra.mxu0 0.0
    %8019 = vmatprep.subr.mxu0 0.0
    %8020 = vmatpush2.msra.mxu0 0.0
    %8021 = vmatprep.subr.mxu0 0.0
    %8022 = vmatpush2.msra.mxu0 0.0
    %8023 = vmatprep.subr.mxu0 0.0
    %8024 = vmatpush2.msra.mxu0 0.0
    %8025 = vmatprep.subr.mxu0 0.0
    %8026 = vmatpush2.msra.mxu0 0.0
    %8027 = vmatprep.subr.mxu0 0.0
    %8028 = vmatpush2.msra.mxu0 0.0
    %8029 = vmatprep.subr.mxu0 0.0
    %8030 = vmatpush2.msra.mxu0 0.0
    %8031 = vmatprep.subr.mxu0 0.0
    %8032 = vmatpush2.msra.mxu0 0.0
    %8033 = vmatprep.subr.mxu0 0.0
    %8034 = vmatpush2.msra.mxu0 0.0
    %8035 = vmatprep.subr.mxu0 0.0
    %8036 = vmatpush2.msra.mxu0 0.0
    %8037 = vmatprep.subr.mxu0 0.0
    %8038 = vmatpush2.msra.mxu0 0.0
    %8039 = vmatprep.mubr.f32.mxu0 0.0
    %8040 = vmatmul.mubr.f32.gmra.mxu0 %v7973
    %v8041 = vpop.f32.mrf.mxu0
    %v8042 = vadd.f32 0.0, %v8041
    %v8043 = vpop.f32.mrf.mxu0
    %8044 = vdwg.mxu0
    %v8045 = vpack.c.bf16 %v8042, %v7965
    %s8046 = scalar_lea.vmem [#allocation6], 208
    %v8047 = vld [vmem:[%s8046] sm:$0xf]
    %v8048 = vld [vmem:[%s8046 + $0x4] sm:$0xf]
    %v8049 = vld [vmem:[%s8046 + $0x8] sm:$0xf]
    %v8050 = vld [vmem:[%s8046 + $0xc] sm:$0xf]
    %v8055 = vunpack.c.l.b16 %v8047
    %v8056 = vunpack.c.l.b16 %v8048
    %v8057 = vunpack.c.l.b16 %v8049
    %v8058 = vunpack.c.l.b16 %v8050
    %v8059 = vpack.c.b16 %v8056, %v8055
    %v8060 = vpack.c.b16 %v8058, %v8057
    %v8064 = vsel %vm441, %v8045, 0
    %8066 = vmatprep.subr.bf16.mxu0 0
    %8067 = vmatpush1.bf16.msra.mxu0 0
    %8068 = vmatprep.subr.bf16.mxu0 0
    %8069 = vmatpush1.bf16.msra.mxu0 0
    %8070 = vmatprep.subr.bf16.mxu0 0
    %8071 = vmatpush1.bf16.msra.mxu0 0
    %8072 = vmatprep.subr.bf16.mxu0 0
    %8073 = vmatpush1.bf16.msra.mxu0 0
    %8074 = vmatprep.subr.bf16.mxu0 0
    %8075 = vmatpush1.bf16.msra.mxu0 0
    %8076 = vmatprep.subr.bf16.mxu0 0
    %8077 = vmatpush1.bf16.msra.mxu0 0
    %8078 = vmatprep.subr.bf16.mxu0 0
    %8079 = vmatpush1.bf16.msra.mxu0 %v8060
    %8080 = vmatprep.subr.bf16.mxu0 0
    %8081 = vmatpush1.bf16.msra.mxu0 %v8059
    %8082 = vmatprep.subr.bf16.mxu0 0
    %8083 = vmatpush2.bf16.msra.mxu0 0
    %8084 = vmatprep.subr.bf16.mxu0 0
    %8085 = vmatpush2.bf16.msra.mxu0 0
    %8086 = vmatprep.subr.bf16.mxu0 0
    %8087 = vmatpush2.bf16.msra.mxu0 0
    %8088 = vmatprep.subr.bf16.mxu0 0
    %8089 = vmatpush2.bf16.msra.mxu0 0
    %8090 = vmatprep.subr.bf16.mxu0 0
    %8091 = vmatpush2.bf16.msra.mxu0 0
    %8092 = vmatprep.subr.bf16.mxu0 0
    %8093 = vmatpush2.bf16.msra.mxu0 0
    %8094 = vmatprep.subr.bf16.mxu0 0
    %8095 = vmatpush2.bf16.msra.mxu0 0
    %8096 = vmatprep.subr.bf16.mxu0 0
    %8097 = vmatpush2.bf16.msra.mxu0 0
    %8098 = vmatprep.mubr.bf16.mxu0 0
    %8099 = vmatmul.mubr.bf16.gmra.mxu0 %v8064
    %v8100 = vpop.f32.mrf.mxu0
    %v8101 = vadd.f32 0.0, %v8100
    %v8102 = vpop.f32.mrf.mxu0
    %v8103 = vpop.f32.mrf.mxu0
    %v8104 = vadd.f32 0.0, %v8103
    %v8105 = vpop.f32.mrf.mxu0
    %8106 = vdwg.mxu0
    %v8111 = vunpack.c.l.b16 %v7705
    %v8112 = vunpack.c.l.b16 %v7706
    %v8113 = vunpack.c.l.b16 %v7707
    %v8114 = vunpack.c.l.b16 %v7708
    %v8115 = vpack.c.b16 %v8112, %v8111
    %v8116 = vpack.c.b16 %v8114, %v8113
    %v8120 = vsel %vm441, %v7703, 0
    %8122 = vmatprep.subr.bf16.mxu0 0
    %8123 = vmatpush1.bf16.msra.mxu0 0
    %8124 = vmatprep.subr.bf16.mxu0 0
    %8125 = vmatpush1.bf16.msra.mxu0 0
    %8126 = vmatprep.subr.bf16.mxu0 0
    %8127 = vmatpush1.bf16.msra.mxu0 0
    %8128 = vmatprep.subr.bf16.mxu0 0
    %8129 = vmatpush1.bf16.msra.mxu0 0
    %8130 = vmatprep.subr.bf16.mxu0 0
    %8131 = vmatpush1.bf16.msra.mxu0 0
    %8132 = vmatprep.subr.bf16.mxu0 0
    %8133 = vmatpush1.bf16.msra.mxu0 0
    %8134 = vmatprep.subr.bf16.mxu0 0
    %8135 = vmatpush1.bf16.msra.mxu0 %v8116
    %8136 = vmatprep.subr.bf16.mxu0 0
    %8137 = vmatpush1.bf16.msra.mxu0 %v8115
    %8138 = vmatprep.subr.bf16.mxu0 0
    %8139 = vmatpush2.bf16.msra.mxu0 0
    %8140 = vmatprep.subr.bf16.mxu0 0
    %8141 = vmatpush2.bf16.msra.mxu0 0
    %8142 = vmatprep.subr.bf16.mxu0 0
    %8143 = vmatpush2.bf16.msra.mxu0 0
    %8144 = vmatprep.subr.bf16.mxu0 0
    %8145 = vmatpush2.bf16.msra.mxu0 0
    %8146 = vmatprep.subr.bf16.mxu0 0
    %8147 = vmatpush2.bf16.msra.mxu0 0
    %8148 = vmatprep.subr.bf16.mxu0 0
    %8149 = vmatpush2.bf16.msra.mxu0 0
    %8150 = vmatprep.subr.bf16.mxu0 0
    %8151 = vmatpush2.bf16.msra.mxu0 0
    %8152 = vmatprep.subr.bf16.mxu0 0
    %8153 = vmatpush2.bf16.msra.mxu0 0
    %8154 = vmatprep.mubr.bf16.mxu0 0
    %8155 = vmatmul.mubr.bf16.gmra.mxu0 %v8120
    %v8156 = vpop.f32.mrf.mxu0
    %v8157 = vadd.f32 %v8101, %v8156
    %v8158 = vpop.f32.mrf.mxu0
    %v8159 = vpop.f32.mrf.mxu0
    %v8160 = vadd.f32 %v8104, %v8159
    %v8161 = vpop.f32.mrf.mxu0
    %8162 = vdwg.mxu0
    %8163 = vrot.lane.b32.xlu0 %v7330, 64
    %v8164 = vpop.permute.xlu0 %8163
    %8165 = vrot.lane.b32.xlu0 %v7332, 64
    %v8166 = vpop.permute.xlu0 %8165
    %v8167 = vsel %vm441, %v8164, 0
    %v8169 = vsel %vm441, %v8166, 0
    %8171 = vmatprep.subr.mxu0 0.0
    %8172 = vmatpush1.xpose.msra.mxu0 0.0
    %8173 = vmatprep.subr.mxu0 0.0
    %8174 = vmatpush1.xpose.msra.mxu0 0.0
    %8175 = vmatprep.subr.mxu0 0.0
    %8176 = vmatpush1.xpose.msra.mxu0 0.0
    %8177 = vmatprep.subr.mxu0 0.0
    %8178 = vmatpush1.xpose.msra.mxu0 0.0
    %8179 = vmatprep.subr.mxu0 0.0
    %8180 = vmatpush1.xpose.msra.mxu0 0.0
    %8181 = vmatprep.subr.mxu0 0.0
    %8182 = vmatpush1.xpose.msra.mxu0 0.0
    %8183 = vmatprep.subr.mxu0 0.0
    %8184 = vmatpush1.xpose.msra.mxu0 0.0
    %8185 = vmatprep.subr.mxu0 0.0
    %8186 = vmatpush1.xpose.msra.mxu0 0.0
    %8187 = vmatprep.subr.mxu0 0.0
    %8188 = vmatpush1.xpose.msra.mxu0 0.0
    %8189 = vmatprep.subr.mxu0 0.0
    %8190 = vmatpush1.xpose.msra.mxu0 0.0
    %8191 = vmatprep.subr.mxu0 0.0
    %8192 = vmatpush1.xpose.msra.mxu0 0.0
    %8193 = vmatprep.subr.mxu0 0.0
    %8194 = vmatpush1.xpose.msra.mxu0 0.0
    %8195 = vmatprep.subr.mxu0 0.0
    %8196 = vmatpush1.xpose.msra.mxu0 0.0
    %8197 = vmatprep.subr.mxu0 0.0
    %8198 = vmatpush1.xpose.msra.mxu0 0.0
    %8199 = vmatprep.subr.mxu0 0.0
    %8200 = vmatpush1.xpose.msra.mxu0 0.0
    %8201 = vmatprep.subr.mxu0 0.0
    %8202 = vmatpush1.xpose.msra.mxu0 %v8169
    %8203 = vmatprep.subr.mxu0 0.0
    %8204 = vmatpush2.xpose.msra.mxu0 0.0
    %8205 = vmatprep.subr.mxu0 0.0
    %8206 = vmatpush2.xpose.msra.mxu0 0.0
    %8207 = vmatprep.subr.mxu0 0.0
    %8208 = vmatpush2.xpose.msra.mxu0 0.0
    %8209 = vmatprep.subr.mxu0 0.0
    %8210 = vmatpush2.xpose.msra.mxu0 0.0
    %8211 = vmatprep.subr.mxu0 0.0
    %8212 = vmatpush2.xpose.msra.mxu0 0.0
    %8213 = vmatprep.subr.mxu0 0.0
    %8214 = vmatpush2.xpose.msra.mxu0 0.0
    %8215 = vmatprep.subr.mxu0 0.0
    %8216 = vmatpush2.xpose.msra.mxu0 0.0
    %8217 = vmatprep.subr.mxu0 0.0
    %8218 = vmatpush2.xpose.msra.mxu0 0.0
    %8219 = vmatprep.subr.mxu0 0.0
    %8220 = vmatpush2.xpose.msra.mxu0 0.0
    %8221 = vmatprep.subr.mxu0 0.0
    %8222 = vmatpush2.xpose.msra.mxu0 0.0
    %8223 = vmatprep.subr.mxu0 0.0
    %8224 = vmatpush2.xpose.msra.mxu0 0.0
    %8225 = vmatprep.subr.mxu0 0.0
    %8226 = vmatpush2.xpose.msra.mxu0 0.0
    %8227 = vmatprep.subr.mxu0 0.0
    %8228 = vmatpush2.xpose.msra.mxu0 0.0
    %8229 = vmatprep.subr.mxu0 0.0
    %8230 = vmatpush2.xpose.msra.mxu0 0.0
    %8231 = vmatprep.subr.mxu0 0.0
    %8232 = vmatpush2.xpose.msra.mxu0 0.0
    %8233 = vmatprep.subr.mxu0 0.0
    %8234 = vmatpush2.xpose.msra.mxu0 0.0
    %8235 = vmatprep.mubr.f32.mxu0 0.0
    %8236 = vmatmul.mubr.f32.gmra.mxu0 %v8167
    %v8237 = vpop.f32.mrf.mxu0
    %v8238 = vadd.f32 0.0, %v8237
    %v8239 = vpop.f32.mrf.mxu0
    %8240 = vdwg.mxu0
    %8241 = vrot.lane.b32.xlu0 %v7334, 64
    %v8242 = vpop.permute.xlu0 %8241
    %8243 = vrot.lane.b32.xlu0 %v7336, 64
    %v8244 = vpop.permute.xlu0 %8243
    %v8245 = vsel %vm441, %v8242, 0
    %v8247 = vsel %vm441, %v8244, 0
    %8249 = vmatprep.subr.mxu0 0.0
    %8250 = vmatpush1.xpose.msra.mxu0 0.0
    %8251 = vmatprep.subr.mxu0 0.0
    %8252 = vmatpush1.xpose.msra.mxu0 0.0
    %8253 = vmatprep.subr.mxu0 0.0
    %8254 = vmatpush1.xpose.msra.mxu0 0.0
    %8255 = vmatprep.subr.mxu0 0.0
    %8256 = vmatpush1.xpose.msra.mxu0 0.0
    %8257 = vmatprep.subr.mxu0 0.0
    %8258 = vmatpush1.xpose.msra.mxu0 0.0
    %8259 = vmatprep.subr.mxu0 0.0
    %8260 = vmatpush1.xpose.msra.mxu0 0.0
    %8261 = vmatprep.subr.mxu0 0.0
    %8262 = vmatpush1.xpose.msra.mxu0 0.0
    %8263 = vmatprep.subr.mxu0 0.0
    %8264 = vmatpush1.xpose.msra.mxu0 0.0
    %8265 = vmatprep.subr.mxu0 0.0
    %8266 = vmatpush1.xpose.msra.mxu0 0.0
    %8267 = vmatprep.subr.mxu0 0.0
    %8268 = vmatpush1.xpose.msra.mxu0 0.0
    %8269 = vmatprep.subr.mxu0 0.0
    %8270 = vmatpush1.xpose.msra.mxu0 0.0
    %8271 = vmatprep.subr.mxu0 0.0
    %8272 = vmatpush1.xpose.msra.mxu0 0.0
    %8273 = vmatprep.subr.mxu0 0.0
    %8274 = vmatpush1.xpose.msra.mxu0 0.0
    %8275 = vmatprep.subr.mxu0 0.0
    %8276 = vmatpush1.xpose.msra.mxu0 0.0
    %8277 = vmatprep.subr.mxu0 0.0
    %8278 = vmatpush1.xpose.msra.mxu0 0.0
    %8279 = vmatprep.subr.mxu0 0.0
    %8280 = vmatpush1.xpose.msra.mxu0 %v8247
    %8281 = vmatprep.subr.mxu0 0.0
    %8282 = vmatpush2.xpose.msra.mxu0 0.0
    %8283 = vmatprep.subr.mxu0 0.0
    %8284 = vmatpush2.xpose.msra.mxu0 0.0
    %8285 = vmatprep.subr.mxu0 0.0
    %8286 = vmatpush2.xpose.msra.mxu0 0.0
    %8287 = vmatprep.subr.mxu0 0.0
    %8288 = vmatpush2.xpose.msra.mxu0 0.0
    %8289 = vmatprep.subr.mxu0 0.0
    %8290 = vmatpush2.xpose.msra.mxu0 0.0
    %8291 = vmatprep.subr.mxu0 0.0
    %8292 = vmatpush2.xpose.msra.mxu0 0.0
    %8293 = vmatprep.subr.mxu0 0.0
    %8294 = vmatpush2.xpose.msra.mxu0 0.0
    %8295 = vmatprep.subr.mxu0 0.0
    %8296 = vmatpush2.xpose.msra.mxu0 0.0
    %8297 = vmatprep.subr.mxu0 0.0
    %8298 = vmatpush2.xpose.msra.mxu0 0.0
    %8299 = vmatprep.subr.mxu0 0.0
    %8300 = vmatpush2.xpose.msra.mxu0 0.0
    %8301 = vmatprep.subr.mxu0 0.0
    %8302 = vmatpush2.xpose.msra.mxu0 0.0
    %8303 = vmatprep.subr.mxu0 0.0
    %8304 = vmatpush2.xpose.msra.mxu0 0.0
    %8305 = vmatprep.subr.mxu0 0.0
    %8306 = vmatpush2.xpose.msra.mxu0 0.0
    %8307 = vmatprep.subr.mxu0 0.0
    %8308 = vmatpush2.xpose.msra.mxu0 0.0
    %8309 = vmatprep.subr.mxu0 0.0
    %8310 = vmatpush2.xpose.msra.mxu0 0.0
    %8311 = vmatprep.subr.mxu0 0.0
    %8312 = vmatpush2.xpose.msra.mxu0 0.0
    %8313 = vmatprep.mubr.f32.mxu0 0.0
    %8314 = vmatmul.mubr.f32.gmra.mxu0 %v8245
    %v8315 = vpop.f32.mrf.mxu0
    %v8316 = vadd.f32 0.0, %v8315
    %v8317 = vpop.f32.mrf.mxu0
    %8318 = vdwg.mxu0
    %v8319 = vmul.f32 %v8238, 0.17677669
    %v8320 = vmul.f32 %v8316, 0.17677669
    %v8321 = vadd.f32 %v8319, %v599
    %v8322 = vadd.f32 %v8320, %v603
    %v8323 = vsel %vm608, %v8321, -inf
    %8324 = vmax.xlane.f32.xlu0 %v8323
    %v8325 = vpop.xlane.xlu0 %8324
    %v8326 = vsel %vm608, %v8322, -inf
    %8327 = vmax.xlane.f32.xlu0 %v8326
    %v8328 = vpop.xlane.xlu0 %8327
    %v8329 = vsub.f32 %v8321, %v8325
    %v8330 = vsub.f32 %v8322, %v8328
    %v8331 = vmul.f32 %v8329, 1.442695
    %v8332 = vpow.pop %v8331
    %v8333 = vmul.f32 %v8330, 1.442695
    %v8334 = vpow.pop %v8333
    %v8335 = vsel %vm608, %v8332, 0.0
    %8336 = vadd.xlane.f32.xlu0 %v8335
    %v8337 = vpop.xlane.xlu0 %8336
    %v8338 = vsel %vm608, %v8334, 0.0
    %8339 = vadd.xlane.f32.xlu0 %v8338
    %v8340 = vpop.xlane.xlu0 %8339
    %v8341 = vrcp.pop %v8337
    %v8342 = vmul.f32 %v8332, %v8341
    %v8343 = vrcp.pop %v8340
    %v8344 = vmul.f32 %v8334, %v8343
    %8345 = vrot.lane.b32.xlu0 %v7373, 64
    %v8346 = vpop.permute.xlu0 %8345
    %v8349 = vsel %vm608, %v8342, 0
    %8351 = vmatprep.subr.mxu0 0.0
    %8352 = vmatpush1.msra.mxu0 0.0
    %8353 = vmatprep.subr.mxu0 0.0
    %8354 = vmatpush1.msra.mxu0 0.0
    %8355 = vmatprep.subr.mxu0 0.0
    %8356 = vmatpush1.msra.mxu0 0.0
    %8357 = vmatprep.subr.mxu0 0.0
    %8358 = vmatpush1.msra.mxu0 0.0
    %8359 = vmatprep.subr.mxu0 0.0
    %8360 = vmatpush1.msra.mxu0 0.0
    %8361 = vmatprep.subr.mxu0 0.0
    %8362 = vmatpush1.msra.mxu0 0.0
    %8363 = vmatprep.subr.mxu0 0.0
    %8364 = vmatpush1.msra.mxu0 0.0
    %8365 = vmatprep.subr.mxu0 0.0
    %8366 = vmatpush1.msra.mxu0 0.0
    %8367 = vmatprep.subr.mxu0 0.0
    %8368 = vmatpush1.msra.mxu0 0.0
    %8369 = vmatprep.subr.mxu0 0.0
    %8370 = vmatpush1.msra.mxu0 0.0
    %8371 = vmatprep.subr.mxu0 0.0
    %8372 = vmatpush1.msra.mxu0 0.0
    %8373 = vmatprep.subr.mxu0 0.0
    %8374 = vmatpush1.msra.mxu0 0.0
    %8375 = vmatprep.subr.mxu0 0.0
    %8376 = vmatpush1.msra.mxu0 0.0
    %8377 = vmatprep.subr.mxu0 0.0
    %8378 = vmatpush1.msra.mxu0 0.0
    %8379 = vmatprep.subr.mxu0 0.0
    %8380 = vmatpush1.msra.mxu0 0.0
    %8381 = vmatprep.subr.mxu0 0.0
    %8382 = vmatpush1.msra.mxu0 %v8346
    %8383 = vmatprep.subr.mxu0 0.0
    %8384 = vmatpush2.msra.mxu0 0.0
    %8385 = vmatprep.subr.mxu0 0.0
    %8386 = vmatpush2.msra.mxu0 0.0
    %8387 = vmatprep.subr.mxu0 0.0
    %8388 = vmatpush2.msra.mxu0 0.0
    %8389 = vmatprep.subr.mxu0 0.0
    %8390 = vmatpush2.msra.mxu0 0.0
    %8391 = vmatprep.subr.mxu0 0.0
    %8392 = vmatpush2.msra.mxu0 0.0
    %8393 = vmatprep.subr.mxu0 0.0
    %8394 = vmatpush2.msra.mxu0 0.0
    %8395 = vmatprep.subr.mxu0 0.0
    %8396 = vmatpush2.msra.mxu0 0.0
    %8397 = vmatprep.subr.mxu0 0.0
    %8398 = vmatpush2.msra.mxu0 0.0
    %8399 = vmatprep.subr.mxu0 0.0
    %8400 = vmatpush2.msra.mxu0 0.0
    %8401 = vmatprep.subr.mxu0 0.0
    %8402 = vmatpush2.msra.mxu0 0.0
    %8403 = vmatprep.subr.mxu0 0.0
    %8404 = vmatpush2.msra.mxu0 0.0
    %8405 = vmatprep.subr.mxu0 0.0
    %8406 = vmatpush2.msra.mxu0 0.0
    %8407 = vmatprep.subr.mxu0 0.0
    %8408 = vmatpush2.msra.mxu0 0.0
    %8409 = vmatprep.subr.mxu0 0.0
    %8410 = vmatpush2.msra.mxu0 0.0
    %8411 = vmatprep.subr.mxu0 0.0
    %8412 = vmatpush2.msra.mxu0 0.0
    %8413 = vmatprep.subr.mxu0 0.0
    %8414 = vmatpush2.msra.mxu0 0.0
    %8415 = vmatprep.mubr.f32.mxu0 0.0
    %8416 = vmatmul.mubr.f32.gmra.mxu0 %v8349
    %v8417 = vpop.f32.mrf.mxu0
    %v8418 = vadd.f32 0.0, %v8417
    %v8419 = vpop.f32.mrf.mxu0
    %8420 = vdwg.mxu0
    %8421 = vrot.lane.b32.xlu0 %v7376, 64
    %v8422 = vpop.permute.xlu0 %8421
    %v8425 = vsel %vm608, %v8344, 0
    %8427 = vmatprep.subr.mxu0 0.0
    %8428 = vmatpush1.msra.mxu0 0.0
    %8429 = vmatprep.subr.mxu0 0.0
    %8430 = vmatpush1.msra.mxu0 0.0
    %8431 = vmatprep.subr.mxu0 0.0
    %8432 = vmatpush1.msra.mxu0 0.0
    %8433 = vmatprep.subr.mxu0 0.0
    %8434 = vmatpush1.msra.mxu0 0.0
    %8435 = vmatprep.subr.mxu0 0.0
    %8436 = vmatpush1.msra.mxu0 0.0
    %8437 = vmatprep.subr.mxu0 0.0
    %8438 = vmatpush1.msra.mxu0 0.0
    %8439 = vmatprep.subr.mxu0 0.0
    %8440 = vmatpush1.msra.mxu0 0.0
    %8441 = vmatprep.subr.mxu0 0.0
    %8442 = vmatpush1.msra.mxu0 0.0
    %8443 = vmatprep.subr.mxu0 0.0
    %8444 = vmatpush1.msra.mxu0 0.0
    %8445 = vmatprep.subr.mxu0 0.0
    %8446 = vmatpush1.msra.mxu0 0.0
    %8447 = vmatprep.subr.mxu0 0.0
    %8448 = vmatpush1.msra.mxu0 0.0
    %8449 = vmatprep.subr.mxu0 0.0
    %8450 = vmatpush1.msra.mxu0 0.0
    %8451 = vmatprep.subr.mxu0 0.0
    %8452 = vmatpush1.msra.mxu0 0.0
    %8453 = vmatprep.subr.mxu0 0.0
    %8454 = vmatpush1.msra.mxu0 0.0
    %8455 = vmatprep.subr.mxu0 0.0
    %8456 = vmatpush1.msra.mxu0 0.0
    %8457 = vmatprep.subr.mxu0 0.0
    %8458 = vmatpush1.msra.mxu0 %v8422
    %8459 = vmatprep.subr.mxu0 0.0
    %8460 = vmatpush2.msra.mxu0 0.0
    %8461 = vmatprep.subr.mxu0 0.0
    %8462 = vmatpush2.msra.mxu0 0.0
    %8463 = vmatprep.subr.mxu0 0.0
    %8464 = vmatpush2.msra.mxu0 0.0
    %8465 = vmatprep.subr.mxu0 0.0
    %8466 = vmatpush2.msra.mxu0 0.0
    %8467 = vmatprep.subr.mxu0 0.0
    %8468 = vmatpush2.msra.mxu0 0.0
    %8469 = vmatprep.subr.mxu0 0.0
    %8470 = vmatpush2.msra.mxu0 0.0
    %8471 = vmatprep.subr.mxu0 0.0
    %8472 = vmatpush2.msra.mxu0 0.0
    %8473 = vmatprep.subr.mxu0 0.0
    %8474 = vmatpush2.msra.mxu0 0.0
    %8475 = vmatprep.subr.mxu0 0.0
    %8476 = vmatpush2.msra.mxu0 0.0
    %8477 = vmatprep.subr.mxu0 0.0
    %8478 = vmatpush2.msra.mxu0 0.0
    %8479 = vmatprep.subr.mxu0 0.0
    %8480 = vmatpush2.msra.mxu0 0.0
    %8481 = vmatprep.subr.mxu0 0.0
    %8482 = vmatpush2.msra.mxu0 0.0
    %8483 = vmatprep.subr.mxu0 0.0
    %8484 = vmatpush2.msra.mxu0 0.0
    %8485 = vmatprep.subr.mxu0 0.0
    %8486 = vmatpush2.msra.mxu0 0.0
    %8487 = vmatprep.subr.mxu0 0.0
    %8488 = vmatpush2.msra.mxu0 0.0
    %8489 = vmatprep.subr.mxu0 0.0
    %8490 = vmatpush2.msra.mxu0 0.0
    %8491 = vmatprep.mubr.f32.mxu0 0.0
    %8492 = vmatmul.mubr.f32.gmra.mxu0 %v8425
    %v8493 = vpop.f32.mrf.mxu0
    %v8494 = vadd.f32 0.0, %v8493
    %v8495 = vpop.f32.mrf.mxu0
    %8496 = vdwg.mxu0
    %v8497 = vpack.c.bf16 %v8494, %v8418
    %s8498 = scalar_lea.vmem [#allocation6], 224
    %v8499 = vld [vmem:[%s8498] sm:$0xf]
    %v8500 = vld [vmem:[%s8498 + $0x4] sm:$0xf]
    %v8501 = vld [vmem:[%s8498 + $0x8] sm:$0xf]
    %v8502 = vld [vmem:[%s8498 + $0xc] sm:$0xf]
    %v8507 = vunpack.c.l.b16 %v8499
    %v8508 = vunpack.c.l.b16 %v8500
    %v8509 = vunpack.c.l.b16 %v8501
    %v8510 = vunpack.c.l.b16 %v8502
    %v8511 = vpack.c.b16 %v8508, %v8507
    %v8512 = vpack.c.b16 %v8510, %v8509
    %v8516 = vsel %vm441, %v8497, 0
    %8518 = vmatprep.subr.bf16.mxu0 0
    %8519 = vmatpush1.bf16.msra.mxu0 0
    %8520 = vmatprep.subr.bf16.mxu0 0
    %8521 = vmatpush1.bf16.msra.mxu0 0
    %8522 = vmatprep.subr.bf16.mxu0 0
    %8523 = vmatpush1.bf16.msra.mxu0 0
    %8524 = vmatprep.subr.bf16.mxu0 0
    %8525 = vmatpush1.bf16.msra.mxu0 0
    %8526 = vmatprep.subr.bf16.mxu0 0
    %8527 = vmatpush1.bf16.msra.mxu0 0
    %8528 = vmatprep.subr.bf16.mxu0 0
    %8529 = vmatpush1.bf16.msra.mxu0 0
    %8530 = vmatprep.subr.bf16.mxu0 0
    %8531 = vmatpush1.bf16.msra.mxu0 %v8512
    %8532 = vmatprep.subr.bf16.mxu0 0
    %8533 = vmatpush1.bf16.msra.mxu0 %v8511
    %8534 = vmatprep.subr.bf16.mxu0 0
    %8535 = vmatpush2.bf16.msra.mxu0 0
    %8536 = vmatprep.subr.bf16.mxu0 0
    %8537 = vmatpush2.bf16.msra.mxu0 0
    %8538 = vmatprep.subr.bf16.mxu0 0
    %8539 = vmatpush2.bf16.msra.mxu0 0
    %8540 = vmatprep.subr.bf16.mxu0 0
    %8541 = vmatpush2.bf16.msra.mxu0 0
    %8542 = vmatprep.subr.bf16.mxu0 0
    %8543 = vmatpush2.bf16.msra.mxu0 0
    %8544 = vmatprep.subr.bf16.mxu0 0
    %8545 = vmatpush2.bf16.msra.mxu0 0
    %8546 = vmatprep.subr.bf16.mxu0 0
    %8547 = vmatpush2.bf16.msra.mxu0 0
    %8548 = vmatprep.subr.bf16.mxu0 0
    %8549 = vmatpush2.bf16.msra.mxu0 0
    %8550 = vmatprep.mubr.bf16.mxu0 0
    %8551 = vmatmul.mubr.bf16.gmra.mxu0 %v8516
    %v8552 = vpop.f32.mrf.mxu0
    %v8553 = vadd.f32 0.0, %v8552
    %v8554 = vpop.f32.mrf.mxu0
    %v8555 = vpop.f32.mrf.mxu0
    %v8556 = vadd.f32 0.0, %v8555
    %v8557 = vpop.f32.mrf.mxu0
    %8558 = vdwg.mxu0
    %v8559 = vadd.f32 %v8157, %v8553
    %v8560 = vadd.f32 %v8160, %v8556
    %8561 = vrot.lane.b32.xlu0 %v7330, 32
    %v8562 = vpop.permute.xlu0 %8561
    %8563 = vrot.lane.b32.xlu0 %v7332, 32
    %v8564 = vpop.permute.xlu0 %8563
    %v8565 = vsel %vm441, %v8562, 0
    %v8567 = vsel %vm441, %v8564, 0
    %8569 = vmatprep.subr.mxu0 0.0
    %8570 = vmatpush1.xpose.msra.mxu0 0.0
    %8571 = vmatprep.subr.mxu0 0.0
    %8572 = vmatpush1.xpose.msra.mxu0 0.0
    %8573 = vmatprep.subr.mxu0 0.0
    %8574 = vmatpush1.xpose.msra.mxu0 0.0
    %8575 = vmatprep.subr.mxu0 0.0
    %8576 = vmatpush1.xpose.msra.mxu0 0.0
    %8577 = vmatprep.subr.mxu0 0.0
    %8578 = vmatpush1.xpose.msra.mxu0 0.0
    %8579 = vmatprep.subr.mxu0 0.0
    %8580 = vmatpush1.xpose.msra.mxu0 0.0
    %8581 = vmatprep.subr.mxu0 0.0
    %8582 = vmatpush1.xpose.msra.mxu0 0.0
    %8583 = vmatprep.subr.mxu0 0.0
    %8584 = vmatpush1.xpose.msra.mxu0 0.0
    %8585 = vmatprep.subr.mxu0 0.0
    %8586 = vmatpush1.xpose.msra.mxu0 0.0
    %8587 = vmatprep.subr.mxu0 0.0
    %8588 = vmatpush1.xpose.msra.mxu0 0.0
    %8589 = vmatprep.subr.mxu0 0.0
    %8590 = vmatpush1.xpose.msra.mxu0 0.0
    %8591 = vmatprep.subr.mxu0 0.0
    %8592 = vmatpush1.xpose.msra.mxu0 0.0
    %8593 = vmatprep.subr.mxu0 0.0
    %8594 = vmatpush1.xpose.msra.mxu0 0.0
    %8595 = vmatprep.subr.mxu0 0.0
    %8596 = vmatpush1.xpose.msra.mxu0 0.0
    %8597 = vmatprep.subr.mxu0 0.0
    %8598 = vmatpush1.xpose.msra.mxu0 0.0
    %8599 = vmatprep.subr.mxu0 0.0
    %8600 = vmatpush1.xpose.msra.mxu0 %v8567
    %8601 = vmatprep.subr.mxu0 0.0
    %8602 = vmatpush2.xpose.msra.mxu0 0.0
    %8603 = vmatprep.subr.mxu0 0.0
    %8604 = vmatpush2.xpose.msra.mxu0 0.0
    %8605 = vmatprep.subr.mxu0 0.0
    %8606 = vmatpush2.xpose.msra.mxu0 0.0
    %8607 = vmatprep.subr.mxu0 0.0
    %8608 = vmatpush2.xpose.msra.mxu0 0.0
    %8609 = vmatprep.subr.mxu0 0.0
    %8610 = vmatpush2.xpose.msra.mxu0 0.0
    %8611 = vmatprep.subr.mxu0 0.0
    %8612 = vmatpush2.xpose.msra.mxu0 0.0
    %8613 = vmatprep.subr.mxu0 0.0
    %8614 = vmatpush2.xpose.msra.mxu0 0.0
    %8615 = vmatprep.subr.mxu0 0.0
    %8616 = vmatpush2.xpose.msra.mxu0 0.0
    %8617 = vmatprep.subr.mxu0 0.0
    %8618 = vmatpush2.xpose.msra.mxu0 0.0
    %8619 = vmatprep.subr.mxu0 0.0
    %8620 = vmatpush2.xpose.msra.mxu0 0.0
    %8621 = vmatprep.subr.mxu0 0.0
    %8622 = vmatpush2.xpose.msra.mxu0 0.0
    %8623 = vmatprep.subr.mxu0 0.0
    %8624 = vmatpush2.xpose.msra.mxu0 0.0
    %8625 = vmatprep.subr.mxu0 0.0
    %8626 = vmatpush2.xpose.msra.mxu0 0.0
    %8627 = vmatprep.subr.mxu0 0.0
    %8628 = vmatpush2.xpose.msra.mxu0 0.0
    %8629 = vmatprep.subr.mxu0 0.0
    %8630 = vmatpush2.xpose.msra.mxu0 0.0
    %8631 = vmatprep.subr.mxu0 0.0
    %8632 = vmatpush2.xpose.msra.mxu0 0.0
    %8633 = vmatprep.mubr.f32.mxu0 0.0
    %8634 = vmatmul.mubr.f32.gmra.mxu0 %v8565
    %v8635 = vpop.f32.mrf.mxu0
    %v8636 = vadd.f32 0.0, %v8635
    %v8637 = vpop.f32.mrf.mxu0
    %8638 = vdwg.mxu0
    %8639 = vrot.lane.b32.xlu0 %v7334, 32
    %v8640 = vpop.permute.xlu0 %8639
    %8641 = vrot.lane.b32.xlu0 %v7336, 32
    %v8642 = vpop.permute.xlu0 %8641
    %v8643 = vsel %vm441, %v8640, 0
    %v8645 = vsel %vm441, %v8642, 0
    %8647 = vmatprep.subr.mxu0 0.0
    %8648 = vmatpush1.xpose.msra.mxu0 0.0
    %8649 = vmatprep.subr.mxu0 0.0
    %8650 = vmatpush1.xpose.msra.mxu0 0.0
    %8651 = vmatprep.subr.mxu0 0.0
    %8652 = vmatpush1.xpose.msra.mxu0 0.0
    %8653 = vmatprep.subr.mxu0 0.0
    %8654 = vmatpush1.xpose.msra.mxu0 0.0
    %8655 = vmatprep.subr.mxu0 0.0
    %8656 = vmatpush1.xpose.msra.mxu0 0.0
    %8657 = vmatprep.subr.mxu0 0.0
    %8658 = vmatpush1.xpose.msra.mxu0 0.0
    %8659 = vmatprep.subr.mxu0 0.0
    %8660 = vmatpush1.xpose.msra.mxu0 0.0
    %8661 = vmatprep.subr.mxu0 0.0
    %8662 = vmatpush1.xpose.msra.mxu0 0.0
    %8663 = vmatprep.subr.mxu0 0.0
    %8664 = vmatpush1.xpose.msra.mxu0 0.0
    %8665 = vmatprep.subr.mxu0 0.0
    %8666 = vmatpush1.xpose.msra.mxu0 0.0
    %8667 = vmatprep.subr.mxu0 0.0
    %8668 = vmatpush1.xpose.msra.mxu0 0.0
    %8669 = vmatprep.subr.mxu0 0.0
    %8670 = vmatpush1.xpose.msra.mxu0 0.0
    %8671 = vmatprep.subr.mxu0 0.0
    %8672 = vmatpush1.xpose.msra.mxu0 0.0
    %8673 = vmatprep.subr.mxu0 0.0
    %8674 = vmatpush1.xpose.msra.mxu0 0.0
    %8675 = vmatprep.subr.mxu0 0.0
    %8676 = vmatpush1.xpose.msra.mxu0 0.0
    %8677 = vmatprep.subr.mxu0 0.0
    %8678 = vmatpush1.xpose.msra.mxu0 %v8645
    %8679 = vmatprep.subr.mxu0 0.0
    %8680 = vmatpush2.xpose.msra.mxu0 0.0
    %8681 = vmatprep.subr.mxu0 0.0
    %8682 = vmatpush2.xpose.msra.mxu0 0.0
    %8683 = vmatprep.subr.mxu0 0.0
    %8684 = vmatpush2.xpose.msra.mxu0 0.0
    %8685 = vmatprep.subr.mxu0 0.0
    %8686 = vmatpush2.xpose.msra.mxu0 0.0
    %8687 = vmatprep.subr.mxu0 0.0
    %8688 = vmatpush2.xpose.msra.mxu0 0.0
    %8689 = vmatprep.subr.mxu0 0.0
    %8690 = vmatpush2.xpose.msra.mxu0 0.0
    %8691 = vmatprep.subr.mxu0 0.0
    %8692 = vmatpush2.xpose.msra.mxu0 0.0
    %8693 = vmatprep.subr.mxu0 0.0
    %8694 = vmatpush2.xpose.msra.mxu0 0.0
    %8695 = vmatprep.subr.mxu0 0.0
    %8696 = vmatpush2.xpose.msra.mxu0 0.0
    %8697 = vmatprep.subr.mxu0 0.0
    %8698 = vmatpush2.xpose.msra.mxu0 0.0
    %8699 = vmatprep.subr.mxu0 0.0
    %8700 = vmatpush2.xpose.msra.mxu0 0.0
    %8701 = vmatprep.subr.mxu0 0.0
    %8702 = vmatpush2.xpose.msra.mxu0 0.0
    %8703 = vmatprep.subr.mxu0 0.0
    %8704 = vmatpush2.xpose.msra.mxu0 0.0
    %8705 = vmatprep.subr.mxu0 0.0
    %8706 = vmatpush2.xpose.msra.mxu0 0.0
    %8707 = vmatprep.subr.mxu0 0.0
    %8708 = vmatpush2.xpose.msra.mxu0 0.0
    %8709 = vmatprep.subr.mxu0 0.0
    %8710 = vmatpush2.xpose.msra.mxu0 0.0
    %8711 = vmatprep.mubr.f32.mxu0 0.0
    %8712 = vmatmul.mubr.f32.gmra.mxu0 %v8643
    %v8713 = vpop.f32.mrf.mxu0
    %v8714 = vadd.f32 0.0, %v8713
    %v8715 = vpop.f32.mrf.mxu0
    %8716 = vdwg.mxu0
    %v8717 = vmul.f32 %v8636, 0.17677669
    %v8718 = vmul.f32 %v8714, 0.17677669
    %v8719 = vadd.f32 %v8717, %v599
    %v8720 = vadd.f32 %v8718, %v603
    %v8721 = vsel %vm608, %v8719, -inf
    %8722 = vmax.xlane.f32.xlu0 %v8721
    %v8723 = vpop.xlane.xlu0 %8722
    %v8724 = vsel %vm608, %v8720, -inf
    %8725 = vmax.xlane.f32.xlu0 %v8724
    %v8726 = vpop.xlane.xlu0 %8725
    %v8727 = vsub.f32 %v8719, %v8723
    %v8728 = vsub.f32 %v8720, %v8726
    %v8729 = vmul.f32 %v8727, 1.442695
    %v8730 = vpow.pop %v8729
    %v8731 = vmul.f32 %v8728, 1.442695
    %v8732 = vpow.pop %v8731
    %v8733 = vsel %vm608, %v8730, 0.0
    %8734 = vadd.xlane.f32.xlu0 %v8733
    %v8735 = vpop.xlane.xlu0 %8734
    %v8736 = vsel %vm608, %v8732, 0.0
    %8737 = vadd.xlane.f32.xlu0 %v8736
    %v8738 = vpop.xlane.xlu0 %8737
    %v8739 = vrcp.pop %v8735
    %v8740 = vmul.f32 %v8730, %v8739
    %v8741 = vrcp.pop %v8738
    %v8742 = vmul.f32 %v8732, %v8741
    %8743 = vrot.lane.b32.xlu0 %v7373, 32
    %v8744 = vpop.permute.xlu0 %8743
    %v8747 = vsel %vm608, %v8740, 0
    %8749 = vmatprep.subr.mxu0 0.0
    %8750 = vmatpush1.msra.mxu0 0.0
    %8751 = vmatprep.subr.mxu0 0.0
    %8752 = vmatpush1.msra.mxu0 0.0
    %8753 = vmatprep.subr.mxu0 0.0
    %8754 = vmatpush1.msra.mxu0 0.0
    %8755 = vmatprep.subr.mxu0 0.0
    %8756 = vmatpush1.msra.mxu0 0.0
    %8757 = vmatprep.subr.mxu0 0.0
    %8758 = vmatpush1.msra.mxu0 0.0
    %8759 = vmatprep.subr.mxu0 0.0
    %8760 = vmatpush1.msra.mxu0 0.0
    %8761 = vmatprep.subr.mxu0 0.0
    %8762 = vmatpush1.msra.mxu0 0.0
    %8763 = vmatprep.subr.mxu0 0.0
    %8764 = vmatpush1.msra.mxu0 0.0
    %8765 = vmatprep.subr.mxu0 0.0
    %8766 = vmatpush1.msra.mxu0 0.0
    %8767 = vmatprep.subr.mxu0 0.0
    %8768 = vmatpush1.msra.mxu0 0.0
    %8769 = vmatprep.subr.mxu0 0.0
    %8770 = vmatpush1.msra.mxu0 0.0
    %8771 = vmatprep.subr.mxu0 0.0
    %8772 = vmatpush1.msra.mxu0 0.0
    %8773 = vmatprep.subr.mxu0 0.0
    %8774 = vmatpush1.msra.mxu0 0.0
    %8775 = vmatprep.subr.mxu0 0.0
    %8776 = vmatpush1.msra.mxu0 0.0
    %8777 = vmatprep.subr.mxu0 0.0
    %8778 = vmatpush1.msra.mxu0 0.0
    %8779 = vmatprep.subr.mxu0 0.0
    %8780 = vmatpush1.msra.mxu0 %v8744
    %8781 = vmatprep.subr.mxu0 0.0
    %8782 = vmatpush2.msra.mxu0 0.0
    %8783 = vmatprep.subr.mxu0 0.0
    %8784 = vmatpush2.msra.mxu0 0.0
    %8785 = vmatprep.subr.mxu0 0.0
    %8786 = vmatpush2.msra.mxu0 0.0
    %8787 = vmatprep.subr.mxu0 0.0
    %8788 = vmatpush2.msra.mxu0 0.0
    %8789 = vmatprep.subr.mxu0 0.0
    %8790 = vmatpush2.msra.mxu0 0.0
    %8791 = vmatprep.subr.mxu0 0.0
    %8792 = vmatpush2.msra.mxu0 0.0
    %8793 = vmatprep.subr.mxu0 0.0
    %8794 = vmatpush2.msra.mxu0 0.0
    %8795 = vmatprep.subr.mxu0 0.0
    %8796 = vmatpush2.msra.mxu0 0.0
    %8797 = vmatprep.subr.mxu0 0.0
    %8798 = vmatpush2.msra.mxu0 0.0
    %8799 = vmatprep.subr.mxu0 0.0
    %8800 = vmatpush2.msra.mxu0 0.0
    %8801 = vmatprep.subr.mxu0 0.0
    %8802 = vmatpush2.msra.mxu0 0.0
    %8803 = vmatprep.subr.mxu0 0.0
    %8804 = vmatpush2.msra.mxu0 0.0
    %8805 = vmatprep.subr.mxu0 0.0
    %8806 = vmatpush2.msra.mxu0 0.0
    %8807 = vmatprep.subr.mxu0 0.0
    %8808 = vmatpush2.msra.mxu0 0.0
    %8809 = vmatprep.subr.mxu0 0.0
    %8810 = vmatpush2.msra.mxu0 0.0
    %8811 = vmatprep.subr.mxu0 0.0
    %8812 = vmatpush2.msra.mxu0 0.0
    %8813 = vmatprep.mubr.f32.mxu0 0.0
    %8814 = vmatmul.mubr.f32.gmra.mxu0 %v8747
    %v8815 = vpop.f32.mrf.mxu0
    %v8816 = vadd.f32 0.0, %v8815
    %v8817 = vpop.f32.mrf.mxu0
    %8818 = vdwg.mxu0
    %8819 = vrot.lane.b32.xlu0 %v7376, 32
    %v8820 = vpop.permute.xlu0 %8819
    %v8823 = vsel %vm608, %v8742, 0
    %8825 = vmatprep.subr.mxu0 0.0
    %8826 = vmatpush1.msra.mxu0 0.0
    %8827 = vmatprep.subr.mxu0 0.0
    %8828 = vmatpush1.msra.mxu0 0.0
    %8829 = vmatprep.subr.mxu0 0.0
    %8830 = vmatpush1.msra.mxu0 0.0
    %8831 = vmatprep.subr.mxu0 0.0
    %8832 = vmatpush1.msra.mxu0 0.0
    %8833 = vmatprep.subr.mxu0 0.0
    %8834 = vmatpush1.msra.mxu0 0.0
    %8835 = vmatprep.subr.mxu0 0.0
    %8836 = vmatpush1.msra.mxu0 0.0
    %8837 = vmatprep.subr.mxu0 0.0
    %8838 = vmatpush1.msra.mxu0 0.0
    %8839 = vmatprep.subr.mxu0 0.0
    %8840 = vmatpush1.msra.mxu0 0.0
    %8841 = vmatprep.subr.mxu0 0.0
    %8842 = vmatpush1.msra.mxu0 0.0
    %8843 = vmatprep.subr.mxu0 0.0
    %8844 = vmatpush1.msra.mxu0 0.0
    %8845 = vmatprep.subr.mxu0 0.0
    %8846 = vmatpush1.msra.mxu0 0.0
    %8847 = vmatprep.subr.mxu0 0.0
    %8848 = vmatpush1.msra.mxu0 0.0
    %8849 = vmatprep.subr.mxu0 0.0
    %8850 = vmatpush1.msra.mxu0 0.0
    %8851 = vmatprep.subr.mxu0 0.0
    %8852 = vmatpush1.msra.mxu0 0.0
    %8853 = vmatprep.subr.mxu0 0.0
    %8854 = vmatpush1.msra.mxu0 0.0
    %8855 = vmatprep.subr.mxu0 0.0
    %8856 = vmatpush1.msra.mxu0 %v8820
    %8857 = vmatprep.subr.mxu0 0.0
    %8858 = vmatpush2.msra.mxu0 0.0
    %8859 = vmatprep.subr.mxu0 0.0
    %8860 = vmatpush2.msra.mxu0 0.0
    %8861 = vmatprep.subr.mxu0 0.0
    %8862 = vmatpush2.msra.mxu0 0.0
    %8863 = vmatprep.subr.mxu0 0.0
    %8864 = vmatpush2.msra.mxu0 0.0
    %8865 = vmatprep.subr.mxu0 0.0
    %8866 = vmatpush2.msra.mxu0 0.0
    %8867 = vmatprep.subr.mxu0 0.0
    %8868 = vmatpush2.msra.mxu0 0.0
    %8869 = vmatprep.subr.mxu0 0.0
    %8870 = vmatpush2.msra.mxu0 0.0
    %8871 = vmatprep.subr.mxu0 0.0
    %8872 = vmatpush2.msra.mxu0 0.0
    %8873 = vmatprep.subr.mxu0 0.0
    %8874 = vmatpush2.msra.mxu0 0.0
    %8875 = vmatprep.subr.mxu0 0.0
    %8876 = vmatpush2.msra.mxu0 0.0
    %8877 = vmatprep.subr.mxu0 0.0
    %8878 = vmatpush2.msra.mxu0 0.0
    %8879 = vmatprep.subr.mxu0 0.0
    %8880 = vmatpush2.msra.mxu0 0.0
    %8881 = vmatprep.subr.mxu0 0.0
    %8882 = vmatpush2.msra.mxu0 0.0
    %8883 = vmatprep.subr.mxu0 0.0
    %8884 = vmatpush2.msra.mxu0 0.0
    %8885 = vmatprep.subr.mxu0 0.0
    %8886 = vmatpush2.msra.mxu0 0.0
    %8887 = vmatprep.subr.mxu0 0.0
    %8888 = vmatpush2.msra.mxu0 0.0
    %8889 = vmatprep.mubr.f32.mxu0 0.0
    %8890 = vmatmul.mubr.f32.gmra.mxu0 %v8823
    %v8891 = vpop.f32.mrf.mxu0
    %v8892 = vadd.f32 0.0, %v8891
    %v8893 = vpop.f32.mrf.mxu0
    %8894 = vdwg.mxu0
    %v8895 = vpack.c.bf16 %v8892, %v8816
    %s8896 = scalar_lea.vmem [#allocation6], 240
    %v8897 = vld [vmem:[%s8896] sm:$0xf]
    %v8898 = vld [vmem:[%s8896 + $0x4] sm:$0xf]
    %v8899 = vld [vmem:[%s8896 + $0x8] sm:$0xf]
    %v8900 = vld [vmem:[%s8896 + $0xc] sm:$0xf]
    %v8905 = vunpack.c.l.b16 %v8897
    %v8906 = vunpack.c.l.b16 %v8898
    %v8907 = vunpack.c.l.b16 %v8899
    %v8908 = vunpack.c.l.b16 %v8900
    %v8909 = vpack.c.b16 %v8906, %v8905
    %v8910 = vpack.c.b16 %v8908, %v8907
    %v8914 = vsel %vm441, %v8895, 0
    %8916 = vmatprep.subr.bf16.mxu0 0
    %8917 = vmatpush1.bf16.msra.mxu0 0
    %8918 = vmatprep.subr.bf16.mxu0 0
    %8919 = vmatpush1.bf16.msra.mxu0 0
    %8920 = vmatprep.subr.bf16.mxu0 0
    %8921 = vmatpush1.bf16.msra.mxu0 0
    %8922 = vmatprep.subr.bf16.mxu0 0
    %8923 = vmatpush1.bf16.msra.mxu0 0
    %8924 = vmatprep.subr.bf16.mxu0 0
    %8925 = vmatpush1.bf16.msra.mxu0 0
    %8926 = vmatprep.subr.bf16.mxu0 0
    %8927 = vmatpush1.bf16.msra.mxu0 0
    %8928 = vmatprep.subr.bf16.mxu0 0
    %8929 = vmatpush1.bf16.msra.mxu0 %v8910
    %8930 = vmatprep.subr.bf16.mxu0 0
    %8931 = vmatpush1.bf16.msra.mxu0 %v8909
    %8932 = vmatprep.subr.bf16.mxu0 0
    %8933 = vmatpush2.bf16.msra.mxu0 0
    %8934 = vmatprep.subr.bf16.mxu0 0
    %8935 = vmatpush2.bf16.msra.mxu0 0
    %8936 = vmatprep.subr.bf16.mxu0 0
    %8937 = vmatpush2.bf16.msra.mxu0 0
    %8938 = vmatprep.subr.bf16.mxu0 0
    %8939 = vmatpush2.bf16.msra.mxu0 0
    %8940 = vmatprep.subr.bf16.mxu0 0
    %8941 = vmatpush2.bf16.msra.mxu0 0
    %8942 = vmatprep.subr.bf16.mxu0 0
    %8943 = vmatpush2.bf16.msra.mxu0 0
    %8944 = vmatprep.subr.bf16.mxu0 0
    %8945 = vmatpush2.bf16.msra.mxu0 0
    %8946 = vmatprep.subr.bf16.mxu0 0
    %8947 = vmatpush2.bf16.msra.mxu0 0
    %8948 = vmatprep.mubr.bf16.mxu0 0
    %8949 = vmatmul.mubr.bf16.gmra.mxu0 %v8914
    %v8950 = vpop.f32.mrf.mxu0
    %v8951 = vadd.f32 0.0, %v8950
    %v8952 = vpop.f32.mrf.mxu0
    %v8953 = vpop.f32.mrf.mxu0
    %v8954 = vadd.f32 0.0, %v8953
    %v8955 = vpop.f32.mrf.mxu0
    %8956 = vdwg.mxu0
    %v8957 = vadd.f32 %v8559, %v8951
    %v8958 = vadd.f32 %v8560, %v8954
    %s8959 = scalar_lea.vmem %s7, 3
    %v8960 = vld [vmem:[%s8959] sm:$0x1]
    %v8962 = vlaneseq
    %v8963 = vshrl.u32 %v8962, 7
    %v8964 = vsub.s32 0, %v8963
    %v8965 = vrot.slane %v8960, %v8964
    %v8967 = vadd.f32 %v8957, %v8965
    %v8968 = vadd.f32 %v8958, %v8965
    %v8969 = vadd.f32 %v8967, %v7113
    %v8970 = vadd.f32 %v8968, %v7114
    %s8971 = scalar_lea.vmem %s8, 3
    %v8972 = vld [vmem:[%s8971] sm:$0x1]
    %s8973 = scalar_lea.vmem %s9, 3
    %v8974 = vld [vmem:[%s8973] sm:$0x1]
    %8975 = vadd.xlane.f32.xlu0 %v8969
    %v8976 = vpop.xlane.xlu0 %8975
    %8977 = vadd.xlane.f32.xlu0 %v8970
    %v8978 = vpop.xlane.xlu0 %8977
    %v8979 = vmul.f32 %v8976, %v144
    %v8980 = vmul.f32 %v8978, %v144
    %v8981 = vsub.f32 %v8969, %v8979
    %v8982 = vsub.f32 %v8970, %v8980
    %v8983 = vmul.f32 %v8981, %v8981
    %v8984 = vmul.f32 %v8982, %v8982
    %8985 = vadd.xlane.f32.xlu0 %v8983
    %v8986 = vpop.xlane.xlu0 %8985
    %8987 = vadd.xlane.f32.xlu0 %v8984
    %v8988 = vpop.xlane.xlu0 %8987
    %v8989 = vmul.f32 %v8986, %v144
    %v8990 = vmul.f32 %v8988, %v144
    %v8991 = vadd.f32 %v8989, 1e-05
    %v8992 = vadd.f32 %v8990, 1e-05
    %v8993 = vrsqrt.pop %v8991
    %v8994 = vrsqrt.pop %v8992
    %v8995 = vmul.f32 %v8981, %v8993
    %v8996 = vmul.f32 %v8982, %v8994
    %v8998 = vlaneseq
    %v8999 = vshrl.u32 %v8998, 7
    %v9000 = vsub.s32 0, %v8999
    %v9001 = vrot.slane %v8972, %v9000
    %v9003 = vmul.f32 %v8995, %v9001
    %v9004 = vmul.f32 %v8996, %v9001
    %v9006 = vlaneseq
    %v9007 = vshrl.u32 %v9006, 7
    %v9008 = vsub.s32 0, %v9007
    %v9009 = vrot.slane %v8974, %v9008
    %v9011 = vadd.f32 %v9003, %v9009
    %v9012 = vadd.f32 %v9004, %v9009
    %v9013 = vpack.c.bf16 %v9012, %v9011
    %s9014 = scalar_lea.vmem %s10, 384
    %v9015 = vld [vmem:[%s9014] sm:$0xff]
    %v9016 = vld [vmem:[%s9014 + $0x8] sm:$0xff]
    %v9017 = vld [vmem:[%s9014 + $0x10] sm:$0xff]
    %v9018 = vld [vmem:[%s9014 + $0x18] sm:$0xff]
    %v9019 = vld [vmem:[%s9014 + $0x20] sm:$0xff]
    %v9020 = vld [vmem:[%s9014 + $0x28] sm:$0xff]
    %v9021 = vld [vmem:[%s9014 + $0x30] sm:$0xff]
    %v9022 = vld [vmem:[%s9014 + $0x38] sm:$0xff]
    %v9023 = vld [vmem:[%s9014 + $0x40] sm:$0xff]
    %v9024 = vld [vmem:[%s9014 + $0x48] sm:$0xff]
    %v9025 = vld [vmem:[%s9014 + $0x50] sm:$0xff]
    %v9026 = vld [vmem:[%s9014 + $0x58] sm:$0xff]
    %v9027 = vld [vmem:[%s9014 + $0x60] sm:$0xff]
    %v9028 = vld [vmem:[%s9014 + $0x68] sm:$0xff]
    %v9029 = vld [vmem:[%s9014 + $0x70] sm:$0xff]
    %v9030 = vld [vmem:[%s9014 + $0x78] sm:$0xff]
    %s9031 = scalar_lea.vmem %s11, 6
    %v9032 = vld [vmem:[%s9031] sm:$0x3]
    %v9034 = vlaneseq
    %v9035 = vshrl.u32 %v9034, 7
    %v9036 = vsub.s32 0, %v9035
    %v9037 = vrot.slane %v9032, %v9036
    %v9038 = vlaneseq
    %v9039 = vshrl.u32 %v9038, 7
    %v9040 = vsub.s32 1, %v9039
    %v9041 = vrot.slane %v9032, %v9040
    %v9060 = vunpack.c.l.b16 %v9015
    %v9061 = vunpack.c.h.b16 %v9015
    %v9062 = vunpack.c.l.b16 %v9016
    %v9063 = vunpack.c.h.b16 %v9016
    %v9064 = vunpack.c.l.b16 %v9017
    %v9065 = vunpack.c.h.b16 %v9017
    %v9066 = vunpack.c.l.b16 %v9018
    %v9067 = vunpack.c.h.b16 %v9018
    %v9068 = vunpack.c.l.b16 %v9019
    %v9069 = vunpack.c.h.b16 %v9019
    %v9070 = vunpack.c.l.b16 %v9020
    %v9071 = vunpack.c.h.b16 %v9020
    %v9072 = vunpack.c.l.b16 %v9021
    %v9073 = vunpack.c.h.b16 %v9021
    %v9074 = vunpack.c.l.b16 %v9022
    %v9075 = vunpack.c.h.b16 %v9022
    %v9076 = vunpack.c.l.b16 %v9023
    %v9077 = vunpack.c.h.b16 %v9023
    %v9078 = vunpack.c.l.b16 %v9024
    %v9079 = vunpack.c.h.b16 %v9024
    %v9080 = vunpack.c.l.b16 %v9025
    %v9081 = vunpack.c.h.b16 %v9025
    %v9082 = vunpack.c.l.b16 %v9026
    %v9083 = vunpack.c.h.b16 %v9026
    %v9084 = vunpack.c.l.b16 %v9027
    %v9085 = vunpack.c.h.b16 %v9027
    %v9086 = vunpack.c.l.b16 %v9028
    %v9087 = vunpack.c.h.b16 %v9028
    %v9088 = vunpack.c.l.b16 %v9029
    %v9089 = vunpack.c.h.b16 %v9029
    %v9090 = vunpack.c.l.b16 %v9030
    %v9091 = vunpack.c.h.b16 %v9030
    %v9092 = vpack.c.b16 %v9062, %v9060
    %v9093 = vpack.c.b16 %v9063, %v9061
    %v9094 = vpack.c.b16 %v9066, %v9064
    %v9095 = vpack.c.b16 %v9067, %v9065
    %v9096 = vpack.c.b16 %v9070, %v9068
    %v9097 = vpack.c.b16 %v9071, %v9069
    %v9098 = vpack.c.b16 %v9074, %v9072
    %v9099 = vpack.c.b16 %v9075, %v9073
    %v9100 = vpack.c.b16 %v9078, %v9076
    %v9101 = vpack.c.b16 %v9079, %v9077
    %v9102 = vpack.c.b16 %v9082, %v9080
    %v9103 = vpack.c.b16 %v9083, %v9081
    %v9104 = vpack.c.b16 %v9086, %v9084
    %v9105 = vpack.c.b16 %v9087, %v9085
    %v9106 = vpack.c.b16 %v9090, %v9088
    %v9107 = vpack.c.b16 %v9091, %v9089
    %9124 = vmatprep.subr.bf16.mxu0 %v9107
    %9125 = vmatpush1.bf16.msra.mxu0 %v9106
    %9126 = vmatprep.subr.bf16.mxu0 %v9105
    %9127 = vmatpush1.bf16.msra.mxu0 %v9104
    %9128 = vmatprep.subr.bf16.mxu0 %v9103
    %9129 = vmatpush1.bf16.msra.mxu0 %v9102
    %9130 = vmatprep.subr.bf16.mxu0 %v9101
    %9131 = vmatpush1.bf16.msra.mxu0 %v9100
    %9132 = vmatprep.subr.bf16.mxu0 %v9099
    %9133 = vmatpush1.bf16.msra.mxu0 %v9098
    %9134 = vmatprep.subr.bf16.mxu0 %v9097
    %9135 = vmatpush1.bf16.msra.mxu0 %v9096
    %9136 = vmatprep.subr.bf16.mxu0 %v9095
    %9137 = vmatpush1.bf16.msra.mxu0 %v9094
    %9138 = vmatprep.subr.bf16.mxu0 %v9093
    %9139 = vmatpush1.bf16.msra.mxu0 %v9092
    %9140 = vmatprep.subr.bf16.mxu0 0
    %9141 = vmatpush2.bf16.msra.mxu0 0
    %9142 = vmatprep.subr.bf16.mxu0 0
    %9143 = vmatpush2.bf16.msra.mxu0 0
    %9144 = vmatprep.subr.bf16.mxu0 0
    %9145 = vmatpush2.bf16.msra.mxu0 0
    %9146 = vmatprep.subr.bf16.mxu0 0
    %9147 = vmatpush2.bf16.msra.mxu0 0
    %9148 = vmatprep.subr.bf16.mxu0 0
    %9149 = vmatpush2.bf16.msra.mxu0 0
    %9150 = vmatprep.subr.bf16.mxu0 0
    %9151 = vmatpush2.bf16.msra.mxu0 0
    %9152 = vmatprep.subr.bf16.mxu0 0
    %9153 = vmatpush2.bf16.msra.mxu0 0
    %9154 = vmatprep.subr.bf16.mxu0 0
    %9155 = vmatpush2.bf16.msra.mxu0 0
    %9156 = vmatprep.mubr.bf16.mxu0 0
    %9157 = vmatmul.mubr.bf16.gmra.mxu0 %v9013
    %v9158 = vpop.f32.mrf.mxu0
    %v9159 = vadd.f32 %v9037, %v9158
    %v9160 = vpop.f32.mrf.mxu0
    %v9161 = vadd.f32 %v9041, %v9160
    %v9162 = vpop.f32.mrf.mxu0
    %v9163 = vadd.f32 %v9037, %v9162
    %v9164 = vpop.f32.mrf.mxu0
    %v9165 = vadd.f32 %v9041, %v9164
    %9166 = vdwg.mxu0
    %v9167 = vmul.f32 %v9159, 0.5
    %v9168 = vmul.f32 %v9161, 0.5
    %v9169 = vmul.f32 %v9163, 0.5
    %v9170 = vmul.f32 %v9165, 0.5
    %v9171 = vmul.f32 %v9159, 0.044715
    %v9172 = vmul.f32 %v9161, 0.044715
    %v9173 = vmul.f32 %v9163, 0.044715
    %v9174 = vmul.f32 %v9165, 0.044715
    %v9175 = vmul.f32 %v9171, %v9159
    %v9176 = vmul.f32 %v9172, %v9161
    %v9177 = vmul.f32 %v9173, %v9163
    %v9178 = vmul.f32 %v9174, %v9165
    %v9179 = vmul.f32 %v9175, %v9159
    %v9180 = vmul.f32 %v9176, %v9161
    %v9181 = vmul.f32 %v9177, %v9163
    %v9182 = vmul.f32 %v9178, %v9165
    %v9183 = vadd.f32 %v9159, %v9179
    %v9184 = vadd.f32 %v9161, %v9180
    %v9185 = vadd.f32 %v9163, %v9181
    %v9186 = vadd.f32 %v9165, %v9182
    %v9187 = vmul.f32 %v9183, 0.7978846
    %v9188 = vmul.f32 %v9184, 0.7978846
    %v9189 = vmul.f32 %v9185, 0.7978846
    %v9190 = vmul.f32 %v9186, 0.7978846
    %v9191 = vtanh.pop %v9187
    %v9192 = vtanh.pop %v9188
    %v9193 = vtanh.pop %v9189
    %v9194 = vtanh.pop %v9190
    %v9195 = vadd.f32 %v9191, 1.0
    %v9196 = vadd.f32 %v9192, 1.0
    %v9197 = vadd.f32 %v9193, 1.0
    %v9198 = vadd.f32 %v9194, 1.0
    %v9199 = vmul.f32 %v9167, %v9195
    %v9200 = vmul.f32 %v9168, %v9196
    %v9201 = vmul.f32 %v9169, %v9197
    %v9202 = vmul.f32 %v9170, %v9198
    %v9203 = vpack.c.bf16 %v9201, %v9199
    %v9204 = vpack.c.bf16 %v9202, %v9200
    %s9205 = scalar_lea.vmem [#allocation8], 384
    %v9206 = vld [vmem:[%s9205] sm:$0xf]
    %v9207 = vld [vmem:[%s9205 + $0x4] sm:$0xf]
    %v9208 = vld [vmem:[%s9205 + $0x8] sm:$0xf]
    %v9209 = vld [vmem:[%s9205 + $0xc] sm:$0xf]
    %v9210 = vld [vmem:[%s9205 + $0x10] sm:$0xf]
    %v9211 = vld [vmem:[%s9205 + $0x14] sm:$0xf]
    %v9212 = vld [vmem:[%s9205 + $0x18] sm:$0xf]
    %v9213 = vld [vmem:[%s9205 + $0x1c] sm:$0xf]
    %v9214 = vld [vmem:[%s9205 + $0x20] sm:$0xf]
    %v9215 = vld [vmem:[%s9205 + $0x24] sm:$0xf]
    %v9216 = vld [vmem:[%s9205 + $0x28] sm:$0xf]
    %v9217 = vld [vmem:[%s9205 + $0x2c] sm:$0xf]
    %v9218 = vld [vmem:[%s9205 + $0x30] sm:$0xf]
    %v9219 = vld [vmem:[%s9205 + $0x34] sm:$0xf]
    %v9220 = vld [vmem:[%s9205 + $0x38] sm:$0xf]
    %v9221 = vld [vmem:[%s9205 + $0x3c] sm:$0xf]
    %v9222 = vld [vmem:[%s9205 + $0x40] sm:$0xf]
    %v9223 = vld [vmem:[%s9205 + $0x44] sm:$0xf]
    %v9224 = vld [vmem:[%s9205 + $0x48] sm:$0xf]
    %v9225 = vld [vmem:[%s9205 + $0x4c] sm:$0xf]
    %v9226 = vld [vmem:[%s9205 + $0x50] sm:$0xf]
    %v9227 = vld [vmem:[%s9205 + $0x54] sm:$0xf]
    %v9228 = vld [vmem:[%s9205 + $0x58] sm:$0xf]
    %v9229 = vld [vmem:[%s9205 + $0x5c] sm:$0xf]
    %v9230 = vld [vmem:[%s9205 + $0x60] sm:$0xf]
    %v9231 = vld [vmem:[%s9205 + $0x64] sm:$0xf]
    %v9232 = vld [vmem:[%s9205 + $0x68] sm:$0xf]
    %v9233 = vld [vmem:[%s9205 + $0x6c] sm:$0xf]
    %v9234 = vld [vmem:[%s9205 + $0x70] sm:$0xf]
    %v9235 = vld [vmem:[%s9205 + $0x74] sm:$0xf]
    %v9236 = vld [vmem:[%s9205 + $0x78] sm:$0xf]
    %v9237 = vld [vmem:[%s9205 + $0x7c] sm:$0xf]
    %s9238 = scalar_lea.vmem %s13, 3
    %v9239 = vld [vmem:[%s9238] sm:$0x1]
    %v9241 = vlaneseq
    %v9242 = vshrl.u32 %v9241, 7
    %v9243 = vsub.s32 0, %v9242
    %v9244 = vrot.slane %v9239, %v9243
    %v9278 = vunpack.c.l.b16 %v9206
    %v9279 = vunpack.c.l.b16 %v9207
    %v9280 = vunpack.c.l.b16 %v9208
    %v9281 = vunpack.c.l.b16 %v9209
    %v9282 = vunpack.c.l.b16 %v9210
    %v9283 = vunpack.c.l.b16 %v9211
    %v9284 = vunpack.c.l.b16 %v9212
    %v9285 = vunpack.c.l.b16 %v9213
    %v9286 = vunpack.c.l.b16 %v9214
    %v9287 = vunpack.c.l.b16 %v9215
    %v9288 = vunpack.c.l.b16 %v9216
    %v9289 = vunpack.c.l.b16 %v9217
    %v9290 = vunpack.c.l.b16 %v9218
    %v9291 = vunpack.c.l.b16 %v9219
    %v9292 = vunpack.c.l.b16 %v9220
    %v9293 = vunpack.c.l.b16 %v9221
    %v9294 = vunpack.c.l.b16 %v9222
    %v9295 = vunpack.c.l.b16 %v9223
    %v9296 = vunpack.c.l.b16 %v9224
    %v9297 = vunpack.c.l.b16 %v9225
    %v9298 = vunpack.c.l.b16 %v9226
    %v9299 = vunpack.c.l.b16 %v9227
    %v9300 = vunpack.c.l.b16 %v9228
    %v9301 = vunpack.c.l.b16 %v9229
    %v9302 = vunpack.c.l.b16 %v9230
    %v9303 = vunpack.c.l.b16 %v9231
    %v9304 = vunpack.c.l.b16 %v9232
    %v9305 = vunpack.c.l.b16 %v9233
    %v9306 = vunpack.c.l.b16 %v9234
    %v9307 = vunpack.c.l.b16 %v9235
    %v9308 = vunpack.c.l.b16 %v9236
    %v9309 = vunpack.c.l.b16 %v9237
    %v9310 = vpack.c.b16 %v9279, %v9278
    %v9311 = vpack.c.b16 %v9281, %v9280
    %v9312 = vpack.c.b16 %v9283, %v9282
    %v9313 = vpack.c.b16 %v9285, %v9284
    %v9314 = vpack.c.b16 %v9287, %v9286
    %v9315 = vpack.c.b16 %v9289, %v9288
    %v9316 = vpack.c.b16 %v9291, %v9290
    %v9317 = vpack.c.b16 %v9293, %v9292
    %v9318 = vpack.c.b16 %v9295, %v9294
    %v9319 = vpack.c.b16 %v9297, %v9296
    %v9320 = vpack.c.b16 %v9299, %v9298
    %v9321 = vpack.c.b16 %v9301, %v9300
    %v9322 = vpack.c.b16 %v9303, %v9302
    %v9323 = vpack.c.b16 %v9305, %v9304
    %v9324 = vpack.c.b16 %v9307, %v9306
    %v9325 = vpack.c.b16 %v9309, %v9308
    %9342 = vmatprep.subr.bf16.mxu0 0
    %9343 = vmatpush1.bf16.msra.mxu0 %v9317
    %9344 = vmatprep.subr.bf16.mxu0 0
    %9345 = vmatpush1.bf16.msra.mxu0 %v9316
    %9346 = vmatprep.subr.bf16.mxu0 0
    %9347 = vmatpush1.bf16.msra.mxu0 %v9315
    %9348 = vmatprep.subr.bf16.mxu0 0
    %9349 = vmatpush1.bf16.msra.mxu0 %v9314
    %9350 = vmatprep.subr.bf16.mxu0 0
    %9351 = vmatpush1.bf16.msra.mxu0 %v9313
    %9352 = vmatprep.subr.bf16.mxu0 0
    %9353 = vmatpush1.bf16.msra.mxu0 %v9312
    %9354 = vmatprep.subr.bf16.mxu0 0
    %9355 = vmatpush1.bf16.msra.mxu0 %v9311
    %9356 = vmatprep.subr.bf16.mxu0 0
    %9357 = vmatpush1.bf16.msra.mxu0 %v9310
    %9358 = vmatprep.subr.bf16.mxu0 0
    %9359 = vmatpush2.bf16.msra.mxu0 %v9325
    %9360 = vmatprep.subr.bf16.mxu0 0
    %9361 = vmatpush2.bf16.msra.mxu0 %v9324
    %9362 = vmatprep.subr.bf16.mxu0 0
    %9363 = vmatpush2.bf16.msra.mxu0 %v9323
    %9364 = vmatprep.subr.bf16.mxu0 0
    %9365 = vmatpush2.bf16.msra.mxu0 %v9322
    %9366 = vmatprep.subr.bf16.mxu0 0
    %9367 = vmatpush2.bf16.msra.mxu0 %v9321
    %9368 = vmatprep.subr.bf16.mxu0 0
    %9369 = vmatpush2.bf16.msra.mxu0 %v9320
    %9370 = vmatprep.subr.bf16.mxu0 0
    %9371 = vmatpush2.bf16.msra.mxu0 %v9319
    %9372 = vmatprep.subr.bf16.mxu0 0
    %9373 = vmatpush2.bf16.msra.mxu0 %v9318
    %9374 = vmatprep.mubr.bf16.mxu0 %v9204
    %9375 = vmatmul.mubr.bf16.gmra.mxu0 %v9203
    %v9376 = vpop.f32.mrf.mxu0
    %v9377 = vadd.f32 %v9244, %v9376
    %v9378 = vpop.f32.mrf.mxu0
    %v9379 = vpop.f32.mrf.mxu0
    %v9380 = vadd.f32 %v9244, %v9379
    %v9381 = vpop.f32.mrf.mxu0
    %9382 = vdwg.mxu0
    %v9383 = vadd.f32 %v9377, %v9011
    %v9384 = vadd.f32 %v9380, %v9012
    %s9385 = scalar_lea.vmem %s14, 3
    %v9386 = vld [vmem:[%s9385] sm:$0x1]
    %s9387 = scalar_lea.vmem %s15, 3
    %v9388 = vld [vmem:[%s9387] sm:$0x1]
    %9389 = vadd.xlane.f32.xlu0 %v9383
    %v9390 = vpop.xlane.xlu0 %9389
    %9391 = vadd.xlane.f32.xlu0 %v9384
    %v9392 = vpop.xlane.xlu0 %9391
    %v9393 = vmul.f32 %v9390, %v144
    %v9394 = vmul.f32 %v9392, %v144
    %v9395 = vsub.f32 %v9383, %v9393
    %v9396 = vsub.f32 %v9384, %v9394
    %v9397 = vmul.f32 %v9395, %v9395
    %v9398 = vmul.f32 %v9396, %v9396
    %9399 = vadd.xlane.f32.xlu0 %v9397
    %v9400 = vpop.xlane.xlu0 %9399
    %9401 = vadd.xlane.f32.xlu0 %v9398
    %v9402 = vpop.xlane.xlu0 %9401
    %v9403 = vmul.f32 %v9400, %v144
    %v9404 = vmul.f32 %v9402, %v144
    %v9405 = vadd.f32 %v9403, 1e-05
    %v9406 = vadd.f32 %v9404, 1e-05
    %v9407 = vrsqrt.pop %v9405
    %v9408 = vrsqrt.pop %v9406
    %v9409 = vmul.f32 %v9395, %v9407
    %v9410 = vmul.f32 %v9396, %v9408
    %v9412 = vlaneseq
    %v9413 = vshrl.u32 %v9412, 7
    %v9414 = vsub.s32 0, %v9413
    %v9415 = vrot.slane %v9386, %v9414
    %v9417 = vmul.f32 %v9409, %v9415
    %v9418 = vmul.f32 %v9410, %v9415
    %v9420 = vlaneseq
    %v9421 = vshrl.u32 %v9420, 7
    %v9422 = vsub.s32 0, %v9421
    %v9423 = vrot.slane %v9388, %v9422
    %v9425 = vadd.f32 %v9417, %v9423
    %v9426 = vadd.f32 %v9418, %v9423
    %v9427 = vld [vmem:[%s16] sm:$0xff]
    %v9428 = vld [vmem:[%s16 + $0x8] sm:$0xff]
    %v9429 = vld [vmem:[%s16 + $0x10] sm:$0xff]
    %v9430 = vld [vmem:[%s16 + $0x18] sm:$0xff]
    %v9431 = vld [vmem:[%s16 + $0x20] sm:$0xff]
    %v9432 = vld [vmem:[%s16 + $0x28] sm:$0xff]
    %v9433 = vld [vmem:[%s16 + $0x30] sm:$0xff]
    %v9434 = vld [vmem:[%s16 + $0x38] sm:$0xff]
    %v9435 = vld [vmem:[%s16 + $0x40] sm:$0xff]
    %v9436 = vld [vmem:[%s16 + $0x48] sm:$0xff]
    %v9437 = vld [vmem:[%s16 + $0x50] sm:$0xff]
    %v9438 = vld [vmem:[%s16 + $0x58] sm:$0xff]
    %v9439 = vld [vmem:[%s16 + $0x60] sm:$0xff]
    %v9440 = vld [vmem:[%s16 + $0x68] sm:$0xff]
    %v9441 = vld [vmem:[%s16 + $0x70] sm:$0xff]
    %v9442 = vld [vmem:[%s16 + $0x78] sm:$0xff]
    %v9443 = vld [vmem:[%s17] sm:$0x1]
    %v9445 = vlaneseq
    %v9446 = vshrl.u32 %v9445, 7
    %v9447 = vsub.s32 0, %v9446
    %v9448 = vrot.slane %v9443, %v9447
    %9450 = vmatprep.subr.mxu0 0.0
    %9451 = vmatpush1.msra.mxu0 %v9442
    %9452 = vmatprep.subr.mxu0 0.0
    %9453 = vmatpush1.msra.mxu0 %v9441
    %9454 = vmatprep.subr.mxu0 0.0
    %9455 = vmatpush1.msra.mxu0 %v9440
    %9456 = vmatprep.subr.mxu0 0.0
    %9457 = vmatpush1.msra.mxu0 %v9439
    %9458 = vmatprep.subr.mxu0 0.0
    %9459 = vmatpush1.msra.mxu0 %v9438
    %9460 = vmatprep.subr.mxu0 0.0
    %9461 = vmatpush1.msra.mxu0 %v9437
    %9462 = vmatprep.subr.mxu0 0.0
    %9463 = vmatpush1.msra.mxu0 %v9436
    %9464 = vmatprep.subr.mxu0 0.0
    %9465 = vmatpush1.msra.mxu0 %v9435
    %9466 = vmatprep.subr.mxu0 0.0
    %9467 = vmatpush1.msra.mxu0 %v9434
    %9468 = vmatprep.subr.mxu0 0.0
    %9469 = vmatpush1.msra.mxu0 %v9433
    %9470 = vmatprep.subr.mxu0 0.0
    %9471 = vmatpush1.msra.mxu0 %v9432
    %9472 = vmatprep.subr.mxu0 0.0
    %9473 = vmatpush1.msra.mxu0 %v9431
    %9474 = vmatprep.subr.mxu0 0.0
    %9475 = vmatpush1.msra.mxu0 %v9430
    %9476 = vmatprep.subr.mxu0 0.0
    %9477 = vmatpush1.msra.mxu0 %v9429
    %9478 = vmatprep.subr.mxu0 0.0
    %9479 = vmatpush1.msra.mxu0 %v9428
    %9480 = vmatprep.subr.mxu0 0.0
    %9481 = vmatpush1.msra.mxu0 %v9427
    %9482 = vmatprep.subr.mxu0 0.0
    %9483 = vmatpush2.msra.mxu0 0.0
    %9484 = vmatprep.subr.mxu0 0.0
    %9485 = vmatpush2.msra.mxu0 0.0
    %9486 = vmatprep.subr.mxu0 0.0
    %9487 = vmatpush2.msra.mxu0 0.0
    %9488 = vmatprep.subr.mxu0 0.0
    %9489 = vmatpush2.msra.mxu0 0.0
    %9490 = vmatprep.subr.mxu0 0.0
    %9491 = vmatpush2.msra.mxu0 0.0
    %9492 = vmatprep.subr.mxu0 0.0
    %9493 = vmatpush2.msra.mxu0 0.0
    %9494 = vmatprep.subr.mxu0 0.0
    %9495 = vmatpush2.msra.mxu0 0.0
    %9496 = vmatprep.subr.mxu0 0.0
    %9497 = vmatpush2.msra.mxu0 0.0
    %9498 = vmatprep.subr.mxu0 0.0
    %9499 = vmatpush2.msra.mxu0 0.0
    %9500 = vmatprep.subr.mxu0 0.0
    %9501 = vmatpush2.msra.mxu0 0.0
    %9502 = vmatprep.subr.mxu0 0.0
    %9503 = vmatpush2.msra.mxu0 0.0
    %9504 = vmatprep.subr.mxu0 0.0
    %9505 = vmatpush2.msra.mxu0 0.0
    %9506 = vmatprep.subr.mxu0 0.0
    %9507 = vmatpush2.msra.mxu0 0.0
    %9508 = vmatprep.subr.mxu0 0.0
    %9509 = vmatpush2.msra.mxu0 0.0
    %9510 = vmatprep.subr.mxu0 0.0
    %9511 = vmatpush2.msra.mxu0 0.0
    %9512 = vmatprep.subr.mxu0 0.0
    %9513 = vmatpush2.msra.mxu0 0.0
    %9514 = vmatprep.mubr.f32.mxu0 0.0
    %9515 = vmatmul.mubr.f32.gmra.mxu0 %v9425
    %v9516 = vpop.f32.mrf.mxu0
    %v9517 = vadd.f32 %v9448, %v9516
    %v9518 = vpop.f32.mrf.mxu0
    %9519 = vmatprep.mubr.f32.mxu0 0.0
    %9520 = vmatmul.mubr.f32.gmra.mxu0 %v9426
    %v9521 = vpop.f32.mrf.mxu0
    %v9522 = vadd.f32 %v9448, %v9521
    %v9523 = vpop.f32.mrf.mxu0
    %9524 = vdwg.mxu0
    %v9525 = vld [vmem:[%s18] sm:$0x1]
    %v9527 = vlaneseq
    %v9528 = vshrl.u32 %v9527, 7
    %v9529 = vsub.s32 0, %v9528
    %v9530 = vrot.slane %v9525, %v9529
    %9532 = vbcast.lane.b32.xlu0 %v9530, 256
    %v9533 = vpop.permute.xlu0 %9532
    %v9535 = vmul.f32 %v9517, %v9533
    %v9536 = vmul.f32 %v9522, %v9533
    %9539 = vset.pattern.permute.xlu0 1
    %9540 = vperm.xlu0 %9539, %v9535
    %v9541 = vpop.permute.xlu0 %9540
    %9542 = vset.pattern.permute.xlu0 1
    %9543 = vperm.xlu0 %9542, %v9536
    %v9544 = vpop.permute.xlu0 %9543
    %v9545 = vlaneseq
    %v9546 = vand.u32 %v9545, 127
    %v9547 = vlaneseq
    %v9548 = vshrl.u32 %v9547, 7
    %v9549 = vsub.s32 %v9546, %v9548
    %v9550 = vrot.slane %v9541, %v9549
    %v9551 = vlaneseq
    %v9552 = vshrl.u32 %v9551, 7
    %v9553 = vsub.s32 %v9546, %v9552
    %v9554 = vrot.slane %v9544, %v9553
    %vm9555 = vcmask 1041409
    %v9556 = vsel %vm9555, %v9554, %v9550
    %vm9558 = vcmask 58368
    %v9559 = vsel %vm9558, %v9556, 0.0
    %9560 = vadd.xlane.f32.xlu0 %v9559
    %v9561 = vpop.xlane.xlu0 %9560
    %v9562 = vld [vmem:[#allocation2] sm:$0x1]
    %v9564 = vlaneseq
    %v9565 = vshrl.u32 %v9564, 7
    %v9566 = vsub.s32 0, %v9565
    %v9567 = vrot.slane %v9562, %v9566
    %v9569 = vadd.f32 %v9561, %v9567
    %9572 = vset.pattern.permute.xlu0 0
    %9573 = vperm.xlu0 %9572, %v9517
    %v9574 = vpop.permute.xlu0 %9573
    %9575 = vset.pattern.permute.xlu0 0
    %9576 = vperm.xlu0 %9575, %v9522
    %v9577 = vpop.permute.xlu0 %9576
    %v9578 = vlaneseq
    %v9579 = vshrl.u32 %v9578, 7
    %v9580 = vsub.s32 %v9546, %v9579
    %v9581 = vrot.slane %v9574, %v9580
    %v9582 = vlaneseq
    %v9583 = vshrl.u32 %v9582, 7
    %v9584 = vsub.s32 %v9546, %v9583
    %v9585 = vrot.slane %v9577, %v9584
    %v9586 = vsel %vm9555, %v9585, %v9581
    %9588 = vst.msk [vmem:[#allocation9] sm:$0x3] %vm9558, %v9586
    %v9589 = vmax.f32 %v9569, 0.0
    %vm9590 = vcmask 1024
    %9591 = vst.msk [vmem:[%s21] sm:$0x3] %vm9590, %v9589
    // Predicated region
    $region94: #{forward.1} parent=1 // pred_check
      _
    $region95: #{forward.1} parent=1 // pred_check_branch
      %9593 = sbr.rel (0) target = $region97
    $region96: #{forward.1} parent=1 // pred_region
      %s9595 = ssub.s32 32, 32
      %9596 = vsyncadd [#allocation5], %s9595
      %s9598 = sshll.u32 [#allocation9], 4
      %s9599 = int_to_ptr.vmem [resolvable:$true] %s9598
      %9601 = dma.vmem_to_hbm [thread:$0]  %s9599, 32, %s20, [#allocation5]
    $region97: #{forward.1} parent=1 // pred_fallthru
      _
    // Predicated region
    $region98: #{forward.1} parent=1 // pred_check
      _
    $region99: #{forward.1} parent=1 // pred_check_branch
      %9603 = sbr.rel (0) target = $region101
    $region100: #{forward.1} parent=1 // pred_region
      _
    $region101: #{forward.1} parent=1 // pred_fallthru
      _
    // Predicated region
    $region102: #{forward.1} parent=1 // pred_check
      _
    $region103: #{forward.1} parent=1 // pred_check_branch
      %9605 = sbr.rel (0) target = $region105
    $region104: #{forward.1} parent=1 // pred_region
      %9606 = dma.done [#allocation5], 32
    $region105: #{forward.1} parent=1 // pred_fallthru
      _
    // Predicated region
    $region106: #{forward.1} parent=1 // pred_check
      _
    $region107: #{forward.1} parent=1 // pred_check_branch
      %9608 = sbr.rel (0) target = $region109
    $region108: #{forward.1} parent=1 // pred_region
      _
    $region109: #{forward.1} parent=1 // pred_fallthru
      _
    %9609 = vsyncpa [#allocation4], 1
    %9610 = vsyncpa [#allocation7], 1
    %9611 = vsyncpa [#allocation5], 1

</llo_original>
